<compile_context>
chip_gen: v6e
topology: v6e:2x2x1
jax: 0.10.0
libtpu: 0.0.40
codegen_flags: <defaults>
</compile_context>

<pallas_src>
import functools

import jax
import jax.numpy as jnp
from jax.experimental import pallas as pl
from jax.experimental.pallas import tpu as pltpu

_LANE = 128   # lane width  (last dim)
_SUB = 8      # sublane width (second-to-last dim)


def _basic_block_kernel(x_ref, w1_ref, b1_ref, w2_ref, b2_ref, o_ref,
                        fat_ref, acc_ref, *, width):
    # x_ref   : (1, H, Wp, Cp) bf16  NHWC tile, zero-padded in W ([width:Wp)) and C
    # w*_ref  : (9*Cp, Cp)     bf16  folded weights, rows ordered (kh, kw, cin)
    # b*_ref  : (1, Cp)        f32
    # o_ref   : (1, H, Wp, Cp) f32
    # fat_ref : (H, Wp, 9*Cp)  bf16  scratch: (kh, kw)-folded im2col slab
    # acc_ref : (H, Wp, Cp)    f32   scratch: matmul accumulator / mid activation
    H, Wp, Cp = acc_ref.shape

    # Halo rows of the kh=0 / kh=2 thirds are never written by build_fat (they
    # correspond to reading above row 0 / below row H-1): zero them once.
    fat_ref[0:1, :, 0:3 * Cp] = jnp.zeros((1, Wp, 3 * Cp), fat_ref.dtype)
    fat_ref[H - 1:H, :, 6 * Cp:9 * Cp] = jnp.zeros((1, Wp, 3 * Cp), fat_ref.dtype)

    def build_fat(src):
        # src: (H, Wp, Cp) f32 with zero pad columns [width:Wp).
        # fat[h, w, (kh*3+kw)*Cp + c] = src[h+kh-1, w+kw-1, c]  (0 out of range)
        # kw shifts via pltpu.roll (jnp.roll semantics, XLU); the wrap-around
        # lands in zeroed pad columns so it contributes nothing.
        for kw, shift in ((0, 1), (1, 0), (2, Wp - 1)):
            sh = pltpu.roll(src, shift, 1) if shift else src
            sh = sh.astype(fat_ref.dtype)                 # cast at the store
            c1 = (3 + kw) * Cp                            # kh = 1: every row
            fat_ref[:, :, c1:c1 + Cp] = sh
            if H > 1:
                c0 = kw * Cp                              # kh = 0: rows 1..H-1
                fat_ref[1:H, :, c0:c0 + Cp] = sh[0:H - 1]
                c2 = (6 + kw) * Cp                        # kh = 2: rows 0..H-2
                fat_ref[0:H - 1, :, c2:c2 + Cp] = sh[1:H]

    def conv(w_ref):
        # One fat MXU matmul per conv: (H*Wp, 9*Cp) @ (9*Cp, Cp), bf16 -> f32.
        acc_ref[...] = jnp.dot(fat_ref[...], w_ref[...],
                               preferred_element_type=jnp.float32)

    # ---- conv1 + bias + ReLU (in place on the accumulator) ----
    build_fat(x_ref[0].astype(jnp.float32))
    conv(w1_ref)
    acc_ref[...] = jnp.maximum(acc_ref[...] + b1_ref[0], 0.0)
    # Pad columns must be zero before conv2 so its halo / roll-wrap reads 0.
    acc_ref[:, width:Wp, :] = jnp.zeros((H, Wp - width, Cp), jnp.float32)

    # ---- conv2 + bias + residual add + ReLU ----
    build_fat(acc_ref[...])
    conv(w2_ref)
    o_ref[0] = jnp.maximum(
        acc_ref[...] + b2_ref[0] + x_ref[0].astype(jnp.float32), 0.0
    ).astype(o_ref.dtype)


def _pick_vmem_limit_bytes():
    # v5e/v6e have 128 MiB physical VMEM -> allow a generous scoped limit so
    # larger images still fit whole-image tiles; v7x only has 64 MiB, keep the
    # conservative 32 MiB there (and as the safe fallback).
    try:
        cap = pltpu.get_tpu_info().vmem_capacity_bytes
    except Exception:
        cap = None
    if cap is not None and cap >= 96 * 1024 * 1024:
        return 64 * 1024 * 1024
    return 32 * 1024 * 1024


def _make_basic_block(single_buffer_weights):
    @jax.jit
    def basic_block(x_nchw, w1_oihw, b1, w2_oihw, b2):
        N, Cin, H, W = x_nchw.shape
        Cout = w1_oihw.shape[0]
        assert Cin == Cout, "residual add requires in_channels == out_channels"

        Cp = pl.cdiv(Cin, _LANE) * _LANE      # lane-dense channels
        Wp = pl.cdiv(W + 1, _SUB) * _SUB      # multiple of 8, >= W+1
        # The kw=0 roll wrap must land in a zero pad column.
        assert Wp >= W + 1

        # NCHW -> NHWC bf16, zero-pad width (right) and channels.  The zero
        # pad columns double as the horizontal conv halo inside the kernel.
        # TODO(synk): for stacked blocks, keep activations in this padded
        # NHWC/bf16 layout between blocks to avoid the transpose/pad HBM passes.
        x = jnp.transpose(x_nchw, (0, 2, 3, 1)).astype(jnp.bfloat16)
        x = jnp.pad(x, ((0, 0), (0, 0), (0, Wp - W), (0, Cp - Cin)))

        def prep_w(w_oihw):
            # OIHW -> HWIO, zero-pad channels, fold (kh, kw) into the
            # contraction dim: (3, 3, Cp, Cp) -> (9*Cp, Cp), rows ordered
            # kh-major, then kw, then cin (matches the fat scratch layout).
            w = jnp.transpose(w_oihw, (2, 3, 1, 0)).astype(jnp.bfloat16)
            w = jnp.pad(w, ((0, 0), (0, 0), (0, Cp - Cin), (0, Cp - Cout)))
            return w.reshape(9 * Cp, Cp)

        w1f, w2f = prep_w(w1_oihw), prep_w(w2_oihw)
        b1p = jnp.pad(b1.astype(jnp.float32), (0, Cp - Cout)).reshape(1, Cp)
        b2p = jnp.pad(b2.astype(jnp.float32), (0, Cp - Cout)).reshape(1, Cp)

        kernel = functools.partial(_basic_block_kernel, width=W)

        # Weights / biases have a constant index_map; single-buffer them so the
        # pipeline does not hold two copies of each (9*Cp, Cp) weight in VMEM.
        wk = dict(pipeline_mode=pl.Buffered(1)) if single_buffer_weights else {}

        # TODO(synk): for large H on v7x (64 MiB VMEM) add a row-strip grid
        # axis with a +/-1-row halo instead of whole-image tiles.
        # TODO(synk): for layers with C << 128 (like this demo's C=8) a packing
        # that folds kh*kw*C into K with W on lanes would avoid padding most of
        # the MXU work with zeros; this mapping targets C >= 64-128 stages.
        out = pl.pallas_call(
            kernel,
            out_shape=jax.ShapeDtypeStruct((N, H, Wp, Cp), jnp.float32),
            grid_spec=pltpu.PrefetchScalarGridSpec(
                num_scalar_prefetch=0,
                grid=(N,),
                in_specs=[
                    pl.BlockSpec((1, H, Wp, Cp), lambda n: (n, 0, 0, 0)),
                    pl.BlockSpec((9 * Cp, Cp), lambda n: (0, 0), **wk),
                    pl.BlockSpec((1, Cp), lambda n: (0, 0), **wk),
                    pl.BlockSpec((9 * Cp, Cp), lambda n: (0, 0), **wk),
                    pl.BlockSpec((1, Cp), lambda n: (0, 0), **wk),
                ],
                out_specs=pl.BlockSpec((1, H, Wp, Cp), lambda n: (n, 0, 0, 0)),
                scratch_shapes=[
                    pltpu.VMEM((H, Wp, 9 * Cp), jnp.bfloat16),
                    pltpu.VMEM((H, Wp, Cp), jnp.float32),
                ],
            ),
            compiler_params=pltpu.CompilerParams(
                dimension_semantics=("parallel",),
                vmem_limit_bytes=_pick_vmem_limit_bytes(),
            ),
        )(x, w1f, b1p, w2f, b2p)

        # Drop the width / channel padding, NHWC -> NCHW.
        return jnp.transpose(out[:, :, :W, :Cout], (0, 3, 1, 2))

    return basic_block


_BLOCK_SINGLE_BUF = _make_basic_block(True)
_BLOCK_DOUBLE_BUF = _make_basic_block(False)


def basic_block_nchw(x_nchw, w1, b1, w2, b2):
    """BasicBlock forward (stride=1, downsample=None) on NCHW input."""
    try:
        return jax.block_until_ready(_BLOCK_SINGLE_BUF(x_nchw, w1, b1, w2, b2))
    except Exception:
        # This jax build rejected pipeline_mode=pl.Buffered(1); fall back to
        # the default (double-buffered) weight/bias specs.
        return jax.block_until_ready(_BLOCK_DOUBLE_BUF(x_nchw, w1, b1, w2, b2))


def _reference_nchw(x, w1, b1, w2, b2):
    """Pure-JAX f32 reference mirroring the PyTorch BasicBlock forward."""
    dn = jax.lax.conv_dimension_numbers(x.shape, w1.shape,
                                        ("NCHW", "OIHW", "NCHW"))

    def conv(a, w, b):
        y = jax.lax.conv_general_dilated(a, w, window_strides=(1, 1),
                                         padding=((1, 1), (1, 1)),
                                         dimension_numbers=dn)
        return y + b.reshape(1, -1, 1, 1)

    out = jnp.maximum(conv(x, w1, b1), 0.0)
    out = conv(out, w2, b2)
    return jnp.maximum(out + x, 0.0)


if __name__ == "__main__":
    # Small shapes: batch=2, channels=8, spatial=8x8 (NCHW like PyTorch).
    N, C, H, W = 2, 8, 8, 8
    key = jax.random.PRNGKey(0)
    kx, k1, kb1, k2, kb2 = jax.random.split(key, 5)

    x = jax.random.normal(kx, (N, C, H, W), dtype=jnp.float32)
    fan_in = C * 3 * 3
    w1 = jax.random.normal(k1, (C, C, 3, 3), dtype=jnp.float32) / jnp.sqrt(fan_in)
    b1 = jax.random.normal(kb1, (C,), dtype=jnp.float32) * 0.1
    w2 = jax.random.normal(k2, (C, C, 3, 3), dtype=jnp.float32) / jnp.sqrt(fan_in)
    b2 = jax.random.normal(kb2, (C,), dtype=jnp.float32) * 0.1

    out = basic_block_nchw(x, w1, b1, w2, b2)
    out = jax.block_until_ready(out)

    ref = _reference_nchw(x, w1, b1, w2, b2)
    assert out.shape == (N, C, H, W)
    # bf16 MXU operands (and bf16 residual) -> relaxed tolerance vs f32 ref.
    assert jnp.allclose(out, ref, atol=7e-2, rtol=7e-2), "mismatch vs reference"

    print("KERNEL_OK")
</pallas_src>

<mosaic_0001>
module attributes {stable_mosaic.version = 11 : i64} {
  func.func @_basic_block_kernel(%arg0: i32, %arg1: memref<1x8x16x128xbf16, #tpu.memory_space<vmem>>, %arg2: memref<1152x128xbf16, #tpu.memory_space<vmem>>, %arg3: memref<1x128xf32, #tpu.memory_space<vmem>>, %arg4: memref<1152x128xbf16, #tpu.memory_space<vmem>>, %arg5: memref<1x128xf32, #tpu.memory_space<vmem>>, %arg6: memref<1x8x16x128xf32, #tpu.memory_space<vmem>>, %arg7: memref<8x16x1152xbf16, #tpu.memory_space<vmem>>, %arg8: memref<8x16x128xf32, #tpu.memory_space<vmem>>) attributes {dimension_semantics = [#tpu.dimension_semantics<parallel>], iteration_bounds = array<i64: 2>, scalar_prefetch = 0 : i64, scratch_operands = 2 : i64, tpu.core_type = #tpu.core_type<tc>, window_params = [{transform_indices = @transform_0, window_bounds = array<i64: 1, 8, 16, 128>}, {pipeline_mode = #tpu.pipeline_mode<synchronous>, transform_indices = @transform_1, window_bounds = array<i64: 1152, 128>}, {pipeline_mode = #tpu.pipeline_mode<synchronous>, transform_indices = @transform_2, window_bounds = array<i64: 1, 128>}, {pipeline_mode = #tpu.pipeline_mode<synchronous>, transform_indices = @transform_3, window_bounds = array<i64: 1152, 128>}, {pipeline_mode = #tpu.pipeline_mode<synchronous>, transform_indices = @transform_4, window_bounds = array<i64: 1, 128>}, {transform_indices = @transform_5, window_bounds = array<i64: 1, 8, 16, 128>}]} {
    %cst = arith.constant 0.000000e+00 : bf16
    %0 = vector.broadcast %cst : bf16 to vector<1x16x384xbf16>
    %c0 = arith.constant 0 : index
    %c0_0 = arith.constant 0 : index
    %c0_1 = arith.constant 0 : index
    %1 = vector.load %arg7[%c0, %c0_0, %c0_1] : memref<8x16x1152xbf16, #tpu.memory_space<vmem>>, vector<1x16x384xbf16>
    tpu.vector_store %arg7[%c0, %c0_0, %c0_1], %0 {strides = array<i32>} : memref<8x16x1152xbf16, #tpu.memory_space<vmem>>, vector<1x16x384xbf16>,
    %cst_2 = arith.constant 0.000000e+00 : bf16
    %2 = vector.broadcast %cst_2 : bf16 to vector<1x16x384xbf16>
    %c7 = arith.constant 7 : index
    %c0_3 = arith.constant 0 : index
    %c768 = arith.constant 768 : index
    %3 = vector.load %arg7[%c7, %c0_3, %c768] : memref<8x16x1152xbf16, #tpu.memory_space<vmem>>, vector<1x16x384xbf16>
    tpu.vector_store %arg7[%c7, %c0_3, %c768], %2 {strides = array<i32>} : memref<8x16x1152xbf16, #tpu.memory_space<vmem>>, vector<1x16x384xbf16>,
    %c0_4 = arith.constant 0 : index
    %c0_5 = arith.constant 0 : index
    %c0_6 = arith.constant 0 : index
    %c0_7 = arith.constant 0 : index
    %4 = vector.load %arg1[%c0_4, %c0_5, %c0_6, %c0_7] : memref<1x8x16x128xbf16, #tpu.memory_space<vmem>>, vector<1x8x16x128xbf16>
    %5 = vector.shape_cast %4 : vector<1x8x16x128xbf16> to vector<8x16x128xbf16>
    %6 = arith.extf %5 : vector<8x16x128xbf16> to vector<8x16x128xf32>
    %c1_i32 = arith.constant 1 : i32
    %7 = tpu.dynamic_rotate %6 by %c1_i32 dim 1 : vector<8x16x128xf32>, i32 -> vector<8x16x128xf32>
    %8 = arith.truncf %7 : vector<8x16x128xf32> to vector<8x16x128xbf16>
    %c0_8 = arith.constant 0 : index
    %c0_9 = arith.constant 0 : index
    %c384 = arith.constant 384 : index
    %9 = vector.load %arg7[%c0_8, %c0_9, %c384] : memref<8x16x1152xbf16, #tpu.memory_space<vmem>>, vector<8x16x128xbf16>
    tpu.vector_store %arg7[%c0_8, %c0_9, %c384], %8 {strides = array<i32>} : memref<8x16x1152xbf16, #tpu.memory_space<vmem>>, vector<8x16x128xbf16>,
    %10 = vector.extract_strided_slice %8 {offsets = [0, 0, 0], sizes = [7, 16, 128], strides = [1, 1, 1]} : vector<8x16x128xbf16> to vector<7x16x128xbf16>
    %c1 = arith.constant 1 : index
    %c0_10 = arith.constant 0 : index
    %c0_11 = arith.constant 0 : index
    %11 = vector.load %arg7[%c1, %c0_10, %c0_11] : memref<8x16x1152xbf16, #tpu.memory_space<vmem>>, vector<7x16x128xbf16>
    tpu.vector_store %arg7[%c1, %c0_10, %c0_11], %10 {strides = array<i32>} : memref<8x16x1152xbf16, #tpu.memory_space<vmem>>, vector<7x16x128xbf16>,
    %12 = vector.extract_strided_slice %8 {offsets = [1, 0, 0], sizes = [7, 16, 128], strides = [1, 1, 1]} : vector<8x16x128xbf16> to vector<7x16x128xbf16>
    %c0_12 = arith.constant 0 : index
    %c0_13 = arith.constant 0 : index
    %c768_14 = arith.constant 768 : index
    %13 = vector.load %arg7[%c0_12, %c0_13, %c768_14] : memref<8x16x1152xbf16, #tpu.memory_space<vmem>>, vector<7x16x128xbf16>
    tpu.vector_store %arg7[%c0_12, %c0_13, %c768_14], %12 {strides = array<i32>} : memref<8x16x1152xbf16, #tpu.memory_space<vmem>>, vector<7x16x128xbf16>,
    %14 = arith.truncf %6 : vector<8x16x128xf32> to vector<8x16x128xbf16>
    %c0_15 = arith.constant 0 : index
    %c0_16 = arith.constant 0 : index
    %c512 = arith.constant 512 : index
    %15 = vector.load %arg7[%c0_15, %c0_16, %c512] : memref<8x16x1152xbf16, #tpu.memory_space<vmem>>, vector<8x16x128xbf16>
    tpu.vector_store %arg7[%c0_15, %c0_16, %c512], %14 {strides = array<i32>} : memref<8x16x1152xbf16, #tpu.memory_space<vmem>>, vector<8x16x128xbf16>,
    %16 = vector.extract_strided_slice %14 {offsets = [0, 0, 0], sizes = [7, 16, 128], strides = [1, 1, 1]} : vector<8x16x128xbf16> to vector<7x16x128xbf16>
    %c1_17 = arith.constant 1 : index
    %c0_18 = arith.constant 0 : index
    %c128 = arith.constant 128 : index
    %17 = vector.load %arg7[%c1_17, %c0_18, %c128] : memref<8x16x1152xbf16, #tpu.memory_space<vmem>>, vector<7x16x128xbf16>
    tpu.vector_store %arg7[%c1_17, %c0_18, %c128], %16 {strides = array<i32>} : memref<8x16x1152xbf16, #tpu.memory_space<vmem>>, vector<7x16x128xbf16>,
    %18 = vector.extract_strided_slice %14 {offsets = [1, 0, 0], sizes = [7, 16, 128], strides = [1, 1, 1]} : vector<8x16x128xbf16> to vector<7x16x128xbf16>
    %c0_19 = arith.constant 0 : index
    %c0_20 = arith.constant 0 : index
    %c896 = arith.constant 896 : index
    %19 = vector.load %arg7[%c0_19, %c0_20, %c896] : memref<8x16x1152xbf16, #tpu.memory_space<vmem>>, vector<7x16x128xbf16>
    tpu.vector_store %arg7[%c0_19, %c0_20, %c896], %18 {strides = array<i32>} : memref<8x16x1152xbf16, #tpu.memory_space<vmem>>, vector<7x16x128xbf16>,
    %c15_i32 = arith.constant 15 : i32
    %20 = tpu.dynamic_rotate %6 by %c15_i32 dim 1 : vector<8x16x128xf32>, i32 -> vector<8x16x128xf32>
    %21 = arith.truncf %20 : vector<8x16x128xf32> to vector<8x16x128xbf16>
    %c0_21 = arith.constant 0 : index
    %c0_22 = arith.constant 0 : index
    %c640 = arith.constant 640 : index
    %22 = vector.load %arg7[%c0_21, %c0_22, %c640] : memref<8x16x1152xbf16, #tpu.memory_space<vmem>>, vector<8x16x128xbf16>
    tpu.vector_store %arg7[%c0_21, %c0_22, %c640], %21 {strides = array<i32>} : memref<8x16x1152xbf16, #tpu.memory_space<vmem>>, vector<8x16x128xbf16>,
    %23 = vector.extract_strided_slice %21 {offsets = [0, 0, 0], sizes = [7, 16, 128], strides = [1, 1, 1]} : vector<8x16x128xbf16> to vector<7x16x128xbf16>
    %c1_23 = arith.constant 1 : index
    %c0_24 = arith.constant 0 : index
    %c256 = arith.constant 256 : index
    %24 = vector.load %arg7[%c1_23, %c0_24, %c256] : memref<8x16x1152xbf16, #tpu.memory_space<vmem>>, vector<7x16x128xbf16>
    tpu.vector_store %arg7[%c1_23, %c0_24, %c256], %23 {strides = array<i32>} : memref<8x16x1152xbf16, #tpu.memory_space<vmem>>, vector<7x16x128xbf16>,
    %25 = vector.extract_strided_slice %21 {offsets = [1, 0, 0], sizes = [7, 16, 128], strides = [1, 1, 1]} : vector<8x16x128xbf16> to vector<7x16x128xbf16>
    %c0_25 = arith.constant 0 : index
    %c0_26 = arith.constant 0 : index
    %c1024 = arith.constant 1024 : index
    %26 = vector.load %arg7[%c0_25, %c0_26, %c1024] : memref<8x16x1152xbf16, #tpu.memory_space<vmem>>, vector<7x16x128xbf16>
    tpu.vector_store %arg7[%c0_25, %c0_26, %c1024], %25 {strides = array<i32>} : memref<8x16x1152xbf16, #tpu.memory_space<vmem>>, vector<7x16x128xbf16>,
    %c0_27 = arith.constant 0 : index
    %c0_28 = arith.constant 0 : index
    %c0_29 = arith.constant 0 : index
    %27 = vector.load %arg7[%c0_27, %c0_28, %c0_29] : memref<8x16x1152xbf16, #tpu.memory_space<vmem>>, vector<8x16x1152xbf16>
    %c0_30 = arith.constant 0 : index
    %c0_31 = arith.constant 0 : index
    %28 = vector.load %arg2[%c0_30, %c0_31] : memref<1152x128xbf16, #tpu.memory_space<vmem>>, vector<1152x128xbf16>
    %cst_32 = arith.constant dense<0.000000e+00> : vector<8x16x128xf32>
    %29 = tpu.matmul %27, %28, %cst_32 {dimension_numbers = #tpu.dot_dimension_numbers<[2], [0], [0, 1], [1], [0, 0, 0, 1, 1, 1], [], []>} : vector<8x16x1152xbf16>, vector<1152x128xbf16>, vector<8x16x128xf32> -> vector<8x16x128xf32>
    %c0_33 = arith.constant 0 : index
    %c0_34 = arith.constant 0 : index
    %c0_35 = arith.constant 0 : index
    %30 = vector.load %arg8[%c0_33, %c0_34, %c0_35] : memref<8x16x128xf32, #tpu.memory_space<vmem>>, vector<8x16x128xf32>
    tpu.vector_store %arg8[%c0_33, %c0_34, %c0_35], %29 {strides = array<i32>} : memref<8x16x128xf32, #tpu.memory_space<vmem>>, vector<8x16x128xf32>,
    %c0_36 = arith.constant 0 : index
    %c0_37 = arith.constant 0 : index
    %c0_38 = arith.constant 0 : index
    %31 = vector.load %arg8[%c0_36, %c0_37, %c0_38] : memref<8x16x128xf32, #tpu.memory_space<vmem>>, vector<8x16x128xf32>
    %c0_39 = arith.constant 0 : index
    %c0_40 = arith.constant 0 : index
    %32 = vector.load %arg3[%c0_39, %c0_40] : memref<1x128xf32, #tpu.memory_space<vmem>>, vector<1x128xf32>
    %33 = vector.shape_cast %32 : vector<1x128xf32> to vector<128xf32>
    %34 = vector.shape_cast %33 : vector<128xf32> to vector<1x1x128xf32>
    %35 = vector.broadcast %34 : vector<1x1x128xf32> to vector<8x16x128xf32>
    %36 = arith.addf %31, %35 : vector<8x16x128xf32>
    %cst_41 = arith.constant 0.000000e+00 : f32
    %37 = vector.broadcast %cst_41 : f32 to vector<8x16x128xf32>
    %38 = arith.maximumf %36, %37 : vector<8x16x128xf32>
    %c0_42 = arith.constant 0 : index
    %c0_43 = arith.constant 0 : index
    %c0_44 = arith.constant 0 : index
    %39 = vector.load %arg8[%c0_42, %c0_43, %c0_44] : memref<8x16x128xf32, #tpu.memory_space<vmem>>, vector<8x16x128xf32>
    tpu.vector_store %arg8[%c0_42, %c0_43, %c0_44], %38 {strides = array<i32>} : memref<8x16x128xf32, #tpu.memory_space<vmem>>, vector<8x16x128xf32>,
    %cst_45 = arith.constant 0.000000e+00 : f32
    %40 = vector.broadcast %cst_45 : f32 to vector<8x8x128xf32>
    %c0_46 = arith.constant 0 : index
    %c8 = arith.constant 8 : index
    %c0_47 = arith.constant 0 : index
    %41 = vector.load %arg8[%c0_46, %c8, %c0_47] : memref<8x16x128xf32, #tpu.memory_space<vmem>>, vector<8x8x128xf32>
    tpu.vector_store %arg8[%c0_46, %c8, %c0_47], %40 {strides = array<i32>} : memref<8x16x128xf32, #tpu.memory_space<vmem>>, vector<8x8x128xf32>,
    %c0_48 = arith.constant 0 : index
    %c0_49 = arith.constant 0 : index
    %c0_50 = arith.constant 0 : index
    %42 = vector.load %arg8[%c0_48, %c0_49, %c0_50] : memref<8x16x128xf32, #tpu.memory_space<vmem>>, vector<8x16x128xf32>
    %c1_i32_51 = arith.constant 1 : i32
    %43 = tpu.dynamic_rotate %42 by %c1_i32_51 dim 1 : vector<8x16x128xf32>, i32 -> vector<8x16x128xf32>
    %44 = arith.truncf %43 : vector<8x16x128xf32> to vector<8x16x128xbf16>
    %c0_52 = arith.constant 0 : index
    %c0_53 = arith.constant 0 : index
    %c384_54 = arith.constant 384 : index
    %45 = vector.load %arg7[%c0_52, %c0_53, %c384_54] : memref<8x16x1152xbf16, #tpu.memory_space<vmem>>, vector<8x16x128xbf16>
    tpu.vector_store %arg7[%c0_52, %c0_53, %c384_54], %44 {strides = array<i32>} : memref<8x16x1152xbf16, #tpu.memory_space<vmem>>, vector<8x16x128xbf16>,
    %46 = vector.extract_strided_slice %44 {offsets = [0, 0, 0], sizes = [7, 16, 128], strides = [1, 1, 1]} : vector<8x16x128xbf16> to vector<7x16x128xbf16>
    %c1_55 = arith.constant 1 : index
    %c0_56 = arith.constant 0 : index
    %c0_57 = arith.constant 0 : index
    %47 = vector.load %arg7[%c1_55, %c0_56, %c0_57] : memref<8x16x1152xbf16, #tpu.memory_space<vmem>>, vector<7x16x128xbf16>
    tpu.vector_store %arg7[%c1_55, %c0_56, %c0_57], %46 {strides = array<i32>} : memref<8x16x1152xbf16, #tpu.memory_space<vmem>>, vector<7x16x128xbf16>,
    %48 = vector.extract_strided_slice %44 {offsets = [1, 0, 0], sizes = [7, 16, 128], strides = [1, 1, 1]} : vector<8x16x128xbf16> to vector<7x16x128xbf16>
    %c0_58 = arith.constant 0 : index
    %c0_59 = arith.constant 0 : index
    %c768_60 = arith.constant 768 : index
    %49 = vector.load %arg7[%c0_58, %c0_59, %c768_60] : memref<8x16x1152xbf16, #tpu.memory_space<vmem>>, vector<7x16x128xbf16>
    tpu.vector_store %arg7[%c0_58, %c0_59, %c768_60], %48 {strides = array<i32>} : memref<8x16x1152xbf16, #tpu.memory_space<vmem>>, vector<7x16x128xbf16>,
    %50 = arith.truncf %42 : vector<8x16x128xf32> to vector<8x16x128xbf16>
    %c0_61 = arith.constant 0 : index
    %c0_62 = arith.constant 0 : index
    %c512_63 = arith.constant 512 : index
    %51 = vector.load %arg7[%c0_61, %c0_62, %c512_63] : memref<8x16x1152xbf16, #tpu.memory_space<vmem>>, vector<8x16x128xbf16>
    tpu.vector_store %arg7[%c0_61, %c0_62, %c512_63], %50 {strides = array<i32>} : memref<8x16x1152xbf16, #tpu.memory_space<vmem>>, vector<8x16x128xbf16>,
    %52 = vector.extract_strided_slice %50 {offsets = [0, 0, 0], sizes = [7, 16, 128], strides = [1, 1, 1]} : vector<8x16x128xbf16> to vector<7x16x128xbf16>
    %c1_64 = arith.constant 1 : index
    %c0_65 = arith.constant 0 : index
    %c128_66 = arith.constant 128 : index
    %53 = vector.load %arg7[%c1_64, %c0_65, %c128_66] : memref<8x16x1152xbf16, #tpu.memory_space<vmem>>, vector<7x16x128xbf16>
    tpu.vector_store %arg7[%c1_64, %c0_65, %c128_66], %52 {strides = array<i32>} : memref<8x16x1152xbf16, #tpu.memory_space<vmem>>, vector<7x16x128xbf16>,
    %54 = vector.extract_strided_slice %50 {offsets = [1, 0, 0], sizes = [7, 16, 128], strides = [1, 1, 1]} : vector<8x16x128xbf16> to vector<7x16x128xbf16>
    %c0_67 = arith.constant 0 : index
    %c0_68 = arith.constant 0 : index
    %c896_69 = arith.constant 896 : index
    %55 = vector.load %arg7[%c0_67, %c0_68, %c896_69] : memref<8x16x1152xbf16, #tpu.memory_space<vmem>>, vector<7x16x128xbf16>
    tpu.vector_store %arg7[%c0_67, %c0_68, %c896_69], %54 {strides = array<i32>} : memref<8x16x1152xbf16, #tpu.memory_space<vmem>>, vector<7x16x128xbf16>,
    %c15_i32_70 = arith.constant 15 : i32
    %56 = tpu.dynamic_rotate %42 by %c15_i32_70 dim 1 : vector<8x16x128xf32>, i32 -> vector<8x16x128xf32>
    %57 = arith.truncf %56 : vector<8x16x128xf32> to vector<8x16x128xbf16>
    %c0_71 = arith.constant 0 : index
    %c0_72 = arith.constant 0 : index
    %c640_73 = arith.constant 640 : index
    %58 = vector.load %arg7[%c0_71, %c0_72, %c640_73] : memref<8x16x1152xbf16, #tpu.memory_space<vmem>>, vector<8x16x128xbf16>
    tpu.vector_store %arg7[%c0_71, %c0_72, %c640_73], %57 {strides = array<i32>} : memref<8x16x1152xbf16, #tpu.memory_space<vmem>>, vector<8x16x128xbf16>,
    %59 = vector.extract_strided_slice %57 {offsets = [0, 0, 0], sizes = [7, 16, 128], strides = [1, 1, 1]} : vector<8x16x128xbf16> to vector<7x16x128xbf16>
    %c1_74 = arith.constant 1 : index
    %c0_75 = arith.constant 0 : index
    %c256_76 = arith.constant 256 : index
    %60 = vector.load %arg7[%c1_74, %c0_75, %c256_76] : memref<8x16x1152xbf16, #tpu.memory_space<vmem>>, vector<7x16x128xbf16>
    tpu.vector_store %arg7[%c1_74, %c0_75, %c256_76], %59 {strides = array<i32>} : memref<8x16x1152xbf16, #tpu.memory_space<vmem>>, vector<7x16x128xbf16>,
    %61 = vector.extract_strided_slice %57 {offsets = [1, 0, 0], sizes = [7, 16, 128], strides = [1, 1, 1]} : vector<8x16x128xbf16> to vector<7x16x128xbf16>
    %c0_77 = arith.constant 0 : index
    %c0_78 = arith.constant 0 : index
    %c1024_79 = arith.constant 1024 : index
    %62 = vector.load %arg7[%c0_77, %c0_78, %c1024_79] : memref<8x16x1152xbf16, #tpu.memory_space<vmem>>, vector<7x16x128xbf16>
    tpu.vector_store %arg7[%c0_77, %c0_78, %c1024_79], %61 {strides = array<i32>} : memref<8x16x1152xbf16, #tpu.memory_space<vmem>>, vector<7x16x128xbf16>,
    %c0_80 = arith.constant 0 : index
    %c0_81 = arith.constant 0 : index
    %c0_82 = arith.constant 0 : index
    %63 = vector.load %arg7[%c0_80, %c0_81, %c0_82] : memref<8x16x1152xbf16, #tpu.memory_space<vmem>>, vector<8x16x1152xbf16>
    %c0_83 = arith.constant 0 : index
    %c0_84 = arith.constant 0 : index
    %64 = vector.load %arg4[%c0_83, %c0_84] : memref<1152x128xbf16, #tpu.memory_space<vmem>>, vector<1152x128xbf16>
    %cst_85 = arith.constant dense<0.000000e+00> : vector<8x16x128xf32>
    %65 = tpu.matmul %63, %64, %cst_85 {dimension_numbers = #tpu.dot_dimension_numbers<[2], [0], [0, 1], [1], [0, 0, 0, 1, 1, 1], [], []>} : vector<8x16x1152xbf16>, vector<1152x128xbf16>, vector<8x16x128xf32> -> vector<8x16x128xf32>
    %c0_86 = arith.constant 0 : index
    %c0_87 = arith.constant 0 : index
    %c0_88 = arith.constant 0 : index
    %66 = vector.load %arg8[%c0_86, %c0_87, %c0_88] : memref<8x16x128xf32, #tpu.memory_space<vmem>>, vector<8x16x128xf32>
    tpu.vector_store %arg8[%c0_86, %c0_87, %c0_88], %65 {strides = array<i32>} : memref<8x16x128xf32, #tpu.memory_space<vmem>>, vector<8x16x128xf32>,
    %c0_89 = arith.constant 0 : index
    %c0_90 = arith.constant 0 : index
    %c0_91 = arith.constant 0 : index
    %67 = vector.load %arg8[%c0_89, %c0_90, %c0_91] : memref<8x16x128xf32, #tpu.memory_space<vmem>>, vector<8x16x128xf32>
    %c0_92 = arith.constant 0 : index
    %c0_93 = arith.constant 0 : index
    %68 = vector.load %arg5[%c0_92, %c0_93] : memref<1x128xf32, #tpu.memory_space<vmem>>, vector<1x128xf32>
    %69 = vector.shape_cast %68 : vector<1x128xf32> to vector<128xf32>
    %70 = vector.shape_cast %69 : vector<128xf32> to vector<1x1x128xf32>
    %71 = vector.broadcast %70 : vector<1x1x128xf32> to vector<8x16x128xf32>
    %72 = arith.addf %67, %71 : vector<8x16x128xf32>
    %c0_94 = arith.constant 0 : index
    %c0_95 = arith.constant 0 : index
    %c0_96 = arith.constant 0 : index
    %c0_97 = arith.constant 0 : index
    %73 = vector.load %arg1[%c0_94, %c0_95, %c0_96, %c0_97] : memref<1x8x16x128xbf16, #tpu.memory_space<vmem>>, vector<1x8x16x128xbf16>
    %74 = vector.shape_cast %73 : vector<1x8x16x128xbf16> to vector<8x16x128xbf16>
    %75 = arith.extf %74 : vector<8x16x128xbf16> to vector<8x16x128xf32>
    %76 = arith.addf %72, %75 : vector<8x16x128xf32>
    %cst_98 = arith.constant 0.000000e+00 : f32
    %77 = vector.broadcast %cst_98 : f32 to vector<8x16x128xf32>
    %78 = arith.maximumf %76, %77 : vector<8x16x128xf32>
    %c0_99 = arith.constant 0 : index
    %c0_100 = arith.constant 0 : index
    %c0_101 = arith.constant 0 : index
    %c0_102 = arith.constant 0 : index
    %79 = vector.load %arg6[%c0_99, %c0_100, %c0_101, %c0_102] : memref<1x8x16x128xf32, #tpu.memory_space<vmem>>, vector<1x8x16x128xf32>
    %80 = vector.shape_cast %79 : vector<1x8x16x128xf32> to vector<8x16x128xf32>
    %81 = vector.shape_cast %78 : vector<8x16x128xf32> to vector<1x8x16x128xf32>
    tpu.vector_store %arg6[%c0_99, %c0_100, %c0_101, %c0_102], %81 {strides = array<i32>} : memref<1x8x16x128xf32, #tpu.memory_space<vmem>>, vector<1x8x16x128xf32>,
    return
  }
  func.func @transform_0(%arg0: i32) -> (i32, i32, i32, i32) {
    %c0_i32 = arith.constant 0 : i32
    %c0_i32_0 = arith.constant 0 : i32
    %c0_i32_1 = arith.constant 0 : i32
    %c0_i32_2 = arith.constant 0 : i32
    return %arg0, %c0_i32, %c0_i32_0, %c0_i32_1 : i32, i32, i32, i32
  }
  func.func @transform_1(%arg0: i32) -> (i32, i32) {
    %c0_i32 = arith.constant 0 : i32
    %c0_i32_0 = arith.constant 0 : i32
    %c0_i32_1 = arith.constant 0 : i32
    return %c0_i32, %c0_i32_0 : i32, i32
  }
  func.func @transform_2(%arg0: i32) -> (i32, i32) {
    %c0_i32 = arith.constant 0 : i32
    %c0_i32_0 = arith.constant 0 : i32
    %c0_i32_1 = arith.constant 0 : i32
    return %c0_i32, %c0_i32_0 : i32, i32
  }
  func.func @transform_3(%arg0: i32) -> (i32, i32) {
    %c0_i32 = arith.constant 0 : i32
    %c0_i32_0 = arith.constant 0 : i32
    %c0_i32_1 = arith.constant 0 : i32
    return %c0_i32, %c0_i32_0 : i32, i32
  }
  func.func @transform_4(%arg0: i32) -> (i32, i32) {
    %c0_i32 = arith.constant 0 : i32
    %c0_i32_0 = arith.constant 0 : i32
    %c0_i32_1 = arith.constant 0 : i32
    return %c0_i32, %c0_i32_0 : i32, i32
  }
  func.func @transform_5(%arg0: i32) -> (i32, i32, i32, i32) {
    %c0_i32 = arith.constant 0 : i32
    %c0_i32_0 = arith.constant 0 : i32
    %c0_i32_1 = arith.constant 0 : i32
    %c0_i32_2 = arith.constant 0 : i32
    return %arg0, %c0_i32, %c0_i32_0, %c0_i32_1 : i32, i32, i32, i32
  }
}

module attributes {stable_mosaic.version = 11 : i64} {
  func.func @_basic_block_kernel(%arg0: i32, %arg1: memref<1x8x16x128xbf16, #tpu.memory_space<vmem>>, %arg2: memref<1152x128xbf16, #tpu.memory_space<vmem>>, %arg3: memref<1x128xf32, #tpu.memory_space<vmem>>, %arg4: memref<1152x128xbf16, #tpu.memory_space<vmem>>, %arg5: memref<1x128xf32, #tpu.memory_space<vmem>>, %arg6: memref<1x8x16x128xf32, #tpu.memory_space<vmem>>, %arg7: memref<8x16x1152xbf16, #tpu.memory_space<vmem>>, %arg8: memref<8x16x128xf32, #tpu.memory_space<vmem>>) attributes {dimension_semantics = [#tpu.dimension_semantics<parallel>], iteration_bounds = array<i64: 2>, scalar_prefetch = 0 : i64, scratch_operands = 2 : i64, tpu.core_type = #tpu.core_type<tc>, window_params = [{transform_indices = @transform_0, window_bounds = array<i64: 1, 8, 16, 128>}, {pipeline_mode = #tpu.pipeline_mode<synchronous>, transform_indices = @transform_1, window_bounds = array<i64: 1152, 128>}, {pipeline_mode = #tpu.pipeline_mode<synchronous>, transform_indices = @transform_2, window_bounds = array<i64: 1, 128>}, {pipeline_mode = #tpu.pipeline_mode<synchronous>, transform_indices = @transform_3, window_bounds = array<i64: 1152, 128>}, {pipeline_mode = #tpu.pipeline_mode<synchronous>, transform_indices = @transform_4, window_bounds = array<i64: 1, 128>}, {transform_indices = @transform_5, window_bounds = array<i64: 1, 8, 16, 128>}]} {
    %cst = arith.constant 0.000000e+00 : bf16
    %0 = vector.broadcast %cst : bf16 to vector<1x16x384xbf16>
    %c0 = arith.constant 0 : index
    %c0_0 = arith.constant 0 : index
    %c0_1 = arith.constant 0 : index
    %1 = vector.load %arg7[%c0, %c0_0, %c0_1] : memref<8x16x1152xbf16, #tpu.memory_space<vmem>>, vector<1x16x384xbf16>
    tpu.vector_store %arg7[%c0, %c0_0, %c0_1], %0 {strides = array<i32>} : memref<8x16x1152xbf16, #tpu.memory_space<vmem>>, vector<1x16x384xbf16>,
    %cst_2 = arith.constant 0.000000e+00 : bf16
    %2 = vector.broadcast %cst_2 : bf16 to vector<1x16x384xbf16>
    %c7 = arith.constant 7 : index
    %c0_3 = arith.constant 0 : index
    %c768 = arith.constant 768 : index
    %3 = vector.load %arg7[%c7, %c0_3, %c768] : memref<8x16x1152xbf16, #tpu.memory_space<vmem>>, vector<1x16x384xbf16>
    tpu.vector_store %arg7[%c7, %c0_3, %c768], %2 {strides = array<i32>} : memref<8x16x1152xbf16, #tpu.memory_space<vmem>>, vector<1x16x384xbf16>,
    %c0_4 = arith.constant 0 : index
    %c0_5 = arith.constant 0 : index
    %c0_6 = arith.constant 0 : index
    %c0_7 = arith.constant 0 : index
    %4 = vector.load %arg1[%c0_4, %c0_5, %c0_6, %c0_7] : memref<1x8x16x128xbf16, #tpu.memory_space<vmem>>, vector<1x8x16x128xbf16>
    %5 = vector.shape_cast %4 : vector<1x8x16x128xbf16> to vector<8x16x128xbf16>
    %6 = arith.extf %5 : vector<8x16x128xbf16> to vector<8x16x128xf32>
    %c1_i32 = arith.constant 1 : i32
    %7 = tpu.dynamic_rotate %6 by %c1_i32 dim 1 : vector<8x16x128xf32>, i32 -> vector<8x16x128xf32>
    %8 = arith.truncf %7 : vector<8x16x128xf32> to vector<8x16x128xbf16>
    %c0_8 = arith.constant 0 : index
    %c0_9 = arith.constant 0 : index
    %c384 = arith.constant 384 : index
    %9 = vector.load %arg7[%c0_8, %c0_9, %c384] : memref<8x16x1152xbf16, #tpu.memory_space<vmem>>, vector<8x16x128xbf16>
    tpu.vector_store %arg7[%c0_8, %c0_9, %c384], %8 {strides = array<i32>} : memref<8x16x1152xbf16, #tpu.memory_space<vmem>>, vector<8x16x128xbf16>,
    %10 = vector.extract_strided_slice %8 {offsets = [0, 0, 0], sizes = [7, 16, 128], strides = [1, 1, 1]} : vector<8x16x128xbf16> to vector<7x16x128xbf16>
    %c1 = arith.constant 1 : index
    %c0_10 = arith.constant 0 : index
    %c0_11 = arith.constant 0 : index
    %11 = vector.load %arg7[%c1, %c0_10, %c0_11] : memref<8x16x1152xbf16, #tpu.memory_space<vmem>>, vector<7x16x128xbf16>
    tpu.vector_store %arg7[%c1, %c0_10, %c0_11], %10 {strides = array<i32>} : memref<8x16x1152xbf16, #tpu.memory_space<vmem>>, vector<7x16x128xbf16>,
    %12 = vector.extract_strided_slice %8 {offsets = [1, 0, 0], sizes = [7, 16, 128], strides = [1, 1, 1]} : vector<8x16x128xbf16> to vector<7x16x128xbf16>
    %c0_12 = arith.constant 0 : index
    %c0_13 = arith.constant 0 : index
    %c768_14 = arith.constant 768 : index
    %13 = vector.load %arg7[%c0_12, %c0_13, %c768_14] : memref<8x16x1152xbf16, #tpu.memory_space<vmem>>, vector<7x16x128xbf16>
    tpu.vector_store %arg7[%c0_12, %c0_13, %c768_14], %12 {strides = array<i32>} : memref<8x16x1152xbf16, #tpu.memory_space<vmem>>, vector<7x16x128xbf16>,
    %14 = arith.truncf %6 : vector<8x16x128xf32> to vector<8x16x128xbf16>
    %c0_15 = arith.constant 0 : index
    %c0_16 = arith.constant 0 : index
    %c512 = arith.constant 512 : index
    %15 = vector.load %arg7[%c0_15, %c0_16, %c512] : memref<8x16x1152xbf16, #tpu.memory_space<vmem>>, vector<8x16x128xbf16>
    tpu.vector_store %arg7[%c0_15, %c0_16, %c512], %14 {strides = array<i32>} : memref<8x16x1152xbf16, #tpu.memory_space<vmem>>, vector<8x16x128xbf16>,
    %16 = vector.extract_strided_slice %14 {offsets = [0, 0, 0], sizes = [7, 16, 128], strides = [1, 1, 1]} : vector<8x16x128xbf16> to vector<7x16x128xbf16>
    %c1_17 = arith.constant 1 : index
    %c0_18 = arith.constant 0 : index
    %c128 = arith.constant 128 : index
    %17 = vector.load %arg7[%c1_17, %c0_18, %c128] : memref<8x16x1152xbf16, #tpu.memory_space<vmem>>, vector<7x16x128xbf16>
    tpu.vector_store %arg7[%c1_17, %c0_18, %c128], %16 {strides = array<i32>} : memref<8x16x1152xbf16, #tpu.memory_space<vmem>>, vector<7x16x128xbf16>,
    %18 = vector.extract_strided_slice %14 {offsets = [1, 0, 0], sizes = [7, 16, 128], strides = [1, 1, 1]} : vector<8x16x128xbf16> to vector<7x16x128xbf16>
    %c0_19 = arith.constant 0 : index
    %c0_20 = arith.constant 0 : index
    %c896 = arith.constant 896 : index
    %19 = vector.load %arg7[%c0_19, %c0_20, %c896] : memref<8x16x1152xbf16, #tpu.memory_space<vmem>>, vector<7x16x128xbf16>
    tpu.vector_store %arg7[%c0_19, %c0_20, %c896], %18 {strides = array<i32>} : memref<8x16x1152xbf16, #tpu.memory_space<vmem>>, vector<7x16x128xbf16>,
    %c15_i32 = arith.constant 15 : i32
    %20 = tpu.dynamic_rotate %6 by %c15_i32 dim 1 : vector<8x16x128xf32>, i32 -> vector<8x16x128xf32>
    %21 = arith.truncf %20 : vector<8x16x128xf32> to vector<8x16x128xbf16>
    %c0_21 = arith.constant 0 : index
    %c0_22 = arith.constant 0 : index
    %c640 = arith.constant 640 : index
    %22 = vector.load %arg7[%c0_21, %c0_22, %c640] : memref<8x16x1152xbf16, #tpu.memory_space<vmem>>, vector<8x16x128xbf16>
    tpu.vector_store %arg7[%c0_21, %c0_22, %c640], %21 {strides = array<i32>} : memref<8x16x1152xbf16, #tpu.memory_space<vmem>>, vector<8x16x128xbf16>,
    %23 = vector.extract_strided_slice %21 {offsets = [0, 0, 0], sizes = [7, 16, 128], strides = [1, 1, 1]} : vector<8x16x128xbf16> to vector<7x16x128xbf16>
    %c1_23 = arith.constant 1 : index
    %c0_24 = arith.constant 0 : index
    %c256 = arith.constant 256 : index
    %24 = vector.load %arg7[%c1_23, %c0_24, %c256] : memref<8x16x1152xbf16, #tpu.memory_space<vmem>>, vector<7x16x128xbf16>
    tpu.vector_store %arg7[%c1_23, %c0_24, %c256], %23 {strides = array<i32>} : memref<8x16x1152xbf16, #tpu.memory_space<vmem>>, vector<7x16x128xbf16>,
    %25 = vector.extract_strided_slice %21 {offsets = [1, 0, 0], sizes = [7, 16, 128], strides = [1, 1, 1]} : vector<8x16x128xbf16> to vector<7x16x128xbf16>
    %c0_25 = arith.constant 0 : index
    %c0_26 = arith.constant 0 : index
    %c1024 = arith.constant 1024 : index
    %26 = vector.load %arg7[%c0_25, %c0_26, %c1024] : memref<8x16x1152xbf16, #tpu.memory_space<vmem>>, vector<7x16x128xbf16>
    tpu.vector_store %arg7[%c0_25, %c0_26, %c1024], %25 {strides = array<i32>} : memref<8x16x1152xbf16, #tpu.memory_space<vmem>>, vector<7x16x128xbf16>,
    %c0_27 = arith.constant 0 : index
    %c0_28 = arith.constant 0 : index
    %c0_29 = arith.constant 0 : index
    %27 = vector.load %arg7[%c0_27, %c0_28, %c0_29] : memref<8x16x1152xbf16, #tpu.memory_space<vmem>>, vector<8x16x1152xbf16>
    %c0_30 = arith.constant 0 : index
    %c0_31 = arith.constant 0 : index
    %28 = vector.load %arg2[%c0_30, %c0_31] : memref<1152x128xbf16, #tpu.memory_space<vmem>>, vector<1152x128xbf16>
    %cst_32 = arith.constant dense<0.000000e+00> : vector<8x16x128xf32>
    %29 = tpu.matmul %27, %28, %cst_32 {dimension_numbers = #tpu.dot_dimension_numbers<[2], [0], [0, 1], [1], [0, 0, 0, 1, 1, 1], [], []>} : vector<8x16x1152xbf16>, vector<1152x128xbf16>, vector<8x16x128xf32> -> vector<8x16x128xf32>
    %c0_33 = arith.constant 0 : index
    %c0_34 = arith.constant 0 : index
    %c0_35 = arith.constant 0 : index
    %30 = vector.load %arg8[%c0_33, %c0_34, %c0_35] : memref<8x16x128xf32, #tpu.memory_space<vmem>>, vector<8x16x128xf32>
    tpu.vector_store %arg8[%c0_33, %c0_34, %c0_35], %29 {strides = array<i32>} : memref<8x16x128xf32, #tpu.memory_space<vmem>>, vector<8x16x128xf32>,
    %c0_36 = arith.constant 0 : index
    %c0_37 = arith.constant 0 : index
    %c0_38 = arith.constant 0 : index
    %31 = vector.load %arg8[%c0_36, %c0_37, %c0_38] : memref<8x16x128xf32, #tpu.memory_space<vmem>>, vector<8x16x128xf32>
    %c0_39 = arith.constant 0 : index
    %c0_40 = arith.constant 0 : index
    %32 = vector.load %arg3[%c0_39, %c0_40] : memref<1x128xf32, #tpu.memory_space<vmem>>, vector<1x128xf32>
    %33 = vector.shape_cast %32 : vector<1x128xf32> to vector<128xf32>
    %34 = vector.shape_cast %33 : vector<128xf32> to vector<1x1x128xf32>
    %35 = vector.broadcast %34 : vector<1x1x128xf32> to vector<8x16x128xf32>
    %36 = arith.addf %31, %35 : vector<8x16x128xf32>
    %cst_41 = arith.constant 0.000000e+00 : f32
    %37 = vector.broadcast %cst_41 : f32 to vector<8x16x128xf32>
    %38 = arith.maximumf %36, %37 : vector<8x16x128xf32>
    %c0_42 = arith.constant 0 : index
    %c0_43 = arith.constant 0 : index
    %c0_44 = arith.constant 0 : index
    %39 = vector.load %arg8[%c0_42, %c0_43, %c0_44] : memref<8x16x128xf32, #tpu.memory_space<vmem>>, vector<8x16x128xf32>
    tpu.vector_store %arg8[%c0_42, %c0_43, %c0_44], %38 {strides = array<i32>} : memref<8x16x128xf32, #tpu.memory_space<vmem>>, vector<8x16x128xf32>,
    %cst_45 = arith.constant 0.000000e+00 : f32
    %40 = vector.broadcast %cst_45 : f32 to vector<8x8x128xf32>
    %c0_46 = arith.constant 0 : index
    %c8 = arith.constant 8 : index
    %c0_47 = arith.constant 0 : index
    %41 = vector.load %arg8[%c0_46, %c8, %c0_47] : memref<8x16x128xf32, #tpu.memory_space<vmem>>, vector<8x8x128xf32>
    tpu.vector_store %arg8[%c0_46, %c8, %c0_47], %40 {strides = array<i32>} : memref<8x16x128xf32, #tpu.memory_space<vmem>>, vector<8x8x128xf32>,
    %c0_48 = arith.constant 0 : index
    %c0_49 = arith.constant 0 : index
    %c0_50 = arith.constant 0 : index
    %42 = vector.load %arg8[%c0_48, %c0_49, %c0_50] : memref<8x16x128xf32, #tpu.memory_space<vmem>>, vector<8x16x128xf32>
    %c1_i32_51 = arith.constant 1 : i32
    %43 = tpu.dynamic_rotate %42 by %c1_i32_51 dim 1 : vector<8x16x128xf32>, i32 -> vector<8x16x128xf32>
    %44 = arith.truncf %43 : vector<8x16x128xf32> to vector<8x16x128xbf16>
    %c0_52 = arith.constant 0 : index
    %c0_53 = arith.constant 0 : index
    %c384_54 = arith.constant 384 : index
    %45 = vector.load %arg7[%c0_52, %c0_53, %c384_54] : memref<8x16x1152xbf16, #tpu.memory_space<vmem>>, vector<8x16x128xbf16>
    tpu.vector_store %arg7[%c0_52, %c0_53, %c384_54], %44 {strides = array<i32>} : memref<8x16x1152xbf16, #tpu.memory_space<vmem>>, vector<8x16x128xbf16>,
    %46 = vector.extract_strided_slice %44 {offsets = [0, 0, 0], sizes = [7, 16, 128], strides = [1, 1, 1]} : vector<8x16x128xbf16> to vector<7x16x128xbf16>
    %c1_55 = arith.constant 1 : index
    %c0_56 = arith.constant 0 : index
    %c0_57 = arith.constant 0 : index
    %47 = vector.load %arg7[%c1_55, %c0_56, %c0_57] : memref<8x16x1152xbf16, #tpu.memory_space<vmem>>, vector<7x16x128xbf16>
    tpu.vector_store %arg7[%c1_55, %c0_56, %c0_57], %46 {strides = array<i32>} : memref<8x16x1152xbf16, #tpu.memory_space<vmem>>, vector<7x16x128xbf16>,
    %48 = vector.extract_strided_slice %44 {offsets = [1, 0, 0], sizes = [7, 16, 128], strides = [1, 1, 1]} : vector<8x16x128xbf16> to vector<7x16x128xbf16>
    %c0_58 = arith.constant 0 : index
    %c0_59 = arith.constant 0 : index
    %c768_60 = arith.constant 768 : index
    %49 = vector.load %arg7[%c0_58, %c0_59, %c768_60] : memref<8x16x1152xbf16, #tpu.memory_space<vmem>>, vector<7x16x128xbf16>
    tpu.vector_store %arg7[%c0_58, %c0_59, %c768_60], %48 {strides = array<i32>} : memref<8x16x1152xbf16, #tpu.memory_space<vmem>>, vector<7x16x128xbf16>,
    %50 = arith.truncf %42 : vector<8x16x128xf32> to vector<8x16x128xbf16>
    %c0_61 = arith.constant 0 : index
    %c0_62 = arith.constant 0 : index
    %c512_63 = arith.constant 512 : index
    %51 = vector.load %arg7[%c0_61, %c0_62, %c512_63] : memref<8x16x1152xbf16, #tpu.memory_space<vmem>>, vector<8x16x128xbf16>
    tpu.vector_store %arg7[%c0_61, %c0_62, %c512_63], %50 {strides = array<i32>} : memref<8x16x1152xbf16, #tpu.memory_space<vmem>>, vector<8x16x128xbf16>,
    %52 = vector.extract_strided_slice %50 {offsets = [0, 0, 0], sizes = [7, 16, 128], strides = [1, 1, 1]} : vector<8x16x128xbf16> to vector<7x16x128xbf16>
    %c1_64 = arith.constant 1 : index
    %c0_65 = arith.constant 0 : index
    %c128_66 = arith.constant 128 : index
    %53 = vector.load %arg7[%c1_64, %c0_65, %c128_66] : memref<8x16x1152xbf16, #tpu.memory_space<vmem>>, vector<7x16x128xbf16>
    tpu.vector_store %arg7[%c1_64, %c0_65, %c128_66], %52 {strides = array<i32>} : memref<8x16x1152xbf16, #tpu.memory_space<vmem>>, vector<7x16x128xbf16>,
    %54 = vector.extract_strided_slice %50 {offsets = [1, 0, 0], sizes = [7, 16, 128], strides = [1, 1, 1]} : vector<8x16x128xbf16> to vector<7x16x128xbf16>
    %c0_67 = arith.constant 0 : index
    %c0_68 = arith.constant 0 : index
    %c896_69 = arith.constant 896 : index
    %55 = vector.load %arg7[%c0_67, %c0_68, %c896_69] : memref<8x16x1152xbf16, #tpu.memory_space<vmem>>, vector<7x16x128xbf16>
    tpu.vector_store %arg7[%c0_67, %c0_68, %c896_69], %54 {strides = array<i32>} : memref<8x16x1152xbf16, #tpu.memory_space<vmem>>, vector<7x16x128xbf16>,
    %c15_i32_70 = arith.constant 15 : i32
    %56 = tpu.dynamic_rotate %42 by %c15_i32_70 dim 1 : vector<8x16x128xf32>, i32 -> vector<8x16x128xf32>
    %57 = arith.truncf %56 : vector<8x16x128xf32> to vector<8x16x128xbf16>
    %c0_71 = arith.constant 0 : index
    %c0_72 = arith.constant 0 : index
    %c640_73 = arith.constant 640 : index
    %58 = vector.load %arg7[%c0_71, %c0_72, %c640_73] : memref<8x16x1152xbf16, #tpu.memory_space<vmem>>, vector<8x16x128xbf16>
    tpu.vector_store %arg7[%c0_71, %c0_72, %c640_73], %57 {strides = array<i32>} : memref<8x16x1152xbf16, #tpu.memory_space<vmem>>, vector<8x16x128xbf16>,
    %59 = vector.extract_strided_slice %57 {offsets = [0, 0, 0], sizes = [7, 16, 128], strides = [1, 1, 1]} : vector<8x16x128xbf16> to vector<7x16x128xbf16>
    %c1_74 = arith.constant 1 : index
    %c0_75 = arith.constant 0 : index
    %c256_76 = arith.constant 256 : index
    %60 = vector.load %arg7[%c1_74, %c0_75, %c256_76] : memref<8x16x1152xbf16, #tpu.memory_space<vmem>>, vector<7x16x128xbf16>
    tpu.vector_store %arg7[%c1_74, %c0_75, %c256_76], %59 {strides = array<i32>} : memref<8x16x1152xbf16, #tpu.memory_space<vmem>>, vector<7x16x128xbf16>,
    %61 = vector.extract_strided_slice %57 {offsets = [1, 0, 0], sizes = [7, 16, 128], strides = [1, 1, 1]} : vector<8x16x128xbf16> to vector<7x16x128xbf16>
    %c0_77 = arith.constant 0 : index
    %c0_78 = arith.constant 0 : index
    %c1024_79 = arith.constant 1024 : index
    %62 = vector.load %arg7[%c0_77, %c0_78, %c1024_79] : memref<8x16x1152xbf16, #tpu.memory_space<vmem>>, vector<7x16x128xbf16>
    tpu.vector_store %arg7[%c0_77, %c0_78, %c1024_79], %61 {strides = array<i32>} : memref<8x16x1152xbf16, #tpu.memory_space<vmem>>, vector<7x16x128xbf16>,
    %c0_80 = arith.constant 0 : index
    %c0_81 = arith.constant 0 : index
    %c0_82 = arith.constant 0 : index
    %63 = vector.load %arg7[%c0_80, %c0_81, %c0_82] : memref<8x16x1152xbf16, #tpu.memory_space<vmem>>, vector<8x16x1152xbf16>
    %c0_83 = arith.constant 0 : index
    %c0_84 = arith.constant 0 : index
    %64 = vector.load %arg4[%c0_83, %c0_84] : memref<1152x128xbf16, #tpu.memory_space<vmem>>, vector<1152x128xbf16>
    %cst_85 = arith.constant dense<0.000000e+00> : vector<8x16x128xf32>
    %65 = tpu.matmul %63, %64, %cst_85 {dimension_numbers = #tpu.dot_dimension_numbers<[2], [0], [0, 1], [1], [0, 0, 0, 1, 1, 1], [], []>} : vector<8x16x1152xbf16>, vector<1152x128xbf16>, vector<8x16x128xf32> -> vector<8x16x128xf32>
    %c0_86 = arith.constant 0 : index
    %c0_87 = arith.constant 0 : index
    %c0_88 = arith.constant 0 : index
    %66 = vector.load %arg8[%c0_86, %c0_87, %c0_88] : memref<8x16x128xf32, #tpu.memory_space<vmem>>, vector<8x16x128xf32>
    tpu.vector_store %arg8[%c0_86, %c0_87, %c0_88], %65 {strides = array<i32>} : memref<8x16x128xf32, #tpu.memory_space<vmem>>, vector<8x16x128xf32>,
    %c0_89 = arith.constant 0 : index
    %c0_90 = arith.constant 0 : index
    %c0_91 = arith.constant 0 : index
    %67 = vector.load %arg8[%c0_89, %c0_90, %c0_91] : memref<8x16x128xf32, #tpu.memory_space<vmem>>, vector<8x16x128xf32>
    %c0_92 = arith.constant 0 : index
    %c0_93 = arith.constant 0 : index
    %68 = vector.load %arg5[%c0_92, %c0_93] : memref<1x128xf32, #tpu.memory_space<vmem>>, vector<1x128xf32>
    %69 = vector.shape_cast %68 : vector<1x128xf32> to vector<128xf32>
    %70 = vector.shape_cast %69 : vector<128xf32> to vector<1x1x128xf32>
    %71 = vector.broadcast %70 : vector<1x1x128xf32> to vector<8x16x128xf32>
    %72 = arith.addf %67, %71 : vector<8x16x128xf32>
    %c0_94 = arith.constant 0 : index
    %c0_95 = arith.constant 0 : index
    %c0_96 = arith.constant 0 : index
    %c0_97 = arith.constant 0 : index
    %73 = vector.load %arg1[%c0_94, %c0_95, %c0_96, %c0_97] : memref<1x8x16x128xbf16, #tpu.memory_space<vmem>>, vector<1x8x16x128xbf16>
    %74 = vector.shape_cast %73 : vector<1x8x16x128xbf16> to vector<8x16x128xbf16>
    %75 = arith.extf %74 : vector<8x16x128xbf16> to vector<8x16x128xf32>
    %76 = arith.addf %72, %75 : vector<8x16x128xf32>
    %cst_98 = arith.constant 0.000000e+00 : f32
    %77 = vector.broadcast %cst_98 : f32 to vector<8x16x128xf32>
    %78 = arith.maximumf %76, %77 : vector<8x16x128xf32>
    %c0_99 = arith.constant 0 : index
    %c0_100 = arith.constant 0 : index
    %c0_101 = arith.constant 0 : index
    %c0_102 = arith.constant 0 : index
    %79 = vector.load %arg6[%c0_99, %c0_100, %c0_101, %c0_102] : memref<1x8x16x128xf32, #tpu.memory_space<vmem>>, vector<1x8x16x128xf32>
    %80 = vector.shape_cast %79 : vector<1x8x16x128xf32> to vector<8x16x128xf32>
    %81 = vector.shape_cast %78 : vector<8x16x128xf32> to vector<1x8x16x128xf32>
    tpu.vector_store %arg6[%c0_99, %c0_100, %c0_101, %c0_102], %81 {strides = array<i32>} : memref<1x8x16x128xf32, #tpu.memory_space<vmem>>, vector<1x8x16x128xf32>,
    return
  }
  func.func @transform_0(%arg0: i32) -> (i32, i32, i32, i32) {
    %c0_i32 = arith.constant 0 : i32
    %c0_i32_0 = arith.constant 0 : i32
    %c0_i32_1 = arith.constant 0 : i32
    %c0_i32_2 = arith.constant 0 : i32
    return %arg0, %c0_i32, %c0_i32_0, %c0_i32_1 : i32, i32, i32, i32
  }
  func.func @transform_1(%arg0: i32) -> (i32, i32) {
    %c0_i32 = arith.constant 0 : i32
    %c0_i32_0 = arith.constant 0 : i32
    %c0_i32_1 = arith.constant 0 : i32
    return %c0_i32, %c0_i32_0 : i32, i32
  }
  func.func @transform_2(%arg0: i32) -> (i32, i32) {
    %c0_i32 = arith.constant 0 : i32
    %c0_i32_0 = arith.constant 0 : i32
    %c0_i32_1 = arith.constant 0 : i32
    return %c0_i32, %c0_i32_0 : i32, i32
  }
  func.func @transform_3(%arg0: i32) -> (i32, i32) {
    %c0_i32 = arith.constant 0 : i32
    %c0_i32_0 = arith.constant 0 : i32
    %c0_i32_1 = arith.constant 0 : i32
    return %c0_i32, %c0_i32_0 : i32, i32
  }
  func.func @transform_4(%arg0: i32) -> (i32, i32) {
    %c0_i32 = arith.constant 0 : i32
    %c0_i32_0 = arith.constant 0 : i32
    %c0_i32_1 = arith.constant 0 : i32
    return %c0_i32, %c0_i32_0 : i32, i32
  }
  func.func @transform_5(%arg0: i32) -> (i32, i32, i32, i32) {
    %c0_i32 = arith.constant 0 : i32
    %c0_i32_0 = arith.constant 0 : i32
    %c0_i32_1 = arith.constant 0 : i32
    %c0_i32_2 = arith.constant 0 : i32
    return %arg0, %c0_i32, %c0_i32_0, %c0_i32_1 : i32, i32, i32, i32
  }
}

</mosaic_0001>

<llo_original>
// kernel: basic_block.1
$region0: #{basic_block.1}
  #allocation0 [shape = 'u32[]', space=smem, size = 0x4, offset = 0x4, fixed_abs, tag = 'smem constant byte address 0x4 - core index']
  #allocation1 [shape = 'u32[144,128]{1,0:T(1,128)}', space=vmem, size = 0x12000, scoped, tag = 'internal scratch']
  #allocation2 [shape = 'bf16[8,16,1152]{2,1,0:T(8,128)(2,1)}', space=vmem, size = 0x48000, scoped, tag = 'scratch operand']
  #allocation3 [shape = 'f32[8,16,128]{2,1,0:T(8,128)}', space=vmem, size = 0x10000, scoped, tag = 'scratch operand']
  %s0 = inlined_call_operand.vmem [shape: bf16[2,8,16,128], index: 0, kind: input, shape index: {}]
  %s1 = inlined_call_operand.vmem [shape: bf16[1152,128], index: 1, kind: input, shape index: {}]
  %s2 = inlined_call_operand.vmem [shape: f32[1,128], index: 2, kind: input, shape index: {}]
  %s3 = inlined_call_operand.vmem [shape: bf16[1152,128], index: 3, kind: input, shape index: {}]
  %s4 = inlined_call_operand.vmem [shape: f32[1,128], index: 4, kind: input, shape index: {}]
  %s5 = inlined_call_operand.vmem [shape: f32[2,8,16,128], index: 5, kind: output, shape index: {}]
  %s6 = sld [smem:[#allocation0]]
  $region53: #{basic_block.1} parent=0
    _
  %s8 = ssub.s32 1, %s6
  %s9 = scalar_select 0, %s8, %s6
  loop: start=0, step=1, limit=4
  $region2: #{basic_block.1} parent=0 // loop_pre_header
    _
  $region3: #{basic_block.1} parent=0 // loop_header
    %s11 = sphi 0, %s15
    %p12 = scmp.ge.s32.totalorder %s11, 4
    %s21 = sphi 0, %s23
    %s24 = sphi 0, %s21
    %s25 = sphi 0, %s24
    %s41 = sphi 0, %s25
    %s45 = sphi 0, %s45
    %s47 = sphi 0, %s45
    %s48 = sphi 0, %s47
    %s62 = sphi 0, %s48
    %s66 = sphi 0, %s66
    %s68 = sphi 0, %s66
    %s69 = sphi 0, %s68
    %s83 = sphi 0, %s69
    %s87 = sphi 0, %s87
    %s89 = sphi 0, %s87
    %s90 = sphi 0, %s89
    %s104 = sphi 0, %s90
    %s108 = sphi 0, %s108
    %s110 = sphi 0, %s108
    %s111 = sphi 0, %s110
    %s125 = sphi 0, %s111
    %s131 = sphi 0, %s133
    %s134 = sphi 0, %s131
    %s135 = sphi 0, %s134
    %s151 = sphi 0, %s135
  $region4: #{basic_block.1} parent=0 // loop_header_branch
    %14 = sbr.rel (%p12) target = $region8
  $region5: #{basic_block.1} parent=0 // loop_body
    %s16 = ssub.s32 %s11, 1
    %s17 = ssub.s32 %s11, 2
    %s18 = sadd.s32 %s11, 1
    %s19 = ssub.s32 %s11, %s18
    %p20 = scmp.eq.s32.totalorder %s19, 0
    %s22 = sadd.s32 %s21, 1
    %s23 = scalar_select %p20, %s21, %s22
    %p26 = pneg %p20
    %p27 = scmp.eq.s32.totalorder %s11, 1
    %p28 = por %p26, %p27
    %p29 = scmp.ne.s32.totalorder %s21, %s24
    %p30 = scmp.eq.s32.totalorder %s11, 0
    %p31 = por %p29, %p30
    %p32 = scmp.ne.s32.totalorder %s21, %s24
    %p33 = scmp.eq.s32.totalorder %s16, 1
    %p34 = por %p32, %p33
    %p35 = scmp.ne.s32.totalorder %s24, %s25
    %p36 = scmp.eq.s32.totalorder %s16, 0
    %p37 = por %p35, %p36
    %p38 = scmp.ne.s32.totalorder %s24, %s25
    %p39 = scmp.eq.s32.totalorder %s17, 1
    %p40 = por %p38, %p39
    %p42 = scmp.ne.s32.totalorder %s25, %s41
    %p43 = scmp.eq.s32.totalorder %s17, 0
    %p44 = por %p42, %p43
    %s46 = sadd.s32 %s45, 1
    %p49 = scmp.eq.s32.totalorder %s11, 1
    %p50 = scmp.ne.s32.totalorder %s45, %s47
    %p51 = scmp.eq.s32.totalorder %s11, 0
    %p52 = por %p50, %p51
    %p53 = scmp.ne.s32.totalorder %s45, %s47
    %p54 = scmp.eq.s32.totalorder %s16, 1
    %p55 = por %p53, %p54
    %p56 = scmp.ne.s32.totalorder %s47, %s48
    %p57 = scmp.eq.s32.totalorder %s16, 0
    %p58 = por %p56, %p57
    %p59 = scmp.ne.s32.totalorder %s47, %s48
    %p60 = scmp.eq.s32.totalorder %s17, 1
    %p61 = por %p59, %p60
    %p63 = scmp.ne.s32.totalorder %s48, %s62
    %p64 = scmp.eq.s32.totalorder %s17, 0
    %p65 = por %p63, %p64
    %s67 = sadd.s32 %s66, 1
    %p70 = scmp.eq.s32.totalorder %s11, 1
    %p71 = scmp.ne.s32.totalorder %s66, %s68
    %p72 = scmp.eq.s32.totalorder %s11, 0
    %p73 = por %p71, %p72
    %p74 = scmp.ne.s32.totalorder %s66, %s68
    %p75 = scmp.eq.s32.totalorder %s16, 1
    %p76 = por %p74, %p75
    %p77 = scmp.ne.s32.totalorder %s68, %s69
    %p78 = scmp.eq.s32.totalorder %s16, 0
    %p79 = por %p77, %p78
    %p80 = scmp.ne.s32.totalorder %s68, %s69
    %p81 = scmp.eq.s32.totalorder %s17, 1
    %p82 = por %p80, %p81
    %p84 = scmp.ne.s32.totalorder %s69, %s83
    %p85 = scmp.eq.s32.totalorder %s17, 0
    %p86 = por %p84, %p85
    %s88 = sadd.s32 %s87, 1
    %p91 = scmp.eq.s32.totalorder %s11, 1
    %p92 = scmp.ne.s32.totalorder %s87, %s89
    %p93 = scmp.eq.s32.totalorder %s11, 0
    %p94 = por %p92, %p93
    %p95 = scmp.ne.s32.totalorder %s87, %s89
    %p96 = scmp.eq.s32.totalorder %s16, 1
    %p97 = por %p95, %p96
    %p98 = scmp.ne.s32.totalorder %s89, %s90
    %p99 = scmp.eq.s32.totalorder %s16, 0
    %p100 = por %p98, %p99
    %p101 = scmp.ne.s32.totalorder %s89, %s90
    %p102 = scmp.eq.s32.totalorder %s17, 1
    %p103 = por %p101, %p102
    %p105 = scmp.ne.s32.totalorder %s90, %s104
    %p106 = scmp.eq.s32.totalorder %s17, 0
    %p107 = por %p105, %p106
    %s109 = sadd.s32 %s108, 1
    %p112 = scmp.eq.s32.totalorder %s11, 1
    %p113 = scmp.ne.s32.totalorder %s108, %s110
    %p114 = scmp.eq.s32.totalorder %s11, 0
    %p115 = por %p113, %p114
    %p116 = scmp.ne.s32.totalorder %s108, %s110
    %p117 = scmp.eq.s32.totalorder %s16, 1
    %p118 = por %p116, %p117
    %p119 = scmp.ne.s32.totalorder %s110, %s111
    %p120 = scmp.eq.s32.totalorder %s16, 0
    %p121 = por %p119, %p120
    %p122 = scmp.ne.s32.totalorder %s110, %s111
    %p123 = scmp.eq.s32.totalorder %s17, 1
    %p124 = por %p122, %p123
    %p126 = scmp.ne.s32.totalorder %s111, %s125
    %p127 = scmp.eq.s32.totalorder %s17, 0
    %p128 = por %p126, %p127
    %s129 = ssub.s32 %s11, %s18
    %p130 = scmp.eq.s32.totalorder %s129, 0
    %s132 = sadd.s32 %s131, 1
    %s133 = scalar_select %p130, %s131, %s132
    %p136 = pneg %p130
    %p137 = scmp.eq.s32.totalorder %s11, 1
    %p138 = por %p136, %p137
    %p139 = scmp.ne.s32.totalorder %s131, %s134
    %p140 = scmp.eq.s32.totalorder %s11, 0
    %p141 = por %p139, %p140
    %p142 = scmp.ne.s32.totalorder %s131, %s134
    %p143 = scmp.eq.s32.totalorder %s16, 1
    %p144 = por %p142, %p143
    %p145 = scmp.ne.s32.totalorder %s134, %s135
    %p146 = scmp.eq.s32.totalorder %s16, 0
    %p147 = por %p145, %p146
    %p148 = scmp.ne.s32.totalorder %s134, %s135
    %p149 = scmp.eq.s32.totalorder %s17, 1
    %p150 = por %p148, %p149
    %p152 = scmp.ne.s32.totalorder %s135, %s151
    %p153 = scmp.eq.s32.totalorder %s17, 0
    %p154 = por %p152, %p153
    %p155 = scmp.le.s32.totalorder 1, %s11
    %p156 = scmp.lt.s32.totalorder %s11, 3
    %p157 = pnand %p155, %p156
    %p158 = pneg %p157
    // Predicated region
    $region9: #{basic_block.1} parent=5 // pred_check
      _
    $region10: #{basic_block.1} parent=5 // pred_check_branch
      %160 = sbr.rel (%p157) target = $region12
    $region11: #{basic_block.1} parent=5 // pred_region
      %s161 = ssub.s32 %s11, 1
      // Predicated region
      $region13: #{basic_block.1} parent=11 // pred_check
        %p162 = pneg %p58
      $region14: #{basic_block.1} parent=11 // pred_check_branch
        %164 = sbr.rel (%p162) target = $region16
      $region15: #{basic_block.1} parent=11 // pred_region
        _
      $region16: #{basic_block.1} parent=11 // pred_fallthru
        _
      // Predicated region
      $region17: #{basic_block.1} parent=11 // pred_check
        %p165 = pneg %p79
      $region18: #{basic_block.1} parent=11 // pred_check_branch
        %167 = sbr.rel (%p165) target = $region20
      $region19: #{basic_block.1} parent=11 // pred_region
        _
      $region20: #{basic_block.1} parent=11 // pred_fallthru
        _
      // Predicated region
      $region21: #{basic_block.1} parent=11 // pred_check
        %p168 = pneg %p100
      $region22: #{basic_block.1} parent=11 // pred_check_branch
        %170 = sbr.rel (%p168) target = $region24
      $region23: #{basic_block.1} parent=11 // pred_region
        _
      $region24: #{basic_block.1} parent=11 // pred_fallthru
        _
      // Predicated region
      $region25: #{basic_block.1} parent=11 // pred_check
        %p171 = pneg %p121
      $region26: #{basic_block.1} parent=11 // pred_check_branch
        %173 = sbr.rel (%p171) target = $region28
      $region27: #{basic_block.1} parent=11 // pred_region
        _
      $region28: #{basic_block.1} parent=11 // pred_fallthru
        _
    $region12: #{basic_block.1} parent=5 // pred_fallthru
      _
    %p174 = scmp.lt.s32.totalorder %s11, 2
    // Predicated region
    $region29: #{basic_block.1} parent=5 // pred_check
      %p175 = pneg %p174
    $region30: #{basic_block.1} parent=5 // pred_check_branch
      %177 = sbr.rel (%p175) target = $region32
    $region31: #{basic_block.1} parent=5 // pred_region
      // Predicated region
      $region33: #{basic_block.1} parent=31 // pred_check
        %p178 = pneg %p31
      $region34: #{basic_block.1} parent=31 // pred_check_branch
        %180 = sbr.rel (%p178) target = $region36
      $region35: #{basic_block.1} parent=31 // pred_region
        %p181 = scmp.lt.s32.totalorder %s11, 1
        %s182 = scalar_select %p181, %s11, 1
        %s183 = smul.addr %s182, 16
        %s184 = smul.addr %s183, 4
        %s185 = scalar_lea.vmem %s0, %s184
      $region36: #{basic_block.1} parent=31 // pred_fallthru
        _
    $region32: #{basic_block.1} parent=5 // pred_fallthru
      _
    %p186 = scmp.le.s32.totalorder 1, %s11
    %p187 = scmp.lt.s32.totalorder %s11, 3
    %p188 = pnand %p186, %p187
    %p189 = pneg %p188
    // Predicated region
    $region37: #{basic_block.1} parent=5 // pred_check
      _
    $region38: #{basic_block.1} parent=5 // pred_check_branch
      %191 = sbr.rel (%p188) target = $region40
    $region39: #{basic_block.1} parent=5 // pred_region
      %s192 = ssub.s32 %s11, 1
      %p193 = scmp.lt.s32.totalorder %s16, 1
      %s194 = scalar_select %p193, %s16, 1
      %s195 = smul.addr %s194, 16
      %s196 = smul.addr %s195, 4
      %s197 = scalar_lea.vmem %s0, %s196
      %p198 = pneg %p37
      %p199 = pneg %p34
      %p200 = pneg %p58
      %p201 = pneg %p55
      %p202 = pneg %p79
      %p203 = pneg %p76
      %p204 = pneg %p100
      %p205 = pneg %p97
      %p206 = pneg %p121
      %p207 = pneg %p118
      %p208 = pneg %p147
      %p209 = pneg %p144
      %p210 = scmp.lt.s32.totalorder %s16, 1
      %s211 = scalar_select %p210, %s16, 1
      %s212 = smul.addr %s211, 16
      %s213 = smul.addr %s212, 8
      %s214 = scalar_lea.vmem %s5, %s213
      %p215 = scmp.lt.s32.totalorder %s16, 1
      %s216 = scalar_select %p215, %s16, 1
      %s217 = smul.addr %s216, 16
      %s218 = smul.addr %s217, 4
      %s219 = scalar_lea.vmem %s0, %s218
      %p220 = scmp.lt.s32.totalorder %s16, 1
      %s221 = scalar_select %p220, %s16, 1
      %s222 = smul.addr %s221, 16
      %s223 = smul.addr %s222, 8
      %s224 = scalar_lea.vmem %s5, %s223
      %226 = vst [vmem:[#allocation2] sm:$0xff] 0
      %227 = vst [vmem:[#allocation2 + $0x8] sm:$0xf] 0
      %228 = vst [vmem:[#allocation2 + $0x24] sm:$0xff] 0
      %229 = vst [vmem:[#allocation2 + $0x2c] sm:$0xf] 0
      %s230 = scalar_lea.vmem [#allocation2], 504
      %231 = vst [vmem:[%s230 + $0x18] sm:$0xff] 0
      %232 = vst [vmem:[%s230 + $0x20] sm:$0xf] 0
      %233 = vst [vmem:[%s230 + $0x3c] sm:$0xff] 0
      %234 = vst [vmem:[%s230 + $0x44] sm:$0xf] 0
      %v235 = vld [vmem:[%s219] sm:$0xf]
      %v236 = vld [vmem:[%s219 + $0x4] sm:$0xf]
      %v237 = vld [vmem:[%s219 + $0x8] sm:$0xf]
      %v238 = vld [vmem:[%s219 + $0xc] sm:$0xf]
      %v239 = vld [vmem:[%s219 + $0x10] sm:$0xf]
      %v240 = vld [vmem:[%s219 + $0x14] sm:$0xf]
      %v241 = vld [vmem:[%s219 + $0x18] sm:$0xf]
      %v242 = vld [vmem:[%s219 + $0x1c] sm:$0xf]
      %v243 = vld [vmem:[%s219 + $0x20] sm:$0xf]
      %v244 = vld [vmem:[%s219 + $0x24] sm:$0xf]
      %v245 = vld [vmem:[%s219 + $0x28] sm:$0xf]
      %v246 = vld [vmem:[%s219 + $0x2c] sm:$0xf]
      %v247 = vld [vmem:[%s219 + $0x30] sm:$0xf]
      %v248 = vld [vmem:[%s219 + $0x34] sm:$0xf]
      %v249 = vld [vmem:[%s219 + $0x38] sm:$0xf]
      %v250 = vld [vmem:[%s219 + $0x3c] sm:$0xf]
      %v251 = vunpack.c.l.bf16 %v235
      %v252 = vunpack.c.l.bf16 %v236
      %v253 = vunpack.c.l.bf16 %v237
      %v254 = vunpack.c.l.bf16 %v238
      %v255 = vunpack.c.l.bf16 %v239
      %v256 = vunpack.c.l.bf16 %v240
      %v257 = vunpack.c.l.bf16 %v241
      %v258 = vunpack.c.l.bf16 %v242
      %v259 = vunpack.c.l.bf16 %v243
      %v260 = vunpack.c.l.bf16 %v244
      %v261 = vunpack.c.l.bf16 %v245
      %v262 = vunpack.c.l.bf16 %v246
      %v263 = vunpack.c.l.bf16 %v247
      %v264 = vunpack.c.l.bf16 %v248
      %v265 = vunpack.c.l.bf16 %v249
      %v266 = vunpack.c.l.bf16 %v250
      %v267 = vrot.slane %v251, 7
      %v268 = vrot.slane %v253, 7
      %v269 = vrot.slane %v255, 7
      %v270 = vrot.slane %v257, 7
      %v271 = vrot.slane %v259, 7
      %v272 = vrot.slane %v261, 7
      %v273 = vrot.slane %v263, 7
      %v274 = vrot.slane %v265, 7
      %v275 = vrot.slane %v252, 7
      %v276 = vrot.slane %v254, 7
      %v277 = vrot.slane %v256, 7
      %v278 = vrot.slane %v258, 7
      %v279 = vrot.slane %v260, 7
      %v280 = vrot.slane %v262, 7
      %v281 = vrot.slane %v264, 7
      %v282 = vrot.slane %v266, 7
      %v283 = vlaneseq
      %v284 = vshrl.u32 %v283, 7
      %vm285 = vcmp.lt.s32.totalorder %v284, 1
      %v286 = vsel %vm285, %v267, %v275
      %v287 = vsel %vm285, %v268, %v276
      %v288 = vsel %vm285, %v269, %v277
      %v289 = vsel %vm285, %v270, %v278
      %v290 = vsel %vm285, %v271, %v279
      %v291 = vsel %vm285, %v272, %v280
      %v292 = vsel %vm285, %v273, %v281
      %v293 = vsel %vm285, %v274, %v282
      %v294 = vsel %vm285, %v275, %v267
      %v295 = vsel %vm285, %v276, %v268
      %v296 = vsel %vm285, %v277, %v269
      %v297 = vsel %vm285, %v278, %v270
      %v298 = vsel %vm285, %v279, %v271
      %v299 = vsel %vm285, %v280, %v272
      %v300 = vsel %vm285, %v281, %v273
      %v301 = vsel %vm285, %v282, %v274
      %v302 = vpack.c.bf16 %v286, %v294
      %v303 = vpack.c.bf16 %v287, %v295
      %v304 = vpack.c.bf16 %v288, %v296
      %v305 = vpack.c.bf16 %v289, %v297
      %v306 = vpack.c.bf16 %v290, %v298
      %v307 = vpack.c.bf16 %v291, %v299
      %v308 = vpack.c.bf16 %v292, %v300
      %v309 = vpack.c.bf16 %v293, %v301
      %v318 = vunpack.c.l.b16 %v302
      %v319 = vunpack.c.h.b16 %v302
      %v320 = vunpack.c.l.b16 %v303
      %v321 = vunpack.c.h.b16 %v303
      %v322 = vunpack.c.l.b16 %v304
      %v323 = vunpack.c.h.b16 %v304
      %v324 = vunpack.c.l.b16 %v305
      %v325 = vunpack.c.h.b16 %v305
      %v326 = vunpack.c.l.b16 %v306
      %v327 = vunpack.c.h.b16 %v306
      %v328 = vunpack.c.l.b16 %v307
      %v329 = vunpack.c.h.b16 %v307
      %v330 = vunpack.c.l.b16 %v308
      %v331 = vunpack.c.h.b16 %v308
      %v332 = vunpack.c.l.b16 %v309
      %v333 = vunpack.c.h.b16 %v309
      %v334 = vpack.c.b16 %v318, %v318
      %v335 = vpack.c.b16 %v319, %v319
      %v336 = vpack.c.b16 %v320, %v320
      %v337 = vpack.c.b16 %v321, %v321
      %v338 = vpack.c.b16 %v322, %v322
      %v339 = vpack.c.b16 %v323, %v323
      %v340 = vpack.c.b16 %v324, %v324
      %v341 = vpack.c.b16 %v325, %v325
      %v342 = vpack.c.b16 %v326, %v326
      %v343 = vpack.c.b16 %v327, %v327
      %v344 = vpack.c.b16 %v328, %v328
      %v345 = vpack.c.b16 %v329, %v329
      %v346 = vpack.c.b16 %v330, %v330
      %v347 = vpack.c.b16 %v331, %v331
      %v348 = vpack.c.b16 %v332, %v332
      %v349 = vpack.c.b16 %v333, %v333
      %366 = vst [vmem:[#allocation2 + $0xc] sm:$0xf] %v334
      %367 = vst [vmem:[#allocation2 + $0x30] sm:$0xf] %v335
      %368 = vst [vmem:[#allocation2 + $0x54] sm:$0xf] %v336
      %369 = vst [vmem:[#allocation2 + $0x78] sm:$0xf] %v337
      %370 = vst [vmem:[#allocation2 + $0x9c] sm:$0xf] %v338
      %371 = vst [vmem:[#allocation2 + $0xc0] sm:$0xf] %v339
      %372 = vst [vmem:[#allocation2 + $0xe4] sm:$0xf] %v340
      %373 = vst [vmem:[#allocation2 + $0x108] sm:$0xf] %v341
      %374 = vst [vmem:[#allocation2 + $0x12c] sm:$0xf] %v342
      %375 = vst [vmem:[#allocation2 + $0x150] sm:$0xf] %v343
      %376 = vst [vmem:[#allocation2 + $0x174] sm:$0xf] %v344
      %377 = vst [vmem:[#allocation2 + $0x198] sm:$0xf] %v345
      %378 = vst [vmem:[#allocation2 + $0x1bc] sm:$0xf] %v346
      %379 = vst [vmem:[#allocation2 + $0x1e0] sm:$0xf] %v347
      %380 = vst [vmem:[#allocation2 + $0x204] sm:$0xf] %v348
      %381 = vst [vmem:[#allocation2 + $0x228] sm:$0xf] %v349
      %s382 = scalar_lea.vmem [#allocation2], 72
      %383 = vst [vmem:[%s382] sm:$0xf] %v334
      %384 = vst [vmem:[%s382 + $0x24] sm:$0xf] %v335
      %385 = vst [vmem:[%s382 + $0x48] sm:$0xf] %v336
      %386 = vst [vmem:[%s382 + $0x6c] sm:$0xf] %v337
      %387 = vst [vmem:[%s382 + $0x90] sm:$0xf] %v338
      %388 = vst [vmem:[%s382 + $0xb4] sm:$0xf] %v339
      %389 = vst [vmem:[%s382 + $0xd8] sm:$0xf] %v340
      %390 = vst [vmem:[%s382 + $0xfc] sm:$0xf] %v341
      %391 = vst [vmem:[%s382 + $0x120] sm:$0xf] %v342
      %392 = vst [vmem:[%s382 + $0x144] sm:$0xf] %v343
      %393 = vst [vmem:[%s382 + $0x168] sm:$0xf] %v344
      %394 = vst [vmem:[%s382 + $0x18c] sm:$0xf] %v345
      %395 = vst [vmem:[%s382 + $0x1b0] sm:$0xf] %v346
      %396 = vst [vmem:[%s382 + $0x1d4] sm:$0xf] %v347
      %397 = vst [vmem:[#allocation2 + $0x18] sm:$0xf] %v336
      %398 = vst [vmem:[#allocation2 + $0x3c] sm:$0xf] %v337
      %399 = vst [vmem:[#allocation2 + $0x60] sm:$0xf] %v338
      %400 = vst [vmem:[#allocation2 + $0x84] sm:$0xf] %v339
      %401 = vst [vmem:[#allocation2 + $0xa8] sm:$0xf] %v340
      %402 = vst [vmem:[#allocation2 + $0xcc] sm:$0xf] %v341
      %403 = vst [vmem:[#allocation2 + $0xf0] sm:$0xf] %v342
      %404 = vst [vmem:[#allocation2 + $0x114] sm:$0xf] %v343
      %405 = vst [vmem:[#allocation2 + $0x138] sm:$0xf] %v344
      %406 = vst [vmem:[#allocation2 + $0x15c] sm:$0xf] %v345
      %407 = vst [vmem:[#allocation2 + $0x180] sm:$0xf] %v346
      %408 = vst [vmem:[#allocation2 + $0x1a4] sm:$0xf] %v347
      %409 = vst [vmem:[#allocation2 + $0x1c8] sm:$0xf] %v348
      %410 = vst [vmem:[#allocation2 + $0x1ec] sm:$0xf] %v349
      %411 = vst [vmem:[#allocation2 + $0x10] sm:$0xf] %v235
      %412 = vst [vmem:[#allocation2 + $0x34] sm:$0xf] %v236
      %413 = vst [vmem:[#allocation2 + $0x58] sm:$0xf] %v237
      %414 = vst [vmem:[#allocation2 + $0x7c] sm:$0xf] %v238
      %415 = vst [vmem:[#allocation2 + $0xa0] sm:$0xf] %v239
      %416 = vst [vmem:[#allocation2 + $0xc4] sm:$0xf] %v240
      %417 = vst [vmem:[#allocation2 + $0xe8] sm:$0xf] %v241
      %418 = vst [vmem:[#allocation2 + $0x10c] sm:$0xf] %v242
      %419 = vst [vmem:[#allocation2 + $0x130] sm:$0xf] %v243
      %420 = vst [vmem:[#allocation2 + $0x154] sm:$0xf] %v244
      %421 = vst [vmem:[#allocation2 + $0x178] sm:$0xf] %v245
      %422 = vst [vmem:[#allocation2 + $0x19c] sm:$0xf] %v246
      %423 = vst [vmem:[#allocation2 + $0x1c0] sm:$0xf] %v247
      %424 = vst [vmem:[#allocation2 + $0x1e4] sm:$0xf] %v248
      %425 = vst [vmem:[#allocation2 + $0x208] sm:$0xf] %v249
      %426 = vst [vmem:[#allocation2 + $0x22c] sm:$0xf] %v250
      %427 = vst [vmem:[%s382 + $0x4] sm:$0xf] %v235
      %428 = vst [vmem:[%s382 + $0x28] sm:$0xf] %v236
      %429 = vst [vmem:[%s382 + $0x4c] sm:$0xf] %v237
      %430 = vst [vmem:[%s382 + $0x70] sm:$0xf] %v238
      %431 = vst [vmem:[%s382 + $0x94] sm:$0xf] %v239
      %432 = vst [vmem:[%s382 + $0xb8] sm:$0xf] %v240
      %433 = vst [vmem:[%s382 + $0xdc] sm:$0xf] %v241
      %434 = vst [vmem:[%s382 + $0x100] sm:$0xf] %v242
      %435 = vst [vmem:[%s382 + $0x124] sm:$0xf] %v243
      %436 = vst [vmem:[%s382 + $0x148] sm:$0xf] %v244
      %437 = vst [vmem:[%s382 + $0x16c] sm:$0xf] %v245
      %438 = vst [vmem:[%s382 + $0x190] sm:$0xf] %v246
      %439 = vst [vmem:[%s382 + $0x1b4] sm:$0xf] %v247
      %440 = vst [vmem:[%s382 + $0x1d8] sm:$0xf] %v248
      %441 = vst [vmem:[#allocation2 + $0x1c] sm:$0xf] %v237
      %442 = vst [vmem:[#allocation2 + $0x40] sm:$0xf] %v238
      %443 = vst [vmem:[#allocation2 + $0x64] sm:$0xf] %v239
      %444 = vst [vmem:[#allocation2 + $0x88] sm:$0xf] %v240
      %445 = vst [vmem:[#allocation2 + $0xac] sm:$0xf] %v241
      %446 = vst [vmem:[#allocation2 + $0xd0] sm:$0xf] %v242
      %447 = vst [vmem:[#allocation2 + $0xf4] sm:$0xf] %v243
      %448 = vst [vmem:[#allocation2 + $0x118] sm:$0xf] %v244
      %449 = vst [vmem:[#allocation2 + $0x13c] sm:$0xf] %v245
      %450 = vst [vmem:[#allocation2 + $0x160] sm:$0xf] %v246
      %451 = vst [vmem:[#allocation2 + $0x184] sm:$0xf] %v247
      %452 = vst [vmem:[#allocation2 + $0x1a8] sm:$0xf] %v248
      %453 = vst [vmem:[#allocation2 + $0x1cc] sm:$0xf] %v249
      %454 = vst [vmem:[#allocation2 + $0x1f0] sm:$0xf] %v250
      %v455 = vrot.slane %v251, 1
      %v456 = vrot.slane %v253, 1
      %v457 = vrot.slane %v255, 1
      %v458 = vrot.slane %v257, 1
      %v459 = vrot.slane %v259, 1
      %v460 = vrot.slane %v261, 1
      %v461 = vrot.slane %v263, 1
      %v462 = vrot.slane %v265, 1
      %v463 = vrot.slane %v252, 1
      %v464 = vrot.slane %v254, 1
      %v465 = vrot.slane %v256, 1
      %v466 = vrot.slane %v258, 1
      %v467 = vrot.slane %v260, 1
      %v468 = vrot.slane %v262, 1
      %v469 = vrot.slane %v264, 1
      %v470 = vrot.slane %v266, 1
      %vm471 = vcmp.lt.s32.totalorder %v284, 7
      %v472 = vsel %vm471, %v455, %v463
      %v473 = vsel %vm471, %v456, %v464
      %v474 = vsel %vm471, %v457, %v465
      %v475 = vsel %vm471, %v458, %v466
      %v476 = vsel %vm471, %v459, %v467
      %v477 = vsel %vm471, %v460, %v468
      %v478 = vsel %vm471, %v461, %v469
      %v479 = vsel %vm471, %v462, %v470
      %v480 = vsel %vm471, %v463, %v455
      %v481 = vsel %vm471, %v464, %v456
      %v482 = vsel %vm471, %v465, %v457
      %v483 = vsel %vm471, %v466, %v458
      %v484 = vsel %vm471, %v467, %v459
      %v485 = vsel %vm471, %v468, %v460
      %v486 = vsel %vm471, %v469, %v461
      %v487 = vsel %vm471, %v470, %v462
      %v488 = vpack.c.bf16 %v480, %v472
      %v489 = vpack.c.bf16 %v481, %v473
      %v490 = vpack.c.bf16 %v482, %v474
      %v491 = vpack.c.bf16 %v483, %v475
      %v492 = vpack.c.bf16 %v484, %v476
      %v493 = vpack.c.bf16 %v485, %v477
      %v494 = vpack.c.bf16 %v486, %v478
      %v495 = vpack.c.bf16 %v487, %v479
      %v504 = vunpack.c.l.b16 %v488
      %v505 = vunpack.c.h.b16 %v488
      %v506 = vunpack.c.l.b16 %v489
      %v507 = vunpack.c.h.b16 %v489
      %v508 = vunpack.c.l.b16 %v490
      %v509 = vunpack.c.h.b16 %v490
      %v510 = vunpack.c.l.b16 %v491
      %v511 = vunpack.c.h.b16 %v491
      %v512 = vunpack.c.l.b16 %v492
      %v513 = vunpack.c.h.b16 %v492
      %v514 = vunpack.c.l.b16 %v493
      %v515 = vunpack.c.h.b16 %v493
      %v516 = vunpack.c.l.b16 %v494
      %v517 = vunpack.c.h.b16 %v494
      %v518 = vunpack.c.l.b16 %v495
      %v519 = vunpack.c.h.b16 %v495
      %v520 = vpack.c.b16 %v504, %v504
      %v521 = vpack.c.b16 %v505, %v505
      %v522 = vpack.c.b16 %v506, %v506
      %v523 = vpack.c.b16 %v507, %v507
      %v524 = vpack.c.b16 %v508, %v508
      %v525 = vpack.c.b16 %v509, %v509
      %v526 = vpack.c.b16 %v510, %v510
      %v527 = vpack.c.b16 %v511, %v511
      %v528 = vpack.c.b16 %v512, %v512
      %v529 = vpack.c.b16 %v513, %v513
      %v530 = vpack.c.b16 %v514, %v514
      %v531 = vpack.c.b16 %v515, %v515
      %v532 = vpack.c.b16 %v516, %v516
      %v533 = vpack.c.b16 %v517, %v517
      %v534 = vpack.c.b16 %v518, %v518
      %v535 = vpack.c.b16 %v519, %v519
      %552 = vst [vmem:[#allocation2 + $0x14] sm:$0xf] %v520
      %553 = vst [vmem:[#allocation2 + $0x38] sm:$0xf] %v521
      %554 = vst [vmem:[#allocation2 + $0x5c] sm:$0xf] %v522
      %555 = vst [vmem:[#allocation2 + $0x80] sm:$0xf] %v523
      %556 = vst [vmem:[#allocation2 + $0xa4] sm:$0xf] %v524
      %557 = vst [vmem:[#allocation2 + $0xc8] sm:$0xf] %v525
      %558 = vst [vmem:[#allocation2 + $0xec] sm:$0xf] %v526
      %559 = vst [vmem:[#allocation2 + $0x110] sm:$0xf] %v527
      %560 = vst [vmem:[#allocation2 + $0x134] sm:$0xf] %v528
      %561 = vst [vmem:[#allocation2 + $0x158] sm:$0xf] %v529
      %562 = vst [vmem:[#allocation2 + $0x17c] sm:$0xf] %v530
      %563 = vst [vmem:[#allocation2 + $0x1a0] sm:$0xf] %v531
      %564 = vst [vmem:[#allocation2 + $0x1c4] sm:$0xf] %v532
      %565 = vst [vmem:[#allocation2 + $0x1e8] sm:$0xf] %v533
      %566 = vst [vmem:[#allocation2 + $0x20c] sm:$0xf] %v534
      %567 = vst [vmem:[#allocation2 + $0x230] sm:$0xf] %v535
      %568 = vst [vmem:[%s382 + $0x8] sm:$0xf] %v520
      %569 = vst [vmem:[%s382 + $0x2c] sm:$0xf] %v521
      %570 = vst [vmem:[%s382 + $0x50] sm:$0xf] %v522
      %571 = vst [vmem:[%s382 + $0x74] sm:$0xf] %v523
      %572 = vst [vmem:[%s382 + $0x98] sm:$0xf] %v524
      %573 = vst [vmem:[%s382 + $0xbc] sm:$0xf] %v525
      %574 = vst [vmem:[%s382 + $0xe0] sm:$0xf] %v526
      %575 = vst [vmem:[%s382 + $0x104] sm:$0xf] %v527
      %576 = vst [vmem:[%s382 + $0x128] sm:$0xf] %v528
      %577 = vst [vmem:[%s382 + $0x14c] sm:$0xf] %v529
      %578 = vst [vmem:[%s382 + $0x170] sm:$0xf] %v530
      %579 = vst [vmem:[%s382 + $0x194] sm:$0xf] %v531
      %580 = vst [vmem:[%s382 + $0x1b8] sm:$0xf] %v532
      %581 = vst [vmem:[%s382 + $0x1dc] sm:$0xf] %v533
      %582 = vst [vmem:[#allocation2 + $0x20] sm:$0xf] %v522
      %583 = vst [vmem:[#allocation2 + $0x44] sm:$0xf] %v523
      %584 = vst [vmem:[#allocation2 + $0x68] sm:$0xf] %v524
      %585 = vst [vmem:[#allocation2 + $0x8c] sm:$0xf] %v525
      %586 = vst [vmem:[#allocation2 + $0xb0] sm:$0xf] %v526
      %587 = vst [vmem:[#allocation2 + $0xd4] sm:$0xf] %v527
      %588 = vst [vmem:[#allocation2 + $0xf8] sm:$0xf] %v528
      %589 = vst [vmem:[#allocation2 + $0x11c] sm:$0xf] %v529
      %590 = vst [vmem:[#allocation2 + $0x140] sm:$0xf] %v530
      %591 = vst [vmem:[#allocation2 + $0x164] sm:$0xf] %v531
      %592 = vst [vmem:[#allocation2 + $0x188] sm:$0xf] %v532
      %593 = vst [vmem:[#allocation2 + $0x1ac] sm:$0xf] %v533
      %594 = vst [vmem:[#allocation2 + $0x1d0] sm:$0xf] %v534
      %595 = vst [vmem:[#allocation2 + $0x1f4] sm:$0xf] %v535
      %v596 = vld [vmem:[#allocation2] sm:$0xff]
      %v597 = vld [vmem:[#allocation2 + $0x8] sm:$0xff]
      %v598 = vld [vmem:[#allocation2 + $0x10] sm:$0xff]
      %v599 = vld [vmem:[#allocation2 + $0x18] sm:$0xff]
      %v600 = vld [vmem:[#allocation2 + $0x20] sm:$0xf]
      %v601 = vld [vmem:[#allocation2 + $0x24] sm:$0xff]
      %v602 = vld [vmem:[#allocation2 + $0x2c] sm:$0xff]
      %v603 = vld [vmem:[#allocation2 + $0x34] sm:$0xff]
      %v604 = vld [vmem:[#allocation2 + $0x3c] sm:$0xff]
      %v605 = vld [vmem:[#allocation2 + $0x44] sm:$0xf]
      %v606 = vld [vmem:[#allocation2 + $0x48] sm:$0xff]
      %v607 = vld [vmem:[#allocation2 + $0x50] sm:$0xff]
      %v608 = vld [vmem:[#allocation2 + $0x58] sm:$0xff]
      %v609 = vld [vmem:[#allocation2 + $0x60] sm:$0xff]
      %v610 = vld [vmem:[#allocation2 + $0x68] sm:$0xf]
      %v611 = vld [vmem:[#allocation2 + $0x6c] sm:$0xff]
      %v612 = vld [vmem:[#allocation2 + $0x74] sm:$0xff]
      %v613 = vld [vmem:[#allocation2 + $0x7c] sm:$0xff]
      %v614 = vld [vmem:[#allocation2 + $0x84] sm:$0xff]
      %v615 = vld [vmem:[#allocation2 + $0x8c] sm:$0xf]
      %v616 = vld [vmem:[#allocation2 + $0x90] sm:$0xff]
      %v617 = vld [vmem:[#allocation2 + $0x98] sm:$0xff]
      %v618 = vld [vmem:[#allocation2 + $0xa0] sm:$0xff]
      %v619 = vld [vmem:[#allocation2 + $0xa8] sm:$0xff]
      %v620 = vld [vmem:[#allocation2 + $0xb0] sm:$0xf]
      %v621 = vld [vmem:[#allocation2 + $0xb4] sm:$0xff]
      %v622 = vld [vmem:[#allocation2 + $0xbc] sm:$0xff]
      %v623 = vld [vmem:[#allocation2 + $0xc4] sm:$0xff]
      %v624 = vld [vmem:[#allocation2 + $0xcc] sm:$0xff]
      %v625 = vld [vmem:[#allocation2 + $0xd4] sm:$0xf]
      %v626 = vld [vmem:[#allocation2 + $0xd8] sm:$0xff]
      %v627 = vld [vmem:[#allocation2 + $0xe0] sm:$0xff]
      %v628 = vld [vmem:[#allocation2 + $0xe8] sm:$0xff]
      %v629 = vld [vmem:[#allocation2 + $0xf0] sm:$0xff]
      %v630 = vld [vmem:[#allocation2 + $0xf8] sm:$0xf]
      %v631 = vld [vmem:[#allocation2 + $0xfc] sm:$0xff]
      %v632 = vld [vmem:[#allocation2 + $0x104] sm:$0xff]
      %v633 = vld [vmem:[#allocation2 + $0x10c] sm:$0xff]
      %v634 = vld [vmem:[#allocation2 + $0x114] sm:$0xff]
      %v635 = vld [vmem:[#allocation2 + $0x11c] sm:$0xf]
      %v636 = vld [vmem:[#allocation2 + $0x120] sm:$0xff]
      %v637 = vld [vmem:[#allocation2 + $0x128] sm:$0xff]
      %v638 = vld [vmem:[#allocation2 + $0x130] sm:$0xff]
      %v639 = vld [vmem:[#allocation2 + $0x138] sm:$0xff]
      %v640 = vld [vmem:[#allocation2 + $0x140] sm:$0xf]
      %v641 = vld [vmem:[#allocation2 + $0x144] sm:$0xff]
      %v642 = vld [vmem:[#allocation2 + $0x14c] sm:$0xff]
      %v643 = vld [vmem:[#allocation2 + $0x154] sm:$0xff]
      %v644 = vld [vmem:[#allocation2 + $0x15c] sm:$0xff]
      %v645 = vld [vmem:[#allocation2 + $0x164] sm:$0xf]
      %v646 = vld [vmem:[#allocation2 + $0x168] sm:$0xff]
      %v647 = vld [vmem:[#allocation2 + $0x170] sm:$0xff]
      %v648 = vld [vmem:[#allocation2 + $0x178] sm:$0xff]
      %v649 = vld [vmem:[#allocation2 + $0x180] sm:$0xff]
      %v650 = vld [vmem:[#allocation2 + $0x188] sm:$0xf]
      %v651 = vld [vmem:[#allocation2 + $0x18c] sm:$0xff]
      %v652 = vld [vmem:[#allocation2 + $0x194] sm:$0xff]
      %v653 = vld [vmem:[#allocation2 + $0x19c] sm:$0xff]
      %v654 = vld [vmem:[#allocation2 + $0x1a4] sm:$0xff]
      %v655 = vld [vmem:[#allocation2 + $0x1ac] sm:$0xf]
      %v656 = vld [vmem:[#allocation2 + $0x1b0] sm:$0xff]
      %v657 = vld [vmem:[#allocation2 + $0x1b8] sm:$0xff]
      %v658 = vld [vmem:[#allocation2 + $0x1c0] sm:$0xff]
      %v659 = vld [vmem:[#allocation2 + $0x1c8] sm:$0xff]
      %v660 = vld [vmem:[#allocation2 + $0x1d0] sm:$0xf]
      %v661 = vld [vmem:[#allocation2 + $0x1d4] sm:$0xff]
      %v662 = vld [vmem:[#allocation2 + $0x1dc] sm:$0xff]
      %v663 = vld [vmem:[#allocation2 + $0x1e4] sm:$0xff]
      %v664 = vld [vmem:[#allocation2 + $0x1ec] sm:$0xff]
      %v665 = vld [vmem:[#allocation2 + $0x1f4] sm:$0xf]
      %v666 = vld [vmem:[#allocation2 + $0x1f8] sm:$0xff]
      %v667 = vld [vmem:[#allocation2 + $0x200] sm:$0xff]
      %v668 = vld [vmem:[#allocation2 + $0x208] sm:$0xff]
      %v669 = vld [vmem:[#allocation2 + $0x210] sm:$0xff]
      %v670 = vld [vmem:[#allocation2 + $0x218] sm:$0xf]
      %v671 = vld [vmem:[#allocation2 + $0x21c] sm:$0xff]
      %v672 = vld [vmem:[#allocation2 + $0x224] sm:$0xff]
      %v673 = vld [vmem:[#allocation2 + $0x22c] sm:$0xff]
      %v674 = vld [vmem:[#allocation2 + $0x234] sm:$0xff]
      %v675 = vld [vmem:[#allocation2 + $0x23c] sm:$0xf]
      %v676 = vld [vmem:[%s1] sm:$0xf]
      %v677 = vld [vmem:[%s1 + $0x4] sm:$0xf]
      %v678 = vld [vmem:[%s1 + $0x8] sm:$0xf]
      %v679 = vld [vmem:[%s1 + $0xc] sm:$0xf]
      %v680 = vld [vmem:[%s1 + $0x10] sm:$0xf]
      %v681 = vld [vmem:[%s1 + $0x14] sm:$0xf]
      %v682 = vld [vmem:[%s1 + $0x18] sm:$0xf]
      %v683 = vld [vmem:[%s1 + $0x1c] sm:$0xf]
      %v684 = vld [vmem:[%s1 + $0x20] sm:$0xf]
      %v685 = vld [vmem:[%s1 + $0x24] sm:$0xf]
      %v686 = vld [vmem:[%s1 + $0x28] sm:$0xf]
      %v687 = vld [vmem:[%s1 + $0x2c] sm:$0xf]
      %v688 = vld [vmem:[%s1 + $0x30] sm:$0xf]
      %v689 = vld [vmem:[%s1 + $0x34] sm:$0xf]
      %v690 = vld [vmem:[%s1 + $0x38] sm:$0xf]
      %v691 = vld [vmem:[%s1 + $0x3c] sm:$0xf]
      %v692 = vld [vmem:[%s1 + $0x40] sm:$0xf]
      %v693 = vld [vmem:[%s1 + $0x44] sm:$0xf]
      %v694 = vld [vmem:[%s1 + $0x48] sm:$0xf]
      %v695 = vld [vmem:[%s1 + $0x4c] sm:$0xf]
      %v696 = vld [vmem:[%s1 + $0x50] sm:$0xf]
      %v697 = vld [vmem:[%s1 + $0x54] sm:$0xf]
      %v698 = vld [vmem:[%s1 + $0x58] sm:$0xf]
      %v699 = vld [vmem:[%s1 + $0x5c] sm:$0xf]
      %v700 = vld [vmem:[%s1 + $0x60] sm:$0xf]
      %v701 = vld [vmem:[%s1 + $0x64] sm:$0xf]
      %v702 = vld [vmem:[%s1 + $0x68] sm:$0xf]
      %v703 = vld [vmem:[%s1 + $0x6c] sm:$0xf]
      %v704 = vld [vmem:[%s1 + $0x70] sm:$0xf]
      %v705 = vld [vmem:[%s1 + $0x74] sm:$0xf]
      %v706 = vld [vmem:[%s1 + $0x78] sm:$0xf]
      %v707 = vld [vmem:[%s1 + $0x7c] sm:$0xf]
      %v708 = vld [vmem:[%s1 + $0x80] sm:$0xf]
      %v709 = vld [vmem:[%s1 + $0x84] sm:$0xf]
      %v710 = vld [vmem:[%s1 + $0x88] sm:$0xf]
      %v711 = vld [vmem:[%s1 + $0x8c] sm:$0xf]
      %v712 = vld [vmem:[%s1 + $0x90] sm:$0xf]
      %v713 = vld [vmem:[%s1 + $0x94] sm:$0xf]
      %v714 = vld [vmem:[%s1 + $0x98] sm:$0xf]
      %v715 = vld [vmem:[%s1 + $0x9c] sm:$0xf]
      %v716 = vld [vmem:[%s1 + $0xa0] sm:$0xf]
      %v717 = vld [vmem:[%s1 + $0xa4] sm:$0xf]
      %v718 = vld [vmem:[%s1 + $0xa8] sm:$0xf]
      %v719 = vld [vmem:[%s1 + $0xac] sm:$0xf]
      %v720 = vld [vmem:[%s1 + $0xb0] sm:$0xf]
      %v721 = vld [vmem:[%s1 + $0xb4] sm:$0xf]
      %v722 = vld [vmem:[%s1 + $0xb8] sm:$0xf]
      %v723 = vld [vmem:[%s1 + $0xbc] sm:$0xf]
      %v724 = vld [vmem:[%s1 + $0xc0] sm:$0xf]
      %v725 = vld [vmem:[%s1 + $0xc4] sm:$0xf]
      %v726 = vld [vmem:[%s1 + $0xc8] sm:$0xf]
      %v727 = vld [vmem:[%s1 + $0xcc] sm:$0xf]
      %v728 = vld [vmem:[%s1 + $0xd0] sm:$0xf]
      %v729 = vld [vmem:[%s1 + $0xd4] sm:$0xf]
      %v730 = vld [vmem:[%s1 + $0xd8] sm:$0xf]
      %v731 = vld [vmem:[%s1 + $0xdc] sm:$0xf]
      %v732 = vld [vmem:[%s1 + $0xe0] sm:$0xf]
      %v733 = vld [vmem:[%s1 + $0xe4] sm:$0xf]
      %v734 = vld [vmem:[%s1 + $0xe8] sm:$0xf]
      %v735 = vld [vmem:[%s1 + $0xec] sm:$0xf]
      %v736 = vld [vmem:[%s1 + $0xf0] sm:$0xf]
      %v737 = vld [vmem:[%s1 + $0xf4] sm:$0xf]
      %v738 = vld [vmem:[%s1 + $0xf8] sm:$0xf]
      %v739 = vld [vmem:[%s1 + $0xfc] sm:$0xf]
      %v740 = vld [vmem:[%s1 + $0x100] sm:$0xf]
      %v741 = vld [vmem:[%s1 + $0x104] sm:$0xf]
      %v742 = vld [vmem:[%s1 + $0x108] sm:$0xf]
      %v743 = vld [vmem:[%s1 + $0x10c] sm:$0xf]
      %v744 = vld [vmem:[%s1 + $0x110] sm:$0xf]
      %v745 = vld [vmem:[%s1 + $0x114] sm:$0xf]
      %v746 = vld [vmem:[%s1 + $0x118] sm:$0xf]
      %v747 = vld [vmem:[%s1 + $0x11c] sm:$0xf]
      %v748 = vld [vmem:[%s1 + $0x120] sm:$0xf]
      %v749 = vld [vmem:[%s1 + $0x124] sm:$0xf]
      %v750 = vld [vmem:[%s1 + $0x128] sm:$0xf]
      %v751 = vld [vmem:[%s1 + $0x12c] sm:$0xf]
      %v752 = vld [vmem:[%s1 + $0x130] sm:$0xf]
      %v753 = vld [vmem:[%s1 + $0x134] sm:$0xf]
      %v754 = vld [vmem:[%s1 + $0x138] sm:$0xf]
      %v755 = vld [vmem:[%s1 + $0x13c] sm:$0xf]
      %v756 = vld [vmem:[%s1 + $0x140] sm:$0xf]
      %v757 = vld [vmem:[%s1 + $0x144] sm:$0xf]
      %v758 = vld [vmem:[%s1 + $0x148] sm:$0xf]
      %v759 = vld [vmem:[%s1 + $0x14c] sm:$0xf]
      %v760 = vld [vmem:[%s1 + $0x150] sm:$0xf]
      %v761 = vld [vmem:[%s1 + $0x154] sm:$0xf]
      %v762 = vld [vmem:[%s1 + $0x158] sm:$0xf]
      %v763 = vld [vmem:[%s1 + $0x15c] sm:$0xf]
      %v764 = vld [vmem:[%s1 + $0x160] sm:$0xf]
      %v765 = vld [vmem:[%s1 + $0x164] sm:$0xf]
      %v766 = vld [vmem:[%s1 + $0x168] sm:$0xf]
      %v767 = vld [vmem:[%s1 + $0x16c] sm:$0xf]
      %v768 = vld [vmem:[%s1 + $0x170] sm:$0xf]
      %v769 = vld [vmem:[%s1 + $0x174] sm:$0xf]
      %v770 = vld [vmem:[%s1 + $0x178] sm:$0xf]
      %v771 = vld [vmem:[%s1 + $0x17c] sm:$0xf]
      %v772 = vld [vmem:[%s1 + $0x180] sm:$0xf]
      %v773 = vld [vmem:[%s1 + $0x184] sm:$0xf]
      %v774 = vld [vmem:[%s1 + $0x188] sm:$0xf]
      %v775 = vld [vmem:[%s1 + $0x18c] sm:$0xf]
      %v776 = vld [vmem:[%s1 + $0x190] sm:$0xf]
      %v777 = vld [vmem:[%s1 + $0x194] sm:$0xf]
      %v778 = vld [vmem:[%s1 + $0x198] sm:$0xf]
      %v779 = vld [vmem:[%s1 + $0x19c] sm:$0xf]
      %v780 = vld [vmem:[%s1 + $0x1a0] sm:$0xf]
      %v781 = vld [vmem:[%s1 + $0x1a4] sm:$0xf]
      %v782 = vld [vmem:[%s1 + $0x1a8] sm:$0xf]
      %v783 = vld [vmem:[%s1 + $0x1ac] sm:$0xf]
      %v784 = vld [vmem:[%s1 + $0x1b0] sm:$0xf]
      %v785 = vld [vmem:[%s1 + $0x1b4] sm:$0xf]
      %v786 = vld [vmem:[%s1 + $0x1b8] sm:$0xf]
      %v787 = vld [vmem:[%s1 + $0x1bc] sm:$0xf]
      %v788 = vld [vmem:[%s1 + $0x1c0] sm:$0xf]
      %v789 = vld [vmem:[%s1 + $0x1c4] sm:$0xf]
      %v790 = vld [vmem:[%s1 + $0x1c8] sm:$0xf]
      %v791 = vld [vmem:[%s1 + $0x1cc] sm:$0xf]
      %v792 = vld [vmem:[%s1 + $0x1d0] sm:$0xf]
      %v793 = vld [vmem:[%s1 + $0x1d4] sm:$0xf]
      %v794 = vld [vmem:[%s1 + $0x1d8] sm:$0xf]
      %v795 = vld [vmem:[%s1 + $0x1dc] sm:$0xf]
      %v796 = vld [vmem:[%s1 + $0x1e0] sm:$0xf]
      %v797 = vld [vmem:[%s1 + $0x1e4] sm:$0xf]
      %v798 = vld [vmem:[%s1 + $0x1e8] sm:$0xf]
      %v799 = vld [vmem:[%s1 + $0x1ec] sm:$0xf]
      %v800 = vld [vmem:[%s1 + $0x1f0] sm:$0xf]
      %v801 = vld [vmem:[%s1 + $0x1f4] sm:$0xf]
      %v802 = vld [vmem:[%s1 + $0x1f8] sm:$0xf]
      %v803 = vld [vmem:[%s1 + $0x1fc] sm:$0xf]
      %v804 = vld [vmem:[%s1 + $0x200] sm:$0xf]
      %v805 = vld [vmem:[%s1 + $0x204] sm:$0xf]
      %v806 = vld [vmem:[%s1 + $0x208] sm:$0xf]
      %v807 = vld [vmem:[%s1 + $0x20c] sm:$0xf]
      %v808 = vld [vmem:[%s1 + $0x210] sm:$0xf]
      %v809 = vld [vmem:[%s1 + $0x214] sm:$0xf]
      %v810 = vld [vmem:[%s1 + $0x218] sm:$0xf]
      %v811 = vld [vmem:[%s1 + $0x21c] sm:$0xf]
      %v812 = vld [vmem:[%s1 + $0x220] sm:$0xf]
      %v813 = vld [vmem:[%s1 + $0x224] sm:$0xf]
      %v814 = vld [vmem:[%s1 + $0x228] sm:$0xf]
      %v815 = vld [vmem:[%s1 + $0x22c] sm:$0xf]
      %v816 = vld [vmem:[%s1 + $0x230] sm:$0xf]
      %v817 = vld [vmem:[%s1 + $0x234] sm:$0xf]
      %v818 = vld [vmem:[%s1 + $0x238] sm:$0xf]
      %v819 = vld [vmem:[%s1 + $0x23c] sm:$0xf]
      %v900 = vunpack.c.l.b16 %v596
      %v901 = vunpack.c.h.b16 %v596
      %v902 = vunpack.c.l.b16 %v597
      %v903 = vunpack.c.h.b16 %v597
      %v904 = vunpack.c.l.b16 %v598
      %v905 = vunpack.c.h.b16 %v598
      %v906 = vunpack.c.l.b16 %v599
      %v907 = vunpack.c.h.b16 %v599
      %v908 = vunpack.c.l.b16 %v600
      %v909 = vunpack.c.l.b16 %v601
      %v910 = vunpack.c.h.b16 %v601
      %v911 = vunpack.c.l.b16 %v602
      %v912 = vunpack.c.h.b16 %v602
      %v913 = vunpack.c.l.b16 %v603
      %v914 = vunpack.c.h.b16 %v603
      %v915 = vunpack.c.l.b16 %v604
      %v916 = vunpack.c.h.b16 %v604
      %v917 = vunpack.c.l.b16 %v605
      %v918 = vunpack.c.l.b16 %v606
      %v919 = vunpack.c.h.b16 %v606
      %v920 = vunpack.c.l.b16 %v607
      %v921 = vunpack.c.h.b16 %v607
      %v922 = vunpack.c.l.b16 %v608
      %v923 = vunpack.c.h.b16 %v608
      %v924 = vunpack.c.l.b16 %v609
      %v925 = vunpack.c.h.b16 %v609
      %v926 = vunpack.c.l.b16 %v610
      %v927 = vunpack.c.l.b16 %v611
      %v928 = vunpack.c.h.b16 %v611
      %v929 = vunpack.c.l.b16 %v612
      %v930 = vunpack.c.h.b16 %v612
      %v931 = vunpack.c.l.b16 %v613
      %v932 = vunpack.c.h.b16 %v613
      %v933 = vunpack.c.l.b16 %v614
      %v934 = vunpack.c.h.b16 %v614
      %v935 = vunpack.c.l.b16 %v615
      %v936 = vunpack.c.l.b16 %v616
      %v937 = vunpack.c.h.b16 %v616
      %v938 = vunpack.c.l.b16 %v617
      %v939 = vunpack.c.h.b16 %v617
      %v940 = vunpack.c.l.b16 %v618
      %v941 = vunpack.c.h.b16 %v618
      %v942 = vunpack.c.l.b16 %v619
      %v943 = vunpack.c.h.b16 %v619
      %v944 = vunpack.c.l.b16 %v620
      %v945 = vunpack.c.l.b16 %v621
      %v946 = vunpack.c.h.b16 %v621
      %v947 = vunpack.c.l.b16 %v622
      %v948 = vunpack.c.h.b16 %v622
      %v949 = vunpack.c.l.b16 %v623
      %v950 = vunpack.c.h.b16 %v623
      %v951 = vunpack.c.l.b16 %v624
      %v952 = vunpack.c.h.b16 %v624
      %v953 = vunpack.c.l.b16 %v625
      %v954 = vunpack.c.l.b16 %v626
      %v955 = vunpack.c.h.b16 %v626
      %v956 = vunpack.c.l.b16 %v627
      %v957 = vunpack.c.h.b16 %v627
      %v958 = vunpack.c.l.b16 %v628
      %v959 = vunpack.c.h.b16 %v628
      %v960 = vunpack.c.l.b16 %v629
      %v961 = vunpack.c.h.b16 %v629
      %v962 = vunpack.c.l.b16 %v630
      %v963 = vunpack.c.l.b16 %v631
      %v964 = vunpack.c.h.b16 %v631
      %v965 = vunpack.c.l.b16 %v632
      %v966 = vunpack.c.h.b16 %v632
      %v967 = vunpack.c.l.b16 %v633
      %v968 = vunpack.c.h.b16 %v633
      %v969 = vunpack.c.l.b16 %v634
      %v970 = vunpack.c.h.b16 %v634
      %v971 = vunpack.c.l.b16 %v635
      %v972 = vunpack.c.l.b16 %v636
      %v973 = vunpack.c.h.b16 %v636
      %v974 = vunpack.c.l.b16 %v637
      %v975 = vunpack.c.h.b16 %v637
      %v976 = vunpack.c.l.b16 %v638
      %v977 = vunpack.c.h.b16 %v638
      %v978 = vunpack.c.l.b16 %v639
      %v979 = vunpack.c.h.b16 %v639
      %v980 = vunpack.c.l.b16 %v640
      %v981 = vunpack.c.l.b16 %v641
      %v982 = vunpack.c.h.b16 %v641
      %v983 = vunpack.c.l.b16 %v642
      %v984 = vunpack.c.h.b16 %v642
      %v985 = vunpack.c.l.b16 %v643
      %v986 = vunpack.c.h.b16 %v643
      %v987 = vunpack.c.l.b16 %v644
      %v988 = vunpack.c.h.b16 %v644
      %v989 = vunpack.c.l.b16 %v645
      %v990 = vunpack.c.l.b16 %v646
      %v991 = vunpack.c.h.b16 %v646
      %v992 = vunpack.c.l.b16 %v647
      %v993 = vunpack.c.h.b16 %v647
      %v994 = vunpack.c.l.b16 %v648
      %v995 = vunpack.c.h.b16 %v648
      %v996 = vunpack.c.l.b16 %v649
      %v997 = vunpack.c.h.b16 %v649
      %v998 = vunpack.c.l.b16 %v650
      %v999 = vunpack.c.l.b16 %v651
      %v1000 = vunpack.c.h.b16 %v651
      %v1001 = vunpack.c.l.b16 %v652
      %v1002 = vunpack.c.h.b16 %v652
      %v1003 = vunpack.c.l.b16 %v653
      %v1004 = vunpack.c.h.b16 %v653
      %v1005 = vunpack.c.l.b16 %v654
      %v1006 = vunpack.c.h.b16 %v654
      %v1007 = vunpack.c.l.b16 %v655
      %v1008 = vunpack.c.l.b16 %v656
      %v1009 = vunpack.c.h.b16 %v656
      %v1010 = vunpack.c.l.b16 %v657
      %v1011 = vunpack.c.h.b16 %v657
      %v1012 = vunpack.c.l.b16 %v658
      %v1013 = vunpack.c.h.b16 %v658
      %v1014 = vunpack.c.l.b16 %v659
      %v1015 = vunpack.c.h.b16 %v659
      %v1016 = vunpack.c.l.b16 %v660
      %v1017 = vunpack.c.l.b16 %v661
      %v1018 = vunpack.c.h.b16 %v661
      %v1019 = vunpack.c.l.b16 %v662
      %v1020 = vunpack.c.h.b16 %v662
      %v1021 = vunpack.c.l.b16 %v663
      %v1022 = vunpack.c.h.b16 %v663
      %v1023 = vunpack.c.l.b16 %v664
      %v1024 = vunpack.c.h.b16 %v664
      %v1025 = vunpack.c.l.b16 %v665
      %v1026 = vunpack.c.l.b16 %v666
      %v1027 = vunpack.c.h.b16 %v666
      %v1028 = vunpack.c.l.b16 %v667
      %v1029 = vunpack.c.h.b16 %v667
      %v1030 = vunpack.c.l.b16 %v668
      %v1031 = vunpack.c.h.b16 %v668
      %v1032 = vunpack.c.l.b16 %v669
      %v1033 = vunpack.c.h.b16 %v669
      %v1034 = vunpack.c.l.b16 %v670
      %v1035 = vunpack.c.l.b16 %v671
      %v1036 = vunpack.c.h.b16 %v671
      %v1037 = vunpack.c.l.b16 %v672
      %v1038 = vunpack.c.h.b16 %v672
      %v1039 = vunpack.c.l.b16 %v673
      %v1040 = vunpack.c.h.b16 %v673
      %v1041 = vunpack.c.l.b16 %v674
      %v1042 = vunpack.c.h.b16 %v674
      %v1043 = vunpack.c.l.b16 %v675
      %v1044 = vpack.c.b16 %v909, %v900
      %v1045 = vpack.c.b16 %v910, %v901
      %v1046 = vpack.c.b16 %v911, %v902
      %v1047 = vpack.c.b16 %v912, %v903
      %v1048 = vpack.c.b16 %v913, %v904
      %v1049 = vpack.c.b16 %v914, %v905
      %v1050 = vpack.c.b16 %v915, %v906
      %v1051 = vpack.c.b16 %v916, %v907
      %v1052 = vpack.c.b16 %v917, %v908
      %v1053 = vpack.c.b16 %v927, %v918
      %v1054 = vpack.c.b16 %v928, %v919
      %v1055 = vpack.c.b16 %v929, %v920
      %v1056 = vpack.c.b16 %v930, %v921
      %v1057 = vpack.c.b16 %v931, %v922
      %v1058 = vpack.c.b16 %v932, %v923
      %v1059 = vpack.c.b16 %v933, %v924
      %v1060 = vpack.c.b16 %v934, %v925
      %v1061 = vpack.c.b16 %v935, %v926
      %v1062 = vpack.c.b16 %v945, %v936
      %v1063 = vpack.c.b16 %v946, %v937
      %v1064 = vpack.c.b16 %v947, %v938
      %v1065 = vpack.c.b16 %v948, %v939
      %v1066 = vpack.c.b16 %v949, %v940
      %v1067 = vpack.c.b16 %v950, %v941
      %v1068 = vpack.c.b16 %v951, %v942
      %v1069 = vpack.c.b16 %v952, %v943
      %v1070 = vpack.c.b16 %v953, %v944
      %v1071 = vpack.c.b16 %v963, %v954
      %v1072 = vpack.c.b16 %v964, %v955
      %v1073 = vpack.c.b16 %v965, %v956
      %v1074 = vpack.c.b16 %v966, %v957
      %v1075 = vpack.c.b16 %v967, %v958
      %v1076 = vpack.c.b16 %v968, %v959
      %v1077 = vpack.c.b16 %v969, %v960
      %v1078 = vpack.c.b16 %v970, %v961
      %v1079 = vpack.c.b16 %v971, %v962
      %v1080 = vpack.c.b16 %v981, %v972
      %v1081 = vpack.c.b16 %v982, %v973
      %v1082 = vpack.c.b16 %v983, %v974
      %v1083 = vpack.c.b16 %v984, %v975
      %v1084 = vpack.c.b16 %v985, %v976
      %v1085 = vpack.c.b16 %v986, %v977
      %v1086 = vpack.c.b16 %v987, %v978
      %v1087 = vpack.c.b16 %v988, %v979
      %v1088 = vpack.c.b16 %v989, %v980
      %v1089 = vpack.c.b16 %v999, %v990
      %v1090 = vpack.c.b16 %v1000, %v991
      %v1091 = vpack.c.b16 %v1001, %v992
      %v1092 = vpack.c.b16 %v1002, %v993
      %v1093 = vpack.c.b16 %v1003, %v994
      %v1094 = vpack.c.b16 %v1004, %v995
      %v1095 = vpack.c.b16 %v1005, %v996
      %v1096 = vpack.c.b16 %v1006, %v997
      %v1097 = vpack.c.b16 %v1007, %v998
      %v1098 = vpack.c.b16 %v1017, %v1008
      %v1099 = vpack.c.b16 %v1018, %v1009
      %v1100 = vpack.c.b16 %v1019, %v1010
      %v1101 = vpack.c.b16 %v1020, %v1011
      %v1102 = vpack.c.b16 %v1021, %v1012
      %v1103 = vpack.c.b16 %v1022, %v1013
      %v1104 = vpack.c.b16 %v1023, %v1014
      %v1105 = vpack.c.b16 %v1024, %v1015
      %v1106 = vpack.c.b16 %v1025, %v1016
      %v1107 = vpack.c.b16 %v1035, %v1026
      %v1108 = vpack.c.b16 %v1036, %v1027
      %v1109 = vpack.c.b16 %v1037, %v1028
      %v1110 = vpack.c.b16 %v1038, %v1029
      %v1111 = vpack.c.b16 %v1039, %v1030
      %v1112 = vpack.c.b16 %v1040, %v1031
      %v1113 = vpack.c.b16 %v1041, %v1032
      %v1114 = vpack.c.b16 %v1042, %v1033
      %v1115 = vpack.c.b16 %v1043, %v1034
      %v1332 = vunpack.c.l.b16 %v676
      %v1333 = vunpack.c.l.b16 %v677
      %v1334 = vunpack.c.l.b16 %v678
      %v1335 = vunpack.c.l.b16 %v679
      %v1336 = vunpack.c.l.b16 %v680
      %v1337 = vunpack.c.l.b16 %v681
      %v1338 = vunpack.c.l.b16 %v682
      %v1339 = vunpack.c.l.b16 %v683
      %v1340 = vunpack.c.l.b16 %v684
      %v1341 = vunpack.c.l.b16 %v685
      %v1342 = vunpack.c.l.b16 %v686
      %v1343 = vunpack.c.l.b16 %v687
      %v1344 = vunpack.c.l.b16 %v688
      %v1345 = vunpack.c.l.b16 %v689
      %v1346 = vunpack.c.l.b16 %v690
      %v1347 = vunpack.c.l.b16 %v691
      %v1348 = vunpack.c.l.b16 %v692
      %v1349 = vunpack.c.l.b16 %v693
      %v1350 = vunpack.c.l.b16 %v694
      %v1351 = vunpack.c.l.b16 %v695
      %v1352 = vunpack.c.l.b16 %v696
      %v1353 = vunpack.c.l.b16 %v697
      %v1354 = vunpack.c.l.b16 %v698
      %v1355 = vunpack.c.l.b16 %v699
      %v1356 = vunpack.c.l.b16 %v700
      %v1357 = vunpack.c.l.b16 %v701
      %v1358 = vunpack.c.l.b16 %v702
      %v1359 = vunpack.c.l.b16 %v703
      %v1360 = vunpack.c.l.b16 %v704
      %v1361 = vunpack.c.l.b16 %v705
      %v1362 = vunpack.c.l.b16 %v706
      %v1363 = vunpack.c.l.b16 %v707
      %v1364 = vunpack.c.l.b16 %v708
      %v1365 = vunpack.c.l.b16 %v709
      %v1366 = vunpack.c.l.b16 %v710
      %v1367 = vunpack.c.l.b16 %v711
      %v1368 = vunpack.c.l.b16 %v712
      %v1369 = vunpack.c.l.b16 %v713
      %v1370 = vunpack.c.l.b16 %v714
      %v1371 = vunpack.c.l.b16 %v715
      %v1372 = vunpack.c.l.b16 %v716
      %v1373 = vunpack.c.l.b16 %v717
      %v1374 = vunpack.c.l.b16 %v718
      %v1375 = vunpack.c.l.b16 %v719
      %v1376 = vunpack.c.l.b16 %v720
      %v1377 = vunpack.c.l.b16 %v721
      %v1378 = vunpack.c.l.b16 %v722
      %v1379 = vunpack.c.l.b16 %v723
      %v1380 = vunpack.c.l.b16 %v724
      %v1381 = vunpack.c.l.b16 %v725
      %v1382 = vunpack.c.l.b16 %v726
      %v1383 = vunpack.c.l.b16 %v727
      %v1384 = vunpack.c.l.b16 %v728
      %v1385 = vunpack.c.l.b16 %v729
      %v1386 = vunpack.c.l.b16 %v730
      %v1387 = vunpack.c.l.b16 %v731
      %v1388 = vunpack.c.l.b16 %v732
      %v1389 = vunpack.c.l.b16 %v733
      %v1390 = vunpack.c.l.b16 %v734
      %v1391 = vunpack.c.l.b16 %v735
      %v1392 = vunpack.c.l.b16 %v736
      %v1393 = vunpack.c.l.b16 %v737
      %v1394 = vunpack.c.l.b16 %v738
      %v1395 = vunpack.c.l.b16 %v739
      %v1396 = vunpack.c.l.b16 %v740
      %v1397 = vunpack.c.l.b16 %v741
      %v1398 = vunpack.c.l.b16 %v742
      %v1399 = vunpack.c.l.b16 %v743
      %v1400 = vunpack.c.l.b16 %v744
      %v1401 = vunpack.c.l.b16 %v745
      %v1402 = vunpack.c.l.b16 %v746
      %v1403 = vunpack.c.l.b16 %v747
      %v1404 = vunpack.c.l.b16 %v748
      %v1405 = vunpack.c.l.b16 %v749
      %v1406 = vunpack.c.l.b16 %v750
      %v1407 = vunpack.c.l.b16 %v751
      %v1408 = vunpack.c.l.b16 %v752
      %v1409 = vunpack.c.l.b16 %v753
      %v1410 = vunpack.c.l.b16 %v754
      %v1411 = vunpack.c.l.b16 %v755
      %v1412 = vunpack.c.l.b16 %v756
      %v1413 = vunpack.c.l.b16 %v757
      %v1414 = vunpack.c.l.b16 %v758
      %v1415 = vunpack.c.l.b16 %v759
      %v1416 = vunpack.c.l.b16 %v760
      %v1417 = vunpack.c.l.b16 %v761
      %v1418 = vunpack.c.l.b16 %v762
      %v1419 = vunpack.c.l.b16 %v763
      %v1420 = vunpack.c.l.b16 %v764
      %v1421 = vunpack.c.l.b16 %v765
      %v1422 = vunpack.c.l.b16 %v766
      %v1423 = vunpack.c.l.b16 %v767
      %v1424 = vunpack.c.l.b16 %v768
      %v1425 = vunpack.c.l.b16 %v769
      %v1426 = vunpack.c.l.b16 %v770
      %v1427 = vunpack.c.l.b16 %v771
      %v1428 = vunpack.c.l.b16 %v772
      %v1429 = vunpack.c.l.b16 %v773
      %v1430 = vunpack.c.l.b16 %v774
      %v1431 = vunpack.c.l.b16 %v775
      %v1432 = vunpack.c.l.b16 %v776
      %v1433 = vunpack.c.l.b16 %v777
      %v1434 = vunpack.c.l.b16 %v778
      %v1435 = vunpack.c.l.b16 %v779
      %v1436 = vunpack.c.l.b16 %v780
      %v1437 = vunpack.c.l.b16 %v781
      %v1438 = vunpack.c.l.b16 %v782
      %v1439 = vunpack.c.l.b16 %v783
      %v1440 = vunpack.c.l.b16 %v784
      %v1441 = vunpack.c.l.b16 %v785
      %v1442 = vunpack.c.l.b16 %v786
      %v1443 = vunpack.c.l.b16 %v787
      %v1444 = vunpack.c.l.b16 %v788
      %v1445 = vunpack.c.l.b16 %v789
      %v1446 = vunpack.c.l.b16 %v790
      %v1447 = vunpack.c.l.b16 %v791
      %v1448 = vunpack.c.l.b16 %v792
      %v1449 = vunpack.c.l.b16 %v793
      %v1450 = vunpack.c.l.b16 %v794
      %v1451 = vunpack.c.l.b16 %v795
      %v1452 = vunpack.c.l.b16 %v796
      %v1453 = vunpack.c.l.b16 %v797
      %v1454 = vunpack.c.l.b16 %v798
      %v1455 = vunpack.c.l.b16 %v799
      %v1456 = vunpack.c.l.b16 %v800
      %v1457 = vunpack.c.l.b16 %v801
      %v1458 = vunpack.c.l.b16 %v802
      %v1459 = vunpack.c.l.b16 %v803
      %v1460 = vunpack.c.l.b16 %v804
      %v1461 = vunpack.c.l.b16 %v805
      %v1462 = vunpack.c.l.b16 %v806
      %v1463 = vunpack.c.l.b16 %v807
      %v1464 = vunpack.c.l.b16 %v808
      %v1465 = vunpack.c.l.b16 %v809
      %v1466 = vunpack.c.l.b16 %v810
      %v1467 = vunpack.c.l.b16 %v811
      %v1468 = vunpack.c.l.b16 %v812
      %v1469 = vunpack.c.l.b16 %v813
      %v1470 = vunpack.c.l.b16 %v814
      %v1471 = vunpack.c.l.b16 %v815
      %v1472 = vunpack.c.l.b16 %v816
      %v1473 = vunpack.c.l.b16 %v817
      %v1474 = vunpack.c.l.b16 %v818
      %v1475 = vunpack.c.l.b16 %v819
      %v1476 = vpack.c.b16 %v1333, %v1332
      %v1477 = vpack.c.b16 %v1335, %v1334
      %v1478 = vpack.c.b16 %v1337, %v1336
      %v1479 = vpack.c.b16 %v1339, %v1338
      %v1480 = vpack.c.b16 %v1341, %v1340
      %v1481 = vpack.c.b16 %v1343, %v1342
      %v1482 = vpack.c.b16 %v1345, %v1344
      %v1483 = vpack.c.b16 %v1347, %v1346
      %v1484 = vpack.c.b16 %v1349, %v1348
      %v1485 = vpack.c.b16 %v1351, %v1350
      %v1486 = vpack.c.b16 %v1353, %v1352
      %v1487 = vpack.c.b16 %v1355, %v1354
      %v1488 = vpack.c.b16 %v1357, %v1356
      %v1489 = vpack.c.b16 %v1359, %v1358
      %v1490 = vpack.c.b16 %v1361, %v1360
      %v1491 = vpack.c.b16 %v1363, %v1362
      %v1492 = vpack.c.b16 %v1365, %v1364
      %v1493 = vpack.c.b16 %v1367, %v1366
      %v1494 = vpack.c.b16 %v1369, %v1368
      %v1495 = vpack.c.b16 %v1371, %v1370
      %v1496 = vpack.c.b16 %v1373, %v1372
      %v1497 = vpack.c.b16 %v1375, %v1374
      %v1498 = vpack.c.b16 %v1377, %v1376
      %v1499 = vpack.c.b16 %v1379, %v1378
      %v1500 = vpack.c.b16 %v1381, %v1380
      %v1501 = vpack.c.b16 %v1383, %v1382
      %v1502 = vpack.c.b16 %v1385, %v1384
      %v1503 = vpack.c.b16 %v1387, %v1386
      %v1504 = vpack.c.b16 %v1389, %v1388
      %v1505 = vpack.c.b16 %v1391, %v1390
      %v1506 = vpack.c.b16 %v1393, %v1392
      %v1507 = vpack.c.b16 %v1395, %v1394
      %v1508 = vpack.c.b16 %v1397, %v1396
      %v1509 = vpack.c.b16 %v1399, %v1398
      %v1510 = vpack.c.b16 %v1401, %v1400
      %v1511 = vpack.c.b16 %v1403, %v1402
      %v1512 = vpack.c.b16 %v1405, %v1404
      %v1513 = vpack.c.b16 %v1407, %v1406
      %v1514 = vpack.c.b16 %v1409, %v1408
      %v1515 = vpack.c.b16 %v1411, %v1410
      %v1516 = vpack.c.b16 %v1413, %v1412
      %v1517 = vpack.c.b16 %v1415, %v1414
      %v1518 = vpack.c.b16 %v1417, %v1416
      %v1519 = vpack.c.b16 %v1419, %v1418
      %v1520 = vpack.c.b16 %v1421, %v1420
      %v1521 = vpack.c.b16 %v1423, %v1422
      %v1522 = vpack.c.b16 %v1425, %v1424
      %v1523 = vpack.c.b16 %v1427, %v1426
      %v1524 = vpack.c.b16 %v1429, %v1428
      %v1525 = vpack.c.b16 %v1431, %v1430
      %v1526 = vpack.c.b16 %v1433, %v1432
      %v1527 = vpack.c.b16 %v1435, %v1434
      %v1528 = vpack.c.b16 %v1437, %v1436
      %v1529 = vpack.c.b16 %v1439, %v1438
      %v1530 = vpack.c.b16 %v1441, %v1440
      %v1531 = vpack.c.b16 %v1443, %v1442
      %v1532 = vpack.c.b16 %v1445, %v1444
      %v1533 = vpack.c.b16 %v1447, %v1446
      %v1534 = vpack.c.b16 %v1449, %v1448
      %v1535 = vpack.c.b16 %v1451, %v1450
      %v1536 = vpack.c.b16 %v1453, %v1452
      %v1537 = vpack.c.b16 %v1455, %v1454
      %v1538 = vpack.c.b16 %v1457, %v1456
      %v1539 = vpack.c.b16 %v1459, %v1458
      %v1540 = vpack.c.b16 %v1461, %v1460
      %v1541 = vpack.c.b16 %v1463, %v1462
      %v1542 = vpack.c.b16 %v1465, %v1464
      %v1543 = vpack.c.b16 %v1467, %v1466
      %v1544 = vpack.c.b16 %v1469, %v1468
      %v1545 = vpack.c.b16 %v1471, %v1470
      %v1546 = vpack.c.b16 %v1473, %v1472
      %v1547 = vpack.c.b16 %v1475, %v1474
      %1620 = vmatprep.subr.bf16.mxu0 0
      %1621 = vmatpush1.bf16.msra.mxu0 %v1483
      %1622 = vmatprep.subr.bf16.mxu0 0
      %1623 = vmatpush1.bf16.msra.mxu0 %v1482
      %1624 = vmatprep.subr.bf16.mxu0 0
      %1625 = vmatpush1.bf16.msra.mxu0 %v1481
      %1626 = vmatprep.subr.bf16.mxu0 0
      %1627 = vmatpush1.bf16.msra.mxu0 %v1480
      %1628 = vmatprep.subr.bf16.mxu0 0
      %1629 = vmatpush1.bf16.msra.mxu0 %v1479
      %1630 = vmatprep.subr.bf16.mxu0 0
      %1631 = vmatpush1.bf16.msra.mxu0 %v1478
      %1632 = vmatprep.subr.bf16.mxu0 0
      %1633 = vmatpush1.bf16.msra.mxu0 %v1477
      %1634 = vmatprep.subr.bf16.mxu0 0
      %1635 = vmatpush1.bf16.msra.mxu0 %v1476
      %1636 = vmatprep.subr.bf16.mxu0 0
      %1637 = vmatpush2.bf16.msra.mxu0 %v1491
      %1638 = vmatprep.subr.bf16.mxu0 0
      %1639 = vmatpush2.bf16.msra.mxu0 %v1490
      %1640 = vmatprep.subr.bf16.mxu0 0
      %1641 = vmatpush2.bf16.msra.mxu0 %v1489
      %1642 = vmatprep.subr.bf16.mxu0 0
      %1643 = vmatpush2.bf16.msra.mxu0 %v1488
      %1644 = vmatprep.subr.bf16.mxu0 0
      %1645 = vmatpush2.bf16.msra.mxu0 %v1487
      %1646 = vmatprep.subr.bf16.mxu0 0
      %1647 = vmatpush2.bf16.msra.mxu0 %v1486
      %1648 = vmatprep.subr.bf16.mxu0 0
      %1649 = vmatpush2.bf16.msra.mxu0 %v1485
      %1650 = vmatprep.subr.bf16.mxu0 0
      %1651 = vmatpush2.bf16.msra.mxu0 %v1484
      %1652 = vmatprep.mubr.bf16.mxu0 %v1045
      %1653 = vmatmul.mubr.bf16.gmra.mxu0 %v1044
      %v1654 = vpop.f32.mrf.mxu0
      %v1655 = vadd.f32 0.0, %v1654
      %v1656 = vpop.f32.mrf.mxu0
      %v1657 = vpop.f32.mrf.mxu0
      %v1658 = vadd.f32 0.0, %v1657
      %v1659 = vpop.f32.mrf.mxu0
      %1660 = vmatprep.mubr.bf16.mxu0 %v1054
      %1661 = vmatmul.mubr.bf16.gmra.mxu0 %v1053
      %v1662 = vpop.f32.mrf.mxu0
      %v1663 = vadd.f32 0.0, %v1662
      %v1664 = vpop.f32.mrf.mxu0
      %v1665 = vpop.f32.mrf.mxu0
      %v1666 = vadd.f32 0.0, %v1665
      %v1667 = vpop.f32.mrf.mxu0
      %1668 = vmatprep.mubr.bf16.mxu0 %v1063
      %1669 = vmatmul.mubr.bf16.gmra.mxu0 %v1062
      %v1670 = vpop.f32.mrf.mxu0
      %v1671 = vadd.f32 0.0, %v1670
      %v1672 = vpop.f32.mrf.mxu0
      %v1673 = vpop.f32.mrf.mxu0
      %v1674 = vadd.f32 0.0, %v1673
      %v1675 = vpop.f32.mrf.mxu0
      %1676 = vmatprep.mubr.bf16.mxu0 %v1072
      %1677 = vmatmul.mubr.bf16.gmra.mxu0 %v1071
      %v1678 = vpop.f32.mrf.mxu0
      %v1679 = vadd.f32 0.0, %v1678
      %v1680 = vpop.f32.mrf.mxu0
      %v1681 = vpop.f32.mrf.mxu0
      %v1682 = vadd.f32 0.0, %v1681
      %v1683 = vpop.f32.mrf.mxu0
      %1684 = vmatprep.mubr.bf16.mxu0 %v1081
      %1685 = vmatmul.mubr.bf16.gmra.mxu0 %v1080
      %v1686 = vpop.f32.mrf.mxu0
      %v1687 = vadd.f32 0.0, %v1686
      %v1688 = vpop.f32.mrf.mxu0
      %v1689 = vpop.f32.mrf.mxu0
      %v1690 = vadd.f32 0.0, %v1689
      %v1691 = vpop.f32.mrf.mxu0
      %1692 = vmatprep.mubr.bf16.mxu0 %v1090
      %1693 = vmatmul.mubr.bf16.gmra.mxu0 %v1089
      %v1694 = vpop.f32.mrf.mxu0
      %v1695 = vadd.f32 0.0, %v1694
      %v1696 = vpop.f32.mrf.mxu0
      %v1697 = vpop.f32.mrf.mxu0
      %v1698 = vadd.f32 0.0, %v1697
      %v1699 = vpop.f32.mrf.mxu0
      %1700 = vmatprep.mubr.bf16.mxu0 %v1099
      %1701 = vmatmul.mubr.bf16.gmra.mxu0 %v1098
      %v1702 = vpop.f32.mrf.mxu0
      %v1703 = vadd.f32 0.0, %v1702
      %v1704 = vpop.f32.mrf.mxu0
      %v1705 = vpop.f32.mrf.mxu0
      %v1706 = vadd.f32 0.0, %v1705
      %v1707 = vpop.f32.mrf.mxu0
      %1708 = vmatprep.mubr.bf16.mxu0 %v1108
      %1709 = vmatmul.mubr.bf16.gmra.mxu0 %v1107
      %v1710 = vpop.f32.mrf.mxu0
      %v1711 = vadd.f32 0.0, %v1710
      %v1712 = vpop.f32.mrf.mxu0
      %v1713 = vpop.f32.mrf.mxu0
      %v1714 = vadd.f32 0.0, %v1713
      %v1715 = vpop.f32.mrf.mxu0
      %1716 = vdwg.mxu0
      %1717 = vmatprep.subr.bf16.mxu0 0
      %1718 = vmatpush1.bf16.msra.mxu0 %v1499
      %1719 = vmatprep.subr.bf16.mxu0 0
      %1720 = vmatpush1.bf16.msra.mxu0 %v1498
      %1721 = vmatprep.subr.bf16.mxu0 0
      %1722 = vmatpush1.bf16.msra.mxu0 %v1497
      %1723 = vmatprep.subr.bf16.mxu0 0
      %1724 = vmatpush1.bf16.msra.mxu0 %v1496
      %1725 = vmatprep.subr.bf16.mxu0 0
      %1726 = vmatpush1.bf16.msra.mxu0 %v1495
      %1727 = vmatprep.subr.bf16.mxu0 0
      %1728 = vmatpush1.bf16.msra.mxu0 %v1494
      %1729 = vmatprep.subr.bf16.mxu0 0
      %1730 = vmatpush1.bf16.msra.mxu0 %v1493
      %1731 = vmatprep.subr.bf16.mxu0 0
      %1732 = vmatpush1.bf16.msra.mxu0 %v1492
      %1733 = vmatprep.subr.bf16.mxu0 0
      %1734 = vmatpush2.bf16.msra.mxu0 %v1507
      %1735 = vmatprep.subr.bf16.mxu0 0
      %1736 = vmatpush2.bf16.msra.mxu0 %v1506
      %1737 = vmatprep.subr.bf16.mxu0 0
      %1738 = vmatpush2.bf16.msra.mxu0 %v1505
      %1739 = vmatprep.subr.bf16.mxu0 0
      %1740 = vmatpush2.bf16.msra.mxu0 %v1504
      %1741 = vmatprep.subr.bf16.mxu0 0
      %1742 = vmatpush2.bf16.msra.mxu0 %v1503
      %1743 = vmatprep.subr.bf16.mxu0 0
      %1744 = vmatpush2.bf16.msra.mxu0 %v1502
      %1745 = vmatprep.subr.bf16.mxu0 0
      %1746 = vmatpush2.bf16.msra.mxu0 %v1501
      %1747 = vmatprep.subr.bf16.mxu0 0
      %1748 = vmatpush2.bf16.msra.mxu0 %v1500
      %1749 = vmatprep.mubr.bf16.mxu0 %v1047
      %1750 = vmatmul.mubr.bf16.gmra.mxu0 %v1046
      %v1751 = vpop.f32.mrf.mxu0
      %v1752 = vadd.f32 %v1655, %v1751
      %v1753 = vpop.f32.mrf.mxu0
      %v1754 = vpop.f32.mrf.mxu0
      %v1755 = vadd.f32 %v1658, %v1754
      %v1756 = vpop.f32.mrf.mxu0
      %1757 = vmatprep.mubr.bf16.mxu0 %v1056
      %1758 = vmatmul.mubr.bf16.gmra.mxu0 %v1055
      %v1759 = vpop.f32.mrf.mxu0
      %v1760 = vadd.f32 %v1663, %v1759
      %v1761 = vpop.f32.mrf.mxu0
      %v1762 = vpop.f32.mrf.mxu0
      %v1763 = vadd.f32 %v1666, %v1762
      %v1764 = vpop.f32.mrf.mxu0
      %1765 = vmatprep.mubr.bf16.mxu0 %v1065
      %1766 = vmatmul.mubr.bf16.gmra.mxu0 %v1064
      %v1767 = vpop.f32.mrf.mxu0
      %v1768 = vadd.f32 %v1671, %v1767
      %v1769 = vpop.f32.mrf.mxu0
      %v1770 = vpop.f32.mrf.mxu0
      %v1771 = vadd.f32 %v1674, %v1770
      %v1772 = vpop.f32.mrf.mxu0
      %1773 = vmatprep.mubr.bf16.mxu0 %v1074
      %1774 = vmatmul.mubr.bf16.gmra.mxu0 %v1073
      %v1775 = vpop.f32.mrf.mxu0
      %v1776 = vadd.f32 %v1679, %v1775
      %v1777 = vpop.f32.mrf.mxu0
      %v1778 = vpop.f32.mrf.mxu0
      %v1779 = vadd.f32 %v1682, %v1778
      %v1780 = vpop.f32.mrf.mxu0
      %1781 = vmatprep.mubr.bf16.mxu0 %v1083
      %1782 = vmatmul.mubr.bf16.gmra.mxu0 %v1082
      %v1783 = vpop.f32.mrf.mxu0
      %v1784 = vadd.f32 %v1687, %v1783
      %v1785 = vpop.f32.mrf.mxu0
      %v1786 = vpop.f32.mrf.mxu0
      %v1787 = vadd.f32 %v1690, %v1786
      %v1788 = vpop.f32.mrf.mxu0
      %1789 = vmatprep.mubr.bf16.mxu0 %v1092
      %1790 = vmatmul.mubr.bf16.gmra.mxu0 %v1091
      %v1791 = vpop.f32.mrf.mxu0
      %v1792 = vadd.f32 %v1695, %v1791
      %v1793 = vpop.f32.mrf.mxu0
      %v1794 = vpop.f32.mrf.mxu0
      %v1795 = vadd.f32 %v1698, %v1794
      %v1796 = vpop.f32.mrf.mxu0
      %1797 = vmatprep.mubr.bf16.mxu0 %v1101
      %1798 = vmatmul.mubr.bf16.gmra.mxu0 %v1100
      %v1799 = vpop.f32.mrf.mxu0
      %v1800 = vadd.f32 %v1703, %v1799
      %v1801 = vpop.f32.mrf.mxu0
      %v1802 = vpop.f32.mrf.mxu0
      %v1803 = vadd.f32 %v1706, %v1802
      %v1804 = vpop.f32.mrf.mxu0
      %1805 = vmatprep.mubr.bf16.mxu0 %v1110
      %1806 = vmatmul.mubr.bf16.gmra.mxu0 %v1109
      %v1807 = vpop.f32.mrf.mxu0
      %v1808 = vadd.f32 %v1711, %v1807
      %v1809 = vpop.f32.mrf.mxu0
      %v1810 = vpop.f32.mrf.mxu0
      %v1811 = vadd.f32 %v1714, %v1810
      %v1812 = vpop.f32.mrf.mxu0
      %1813 = vdwg.mxu0
      %1814 = vmatprep.subr.bf16.mxu0 0
      %1815 = vmatpush1.bf16.msra.mxu0 %v1515
      %1816 = vmatprep.subr.bf16.mxu0 0
      %1817 = vmatpush1.bf16.msra.mxu0 %v1514
      %1818 = vmatprep.subr.bf16.mxu0 0
      %1819 = vmatpush1.bf16.msra.mxu0 %v1513
      %1820 = vmatprep.subr.bf16.mxu0 0
      %1821 = vmatpush1.bf16.msra.mxu0 %v1512
      %1822 = vmatprep.subr.bf16.mxu0 0
      %1823 = vmatpush1.bf16.msra.mxu0 %v1511
      %1824 = vmatprep.subr.bf16.mxu0 0
      %1825 = vmatpush1.bf16.msra.mxu0 %v1510
      %1826 = vmatprep.subr.bf16.mxu0 0
      %1827 = vmatpush1.bf16.msra.mxu0 %v1509
      %1828 = vmatprep.subr.bf16.mxu0 0
      %1829 = vmatpush1.bf16.msra.mxu0 %v1508
      %1830 = vmatprep.subr.bf16.mxu0 0
      %1831 = vmatpush2.bf16.msra.mxu0 %v1523
      %1832 = vmatprep.subr.bf16.mxu0 0
      %1833 = vmatpush2.bf16.msra.mxu0 %v1522
      %1834 = vmatprep.subr.bf16.mxu0 0
      %1835 = vmatpush2.bf16.msra.mxu0 %v1521
      %1836 = vmatprep.subr.bf16.mxu0 0
      %1837 = vmatpush2.bf16.msra.mxu0 %v1520
      %1838 = vmatprep.subr.bf16.mxu0 0
      %1839 = vmatpush2.bf16.msra.mxu0 %v1519
      %1840 = vmatprep.subr.bf16.mxu0 0
      %1841 = vmatpush2.bf16.msra.mxu0 %v1518
      %1842 = vmatprep.subr.bf16.mxu0 0
      %1843 = vmatpush2.bf16.msra.mxu0 %v1517
      %1844 = vmatprep.subr.bf16.mxu0 0
      %1845 = vmatpush2.bf16.msra.mxu0 %v1516
      %1846 = vmatprep.mubr.bf16.mxu0 %v1049
      %1847 = vmatmul.mubr.bf16.gmra.mxu0 %v1048
      %v1848 = vpop.f32.mrf.mxu0
      %v1849 = vadd.f32 %v1752, %v1848
      %v1850 = vpop.f32.mrf.mxu0
      %v1851 = vpop.f32.mrf.mxu0
      %v1852 = vadd.f32 %v1755, %v1851
      %v1853 = vpop.f32.mrf.mxu0
      %1854 = vmatprep.mubr.bf16.mxu0 %v1058
      %1855 = vmatmul.mubr.bf16.gmra.mxu0 %v1057
      %v1856 = vpop.f32.mrf.mxu0
      %v1857 = vadd.f32 %v1760, %v1856
      %v1858 = vpop.f32.mrf.mxu0
      %v1859 = vpop.f32.mrf.mxu0
      %v1860 = vadd.f32 %v1763, %v1859
      %v1861 = vpop.f32.mrf.mxu0
      %1862 = vmatprep.mubr.bf16.mxu0 %v1067
      %1863 = vmatmul.mubr.bf16.gmra.mxu0 %v1066
      %v1864 = vpop.f32.mrf.mxu0
      %v1865 = vadd.f32 %v1768, %v1864
      %v1866 = vpop.f32.mrf.mxu0
      %v1867 = vpop.f32.mrf.mxu0
      %v1868 = vadd.f32 %v1771, %v1867
      %v1869 = vpop.f32.mrf.mxu0
      %1870 = vmatprep.mubr.bf16.mxu0 %v1076
      %1871 = vmatmul.mubr.bf16.gmra.mxu0 %v1075
      %v1872 = vpop.f32.mrf.mxu0
      %v1873 = vadd.f32 %v1776, %v1872
      %v1874 = vpop.f32.mrf.mxu0
      %v1875 = vpop.f32.mrf.mxu0
      %v1876 = vadd.f32 %v1779, %v1875
      %v1877 = vpop.f32.mrf.mxu0
      %1878 = vmatprep.mubr.bf16.mxu0 %v1085
      %1879 = vmatmul.mubr.bf16.gmra.mxu0 %v1084
      %v1880 = vpop.f32.mrf.mxu0
      %v1881 = vadd.f32 %v1784, %v1880
      %v1882 = vpop.f32.mrf.mxu0
      %v1883 = vpop.f32.mrf.mxu0
      %v1884 = vadd.f32 %v1787, %v1883
      %v1885 = vpop.f32.mrf.mxu0
      %1886 = vmatprep.mubr.bf16.mxu0 %v1094
      %1887 = vmatmul.mubr.bf16.gmra.mxu0 %v1093
      %v1888 = vpop.f32.mrf.mxu0
      %v1889 = vadd.f32 %v1792, %v1888
      %v1890 = vpop.f32.mrf.mxu0
      %v1891 = vpop.f32.mrf.mxu0
      %v1892 = vadd.f32 %v1795, %v1891
      %v1893 = vpop.f32.mrf.mxu0
      %1894 = vmatprep.mubr.bf16.mxu0 %v1103
      %1895 = vmatmul.mubr.bf16.gmra.mxu0 %v1102
      %v1896 = vpop.f32.mrf.mxu0
      %v1897 = vadd.f32 %v1800, %v1896
      %v1898 = vpop.f32.mrf.mxu0
      %v1899 = vpop.f32.mrf.mxu0
      %v1900 = vadd.f32 %v1803, %v1899
      %v1901 = vpop.f32.mrf.mxu0
      %1902 = vmatprep.mubr.bf16.mxu0 %v1112
      %1903 = vmatmul.mubr.bf16.gmra.mxu0 %v1111
      %v1904 = vpop.f32.mrf.mxu0
      %v1905 = vadd.f32 %v1808, %v1904
      %v1906 = vpop.f32.mrf.mxu0
      %v1907 = vpop.f32.mrf.mxu0
      %v1908 = vadd.f32 %v1811, %v1907
      %v1909 = vpop.f32.mrf.mxu0
      %1910 = vdwg.mxu0
      %1911 = vmatprep.subr.bf16.mxu0 0
      %1912 = vmatpush1.bf16.msra.mxu0 %v1531
      %1913 = vmatprep.subr.bf16.mxu0 0
      %1914 = vmatpush1.bf16.msra.mxu0 %v1530
      %1915 = vmatprep.subr.bf16.mxu0 0
      %1916 = vmatpush1.bf16.msra.mxu0 %v1529
      %1917 = vmatprep.subr.bf16.mxu0 0
      %1918 = vmatpush1.bf16.msra.mxu0 %v1528
      %1919 = vmatprep.subr.bf16.mxu0 0
      %1920 = vmatpush1.bf16.msra.mxu0 %v1527
      %1921 = vmatprep.subr.bf16.mxu0 0
      %1922 = vmatpush1.bf16.msra.mxu0 %v1526
      %1923 = vmatprep.subr.bf16.mxu0 0
      %1924 = vmatpush1.bf16.msra.mxu0 %v1525
      %1925 = vmatprep.subr.bf16.mxu0 0
      %1926 = vmatpush1.bf16.msra.mxu0 %v1524
      %1927 = vmatprep.subr.bf16.mxu0 0
      %1928 = vmatpush2.bf16.msra.mxu0 %v1539
      %1929 = vmatprep.subr.bf16.mxu0 0
      %1930 = vmatpush2.bf16.msra.mxu0 %v1538
      %1931 = vmatprep.subr.bf16.mxu0 0
      %1932 = vmatpush2.bf16.msra.mxu0 %v1537
      %1933 = vmatprep.subr.bf16.mxu0 0
      %1934 = vmatpush2.bf16.msra.mxu0 %v1536
      %1935 = vmatprep.subr.bf16.mxu0 0
      %1936 = vmatpush2.bf16.msra.mxu0 %v1535
      %1937 = vmatprep.subr.bf16.mxu0 0
      %1938 = vmatpush2.bf16.msra.mxu0 %v1534
      %1939 = vmatprep.subr.bf16.mxu0 0
      %1940 = vmatpush2.bf16.msra.mxu0 %v1533
      %1941 = vmatprep.subr.bf16.mxu0 0
      %1942 = vmatpush2.bf16.msra.mxu0 %v1532
      %1943 = vmatprep.mubr.bf16.mxu0 %v1051
      %1944 = vmatmul.mubr.bf16.gmra.mxu0 %v1050
      %v1945 = vpop.f32.mrf.mxu0
      %v1946 = vadd.f32 %v1849, %v1945
      %v1947 = vpop.f32.mrf.mxu0
      %v1948 = vpop.f32.mrf.mxu0
      %v1949 = vadd.f32 %v1852, %v1948
      %v1950 = vpop.f32.mrf.mxu0
      %1951 = vmatprep.mubr.bf16.mxu0 %v1060
      %1952 = vmatmul.mubr.bf16.gmra.mxu0 %v1059
      %v1953 = vpop.f32.mrf.mxu0
      %v1954 = vadd.f32 %v1857, %v1953
      %v1955 = vpop.f32.mrf.mxu0
      %v1956 = vpop.f32.mrf.mxu0
      %v1957 = vadd.f32 %v1860, %v1956
      %v1958 = vpop.f32.mrf.mxu0
      %1959 = vmatprep.mubr.bf16.mxu0 %v1069
      %1960 = vmatmul.mubr.bf16.gmra.mxu0 %v1068
      %v1961 = vpop.f32.mrf.mxu0
      %v1962 = vadd.f32 %v1865, %v1961
      %v1963 = vpop.f32.mrf.mxu0
      %v1964 = vpop.f32.mrf.mxu0
      %v1965 = vadd.f32 %v1868, %v1964
      %v1966 = vpop.f32.mrf.mxu0
      %1967 = vmatprep.mubr.bf16.mxu0 %v1078
      %1968 = vmatmul.mubr.bf16.gmra.mxu0 %v1077
      %v1969 = vpop.f32.mrf.mxu0
      %v1970 = vadd.f32 %v1873, %v1969
      %v1971 = vpop.f32.mrf.mxu0
      %v1972 = vpop.f32.mrf.mxu0
      %v1973 = vadd.f32 %v1876, %v1972
      %v1974 = vpop.f32.mrf.mxu0
      %1975 = vmatprep.mubr.bf16.mxu0 %v1087
      %1976 = vmatmul.mubr.bf16.gmra.mxu0 %v1086
      %v1977 = vpop.f32.mrf.mxu0
      %v1978 = vadd.f32 %v1881, %v1977
      %v1979 = vpop.f32.mrf.mxu0
      %v1980 = vpop.f32.mrf.mxu0
      %v1981 = vadd.f32 %v1884, %v1980
      %v1982 = vpop.f32.mrf.mxu0
      %1983 = vmatprep.mubr.bf16.mxu0 %v1096
      %1984 = vmatmul.mubr.bf16.gmra.mxu0 %v1095
      %v1985 = vpop.f32.mrf.mxu0
      %v1986 = vadd.f32 %v1889, %v1985
      %v1987 = vpop.f32.mrf.mxu0
      %v1988 = vpop.f32.mrf.mxu0
      %v1989 = vadd.f32 %v1892, %v1988
      %v1990 = vpop.f32.mrf.mxu0
      %1991 = vmatprep.mubr.bf16.mxu0 %v1105
      %1992 = vmatmul.mubr.bf16.gmra.mxu0 %v1104
      %v1993 = vpop.f32.mrf.mxu0
      %v1994 = vadd.f32 %v1897, %v1993
      %v1995 = vpop.f32.mrf.mxu0
      %v1996 = vpop.f32.mrf.mxu0
      %v1997 = vadd.f32 %v1900, %v1996
      %v1998 = vpop.f32.mrf.mxu0
      %1999 = vmatprep.mubr.bf16.mxu0 %v1114
      %2000 = vmatmul.mubr.bf16.gmra.mxu0 %v1113
      %v2001 = vpop.f32.mrf.mxu0
      %v2002 = vadd.f32 %v1905, %v2001
      %v2003 = vpop.f32.mrf.mxu0
      %v2004 = vpop.f32.mrf.mxu0
      %v2005 = vadd.f32 %v1908, %v2004
      %v2006 = vpop.f32.mrf.mxu0
      %2007 = vdwg.mxu0
      %2008 = vmatprep.subr.bf16.mxu0 0
      %2009 = vmatpush1.bf16.msra.mxu0 %v1547
      %2010 = vmatprep.subr.bf16.mxu0 0
      %2011 = vmatpush1.bf16.msra.mxu0 %v1546
      %2012 = vmatprep.subr.bf16.mxu0 0
      %2013 = vmatpush1.bf16.msra.mxu0 %v1545
      %2014 = vmatprep.subr.bf16.mxu0 0
      %2015 = vmatpush1.bf16.msra.mxu0 %v1544
      %2016 = vmatprep.subr.bf16.mxu0 0
      %2017 = vmatpush1.bf16.msra.mxu0 %v1543
      %2018 = vmatprep.subr.bf16.mxu0 0
      %2019 = vmatpush1.bf16.msra.mxu0 %v1542
      %2020 = vmatprep.subr.bf16.mxu0 0
      %2021 = vmatpush1.bf16.msra.mxu0 %v1541
      %2022 = vmatprep.subr.bf16.mxu0 0
      %2023 = vmatpush1.bf16.msra.mxu0 %v1540
      %2024 = vmatprep.subr.bf16.mxu0 0
      %2025 = vmatpush2.bf16.msra.mxu0 0
      %2026 = vmatprep.subr.bf16.mxu0 0
      %2027 = vmatpush2.bf16.msra.mxu0 0
      %2028 = vmatprep.subr.bf16.mxu0 0
      %2029 = vmatpush2.bf16.msra.mxu0 0
      %2030 = vmatprep.subr.bf16.mxu0 0
      %2031 = vmatpush2.bf16.msra.mxu0 0
      %2032 = vmatprep.subr.bf16.mxu0 0
      %2033 = vmatpush2.bf16.msra.mxu0 0
      %2034 = vmatprep.subr.bf16.mxu0 0
      %2035 = vmatpush2.bf16.msra.mxu0 0
      %2036 = vmatprep.subr.bf16.mxu0 0
      %2037 = vmatpush2.bf16.msra.mxu0 0
      %2038 = vmatprep.subr.bf16.mxu0 0
      %2039 = vmatpush2.bf16.msra.mxu0 0
      %2040 = vmatprep.mubr.bf16.mxu0 0
      %2041 = vmatmul.mubr.bf16.gmra.mxu0 %v1052
      %v2042 = vpop.f32.mrf.mxu0
      %v2043 = vadd.f32 %v1946, %v2042
      %v2044 = vpop.f32.mrf.mxu0
      %v2045 = vpop.f32.mrf.mxu0
      %v2046 = vadd.f32 %v1949, %v2045
      %v2047 = vpop.f32.mrf.mxu0
      %2048 = vmatprep.mubr.bf16.mxu0 0
      %2049 = vmatmul.mubr.bf16.gmra.mxu0 %v1061
      %v2050 = vpop.f32.mrf.mxu0
      %v2051 = vadd.f32 %v1954, %v2050
      %v2052 = vpop.f32.mrf.mxu0
      %v2053 = vpop.f32.mrf.mxu0
      %v2054 = vadd.f32 %v1957, %v2053
      %v2055 = vpop.f32.mrf.mxu0
      %2056 = vmatprep.mubr.bf16.mxu0 0
      %2057 = vmatmul.mubr.bf16.gmra.mxu0 %v1070
      %v2058 = vpop.f32.mrf.mxu0
      %v2059 = vadd.f32 %v1962, %v2058
      %v2060 = vpop.f32.mrf.mxu0
      %v2061 = vpop.f32.mrf.mxu0
      %v2062 = vadd.f32 %v1965, %v2061
      %v2063 = vpop.f32.mrf.mxu0
      %2064 = vmatprep.mubr.bf16.mxu0 0
      %2065 = vmatmul.mubr.bf16.gmra.mxu0 %v1079
      %v2066 = vpop.f32.mrf.mxu0
      %v2067 = vadd.f32 %v1970, %v2066
      %v2068 = vpop.f32.mrf.mxu0
      %v2069 = vpop.f32.mrf.mxu0
      %v2070 = vadd.f32 %v1973, %v2069
      %v2071 = vpop.f32.mrf.mxu0
      %2072 = vmatprep.mubr.bf16.mxu0 0
      %2073 = vmatmul.mubr.bf16.gmra.mxu0 %v1088
      %v2074 = vpop.f32.mrf.mxu0
      %v2075 = vadd.f32 %v1978, %v2074
      %v2076 = vpop.f32.mrf.mxu0
      %v2077 = vpop.f32.mrf.mxu0
      %v2078 = vadd.f32 %v1981, %v2077
      %v2079 = vpop.f32.mrf.mxu0
      %2080 = vmatprep.mubr.bf16.mxu0 0
      %2081 = vmatmul.mubr.bf16.gmra.mxu0 %v1097
      %v2082 = vpop.f32.mrf.mxu0
      %v2083 = vadd.f32 %v1986, %v2082
      %v2084 = vpop.f32.mrf.mxu0
      %v2085 = vpop.f32.mrf.mxu0
      %v2086 = vadd.f32 %v1989, %v2085
      %v2087 = vpop.f32.mrf.mxu0
      %2088 = vmatprep.mubr.bf16.mxu0 0
      %2089 = vmatmul.mubr.bf16.gmra.mxu0 %v1106
      %v2090 = vpop.f32.mrf.mxu0
      %v2091 = vadd.f32 %v1994, %v2090
      %v2092 = vpop.f32.mrf.mxu0
      %v2093 = vpop.f32.mrf.mxu0
      %v2094 = vadd.f32 %v1997, %v2093
      %v2095 = vpop.f32.mrf.mxu0
      %2096 = vmatprep.mubr.bf16.mxu0 0
      %2097 = vmatmul.mubr.bf16.gmra.mxu0 %v1115
      %v2098 = vpop.f32.mrf.mxu0
      %v2099 = vadd.f32 %v2002, %v2098
      %v2100 = vpop.f32.mrf.mxu0
      %v2101 = vpop.f32.mrf.mxu0
      %v2102 = vadd.f32 %v2005, %v2101
      %v2103 = vpop.f32.mrf.mxu0
      %2104 = vdwg.mxu0
      %2105 = vst [vmem:[#allocation3] sm:$0xff] %v2043
      %2106 = vst [vmem:[#allocation3 + $0x8] sm:$0xff] %v2046
      %2107 = vst [vmem:[#allocation3 + $0x10] sm:$0xff] %v2051
      %2108 = vst [vmem:[#allocation3 + $0x18] sm:$0xff] %v2054
      %2109 = vst [vmem:[#allocation3 + $0x20] sm:$0xff] %v2059
      %2110 = vst [vmem:[#allocation3 + $0x28] sm:$0xff] %v2062
      %2111 = vst [vmem:[#allocation3 + $0x30] sm:$0xff] %v2067
      %2112 = vst [vmem:[#allocation3 + $0x38] sm:$0xff] %v2070
      %2113 = vst [vmem:[#allocation3 + $0x40] sm:$0xff] %v2075
      %2114 = vst [vmem:[#allocation3 + $0x48] sm:$0xff] %v2078
      %2115 = vst [vmem:[#allocation3 + $0x50] sm:$0xff] %v2083
      %2116 = vst [vmem:[#allocation3 + $0x58] sm:$0xff] %v2086
      %2117 = vst [vmem:[#allocation3 + $0x60] sm:$0xff] %v2091
      %2118 = vst [vmem:[#allocation3 + $0x68] sm:$0xff] %v2094
      %2119 = vst [vmem:[#allocation3 + $0x70] sm:$0xff] %v2099
      %2120 = vst [vmem:[#allocation3 + $0x78] sm:$0xff] %v2102
      %v2121 = vld [vmem:[#allocation3] sm:$0xff]
      %v2122 = vld [vmem:[#allocation3 + $0x8] sm:$0xff]
      %v2123 = vld [vmem:[#allocation3 + $0x10] sm:$0xff]
      %v2124 = vld [vmem:[#allocation3 + $0x18] sm:$0xff]
      %v2125 = vld [vmem:[#allocation3 + $0x20] sm:$0xff]
      %v2126 = vld [vmem:[#allocation3 + $0x28] sm:$0xff]
      %v2127 = vld [vmem:[#allocation3 + $0x30] sm:$0xff]
      %v2128 = vld [vmem:[#allocation3 + $0x38] sm:$0xff]
      %v2129 = vld [vmem:[#allocation3 + $0x40] sm:$0xff]
      %v2130 = vld [vmem:[#allocation3 + $0x48] sm:$0xff]
      %v2131 = vld [vmem:[#allocation3 + $0x50] sm:$0xff]
      %v2132 = vld [vmem:[#allocation3 + $0x58] sm:$0xff]
      %v2133 = vld [vmem:[#allocation3 + $0x60] sm:$0xff]
      %v2134 = vld [vmem:[#allocation3 + $0x68] sm:$0xff]
      %v2135 = vld [vmem:[#allocation3 + $0x70] sm:$0xff]
      %v2136 = vld [vmem:[#allocation3 + $0x78] sm:$0xff]
      %v2137 = vld [vmem:[%s2] sm:$0x1]
      %v2139 = vlaneseq
      %v2140 = vshrl.u32 %v2139, 7
      %v2141 = vsub.s32 0, %v2140
      %v2142 = vrot.slane %v2137, %v2141
      %v2144 = vadd.f32 %v2121, %v2142
      %v2145 = vadd.f32 %v2122, %v2142
      %v2146 = vadd.f32 %v2123, %v2142
      %v2147 = vadd.f32 %v2124, %v2142
      %v2148 = vadd.f32 %v2125, %v2142
      %v2149 = vadd.f32 %v2126, %v2142
      %v2150 = vadd.f32 %v2127, %v2142
      %v2151 = vadd.f32 %v2128, %v2142
      %v2152 = vadd.f32 %v2129, %v2142
      %v2153 = vadd.f32 %v2130, %v2142
      %v2154 = vadd.f32 %v2131, %v2142
      %v2155 = vadd.f32 %v2132, %v2142
      %v2156 = vadd.f32 %v2133, %v2142
      %v2157 = vadd.f32 %v2134, %v2142
      %v2158 = vadd.f32 %v2135, %v2142
      %v2159 = vadd.f32 %v2136, %v2142
      %v2160 = vmax.f32 %v2144, 0.0
      %v2161 = vmax.f32 %v2145, 0.0
      %v2162 = vmax.f32 %v2146, 0.0
      %v2163 = vmax.f32 %v2147, 0.0
      %v2164 = vmax.f32 %v2148, 0.0
      %v2165 = vmax.f32 %v2149, 0.0
      %v2166 = vmax.f32 %v2150, 0.0
      %v2167 = vmax.f32 %v2151, 0.0
      %v2168 = vmax.f32 %v2152, 0.0
      %v2169 = vmax.f32 %v2153, 0.0
      %v2170 = vmax.f32 %v2154, 0.0
      %v2171 = vmax.f32 %v2155, 0.0
      %v2172 = vmax.f32 %v2156, 0.0
      %v2173 = vmax.f32 %v2157, 0.0
      %v2174 = vmax.f32 %v2158, 0.0
      %v2175 = vmax.f32 %v2159, 0.0
      %2176 = vst [vmem:[#allocation3] sm:$0xff] %v2160
      %2177 = vst [vmem:[#allocation3 + $0x8] sm:$0xff] %v2161
      %2178 = vst [vmem:[#allocation3 + $0x10] sm:$0xff] %v2162
      %2179 = vst [vmem:[#allocation3 + $0x18] sm:$0xff] %v2163
      %2180 = vst [vmem:[#allocation3 + $0x20] sm:$0xff] %v2164
      %2181 = vst [vmem:[#allocation3 + $0x28] sm:$0xff] %v2165
      %2182 = vst [vmem:[#allocation3 + $0x30] sm:$0xff] %v2166
      %2183 = vst [vmem:[#allocation3 + $0x38] sm:$0xff] %v2167
      %2184 = vst [vmem:[#allocation3 + $0x40] sm:$0xff] %v2168
      %2185 = vst [vmem:[#allocation3 + $0x48] sm:$0xff] %v2169
      %2186 = vst [vmem:[#allocation3 + $0x50] sm:$0xff] %v2170
      %2187 = vst [vmem:[#allocation3 + $0x58] sm:$0xff] %v2171
      %2188 = vst [vmem:[#allocation3 + $0x60] sm:$0xff] %v2172
      %2189 = vst [vmem:[#allocation3 + $0x68] sm:$0xff] %v2173
      %2190 = vst [vmem:[#allocation3 + $0x70] sm:$0xff] %v2174
      %2191 = vst [vmem:[#allocation3 + $0x78] sm:$0xff] %v2175
      %2192 = vst [vmem:[#allocation3 + $0x8] sm:$0xff] 0.0
      %2193 = vst [vmem:[#allocation3 + $0x18] sm:$0xff] 0.0
      %2194 = vst [vmem:[#allocation3 + $0x28] sm:$0xff] 0.0
      %2195 = vst [vmem:[#allocation3 + $0x38] sm:$0xff] 0.0
      %2196 = vst [vmem:[#allocation3 + $0x48] sm:$0xff] 0.0
      %2197 = vst [vmem:[#allocation3 + $0x58] sm:$0xff] 0.0
      %2198 = vst [vmem:[#allocation3 + $0x68] sm:$0xff] 0.0
      %2199 = vst [vmem:[#allocation3 + $0x78] sm:$0xff] 0.0
      %v2200 = vld [vmem:[#allocation3] sm:$0xff]
      %v2201 = vld [vmem:[#allocation3 + $0x8] sm:$0xff]
      %v2202 = vld [vmem:[#allocation3 + $0x10] sm:$0xff]
      %v2203 = vld [vmem:[#allocation3 + $0x18] sm:$0xff]
      %v2204 = vld [vmem:[#allocation3 + $0x20] sm:$0xff]
      %v2205 = vld [vmem:[#allocation3 + $0x28] sm:$0xff]
      %v2206 = vld [vmem:[#allocation3 + $0x30] sm:$0xff]
      %v2207 = vld [vmem:[#allocation3 + $0x38] sm:$0xff]
      %v2208 = vld [vmem:[#allocation3 + $0x40] sm:$0xff]
      %v2209 = vld [vmem:[#allocation3 + $0x48] sm:$0xff]
      %v2210 = vld [vmem:[#allocation3 + $0x50] sm:$0xff]
      %v2211 = vld [vmem:[#allocation3 + $0x58] sm:$0xff]
      %v2212 = vld [vmem:[#allocation3 + $0x60] sm:$0xff]
      %v2213 = vld [vmem:[#allocation3 + $0x68] sm:$0xff]
      %v2214 = vld [vmem:[#allocation3 + $0x70] sm:$0xff]
      %v2215 = vld [vmem:[#allocation3 + $0x78] sm:$0xff]
      %v2216 = vrot.slane %v2200, 7
      %v2217 = vrot.slane %v2202, 7
      %v2218 = vrot.slane %v2204, 7
      %v2219 = vrot.slane %v2206, 7
      %v2220 = vrot.slane %v2208, 7
      %v2221 = vrot.slane %v2210, 7
      %v2222 = vrot.slane %v2212, 7
      %v2223 = vrot.slane %v2214, 7
      %v2224 = vrot.slane %v2201, 7
      %v2225 = vrot.slane %v2203, 7
      %v2226 = vrot.slane %v2205, 7
      %v2227 = vrot.slane %v2207, 7
      %v2228 = vrot.slane %v2209, 7
      %v2229 = vrot.slane %v2211, 7
      %v2230 = vrot.slane %v2213, 7
      %v2231 = vrot.slane %v2215, 7
      %v2232 = vsel %vm285, %v2216, %v2224
      %v2233 = vsel %vm285, %v2217, %v2225
      %v2234 = vsel %vm285, %v2218, %v2226
      %v2235 = vsel %vm285, %v2219, %v2227
      %v2236 = vsel %vm285, %v2220, %v2228
      %v2237 = vsel %vm285, %v2221, %v2229
      %v2238 = vsel %vm285, %v2222, %v2230
      %v2239 = vsel %vm285, %v2223, %v2231
      %v2240 = vsel %vm285, %v2224, %v2216
      %v2241 = vsel %vm285, %v2225, %v2217
      %v2242 = vsel %vm285, %v2226, %v2218
      %v2243 = vsel %vm285, %v2227, %v2219
      %v2244 = vsel %vm285, %v2228, %v2220
      %v2245 = vsel %vm285, %v2229, %v2221
      %v2246 = vsel %vm285, %v2230, %v2222
      %v2247 = vsel %vm285, %v2231, %v2223
      %v2248 = vpack.c.bf16 %v2232, %v2240
      %v2249 = vpack.c.bf16 %v2233, %v2241
      %v2250 = vpack.c.bf16 %v2234, %v2242
      %v2251 = vpack.c.bf16 %v2235, %v2243
      %v2252 = vpack.c.bf16 %v2236, %v2244
      %v2253 = vpack.c.bf16 %v2237, %v2245
      %v2254 = vpack.c.bf16 %v2238, %v2246
      %v2255 = vpack.c.bf16 %v2239, %v2247
      %v2264 = vunpack.c.l.b16 %v2248
      %v2265 = vunpack.c.h.b16 %v2248
      %v2266 = vunpack.c.l.b16 %v2249
      %v2267 = vunpack.c.h.b16 %v2249
      %v2268 = vunpack.c.l.b16 %v2250
      %v2269 = vunpack.c.h.b16 %v2250
      %v2270 = vunpack.c.l.b16 %v2251
      %v2271 = vunpack.c.h.b16 %v2251
      %v2272 = vunpack.c.l.b16 %v2252
      %v2273 = vunpack.c.h.b16 %v2252
      %v2274 = vunpack.c.l.b16 %v2253
      %v2275 = vunpack.c.h.b16 %v2253
      %v2276 = vunpack.c.l.b16 %v2254
      %v2277 = vunpack.c.h.b16 %v2254
      %v2278 = vunpack.c.l.b16 %v2255
      %v2279 = vunpack.c.h.b16 %v2255
      %v2280 = vpack.c.b16 %v2264, %v2264
      %v2281 = vpack.c.b16 %v2265, %v2265
      %v2282 = vpack.c.b16 %v2266, %v2266
      %v2283 = vpack.c.b16 %v2267, %v2267
      %v2284 = vpack.c.b16 %v2268, %v2268
      %v2285 = vpack.c.b16 %v2269, %v2269
      %v2286 = vpack.c.b16 %v2270, %v2270
      %v2287 = vpack.c.b16 %v2271, %v2271
      %v2288 = vpack.c.b16 %v2272, %v2272
      %v2289 = vpack.c.b16 %v2273, %v2273
      %v2290 = vpack.c.b16 %v2274, %v2274
      %v2291 = vpack.c.b16 %v2275, %v2275
      %v2292 = vpack.c.b16 %v2276, %v2276
      %v2293 = vpack.c.b16 %v2277, %v2277
      %v2294 = vpack.c.b16 %v2278, %v2278
      %v2295 = vpack.c.b16 %v2279, %v2279
      %2312 = vst [vmem:[#allocation2 + $0xc] sm:$0xf] %v2280
      %2313 = vst [vmem:[#allocation2 + $0x30] sm:$0xf] %v2281
      %2314 = vst [vmem:[#allocation2 + $0x54] sm:$0xf] %v2282
      %2315 = vst [vmem:[#allocation2 + $0x78] sm:$0xf] %v2283
      %2316 = vst [vmem:[#allocation2 + $0x9c] sm:$0xf] %v2284
      %2317 = vst [vmem:[#allocation2 + $0xc0] sm:$0xf] %v2285
      %2318 = vst [vmem:[#allocation2 + $0xe4] sm:$0xf] %v2286
      %2319 = vst [vmem:[#allocation2 + $0x108] sm:$0xf] %v2287
      %2320 = vst [vmem:[#allocation2 + $0x12c] sm:$0xf] %v2288
      %2321 = vst [vmem:[#allocation2 + $0x150] sm:$0xf] %v2289
      %2322 = vst [vmem:[#allocation2 + $0x174] sm:$0xf] %v2290
      %2323 = vst [vmem:[#allocation2 + $0x198] sm:$0xf] %v2291
      %2324 = vst [vmem:[#allocation2 + $0x1bc] sm:$0xf] %v2292
      %2325 = vst [vmem:[#allocation2 + $0x1e0] sm:$0xf] %v2293
      %2326 = vst [vmem:[#allocation2 + $0x204] sm:$0xf] %v2294
      %2327 = vst [vmem:[#allocation2 + $0x228] sm:$0xf] %v2295
      %2328 = vst [vmem:[%s382] sm:$0xf] %v2280
      %2329 = vst [vmem:[%s382 + $0x24] sm:$0xf] %v2281
      %2330 = vst [vmem:[%s382 + $0x48] sm:$0xf] %v2282
      %2331 = vst [vmem:[%s382 + $0x6c] sm:$0xf] %v2283
      %2332 = vst [vmem:[%s382 + $0x90] sm:$0xf] %v2284
      %2333 = vst [vmem:[%s382 + $0xb4] sm:$0xf] %v2285
      %2334 = vst [vmem:[%s382 + $0xd8] sm:$0xf] %v2286
      %2335 = vst [vmem:[%s382 + $0xfc] sm:$0xf] %v2287
      %2336 = vst [vmem:[%s382 + $0x120] sm:$0xf] %v2288
      %2337 = vst [vmem:[%s382 + $0x144] sm:$0xf] %v2289
      %2338 = vst [vmem:[%s382 + $0x168] sm:$0xf] %v2290
      %2339 = vst [vmem:[%s382 + $0x18c] sm:$0xf] %v2291
      %2340 = vst [vmem:[%s382 + $0x1b0] sm:$0xf] %v2292
      %2341 = vst [vmem:[%s382 + $0x1d4] sm:$0xf] %v2293
      %2342 = vst [vmem:[#allocation2 + $0x18] sm:$0xf] %v2282
      %2343 = vst [vmem:[#allocation2 + $0x3c] sm:$0xf] %v2283
      %2344 = vst [vmem:[#allocation2 + $0x60] sm:$0xf] %v2284
      %2345 = vst [vmem:[#allocation2 + $0x84] sm:$0xf] %v2285
      %2346 = vst [vmem:[#allocation2 + $0xa8] sm:$0xf] %v2286
      %2347 = vst [vmem:[#allocation2 + $0xcc] sm:$0xf] %v2287
      %2348 = vst [vmem:[#allocation2 + $0xf0] sm:$0xf] %v2288
      %2349 = vst [vmem:[#allocation2 + $0x114] sm:$0xf] %v2289
      %2350 = vst [vmem:[#allocation2 + $0x138] sm:$0xf] %v2290
      %2351 = vst [vmem:[#allocation2 + $0x15c] sm:$0xf] %v2291
      %2352 = vst [vmem:[#allocation2 + $0x180] sm:$0xf] %v2292
      %2353 = vst [vmem:[#allocation2 + $0x1a4] sm:$0xf] %v2293
      %2354 = vst [vmem:[#allocation2 + $0x1c8] sm:$0xf] %v2294
      %2355 = vst [vmem:[#allocation2 + $0x1ec] sm:$0xf] %v2295
      %v2356 = vpack.c.bf16 %v2201, %v2200
      %v2357 = vpack.c.bf16 %v2203, %v2202
      %v2358 = vpack.c.bf16 %v2205, %v2204
      %v2359 = vpack.c.bf16 %v2207, %v2206
      %v2360 = vpack.c.bf16 %v2209, %v2208
      %v2361 = vpack.c.bf16 %v2211, %v2210
      %v2362 = vpack.c.bf16 %v2213, %v2212
      %v2363 = vpack.c.bf16 %v2215, %v2214
      %v2372 = vunpack.c.l.b16 %v2356
      %v2373 = vunpack.c.h.b16 %v2356
      %v2374 = vunpack.c.l.b16 %v2357
      %v2375 = vunpack.c.h.b16 %v2357
      %v2376 = vunpack.c.l.b16 %v2358
      %v2377 = vunpack.c.h.b16 %v2358
      %v2378 = vunpack.c.l.b16 %v2359
      %v2379 = vunpack.c.h.b16 %v2359
      %v2380 = vunpack.c.l.b16 %v2360
      %v2381 = vunpack.c.h.b16 %v2360
      %v2382 = vunpack.c.l.b16 %v2361
      %v2383 = vunpack.c.h.b16 %v2361
      %v2384 = vunpack.c.l.b16 %v2362
      %v2385 = vunpack.c.h.b16 %v2362
      %v2386 = vunpack.c.l.b16 %v2363
      %v2387 = vunpack.c.h.b16 %v2363
      %v2388 = vpack.c.b16 %v2372, %v2372
      %v2389 = vpack.c.b16 %v2373, %v2373
      %v2390 = vpack.c.b16 %v2374, %v2374
      %v2391 = vpack.c.b16 %v2375, %v2375
      %v2392 = vpack.c.b16 %v2376, %v2376
      %v2393 = vpack.c.b16 %v2377, %v2377
      %v2394 = vpack.c.b16 %v2378, %v2378
      %v2395 = vpack.c.b16 %v2379, %v2379
      %v2396 = vpack.c.b16 %v2380, %v2380
      %v2397 = vpack.c.b16 %v2381, %v2381
      %v2398 = vpack.c.b16 %v2382, %v2382
      %v2399 = vpack.c.b16 %v2383, %v2383
      %v2400 = vpack.c.b16 %v2384, %v2384
      %v2401 = vpack.c.b16 %v2385, %v2385
      %v2402 = vpack.c.b16 %v2386, %v2386
      %v2403 = vpack.c.b16 %v2387, %v2387
      %2420 = vst [vmem:[#allocation2 + $0x10] sm:$0xf] %v2388
      %2421 = vst [vmem:[#allocation2 + $0x34] sm:$0xf] %v2389
      %2422 = vst [vmem:[#allocation2 + $0x58] sm:$0xf] %v2390
      %2423 = vst [vmem:[#allocation2 + $0x7c] sm:$0xf] %v2391
      %2424 = vst [vmem:[#allocation2 + $0xa0] sm:$0xf] %v2392
      %2425 = vst [vmem:[#allocation2 + $0xc4] sm:$0xf] %v2393
      %2426 = vst [vmem:[#allocation2 + $0xe8] sm:$0xf] %v2394
      %2427 = vst [vmem:[#allocation2 + $0x10c] sm:$0xf] %v2395
      %2428 = vst [vmem:[#allocation2 + $0x130] sm:$0xf] %v2396
      %2429 = vst [vmem:[#allocation2 + $0x154] sm:$0xf] %v2397
      %2430 = vst [vmem:[#allocation2 + $0x178] sm:$0xf] %v2398
      %2431 = vst [vmem:[#allocation2 + $0x19c] sm:$0xf] %v2399
      %2432 = vst [vmem:[#allocation2 + $0x1c0] sm:$0xf] %v2400
      %2433 = vst [vmem:[#allocation2 + $0x1e4] sm:$0xf] %v2401
      %2434 = vst [vmem:[#allocation2 + $0x208] sm:$0xf] %v2402
      %2435 = vst [vmem:[#allocation2 + $0x22c] sm:$0xf] %v2403
      %2436 = vst [vmem:[%s382 + $0x4] sm:$0xf] %v2388
      %2437 = vst [vmem:[%s382 + $0x28] sm:$0xf] %v2389
      %2438 = vst [vmem:[%s382 + $0x4c] sm:$0xf] %v2390
      %2439 = vst [vmem:[%s382 + $0x70] sm:$0xf] %v2391
      %2440 = vst [vmem:[%s382 + $0x94] sm:$0xf] %v2392
      %2441 = vst [vmem:[%s382 + $0xb8] sm:$0xf] %v2393
      %2442 = vst [vmem:[%s382 + $0xdc] sm:$0xf] %v2394
      %2443 = vst [vmem:[%s382 + $0x100] sm:$0xf] %v2395
      %2444 = vst [vmem:[%s382 + $0x124] sm:$0xf] %v2396
      %2445 = vst [vmem:[%s382 + $0x148] sm:$0xf] %v2397
      %2446 = vst [vmem:[%s382 + $0x16c] sm:$0xf] %v2398
      %2447 = vst [vmem:[%s382 + $0x190] sm:$0xf] %v2399
      %2448 = vst [vmem:[%s382 + $0x1b4] sm:$0xf] %v2400
      %2449 = vst [vmem:[%s382 + $0x1d8] sm:$0xf] %v2401
      %2450 = vst [vmem:[#allocation2 + $0x1c] sm:$0xf] %v2390
      %2451 = vst [vmem:[#allocation2 + $0x40] sm:$0xf] %v2391
      %2452 = vst [vmem:[#allocation2 + $0x64] sm:$0xf] %v2392
      %2453 = vst [vmem:[#allocation2 + $0x88] sm:$0xf] %v2393
      %2454 = vst [vmem:[#allocation2 + $0xac] sm:$0xf] %v2394
      %2455 = vst [vmem:[#allocation2 + $0xd0] sm:$0xf] %v2395
      %2456 = vst [vmem:[#allocation2 + $0xf4] sm:$0xf] %v2396
      %2457 = vst [vmem:[#allocation2 + $0x118] sm:$0xf] %v2397
      %2458 = vst [vmem:[#allocation2 + $0x13c] sm:$0xf] %v2398
      %2459 = vst [vmem:[#allocation2 + $0x160] sm:$0xf] %v2399
      %2460 = vst [vmem:[#allocation2 + $0x184] sm:$0xf] %v2400
      %2461 = vst [vmem:[#allocation2 + $0x1a8] sm:$0xf] %v2401
      %2462 = vst [vmem:[#allocation2 + $0x1cc] sm:$0xf] %v2402
      %2463 = vst [vmem:[#allocation2 + $0x1f0] sm:$0xf] %v2403
      %v2464 = vrot.slane %v2200, 1
      %v2465 = vrot.slane %v2202, 1
      %v2466 = vrot.slane %v2204, 1
      %v2467 = vrot.slane %v2206, 1
      %v2468 = vrot.slane %v2208, 1
      %v2469 = vrot.slane %v2210, 1
      %v2470 = vrot.slane %v2212, 1
      %v2471 = vrot.slane %v2214, 1
      %v2472 = vrot.slane %v2201, 1
      %v2473 = vrot.slane %v2203, 1
      %v2474 = vrot.slane %v2205, 1
      %v2475 = vrot.slane %v2207, 1
      %v2476 = vrot.slane %v2209, 1
      %v2477 = vrot.slane %v2211, 1
      %v2478 = vrot.slane %v2213, 1
      %v2479 = vrot.slane %v2215, 1
      %v2480 = vsel %vm471, %v2464, %v2472
      %v2481 = vsel %vm471, %v2465, %v2473
      %v2482 = vsel %vm471, %v2466, %v2474
      %v2483 = vsel %vm471, %v2467, %v2475
      %v2484 = vsel %vm471, %v2468, %v2476
      %v2485 = vsel %vm471, %v2469, %v2477
      %v2486 = vsel %vm471, %v2470, %v2478
      %v2487 = vsel %vm471, %v2471, %v2479
      %v2488 = vsel %vm471, %v2472, %v2464
      %v2489 = vsel %vm471, %v2473, %v2465
      %v2490 = vsel %vm471, %v2474, %v2466
      %v2491 = vsel %vm471, %v2475, %v2467
      %v2492 = vsel %vm471, %v2476, %v2468
      %v2493 = vsel %vm471, %v2477, %v2469
      %v2494 = vsel %vm471, %v2478, %v2470
      %v2495 = vsel %vm471, %v2479, %v2471
      %v2496 = vpack.c.bf16 %v2488, %v2480
      %v2497 = vpack.c.bf16 %v2489, %v2481
      %v2498 = vpack.c.bf16 %v2490, %v2482
      %v2499 = vpack.c.bf16 %v2491, %v2483
      %v2500 = vpack.c.bf16 %v2492, %v2484
      %v2501 = vpack.c.bf16 %v2493, %v2485
      %v2502 = vpack.c.bf16 %v2494, %v2486
      %v2503 = vpack.c.bf16 %v2495, %v2487
      %v2512 = vunpack.c.l.b16 %v2496
      %v2513 = vunpack.c.h.b16 %v2496
      %v2514 = vunpack.c.l.b16 %v2497
      %v2515 = vunpack.c.h.b16 %v2497
      %v2516 = vunpack.c.l.b16 %v2498
      %v2517 = vunpack.c.h.b16 %v2498
      %v2518 = vunpack.c.l.b16 %v2499
      %v2519 = vunpack.c.h.b16 %v2499
      %v2520 = vunpack.c.l.b16 %v2500
      %v2521 = vunpack.c.h.b16 %v2500
      %v2522 = vunpack.c.l.b16 %v2501
      %v2523 = vunpack.c.h.b16 %v2501
      %v2524 = vunpack.c.l.b16 %v2502
      %v2525 = vunpack.c.h.b16 %v2502
      %v2526 = vunpack.c.l.b16 %v2503
      %v2527 = vunpack.c.h.b16 %v2503
      %v2528 = vpack.c.b16 %v2512, %v2512
      %v2529 = vpack.c.b16 %v2513, %v2513
      %v2530 = vpack.c.b16 %v2514, %v2514
      %v2531 = vpack.c.b16 %v2515, %v2515
      %v2532 = vpack.c.b16 %v2516, %v2516
      %v2533 = vpack.c.b16 %v2517, %v2517
      %v2534 = vpack.c.b16 %v2518, %v2518
      %v2535 = vpack.c.b16 %v2519, %v2519
      %v2536 = vpack.c.b16 %v2520, %v2520
      %v2537 = vpack.c.b16 %v2521, %v2521
      %v2538 = vpack.c.b16 %v2522, %v2522
      %v2539 = vpack.c.b16 %v2523, %v2523
      %v2540 = vpack.c.b16 %v2524, %v2524
      %v2541 = vpack.c.b16 %v2525, %v2525
      %v2542 = vpack.c.b16 %v2526, %v2526
      %v2543 = vpack.c.b16 %v2527, %v2527
      %2560 = vst [vmem:[#allocation2 + $0x14] sm:$0xf] %v2528
      %2561 = vst [vmem:[#allocation2 + $0x38] sm:$0xf] %v2529
      %2562 = vst [vmem:[#allocation2 + $0x5c] sm:$0xf] %v2530
      %2563 = vst [vmem:[#allocation2 + $0x80] sm:$0xf] %v2531
      %2564 = vst [vmem:[#allocation2 + $0xa4] sm:$0xf] %v2532
      %2565 = vst [vmem:[#allocation2 + $0xc8] sm:$0xf] %v2533
      %2566 = vst [vmem:[#allocation2 + $0xec] sm:$0xf] %v2534
      %2567 = vst [vmem:[#allocation2 + $0x110] sm:$0xf] %v2535
      %2568 = vst [vmem:[#allocation2 + $0x134] sm:$0xf] %v2536
      %2569 = vst [vmem:[#allocation2 + $0x158] sm:$0xf] %v2537
      %2570 = vst [vmem:[#allocation2 + $0x17c] sm:$0xf] %v2538
      %2571 = vst [vmem:[#allocation2 + $0x1a0] sm:$0xf] %v2539
      %2572 = vst [vmem:[#allocation2 + $0x1c4] sm:$0xf] %v2540
      %2573 = vst [vmem:[#allocation2 + $0x1e8] sm:$0xf] %v2541
      %2574 = vst [vmem:[#allocation2 + $0x20c] sm:$0xf] %v2542
      %2575 = vst [vmem:[#allocation2 + $0x230] sm:$0xf] %v2543
      %2576 = vst [vmem:[%s382 + $0x8] sm:$0xf] %v2528
      %2577 = vst [vmem:[%s382 + $0x2c] sm:$0xf] %v2529
      %2578 = vst [vmem:[%s382 + $0x50] sm:$0xf] %v2530
      %2579 = vst [vmem:[%s382 + $0x74] sm:$0xf] %v2531
      %2580 = vst [vmem:[%s382 + $0x98] sm:$0xf] %v2532
      %2581 = vst [vmem:[%s382 + $0xbc] sm:$0xf] %v2533
      %2582 = vst [vmem:[%s382 + $0xe0] sm:$0xf] %v2534
      %2583 = vst [vmem:[%s382 + $0x104] sm:$0xf] %v2535
      %2584 = vst [vmem:[%s382 + $0x128] sm:$0xf] %v2536
      %2585 = vst [vmem:[%s382 + $0x14c] sm:$0xf] %v2537
      %2586 = vst [vmem:[%s382 + $0x170] sm:$0xf] %v2538
      %2587 = vst [vmem:[%s382 + $0x194] sm:$0xf] %v2539
      %2588 = vst [vmem:[%s382 + $0x1b8] sm:$0xf] %v2540
      %2589 = vst [vmem:[%s382 + $0x1dc] sm:$0xf] %v2541
      %2590 = vst [vmem:[#allocation2 + $0x20] sm:$0xf] %v2530
      %2591 = vst [vmem:[#allocation2 + $0x44] sm:$0xf] %v2531
      %2592 = vst [vmem:[#allocation2 + $0x68] sm:$0xf] %v2532
      %2593 = vst [vmem:[#allocation2 + $0x8c] sm:$0xf] %v2533
      %2594 = vst [vmem:[#allocation2 + $0xb0] sm:$0xf] %v2534
      %2595 = vst [vmem:[#allocation2 + $0xd4] sm:$0xf] %v2535
      %2596 = vst [vmem:[#allocation2 + $0xf8] sm:$0xf] %v2536
      %2597 = vst [vmem:[#allocation2 + $0x11c] sm:$0xf] %v2537
      %2598 = vst [vmem:[#allocation2 + $0x140] sm:$0xf] %v2538
      %2599 = vst [vmem:[#allocation2 + $0x164] sm:$0xf] %v2539
      %2600 = vst [vmem:[#allocation2 + $0x188] sm:$0xf] %v2540
      %2601 = vst [vmem:[#allocation2 + $0x1ac] sm:$0xf] %v2541
      %2602 = vst [vmem:[#allocation2 + $0x1d0] sm:$0xf] %v2542
      %2603 = vst [vmem:[#allocation2 + $0x1f4] sm:$0xf] %v2543
      %v2604 = vld [vmem:[#allocation2] sm:$0xff]
      %v2605 = vld [vmem:[#allocation2 + $0x8] sm:$0xff]
      %v2606 = vld [vmem:[#allocation2 + $0x10] sm:$0xff]
      %v2607 = vld [vmem:[#allocation2 + $0x18] sm:$0xff]
      %v2608 = vld [vmem:[#allocation2 + $0x20] sm:$0xf]
      %v2609 = vld [vmem:[#allocation2 + $0x24] sm:$0xff]
      %v2610 = vld [vmem:[#allocation2 + $0x2c] sm:$0xff]
      %v2611 = vld [vmem:[#allocation2 + $0x34] sm:$0xff]
      %v2612 = vld [vmem:[#allocation2 + $0x3c] sm:$0xff]
      %v2613 = vld [vmem:[#allocation2 + $0x44] sm:$0xf]
      %v2614 = vld [vmem:[#allocation2 + $0x48] sm:$0xff]
      %v2615 = vld [vmem:[#allocation2 + $0x50] sm:$0xff]
      %v2616 = vld [vmem:[#allocation2 + $0x58] sm:$0xff]
      %v2617 = vld [vmem:[#allocation2 + $0x60] sm:$0xff]
      %v2618 = vld [vmem:[#allocation2 + $0x68] sm:$0xf]
      %v2619 = vld [vmem:[#allocation2 + $0x6c] sm:$0xff]
      %v2620 = vld [vmem:[#allocation2 + $0x74] sm:$0xff]
      %v2621 = vld [vmem:[#allocation2 + $0x7c] sm:$0xff]
      %v2622 = vld [vmem:[#allocation2 + $0x84] sm:$0xff]
      %v2623 = vld [vmem:[#allocation2 + $0x8c] sm:$0xf]
      %v2624 = vld [vmem:[#allocation2 + $0x90] sm:$0xff]
      %v2625 = vld [vmem:[#allocation2 + $0x98] sm:$0xff]
      %v2626 = vld [vmem:[#allocation2 + $0xa0] sm:$0xff]
      %v2627 = vld [vmem:[#allocation2 + $0xa8] sm:$0xff]
      %v2628 = vld [vmem:[#allocation2 + $0xb0] sm:$0xf]
      %v2629 = vld [vmem:[#allocation2 + $0xb4] sm:$0xff]
      %v2630 = vld [vmem:[#allocation2 + $0xbc] sm:$0xff]
      %v2631 = vld [vmem:[#allocation2 + $0xc4] sm:$0xff]
      %v2632 = vld [vmem:[#allocation2 + $0xcc] sm:$0xff]
      %v2633 = vld [vmem:[#allocation2 + $0xd4] sm:$0xf]
      %v2634 = vld [vmem:[#allocation2 + $0xd8] sm:$0xff]
      %v2635 = vld [vmem:[#allocation2 + $0xe0] sm:$0xff]
      %v2636 = vld [vmem:[#allocation2 + $0xe8] sm:$0xff]
      %v2637 = vld [vmem:[#allocation2 + $0xf0] sm:$0xff]
      %v2638 = vld [vmem:[#allocation2 + $0xf8] sm:$0xf]
      %v2639 = vld [vmem:[#allocation2 + $0xfc] sm:$0xff]
      %v2640 = vld [vmem:[#allocation2 + $0x104] sm:$0xff]
      %v2641 = vld [vmem:[#allocation2 + $0x10c] sm:$0xff]
      %v2642 = vld [vmem:[#allocation2 + $0x114] sm:$0xff]
      %v2643 = vld [vmem:[#allocation2 + $0x11c] sm:$0xf]
      %v2644 = vld [vmem:[#allocation2 + $0x120] sm:$0xff]
      %v2645 = vld [vmem:[#allocation2 + $0x128] sm:$0xff]
      %v2646 = vld [vmem:[#allocation2 + $0x130] sm:$0xff]
      %v2647 = vld [vmem:[#allocation2 + $0x138] sm:$0xff]
      %v2648 = vld [vmem:[#allocation2 + $0x140] sm:$0xf]
      %v2649 = vld [vmem:[#allocation2 + $0x144] sm:$0xff]
      %v2650 = vld [vmem:[#allocation2 + $0x14c] sm:$0xff]
      %v2651 = vld [vmem:[#allocation2 + $0x154] sm:$0xff]
      %v2652 = vld [vmem:[#allocation2 + $0x15c] sm:$0xff]
      %v2653 = vld [vmem:[#allocation2 + $0x164] sm:$0xf]
      %v2654 = vld [vmem:[#allocation2 + $0x168] sm:$0xff]
      %v2655 = vld [vmem:[#allocation2 + $0x170] sm:$0xff]
      %v2656 = vld [vmem:[#allocation2 + $0x178] sm:$0xff]
      %v2657 = vld [vmem:[#allocation2 + $0x180] sm:$0xff]
      %v2658 = vld [vmem:[#allocation2 + $0x188] sm:$0xf]
      %v2659 = vld [vmem:[#allocation2 + $0x18c] sm:$0xff]
      %v2660 = vld [vmem:[#allocation2 + $0x194] sm:$0xff]
      %v2661 = vld [vmem:[#allocation2 + $0x19c] sm:$0xff]
      %v2662 = vld [vmem:[#allocation2 + $0x1a4] sm:$0xff]
      %v2663 = vld [vmem:[#allocation2 + $0x1ac] sm:$0xf]
      %v2664 = vld [vmem:[#allocation2 + $0x1b0] sm:$0xff]
      %v2665 = vld [vmem:[#allocation2 + $0x1b8] sm:$0xff]
      %v2666 = vld [vmem:[#allocation2 + $0x1c0] sm:$0xff]
      %v2667 = vld [vmem:[#allocation2 + $0x1c8] sm:$0xff]
      %v2668 = vld [vmem:[#allocation2 + $0x1d0] sm:$0xf]
      %v2669 = vld [vmem:[#allocation2 + $0x1d4] sm:$0xff]
      %v2670 = vld [vmem:[#allocation2 + $0x1dc] sm:$0xff]
      %v2671 = vld [vmem:[#allocation2 + $0x1e4] sm:$0xff]
      %v2672 = vld [vmem:[#allocation2 + $0x1ec] sm:$0xff]
      %v2673 = vld [vmem:[#allocation2 + $0x1f4] sm:$0xf]
      %v2674 = vld [vmem:[#allocation2 + $0x1f8] sm:$0xff]
      %v2675 = vld [vmem:[#allocation2 + $0x200] sm:$0xff]
      %v2676 = vld [vmem:[#allocation2 + $0x208] sm:$0xff]
      %v2677 = vld [vmem:[#allocation2 + $0x210] sm:$0xff]
      %v2678 = vld [vmem:[#allocation2 + $0x218] sm:$0xf]
      %v2679 = vld [vmem:[#allocation2 + $0x21c] sm:$0xff]
      %v2680 = vld [vmem:[#allocation2 + $0x224] sm:$0xff]
      %v2681 = vld [vmem:[#allocation2 + $0x22c] sm:$0xff]
      %v2682 = vld [vmem:[#allocation2 + $0x234] sm:$0xff]
      %v2683 = vld [vmem:[#allocation2 + $0x23c] sm:$0xf]
      %v2684 = vld [vmem:[%s3] sm:$0xf]
      %v2685 = vld [vmem:[%s3 + $0x4] sm:$0xf]
      %v2686 = vld [vmem:[%s3 + $0x8] sm:$0xf]
      %v2687 = vld [vmem:[%s3 + $0xc] sm:$0xf]
      %v2688 = vld [vmem:[%s3 + $0x10] sm:$0xf]
      %v2689 = vld [vmem:[%s3 + $0x14] sm:$0xf]
      %v2690 = vld [vmem:[%s3 + $0x18] sm:$0xf]
      %v2691 = vld [vmem:[%s3 + $0x1c] sm:$0xf]
      %v2692 = vld [vmem:[%s3 + $0x20] sm:$0xf]
      %v2693 = vld [vmem:[%s3 + $0x24] sm:$0xf]
      %v2694 = vld [vmem:[%s3 + $0x28] sm:$0xf]
      %v2695 = vld [vmem:[%s3 + $0x2c] sm:$0xf]
      %v2696 = vld [vmem:[%s3 + $0x30] sm:$0xf]
      %v2697 = vld [vmem:[%s3 + $0x34] sm:$0xf]
      %v2698 = vld [vmem:[%s3 + $0x38] sm:$0xf]
      %v2699 = vld [vmem:[%s3 + $0x3c] sm:$0xf]
      %v2700 = vld [vmem:[%s3 + $0x40] sm:$0xf]
      %v2701 = vld [vmem:[%s3 + $0x44] sm:$0xf]
      %v2702 = vld [vmem:[%s3 + $0x48] sm:$0xf]
      %v2703 = vld [vmem:[%s3 + $0x4c] sm:$0xf]
      %v2704 = vld [vmem:[%s3 + $0x50] sm:$0xf]
      %v2705 = vld [vmem:[%s3 + $0x54] sm:$0xf]
      %v2706 = vld [vmem:[%s3 + $0x58] sm:$0xf]
      %v2707 = vld [vmem:[%s3 + $0x5c] sm:$0xf]
      %v2708 = vld [vmem:[%s3 + $0x60] sm:$0xf]
      %v2709 = vld [vmem:[%s3 + $0x64] sm:$0xf]
      %v2710 = vld [vmem:[%s3 + $0x68] sm:$0xf]
      %v2711 = vld [vmem:[%s3 + $0x6c] sm:$0xf]
      %v2712 = vld [vmem:[%s3 + $0x70] sm:$0xf]
      %v2713 = vld [vmem:[%s3 + $0x74] sm:$0xf]
      %v2714 = vld [vmem:[%s3 + $0x78] sm:$0xf]
      %v2715 = vld [vmem:[%s3 + $0x7c] sm:$0xf]
      %v2716 = vld [vmem:[%s3 + $0x80] sm:$0xf]
      %v2717 = vld [vmem:[%s3 + $0x84] sm:$0xf]
      %v2718 = vld [vmem:[%s3 + $0x88] sm:$0xf]
      %v2719 = vld [vmem:[%s3 + $0x8c] sm:$0xf]
      %v2720 = vld [vmem:[%s3 + $0x90] sm:$0xf]
      %v2721 = vld [vmem:[%s3 + $0x94] sm:$0xf]
      %v2722 = vld [vmem:[%s3 + $0x98] sm:$0xf]
      %v2723 = vld [vmem:[%s3 + $0x9c] sm:$0xf]
      %v2724 = vld [vmem:[%s3 + $0xa0] sm:$0xf]
      %v2725 = vld [vmem:[%s3 + $0xa4] sm:$0xf]
      %v2726 = vld [vmem:[%s3 + $0xa8] sm:$0xf]
      %v2727 = vld [vmem:[%s3 + $0xac] sm:$0xf]
      %v2728 = vld [vmem:[%s3 + $0xb0] sm:$0xf]
      %v2729 = vld [vmem:[%s3 + $0xb4] sm:$0xf]
      %v2730 = vld [vmem:[%s3 + $0xb8] sm:$0xf]
      %v2731 = vld [vmem:[%s3 + $0xbc] sm:$0xf]
      %v2732 = vld [vmem:[%s3 + $0xc0] sm:$0xf]
      %v2733 = vld [vmem:[%s3 + $0xc4] sm:$0xf]
      %v2734 = vld [vmem:[%s3 + $0xc8] sm:$0xf]
      %v2735 = vld [vmem:[%s3 + $0xcc] sm:$0xf]
      %v2736 = vld [vmem:[%s3 + $0xd0] sm:$0xf]
      %v2737 = vld [vmem:[%s3 + $0xd4] sm:$0xf]
      %v2738 = vld [vmem:[%s3 + $0xd8] sm:$0xf]
      %v2739 = vld [vmem:[%s3 + $0xdc] sm:$0xf]
      %v2740 = vld [vmem:[%s3 + $0xe0] sm:$0xf]
      %v2741 = vld [vmem:[%s3 + $0xe4] sm:$0xf]
      %v2742 = vld [vmem:[%s3 + $0xe8] sm:$0xf]
      %v2743 = vld [vmem:[%s3 + $0xec] sm:$0xf]
      %v2744 = vld [vmem:[%s3 + $0xf0] sm:$0xf]
      %v2745 = vld [vmem:[%s3 + $0xf4] sm:$0xf]
      %v2746 = vld [vmem:[%s3 + $0xf8] sm:$0xf]
      %v2747 = vld [vmem:[%s3 + $0xfc] sm:$0xf]
      %v2748 = vld [vmem:[%s3 + $0x100] sm:$0xf]
      %v2749 = vld [vmem:[%s3 + $0x104] sm:$0xf]
      %v2750 = vld [vmem:[%s3 + $0x108] sm:$0xf]
      %v2751 = vld [vmem:[%s3 + $0x10c] sm:$0xf]
      %v2752 = vld [vmem:[%s3 + $0x110] sm:$0xf]
      %v2753 = vld [vmem:[%s3 + $0x114] sm:$0xf]
      %v2754 = vld [vmem:[%s3 + $0x118] sm:$0xf]
      %v2755 = vld [vmem:[%s3 + $0x11c] sm:$0xf]
      %v2756 = vld [vmem:[%s3 + $0x120] sm:$0xf]
      %v2757 = vld [vmem:[%s3 + $0x124] sm:$0xf]
      %v2758 = vld [vmem:[%s3 + $0x128] sm:$0xf]
      %v2759 = vld [vmem:[%s3 + $0x12c] sm:$0xf]
      %v2760 = vld [vmem:[%s3 + $0x130] sm:$0xf]
      %v2761 = vld [vmem:[%s3 + $0x134] sm:$0xf]
      %v2762 = vld [vmem:[%s3 + $0x138] sm:$0xf]
      %v2763 = vld [vmem:[%s3 + $0x13c] sm:$0xf]
      %v2764 = vld [vmem:[%s3 + $0x140] sm:$0xf]
      %v2765 = vld [vmem:[%s3 + $0x144] sm:$0xf]
      %v2766 = vld [vmem:[%s3 + $0x148] sm:$0xf]
      %v2767 = vld [vmem:[%s3 + $0x14c] sm:$0xf]
      %v2768 = vld [vmem:[%s3 + $0x150] sm:$0xf]
      %v2769 = vld [vmem:[%s3 + $0x154] sm:$0xf]
      %v2770 = vld [vmem:[%s3 + $0x158] sm:$0xf]
      %v2771 = vld [vmem:[%s3 + $0x15c] sm:$0xf]
      %v2772 = vld [vmem:[%s3 + $0x160] sm:$0xf]
      %v2773 = vld [vmem:[%s3 + $0x164] sm:$0xf]
      %v2774 = vld [vmem:[%s3 + $0x168] sm:$0xf]
      %v2775 = vld [vmem:[%s3 + $0x16c] sm:$0xf]
      %v2776 = vld [vmem:[%s3 + $0x170] sm:$0xf]
      %v2777 = vld [vmem:[%s3 + $0x174] sm:$0xf]
      %v2778 = vld [vmem:[%s3 + $0x178] sm:$0xf]
      %v2779 = vld [vmem:[%s3 + $0x17c] sm:$0xf]
      %v2780 = vld [vmem:[%s3 + $0x180] sm:$0xf]
      %v2781 = vld [vmem:[%s3 + $0x184] sm:$0xf]
      %v2782 = vld [vmem:[%s3 + $0x188] sm:$0xf]
      %v2783 = vld [vmem:[%s3 + $0x18c] sm:$0xf]
      %v2784 = vld [vmem:[%s3 + $0x190] sm:$0xf]
      %v2785 = vld [vmem:[%s3 + $0x194] sm:$0xf]
      %v2786 = vld [vmem:[%s3 + $0x198] sm:$0xf]
      %v2787 = vld [vmem:[%s3 + $0x19c] sm:$0xf]
      %v2788 = vld [vmem:[%s3 + $0x1a0] sm:$0xf]
      %v2789 = vld [vmem:[%s3 + $0x1a4] sm:$0xf]
      %v2790 = vld [vmem:[%s3 + $0x1a8] sm:$0xf]
      %v2791 = vld [vmem:[%s3 + $0x1ac] sm:$0xf]
      %v2792 = vld [vmem:[%s3 + $0x1b0] sm:$0xf]
      %v2793 = vld [vmem:[%s3 + $0x1b4] sm:$0xf]
      %v2794 = vld [vmem:[%s3 + $0x1b8] sm:$0xf]
      %v2795 = vld [vmem:[%s3 + $0x1bc] sm:$0xf]
      %v2796 = vld [vmem:[%s3 + $0x1c0] sm:$0xf]
      %v2797 = vld [vmem:[%s3 + $0x1c4] sm:$0xf]
      %v2798 = vld [vmem:[%s3 + $0x1c8] sm:$0xf]
      %v2799 = vld [vmem:[%s3 + $0x1cc] sm:$0xf]
      %v2800 = vld [vmem:[%s3 + $0x1d0] sm:$0xf]
      %v2801 = vld [vmem:[%s3 + $0x1d4] sm:$0xf]
      %v2802 = vld [vmem:[%s3 + $0x1d8] sm:$0xf]
      %v2803 = vld [vmem:[%s3 + $0x1dc] sm:$0xf]
      %v2804 = vld [vmem:[%s3 + $0x1e0] sm:$0xf]
      %v2805 = vld [vmem:[%s3 + $0x1e4] sm:$0xf]
      %v2806 = vld [vmem:[%s3 + $0x1e8] sm:$0xf]
      %v2807 = vld [vmem:[%s3 + $0x1ec] sm:$0xf]
      %v2808 = vld [vmem:[%s3 + $0x1f0] sm:$0xf]
      %v2809 = vld [vmem:[%s3 + $0x1f4] sm:$0xf]
      %v2810 = vld [vmem:[%s3 + $0x1f8] sm:$0xf]
      %v2811 = vld [vmem:[%s3 + $0x1fc] sm:$0xf]
      %v2812 = vld [vmem:[%s3 + $0x200] sm:$0xf]
      %v2813 = vld [vmem:[%s3 + $0x204] sm:$0xf]
      %v2814 = vld [vmem:[%s3 + $0x208] sm:$0xf]
      %v2815 = vld [vmem:[%s3 + $0x20c] sm:$0xf]
      %v2816 = vld [vmem:[%s3 + $0x210] sm:$0xf]
      %v2817 = vld [vmem:[%s3 + $0x214] sm:$0xf]
      %v2818 = vld [vmem:[%s3 + $0x218] sm:$0xf]
      %v2819 = vld [vmem:[%s3 + $0x21c] sm:$0xf]
      %v2820 = vld [vmem:[%s3 + $0x220] sm:$0xf]
      %v2821 = vld [vmem:[%s3 + $0x224] sm:$0xf]
      %v2822 = vld [vmem:[%s3 + $0x228] sm:$0xf]
      %v2823 = vld [vmem:[%s3 + $0x22c] sm:$0xf]
      %v2824 = vld [vmem:[%s3 + $0x230] sm:$0xf]
      %v2825 = vld [vmem:[%s3 + $0x234] sm:$0xf]
      %v2826 = vld [vmem:[%s3 + $0x238] sm:$0xf]
      %v2827 = vld [vmem:[%s3 + $0x23c] sm:$0xf]
      %v2908 = vunpack.c.l.b16 %v2604
      %v2909 = vunpack.c.h.b16 %v2604
      %v2910 = vunpack.c.l.b16 %v2605
      %v2911 = vunpack.c.h.b16 %v2605
      %v2912 = vunpack.c.l.b16 %v2606
      %v2913 = vunpack.c.h.b16 %v2606
      %v2914 = vunpack.c.l.b16 %v2607
      %v2915 = vunpack.c.h.b16 %v2607
      %v2916 = vunpack.c.l.b16 %v2608
      %v2917 = vunpack.c.l.b16 %v2609
      %v2918 = vunpack.c.h.b16 %v2609
      %v2919 = vunpack.c.l.b16 %v2610
      %v2920 = vunpack.c.h.b16 %v2610
      %v2921 = vunpack.c.l.b16 %v2611
      %v2922 = vunpack.c.h.b16 %v2611
      %v2923 = vunpack.c.l.b16 %v2612
      %v2924 = vunpack.c.h.b16 %v2612
      %v2925 = vunpack.c.l.b16 %v2613
      %v2926 = vunpack.c.l.b16 %v2614
      %v2927 = vunpack.c.h.b16 %v2614
      %v2928 = vunpack.c.l.b16 %v2615
      %v2929 = vunpack.c.h.b16 %v2615
      %v2930 = vunpack.c.l.b16 %v2616
      %v2931 = vunpack.c.h.b16 %v2616
      %v2932 = vunpack.c.l.b16 %v2617
      %v2933 = vunpack.c.h.b16 %v2617
      %v2934 = vunpack.c.l.b16 %v2618
      %v2935 = vunpack.c.l.b16 %v2619
      %v2936 = vunpack.c.h.b16 %v2619
      %v2937 = vunpack.c.l.b16 %v2620
      %v2938 = vunpack.c.h.b16 %v2620
      %v2939 = vunpack.c.l.b16 %v2621
      %v2940 = vunpack.c.h.b16 %v2621
      %v2941 = vunpack.c.l.b16 %v2622
      %v2942 = vunpack.c.h.b16 %v2622
      %v2943 = vunpack.c.l.b16 %v2623
      %v2944 = vunpack.c.l.b16 %v2624
      %v2945 = vunpack.c.h.b16 %v2624
      %v2946 = vunpack.c.l.b16 %v2625
      %v2947 = vunpack.c.h.b16 %v2625
      %v2948 = vunpack.c.l.b16 %v2626
      %v2949 = vunpack.c.h.b16 %v2626
      %v2950 = vunpack.c.l.b16 %v2627
      %v2951 = vunpack.c.h.b16 %v2627
      %v2952 = vunpack.c.l.b16 %v2628
      %v2953 = vunpack.c.l.b16 %v2629
      %v2954 = vunpack.c.h.b16 %v2629
      %v2955 = vunpack.c.l.b16 %v2630
      %v2956 = vunpack.c.h.b16 %v2630
      %v2957 = vunpack.c.l.b16 %v2631
      %v2958 = vunpack.c.h.b16 %v2631
      %v2959 = vunpack.c.l.b16 %v2632
      %v2960 = vunpack.c.h.b16 %v2632
      %v2961 = vunpack.c.l.b16 %v2633
      %v2962 = vunpack.c.l.b16 %v2634
      %v2963 = vunpack.c.h.b16 %v2634
      %v2964 = vunpack.c.l.b16 %v2635
      %v2965 = vunpack.c.h.b16 %v2635
      %v2966 = vunpack.c.l.b16 %v2636
      %v2967 = vunpack.c.h.b16 %v2636
      %v2968 = vunpack.c.l.b16 %v2637
      %v2969 = vunpack.c.h.b16 %v2637
      %v2970 = vunpack.c.l.b16 %v2638
      %v2971 = vunpack.c.l.b16 %v2639
      %v2972 = vunpack.c.h.b16 %v2639
      %v2973 = vunpack.c.l.b16 %v2640
      %v2974 = vunpack.c.h.b16 %v2640
      %v2975 = vunpack.c.l.b16 %v2641
      %v2976 = vunpack.c.h.b16 %v2641
      %v2977 = vunpack.c.l.b16 %v2642
      %v2978 = vunpack.c.h.b16 %v2642
      %v2979 = vunpack.c.l.b16 %v2643
      %v2980 = vunpack.c.l.b16 %v2644
      %v2981 = vunpack.c.h.b16 %v2644
      %v2982 = vunpack.c.l.b16 %v2645
      %v2983 = vunpack.c.h.b16 %v2645
      %v2984 = vunpack.c.l.b16 %v2646
      %v2985 = vunpack.c.h.b16 %v2646
      %v2986 = vunpack.c.l.b16 %v2647
      %v2987 = vunpack.c.h.b16 %v2647
      %v2988 = vunpack.c.l.b16 %v2648
      %v2989 = vunpack.c.l.b16 %v2649
      %v2990 = vunpack.c.h.b16 %v2649
      %v2991 = vunpack.c.l.b16 %v2650
      %v2992 = vunpack.c.h.b16 %v2650
      %v2993 = vunpack.c.l.b16 %v2651
      %v2994 = vunpack.c.h.b16 %v2651
      %v2995 = vunpack.c.l.b16 %v2652
      %v2996 = vunpack.c.h.b16 %v2652
      %v2997 = vunpack.c.l.b16 %v2653
      %v2998 = vunpack.c.l.b16 %v2654
      %v2999 = vunpack.c.h.b16 %v2654
      %v3000 = vunpack.c.l.b16 %v2655
      %v3001 = vunpack.c.h.b16 %v2655
      %v3002 = vunpack.c.l.b16 %v2656
      %v3003 = vunpack.c.h.b16 %v2656
      %v3004 = vunpack.c.l.b16 %v2657
      %v3005 = vunpack.c.h.b16 %v2657
      %v3006 = vunpack.c.l.b16 %v2658
      %v3007 = vunpack.c.l.b16 %v2659
      %v3008 = vunpack.c.h.b16 %v2659
      %v3009 = vunpack.c.l.b16 %v2660
      %v3010 = vunpack.c.h.b16 %v2660
      %v3011 = vunpack.c.l.b16 %v2661
      %v3012 = vunpack.c.h.b16 %v2661
      %v3013 = vunpack.c.l.b16 %v2662
      %v3014 = vunpack.c.h.b16 %v2662
      %v3015 = vunpack.c.l.b16 %v2663
      %v3016 = vunpack.c.l.b16 %v2664
      %v3017 = vunpack.c.h.b16 %v2664
      %v3018 = vunpack.c.l.b16 %v2665
      %v3019 = vunpack.c.h.b16 %v2665
      %v3020 = vunpack.c.l.b16 %v2666
      %v3021 = vunpack.c.h.b16 %v2666
      %v3022 = vunpack.c.l.b16 %v2667
      %v3023 = vunpack.c.h.b16 %v2667
      %v3024 = vunpack.c.l.b16 %v2668
      %v3025 = vunpack.c.l.b16 %v2669
      %v3026 = vunpack.c.h.b16 %v2669
      %v3027 = vunpack.c.l.b16 %v2670
      %v3028 = vunpack.c.h.b16 %v2670
      %v3029 = vunpack.c.l.b16 %v2671
      %v3030 = vunpack.c.h.b16 %v2671
      %v3031 = vunpack.c.l.b16 %v2672
      %v3032 = vunpack.c.h.b16 %v2672
      %v3033 = vunpack.c.l.b16 %v2673
      %v3034 = vunpack.c.l.b16 %v2674
      %v3035 = vunpack.c.h.b16 %v2674
      %v3036 = vunpack.c.l.b16 %v2675
      %v3037 = vunpack.c.h.b16 %v2675
      %v3038 = vunpack.c.l.b16 %v2676
      %v3039 = vunpack.c.h.b16 %v2676
      %v3040 = vunpack.c.l.b16 %v2677
      %v3041 = vunpack.c.h.b16 %v2677
      %v3042 = vunpack.c.l.b16 %v2678
      %v3043 = vunpack.c.l.b16 %v2679
      %v3044 = vunpack.c.h.b16 %v2679
      %v3045 = vunpack.c.l.b16 %v2680
      %v3046 = vunpack.c.h.b16 %v2680
      %v3047 = vunpack.c.l.b16 %v2681
      %v3048 = vunpack.c.h.b16 %v2681
      %v3049 = vunpack.c.l.b16 %v2682
      %v3050 = vunpack.c.h.b16 %v2682
      %v3051 = vunpack.c.l.b16 %v2683
      %v3052 = vpack.c.b16 %v2917, %v2908
      %v3053 = vpack.c.b16 %v2918, %v2909
      %v3054 = vpack.c.b16 %v2919, %v2910
      %v3055 = vpack.c.b16 %v2920, %v2911
      %v3056 = vpack.c.b16 %v2921, %v2912
      %v3057 = vpack.c.b16 %v2922, %v2913
      %v3058 = vpack.c.b16 %v2923, %v2914
      %v3059 = vpack.c.b16 %v2924, %v2915
      %v3060 = vpack.c.b16 %v2925, %v2916
      %v3061 = vpack.c.b16 %v2935, %v2926
      %v3062 = vpack.c.b16 %v2936, %v2927
      %v3063 = vpack.c.b16 %v2937, %v2928
      %v3064 = vpack.c.b16 %v2938, %v2929
      %v3065 = vpack.c.b16 %v2939, %v2930
      %v3066 = vpack.c.b16 %v2940, %v2931
      %v3067 = vpack.c.b16 %v2941, %v2932
      %v3068 = vpack.c.b16 %v2942, %v2933
      %v3069 = vpack.c.b16 %v2943, %v2934
      %v3070 = vpack.c.b16 %v2953, %v2944
      %v3071 = vpack.c.b16 %v2954, %v2945
      %v3072 = vpack.c.b16 %v2955, %v2946
      %v3073 = vpack.c.b16 %v2956, %v2947
      %v3074 = vpack.c.b16 %v2957, %v2948
      %v3075 = vpack.c.b16 %v2958, %v2949
      %v3076 = vpack.c.b16 %v2959, %v2950
      %v3077 = vpack.c.b16 %v2960, %v2951
      %v3078 = vpack.c.b16 %v2961, %v2952
      %v3079 = vpack.c.b16 %v2971, %v2962
      %v3080 = vpack.c.b16 %v2972, %v2963
      %v3081 = vpack.c.b16 %v2973, %v2964
      %v3082 = vpack.c.b16 %v2974, %v2965
      %v3083 = vpack.c.b16 %v2975, %v2966
      %v3084 = vpack.c.b16 %v2976, %v2967
      %v3085 = vpack.c.b16 %v2977, %v2968
      %v3086 = vpack.c.b16 %v2978, %v2969
      %v3087 = vpack.c.b16 %v2979, %v2970
      %v3088 = vpack.c.b16 %v2989, %v2980
      %v3089 = vpack.c.b16 %v2990, %v2981
      %v3090 = vpack.c.b16 %v2991, %v2982
      %v3091 = vpack.c.b16 %v2992, %v2983
      %v3092 = vpack.c.b16 %v2993, %v2984
      %v3093 = vpack.c.b16 %v2994, %v2985
      %v3094 = vpack.c.b16 %v2995, %v2986
      %v3095 = vpack.c.b16 %v2996, %v2987
      %v3096 = vpack.c.b16 %v2997, %v2988
      %v3097 = vpack.c.b16 %v3007, %v2998
      %v3098 = vpack.c.b16 %v3008, %v2999
      %v3099 = vpack.c.b16 %v3009, %v3000
      %v3100 = vpack.c.b16 %v3010, %v3001
      %v3101 = vpack.c.b16 %v3011, %v3002
      %v3102 = vpack.c.b16 %v3012, %v3003
      %v3103 = vpack.c.b16 %v3013, %v3004
      %v3104 = vpack.c.b16 %v3014, %v3005
      %v3105 = vpack.c.b16 %v3015, %v3006
      %v3106 = vpack.c.b16 %v3025, %v3016
      %v3107 = vpack.c.b16 %v3026, %v3017
      %v3108 = vpack.c.b16 %v3027, %v3018
      %v3109 = vpack.c.b16 %v3028, %v3019
      %v3110 = vpack.c.b16 %v3029, %v3020
      %v3111 = vpack.c.b16 %v3030, %v3021
      %v3112 = vpack.c.b16 %v3031, %v3022
      %v3113 = vpack.c.b16 %v3032, %v3023
      %v3114 = vpack.c.b16 %v3033, %v3024
      %v3115 = vpack.c.b16 %v3043, %v3034
      %v3116 = vpack.c.b16 %v3044, %v3035
      %v3117 = vpack.c.b16 %v3045, %v3036
      %v3118 = vpack.c.b16 %v3046, %v3037
      %v3119 = vpack.c.b16 %v3047, %v3038
      %v3120 = vpack.c.b16 %v3048, %v3039
      %v3121 = vpack.c.b16 %v3049, %v3040
      %v3122 = vpack.c.b16 %v3050, %v3041
      %v3123 = vpack.c.b16 %v3051, %v3042
      %v3340 = vunpack.c.l.b16 %v2684
      %v3341 = vunpack.c.l.b16 %v2685
      %v3342 = vunpack.c.l.b16 %v2686
      %v3343 = vunpack.c.l.b16 %v2687
      %v3344 = vunpack.c.l.b16 %v2688
      %v3345 = vunpack.c.l.b16 %v2689
      %v3346 = vunpack.c.l.b16 %v2690
      %v3347 = vunpack.c.l.b16 %v2691
      %v3348 = vunpack.c.l.b16 %v2692
      %v3349 = vunpack.c.l.b16 %v2693
      %v3350 = vunpack.c.l.b16 %v2694
      %v3351 = vunpack.c.l.b16 %v2695
      %v3352 = vunpack.c.l.b16 %v2696
      %v3353 = vunpack.c.l.b16 %v2697
      %v3354 = vunpack.c.l.b16 %v2698
      %v3355 = vunpack.c.l.b16 %v2699
      %v3356 = vunpack.c.l.b16 %v2700
      %v3357 = vunpack.c.l.b16 %v2701
      %v3358 = vunpack.c.l.b16 %v2702
      %v3359 = vunpack.c.l.b16 %v2703
      %v3360 = vunpack.c.l.b16 %v2704
      %v3361 = vunpack.c.l.b16 %v2705
      %v3362 = vunpack.c.l.b16 %v2706
      %v3363 = vunpack.c.l.b16 %v2707
      %v3364 = vunpack.c.l.b16 %v2708
      %v3365 = vunpack.c.l.b16 %v2709
      %v3366 = vunpack.c.l.b16 %v2710
      %v3367 = vunpack.c.l.b16 %v2711
      %v3368 = vunpack.c.l.b16 %v2712
      %v3369 = vunpack.c.l.b16 %v2713
      %v3370 = vunpack.c.l.b16 %v2714
      %v3371 = vunpack.c.l.b16 %v2715
      %v3372 = vunpack.c.l.b16 %v2716
      %v3373 = vunpack.c.l.b16 %v2717
      %v3374 = vunpack.c.l.b16 %v2718
      %v3375 = vunpack.c.l.b16 %v2719
      %v3376 = vunpack.c.l.b16 %v2720
      %v3377 = vunpack.c.l.b16 %v2721
      %v3378 = vunpack.c.l.b16 %v2722
      %v3379 = vunpack.c.l.b16 %v2723
      %v3380 = vunpack.c.l.b16 %v2724
      %v3381 = vunpack.c.l.b16 %v2725
      %v3382 = vunpack.c.l.b16 %v2726
      %v3383 = vunpack.c.l.b16 %v2727
      %v3384 = vunpack.c.l.b16 %v2728
      %v3385 = vunpack.c.l.b16 %v2729
      %v3386 = vunpack.c.l.b16 %v2730
      %v3387 = vunpack.c.l.b16 %v2731
      %v3388 = vunpack.c.l.b16 %v2732
      %v3389 = vunpack.c.l.b16 %v2733
      %v3390 = vunpack.c.l.b16 %v2734
      %v3391 = vunpack.c.l.b16 %v2735
      %v3392 = vunpack.c.l.b16 %v2736
      %v3393 = vunpack.c.l.b16 %v2737
      %v3394 = vunpack.c.l.b16 %v2738
      %v3395 = vunpack.c.l.b16 %v2739
      %v3396 = vunpack.c.l.b16 %v2740
      %v3397 = vunpack.c.l.b16 %v2741
      %v3398 = vunpack.c.l.b16 %v2742
      %v3399 = vunpack.c.l.b16 %v2743
      %v3400 = vunpack.c.l.b16 %v2744
      %v3401 = vunpack.c.l.b16 %v2745
      %v3402 = vunpack.c.l.b16 %v2746
      %v3403 = vunpack.c.l.b16 %v2747
      %v3404 = vunpack.c.l.b16 %v2748
      %v3405 = vunpack.c.l.b16 %v2749
      %v3406 = vunpack.c.l.b16 %v2750
      %v3407 = vunpack.c.l.b16 %v2751
      %v3408 = vunpack.c.l.b16 %v2752
      %v3409 = vunpack.c.l.b16 %v2753
      %v3410 = vunpack.c.l.b16 %v2754
      %v3411 = vunpack.c.l.b16 %v2755
      %v3412 = vunpack.c.l.b16 %v2756
      %v3413 = vunpack.c.l.b16 %v2757
      %v3414 = vunpack.c.l.b16 %v2758
      %v3415 = vunpack.c.l.b16 %v2759
      %v3416 = vunpack.c.l.b16 %v2760
      %v3417 = vunpack.c.l.b16 %v2761
      %v3418 = vunpack.c.l.b16 %v2762
      %v3419 = vunpack.c.l.b16 %v2763
      %v3420 = vunpack.c.l.b16 %v2764
      %v3421 = vunpack.c.l.b16 %v2765
      %v3422 = vunpack.c.l.b16 %v2766
      %v3423 = vunpack.c.l.b16 %v2767
      %v3424 = vunpack.c.l.b16 %v2768
      %v3425 = vunpack.c.l.b16 %v2769
      %v3426 = vunpack.c.l.b16 %v2770
      %v3427 = vunpack.c.l.b16 %v2771
      %v3428 = vunpack.c.l.b16 %v2772
      %v3429 = vunpack.c.l.b16 %v2773
      %v3430 = vunpack.c.l.b16 %v2774
      %v3431 = vunpack.c.l.b16 %v2775
      %v3432 = vunpack.c.l.b16 %v2776
      %v3433 = vunpack.c.l.b16 %v2777
      %v3434 = vunpack.c.l.b16 %v2778
      %v3435 = vunpack.c.l.b16 %v2779
      %v3436 = vunpack.c.l.b16 %v2780
      %v3437 = vunpack.c.l.b16 %v2781
      %v3438 = vunpack.c.l.b16 %v2782
      %v3439 = vunpack.c.l.b16 %v2783
      %v3440 = vunpack.c.l.b16 %v2784
      %v3441 = vunpack.c.l.b16 %v2785
      %v3442 = vunpack.c.l.b16 %v2786
      %v3443 = vunpack.c.l.b16 %v2787
      %v3444 = vunpack.c.l.b16 %v2788
      %v3445 = vunpack.c.l.b16 %v2789
      %v3446 = vunpack.c.l.b16 %v2790
      %v3447 = vunpack.c.l.b16 %v2791
      %v3448 = vunpack.c.l.b16 %v2792
      %v3449 = vunpack.c.l.b16 %v2793
      %v3450 = vunpack.c.l.b16 %v2794
      %v3451 = vunpack.c.l.b16 %v2795
      %v3452 = vunpack.c.l.b16 %v2796
      %v3453 = vunpack.c.l.b16 %v2797
      %v3454 = vunpack.c.l.b16 %v2798
      %v3455 = vunpack.c.l.b16 %v2799
      %v3456 = vunpack.c.l.b16 %v2800
      %v3457 = vunpack.c.l.b16 %v2801
      %v3458 = vunpack.c.l.b16 %v2802
      %v3459 = vunpack.c.l.b16 %v2803
      %v3460 = vunpack.c.l.b16 %v2804
      %v3461 = vunpack.c.l.b16 %v2805
      %v3462 = vunpack.c.l.b16 %v2806
      %v3463 = vunpack.c.l.b16 %v2807
      %v3464 = vunpack.c.l.b16 %v2808
      %v3465 = vunpack.c.l.b16 %v2809
      %v3466 = vunpack.c.l.b16 %v2810
      %v3467 = vunpack.c.l.b16 %v2811
      %v3468 = vunpack.c.l.b16 %v2812
      %v3469 = vunpack.c.l.b16 %v2813
      %v3470 = vunpack.c.l.b16 %v2814
      %v3471 = vunpack.c.l.b16 %v2815
      %v3472 = vunpack.c.l.b16 %v2816
      %v3473 = vunpack.c.l.b16 %v2817
      %v3474 = vunpack.c.l.b16 %v2818
      %v3475 = vunpack.c.l.b16 %v2819
      %v3476 = vunpack.c.l.b16 %v2820
      %v3477 = vunpack.c.l.b16 %v2821
      %v3478 = vunpack.c.l.b16 %v2822
      %v3479 = vunpack.c.l.b16 %v2823
      %v3480 = vunpack.c.l.b16 %v2824
      %v3481 = vunpack.c.l.b16 %v2825
      %v3482 = vunpack.c.l.b16 %v2826
      %v3483 = vunpack.c.l.b16 %v2827
      %v3484 = vpack.c.b16 %v3341, %v3340
      %v3485 = vpack.c.b16 %v3343, %v3342
      %v3486 = vpack.c.b16 %v3345, %v3344
      %v3487 = vpack.c.b16 %v3347, %v3346
      %v3488 = vpack.c.b16 %v3349, %v3348
      %v3489 = vpack.c.b16 %v3351, %v3350
      %v3490 = vpack.c.b16 %v3353, %v3352
      %v3491 = vpack.c.b16 %v3355, %v3354
      %v3492 = vpack.c.b16 %v3357, %v3356
      %v3493 = vpack.c.b16 %v3359, %v3358
      %v3494 = vpack.c.b16 %v3361, %v3360
      %v3495 = vpack.c.b16 %v3363, %v3362
      %v3496 = vpack.c.b16 %v3365, %v3364
      %v3497 = vpack.c.b16 %v3367, %v3366
      %v3498 = vpack.c.b16 %v3369, %v3368
      %v3499 = vpack.c.b16 %v3371, %v3370
      %v3500 = vpack.c.b16 %v3373, %v3372
      %v3501 = vpack.c.b16 %v3375, %v3374
      %v3502 = vpack.c.b16 %v3377, %v3376
      %v3503 = vpack.c.b16 %v3379, %v3378
      %v3504 = vpack.c.b16 %v3381, %v3380
      %v3505 = vpack.c.b16 %v3383, %v3382
      %v3506 = vpack.c.b16 %v3385, %v3384
      %v3507 = vpack.c.b16 %v3387, %v3386
      %v3508 = vpack.c.b16 %v3389, %v3388
      %v3509 = vpack.c.b16 %v3391, %v3390
      %v3510 = vpack.c.b16 %v3393, %v3392
      %v3511 = vpack.c.b16 %v3395, %v3394
      %v3512 = vpack.c.b16 %v3397, %v3396
      %v3513 = vpack.c.b16 %v3399, %v3398
      %v3514 = vpack.c.b16 %v3401, %v3400
      %v3515 = vpack.c.b16 %v3403, %v3402
      %v3516 = vpack.c.b16 %v3405, %v3404
      %v3517 = vpack.c.b16 %v3407, %v3406
      %v3518 = vpack.c.b16 %v3409, %v3408
      %v3519 = vpack.c.b16 %v3411, %v3410
      %v3520 = vpack.c.b16 %v3413, %v3412
      %v3521 = vpack.c.b16 %v3415, %v3414
      %v3522 = vpack.c.b16 %v3417, %v3416
      %v3523 = vpack.c.b16 %v3419, %v3418
      %v3524 = vpack.c.b16 %v3421, %v3420
      %v3525 = vpack.c.b16 %v3423, %v3422
      %v3526 = vpack.c.b16 %v3425, %v3424
      %v3527 = vpack.c.b16 %v3427, %v3426
      %v3528 = vpack.c.b16 %v3429, %v3428
      %v3529 = vpack.c.b16 %v3431, %v3430
      %v3530 = vpack.c.b16 %v3433, %v3432
      %v3531 = vpack.c.b16 %v3435, %v3434
      %v3532 = vpack.c.b16 %v3437, %v3436
      %v3533 = vpack.c.b16 %v3439, %v3438
      %v3534 = vpack.c.b16 %v3441, %v3440
      %v3535 = vpack.c.b16 %v3443, %v3442
      %v3536 = vpack.c.b16 %v3445, %v3444
      %v3537 = vpack.c.b16 %v3447, %v3446
      %v3538 = vpack.c.b16 %v3449, %v3448
      %v3539 = vpack.c.b16 %v3451, %v3450
      %v3540 = vpack.c.b16 %v3453, %v3452
      %v3541 = vpack.c.b16 %v3455, %v3454
      %v3542 = vpack.c.b16 %v3457, %v3456
      %v3543 = vpack.c.b16 %v3459, %v3458
      %v3544 = vpack.c.b16 %v3461, %v3460
      %v3545 = vpack.c.b16 %v3463, %v3462
      %v3546 = vpack.c.b16 %v3465, %v3464
      %v3547 = vpack.c.b16 %v3467, %v3466
      %v3548 = vpack.c.b16 %v3469, %v3468
      %v3549 = vpack.c.b16 %v3471, %v3470
      %v3550 = vpack.c.b16 %v3473, %v3472
      %v3551 = vpack.c.b16 %v3475, %v3474
      %v3552 = vpack.c.b16 %v3477, %v3476
      %v3553 = vpack.c.b16 %v3479, %v3478
      %v3554 = vpack.c.b16 %v3481, %v3480
      %v3555 = vpack.c.b16 %v3483, %v3482
      %3628 = vmatprep.subr.bf16.mxu0 0
      %3629 = vmatpush1.bf16.msra.mxu0 %v3491
      %3630 = vmatprep.subr.bf16.mxu0 0
      %3631 = vmatpush1.bf16.msra.mxu0 %v3490
      %3632 = vmatprep.subr.bf16.mxu0 0
      %3633 = vmatpush1.bf16.msra.mxu0 %v3489
      %3634 = vmatprep.subr.bf16.mxu0 0
      %3635 = vmatpush1.bf16.msra.mxu0 %v3488
      %3636 = vmatprep.subr.bf16.mxu0 0
      %3637 = vmatpush1.bf16.msra.mxu0 %v3487
      %3638 = vmatprep.subr.bf16.mxu0 0
      %3639 = vmatpush1.bf16.msra.mxu0 %v3486
      %3640 = vmatprep.subr.bf16.mxu0 0
      %3641 = vmatpush1.bf16.msra.mxu0 %v3485
      %3642 = vmatprep.subr.bf16.mxu0 0
      %3643 = vmatpush1.bf16.msra.mxu0 %v3484
      %3644 = vmatprep.subr.bf16.mxu0 0
      %3645 = vmatpush2.bf16.msra.mxu0 %v3499
      %3646 = vmatprep.subr.bf16.mxu0 0
      %3647 = vmatpush2.bf16.msra.mxu0 %v3498
      %3648 = vmatprep.subr.bf16.mxu0 0
      %3649 = vmatpush2.bf16.msra.mxu0 %v3497
      %3650 = vmatprep.subr.bf16.mxu0 0
      %3651 = vmatpush2.bf16.msra.mxu0 %v3496
      %3652 = vmatprep.subr.bf16.mxu0 0
      %3653 = vmatpush2.bf16.msra.mxu0 %v3495
      %3654 = vmatprep.subr.bf16.mxu0 0
      %3655 = vmatpush2.bf16.msra.mxu0 %v3494
      %3656 = vmatprep.subr.bf16.mxu0 0
      %3657 = vmatpush2.bf16.msra.mxu0 %v3493
      %3658 = vmatprep.subr.bf16.mxu0 0
      %3659 = vmatpush2.bf16.msra.mxu0 %v3492
      %3660 = vmatprep.mubr.bf16.mxu0 %v3053
      %3661 = vmatmul.mubr.bf16.gmra.mxu0 %v3052
      %v3662 = vpop.f32.mrf.mxu0
      %v3663 = vadd.f32 0.0, %v3662
      %v3664 = vpop.f32.mrf.mxu0
      %v3665 = vpop.f32.mrf.mxu0
      %v3666 = vadd.f32 0.0, %v3665
      %v3667 = vpop.f32.mrf.mxu0
      %3668 = vmatprep.mubr.bf16.mxu0 %v3062
      %3669 = vmatmul.mubr.bf16.gmra.mxu0 %v3061
      %v3670 = vpop.f32.mrf.mxu0
      %v3671 = vadd.f32 0.0, %v3670
      %v3672 = vpop.f32.mrf.mxu0
      %v3673 = vpop.f32.mrf.mxu0
      %v3674 = vadd.f32 0.0, %v3673
      %v3675 = vpop.f32.mrf.mxu0
      %3676 = vmatprep.mubr.bf16.mxu0 %v3071
      %3677 = vmatmul.mubr.bf16.gmra.mxu0 %v3070
      %v3678 = vpop.f32.mrf.mxu0
      %v3679 = vadd.f32 0.0, %v3678
      %v3680 = vpop.f32.mrf.mxu0
      %v3681 = vpop.f32.mrf.mxu0
      %v3682 = vadd.f32 0.0, %v3681
      %v3683 = vpop.f32.mrf.mxu0
      %3684 = vmatprep.mubr.bf16.mxu0 %v3080
      %3685 = vmatmul.mubr.bf16.gmra.mxu0 %v3079
      %v3686 = vpop.f32.mrf.mxu0
      %v3687 = vadd.f32 0.0, %v3686
      %v3688 = vpop.f32.mrf.mxu0
      %v3689 = vpop.f32.mrf.mxu0
      %v3690 = vadd.f32 0.0, %v3689
      %v3691 = vpop.f32.mrf.mxu0
      %3692 = vmatprep.mubr.bf16.mxu0 %v3089
      %3693 = vmatmul.mubr.bf16.gmra.mxu0 %v3088
      %v3694 = vpop.f32.mrf.mxu0
      %v3695 = vadd.f32 0.0, %v3694
      %v3696 = vpop.f32.mrf.mxu0
      %v3697 = vpop.f32.mrf.mxu0
      %v3698 = vadd.f32 0.0, %v3697
      %v3699 = vpop.f32.mrf.mxu0
      %3700 = vmatprep.mubr.bf16.mxu0 %v3098
      %3701 = vmatmul.mubr.bf16.gmra.mxu0 %v3097
      %v3702 = vpop.f32.mrf.mxu0
      %v3703 = vadd.f32 0.0, %v3702
      %v3704 = vpop.f32.mrf.mxu0
      %v3705 = vpop.f32.mrf.mxu0
      %v3706 = vadd.f32 0.0, %v3705
      %v3707 = vpop.f32.mrf.mxu0
      %3708 = vmatprep.mubr.bf16.mxu0 %v3107
      %3709 = vmatmul.mubr.bf16.gmra.mxu0 %v3106
      %v3710 = vpop.f32.mrf.mxu0
      %v3711 = vadd.f32 0.0, %v3710
      %v3712 = vpop.f32.mrf.mxu0
      %v3713 = vpop.f32.mrf.mxu0
      %v3714 = vadd.f32 0.0, %v3713
      %v3715 = vpop.f32.mrf.mxu0
      %3716 = vmatprep.mubr.bf16.mxu0 %v3116
      %3717 = vmatmul.mubr.bf16.gmra.mxu0 %v3115
      %v3718 = vpop.f32.mrf.mxu0
      %v3719 = vadd.f32 0.0, %v3718
      %v3720 = vpop.f32.mrf.mxu0
      %v3721 = vpop.f32.mrf.mxu0
      %v3722 = vadd.f32 0.0, %v3721
      %v3723 = vpop.f32.mrf.mxu0
      %3724 = vdwg.mxu0
      %3725 = vmatprep.subr.bf16.mxu0 0
      %3726 = vmatpush1.bf16.msra.mxu0 %v3507
      %3727 = vmatprep.subr.bf16.mxu0 0
      %3728 = vmatpush1.bf16.msra.mxu0 %v3506
      %3729 = vmatprep.subr.bf16.mxu0 0
      %3730 = vmatpush1.bf16.msra.mxu0 %v3505
      %3731 = vmatprep.subr.bf16.mxu0 0
      %3732 = vmatpush1.bf16.msra.mxu0 %v3504
      %3733 = vmatprep.subr.bf16.mxu0 0
      %3734 = vmatpush1.bf16.msra.mxu0 %v3503
      %3735 = vmatprep.subr.bf16.mxu0 0
      %3736 = vmatpush1.bf16.msra.mxu0 %v3502
      %3737 = vmatprep.subr.bf16.mxu0 0
      %3738 = vmatpush1.bf16.msra.mxu0 %v3501
      %3739 = vmatprep.subr.bf16.mxu0 0
      %3740 = vmatpush1.bf16.msra.mxu0 %v3500
      %3741 = vmatprep.subr.bf16.mxu0 0
      %3742 = vmatpush2.bf16.msra.mxu0 %v3515
      %3743 = vmatprep.subr.bf16.mxu0 0
      %3744 = vmatpush2.bf16.msra.mxu0 %v3514
      %3745 = vmatprep.subr.bf16.mxu0 0
      %3746 = vmatpush2.bf16.msra.mxu0 %v3513
      %3747 = vmatprep.subr.bf16.mxu0 0
      %3748 = vmatpush2.bf16.msra.mxu0 %v3512
      %3749 = vmatprep.subr.bf16.mxu0 0
      %3750 = vmatpush2.bf16.msra.mxu0 %v3511
      %3751 = vmatprep.subr.bf16.mxu0 0
      %3752 = vmatpush2.bf16.msra.mxu0 %v3510
      %3753 = vmatprep.subr.bf16.mxu0 0
      %3754 = vmatpush2.bf16.msra.mxu0 %v3509
      %3755 = vmatprep.subr.bf16.mxu0 0
      %3756 = vmatpush2.bf16.msra.mxu0 %v3508
      %3757 = vmatprep.mubr.bf16.mxu0 %v3055
      %3758 = vmatmul.mubr.bf16.gmra.mxu0 %v3054
      %v3759 = vpop.f32.mrf.mxu0
      %v3760 = vadd.f32 %v3663, %v3759
      %v3761 = vpop.f32.mrf.mxu0
      %v3762 = vpop.f32.mrf.mxu0
      %v3763 = vadd.f32 %v3666, %v3762
      %v3764 = vpop.f32.mrf.mxu0
      %3765 = vmatprep.mubr.bf16.mxu0 %v3064
      %3766 = vmatmul.mubr.bf16.gmra.mxu0 %v3063
      %v3767 = vpop.f32.mrf.mxu0
      %v3768 = vadd.f32 %v3671, %v3767
      %v3769 = vpop.f32.mrf.mxu0
      %v3770 = vpop.f32.mrf.mxu0
      %v3771 = vadd.f32 %v3674, %v3770
      %v3772 = vpop.f32.mrf.mxu0
      %3773 = vmatprep.mubr.bf16.mxu0 %v3073
      %3774 = vmatmul.mubr.bf16.gmra.mxu0 %v3072
      %v3775 = vpop.f32.mrf.mxu0
      %v3776 = vadd.f32 %v3679, %v3775
      %v3777 = vpop.f32.mrf.mxu0
      %v3778 = vpop.f32.mrf.mxu0
      %v3779 = vadd.f32 %v3682, %v3778
      %v3780 = vpop.f32.mrf.mxu0
      %3781 = vmatprep.mubr.bf16.mxu0 %v3082
      %3782 = vmatmul.mubr.bf16.gmra.mxu0 %v3081
      %v3783 = vpop.f32.mrf.mxu0
      %v3784 = vadd.f32 %v3687, %v3783
      %v3785 = vpop.f32.mrf.mxu0
      %v3786 = vpop.f32.mrf.mxu0
      %v3787 = vadd.f32 %v3690, %v3786
      %v3788 = vpop.f32.mrf.mxu0
      %3789 = vmatprep.mubr.bf16.mxu0 %v3091
      %3790 = vmatmul.mubr.bf16.gmra.mxu0 %v3090
      %v3791 = vpop.f32.mrf.mxu0
      %v3792 = vadd.f32 %v3695, %v3791
      %v3793 = vpop.f32.mrf.mxu0
      %v3794 = vpop.f32.mrf.mxu0
      %v3795 = vadd.f32 %v3698, %v3794
      %v3796 = vpop.f32.mrf.mxu0
      %3797 = vmatprep.mubr.bf16.mxu0 %v3100
      %3798 = vmatmul.mubr.bf16.gmra.mxu0 %v3099
      %v3799 = vpop.f32.mrf.mxu0
      %v3800 = vadd.f32 %v3703, %v3799
      %v3801 = vpop.f32.mrf.mxu0
      %v3802 = vpop.f32.mrf.mxu0
      %v3803 = vadd.f32 %v3706, %v3802
      %v3804 = vpop.f32.mrf.mxu0
      %3805 = vmatprep.mubr.bf16.mxu0 %v3109
      %3806 = vmatmul.mubr.bf16.gmra.mxu0 %v3108
      %v3807 = vpop.f32.mrf.mxu0
      %v3808 = vadd.f32 %v3711, %v3807
      %v3809 = vpop.f32.mrf.mxu0
      %v3810 = vpop.f32.mrf.mxu0
      %v3811 = vadd.f32 %v3714, %v3810
      %v3812 = vpop.f32.mrf.mxu0
      %3813 = vmatprep.mubr.bf16.mxu0 %v3118
      %3814 = vmatmul.mubr.bf16.gmra.mxu0 %v3117
      %v3815 = vpop.f32.mrf.mxu0
      %v3816 = vadd.f32 %v3719, %v3815
      %v3817 = vpop.f32.mrf.mxu0
      %v3818 = vpop.f32.mrf.mxu0
      %v3819 = vadd.f32 %v3722, %v3818
      %v3820 = vpop.f32.mrf.mxu0
      %3821 = vdwg.mxu0
      %3822 = vmatprep.subr.bf16.mxu0 0
      %3823 = vmatpush1.bf16.msra.mxu0 %v3523
      %3824 = vmatprep.subr.bf16.mxu0 0
      %3825 = vmatpush1.bf16.msra.mxu0 %v3522
      %3826 = vmatprep.subr.bf16.mxu0 0
      %3827 = vmatpush1.bf16.msra.mxu0 %v3521
      %3828 = vmatprep.subr.bf16.mxu0 0
      %3829 = vmatpush1.bf16.msra.mxu0 %v3520
      %3830 = vmatprep.subr.bf16.mxu0 0
      %3831 = vmatpush1.bf16.msra.mxu0 %v3519
      %3832 = vmatprep.subr.bf16.mxu0 0
      %3833 = vmatpush1.bf16.msra.mxu0 %v3518
      %3834 = vmatprep.subr.bf16.mxu0 0
      %3835 = vmatpush1.bf16.msra.mxu0 %v3517
      %3836 = vmatprep.subr.bf16.mxu0 0
      %3837 = vmatpush1.bf16.msra.mxu0 %v3516
      %3838 = vmatprep.subr.bf16.mxu0 0
      %3839 = vmatpush2.bf16.msra.mxu0 %v3531
      %3840 = vmatprep.subr.bf16.mxu0 0
      %3841 = vmatpush2.bf16.msra.mxu0 %v3530
      %3842 = vmatprep.subr.bf16.mxu0 0
      %3843 = vmatpush2.bf16.msra.mxu0 %v3529
      %3844 = vmatprep.subr.bf16.mxu0 0
      %3845 = vmatpush2.bf16.msra.mxu0 %v3528
      %3846 = vmatprep.subr.bf16.mxu0 0
      %3847 = vmatpush2.bf16.msra.mxu0 %v3527
      %3848 = vmatprep.subr.bf16.mxu0 0
      %3849 = vmatpush2.bf16.msra.mxu0 %v3526
      %3850 = vmatprep.subr.bf16.mxu0 0
      %3851 = vmatpush2.bf16.msra.mxu0 %v3525
      %3852 = vmatprep.subr.bf16.mxu0 0
      %3853 = vmatpush2.bf16.msra.mxu0 %v3524
      %3854 = vmatprep.mubr.bf16.mxu0 %v3057
      %3855 = vmatmul.mubr.bf16.gmra.mxu0 %v3056
      %v3856 = vpop.f32.mrf.mxu0
      %v3857 = vadd.f32 %v3760, %v3856
      %v3858 = vpop.f32.mrf.mxu0
      %v3859 = vpop.f32.mrf.mxu0
      %v3860 = vadd.f32 %v3763, %v3859
      %v3861 = vpop.f32.mrf.mxu0
      %3862 = vmatprep.mubr.bf16.mxu0 %v3066
      %3863 = vmatmul.mubr.bf16.gmra.mxu0 %v3065
      %v3864 = vpop.f32.mrf.mxu0
      %v3865 = vadd.f32 %v3768, %v3864
      %v3866 = vpop.f32.mrf.mxu0
      %v3867 = vpop.f32.mrf.mxu0
      %v3868 = vadd.f32 %v3771, %v3867
      %v3869 = vpop.f32.mrf.mxu0
      %3870 = vmatprep.mubr.bf16.mxu0 %v3075
      %3871 = vmatmul.mubr.bf16.gmra.mxu0 %v3074
      %v3872 = vpop.f32.mrf.mxu0
      %v3873 = vadd.f32 %v3776, %v3872
      %v3874 = vpop.f32.mrf.mxu0
      %v3875 = vpop.f32.mrf.mxu0
      %v3876 = vadd.f32 %v3779, %v3875
      %v3877 = vpop.f32.mrf.mxu0
      %3878 = vmatprep.mubr.bf16.mxu0 %v3084
      %3879 = vmatmul.mubr.bf16.gmra.mxu0 %v3083
      %v3880 = vpop.f32.mrf.mxu0
      %v3881 = vadd.f32 %v3784, %v3880
      %v3882 = vpop.f32.mrf.mxu0
      %v3883 = vpop.f32.mrf.mxu0
      %v3884 = vadd.f32 %v3787, %v3883
      %v3885 = vpop.f32.mrf.mxu0
      %3886 = vmatprep.mubr.bf16.mxu0 %v3093
      %3887 = vmatmul.mubr.bf16.gmra.mxu0 %v3092
      %v3888 = vpop.f32.mrf.mxu0
      %v3889 = vadd.f32 %v3792, %v3888
      %v3890 = vpop.f32.mrf.mxu0
      %v3891 = vpop.f32.mrf.mxu0
      %v3892 = vadd.f32 %v3795, %v3891
      %v3893 = vpop.f32.mrf.mxu0
      %3894 = vmatprep.mubr.bf16.mxu0 %v3102
      %3895 = vmatmul.mubr.bf16.gmra.mxu0 %v3101
      %v3896 = vpop.f32.mrf.mxu0
      %v3897 = vadd.f32 %v3800, %v3896
      %v3898 = vpop.f32.mrf.mxu0
      %v3899 = vpop.f32.mrf.mxu0
      %v3900 = vadd.f32 %v3803, %v3899
      %v3901 = vpop.f32.mrf.mxu0
      %3902 = vmatprep.mubr.bf16.mxu0 %v3111
      %3903 = vmatmul.mubr.bf16.gmra.mxu0 %v3110
      %v3904 = vpop.f32.mrf.mxu0
      %v3905 = vadd.f32 %v3808, %v3904
      %v3906 = vpop.f32.mrf.mxu0
      %v3907 = vpop.f32.mrf.mxu0
      %v3908 = vadd.f32 %v3811, %v3907
      %v3909 = vpop.f32.mrf.mxu0
      %3910 = vmatprep.mubr.bf16.mxu0 %v3120
      %3911 = vmatmul.mubr.bf16.gmra.mxu0 %v3119
      %v3912 = vpop.f32.mrf.mxu0
      %v3913 = vadd.f32 %v3816, %v3912
      %v3914 = vpop.f32.mrf.mxu0
      %v3915 = vpop.f32.mrf.mxu0
      %v3916 = vadd.f32 %v3819, %v3915
      %v3917 = vpop.f32.mrf.mxu0
      %3918 = vdwg.mxu0
      %3919 = vmatprep.subr.bf16.mxu0 0
      %3920 = vmatpush1.bf16.msra.mxu0 %v3539
      %3921 = vmatprep.subr.bf16.mxu0 0
      %3922 = vmatpush1.bf16.msra.mxu0 %v3538
      %3923 = vmatprep.subr.bf16.mxu0 0
      %3924 = vmatpush1.bf16.msra.mxu0 %v3537
      %3925 = vmatprep.subr.bf16.mxu0 0
      %3926 = vmatpush1.bf16.msra.mxu0 %v3536
      %3927 = vmatprep.subr.bf16.mxu0 0
      %3928 = vmatpush1.bf16.msra.mxu0 %v3535
      %3929 = vmatprep.subr.bf16.mxu0 0
      %3930 = vmatpush1.bf16.msra.mxu0 %v3534
      %3931 = vmatprep.subr.bf16.mxu0 0
      %3932 = vmatpush1.bf16.msra.mxu0 %v3533
      %3933 = vmatprep.subr.bf16.mxu0 0
      %3934 = vmatpush1.bf16.msra.mxu0 %v3532
      %3935 = vmatprep.subr.bf16.mxu0 0
      %3936 = vmatpush2.bf16.msra.mxu0 %v3547
      %3937 = vmatprep.subr.bf16.mxu0 0
      %3938 = vmatpush2.bf16.msra.mxu0 %v3546
      %3939 = vmatprep.subr.bf16.mxu0 0
      %3940 = vmatpush2.bf16.msra.mxu0 %v3545
      %3941 = vmatprep.subr.bf16.mxu0 0
      %3942 = vmatpush2.bf16.msra.mxu0 %v3544
      %3943 = vmatprep.subr.bf16.mxu0 0
      %3944 = vmatpush2.bf16.msra.mxu0 %v3543
      %3945 = vmatprep.subr.bf16.mxu0 0
      %3946 = vmatpush2.bf16.msra.mxu0 %v3542
      %3947 = vmatprep.subr.bf16.mxu0 0
      %3948 = vmatpush2.bf16.msra.mxu0 %v3541
      %3949 = vmatprep.subr.bf16.mxu0 0
      %3950 = vmatpush2.bf16.msra.mxu0 %v3540
      %3951 = vmatprep.mubr.bf16.mxu0 %v3059
      %3952 = vmatmul.mubr.bf16.gmra.mxu0 %v3058
      %v3953 = vpop.f32.mrf.mxu0
      %v3954 = vadd.f32 %v3857, %v3953
      %v3955 = vpop.f32.mrf.mxu0
      %v3956 = vpop.f32.mrf.mxu0
      %v3957 = vadd.f32 %v3860, %v3956
      %v3958 = vpop.f32.mrf.mxu0
      %3959 = vmatprep.mubr.bf16.mxu0 %v3068
      %3960 = vmatmul.mubr.bf16.gmra.mxu0 %v3067
      %v3961 = vpop.f32.mrf.mxu0
      %v3962 = vadd.f32 %v3865, %v3961
      %v3963 = vpop.f32.mrf.mxu0
      %v3964 = vpop.f32.mrf.mxu0
      %v3965 = vadd.f32 %v3868, %v3964
      %v3966 = vpop.f32.mrf.mxu0
      %3967 = vmatprep.mubr.bf16.mxu0 %v3077
      %3968 = vmatmul.mubr.bf16.gmra.mxu0 %v3076
      %v3969 = vpop.f32.mrf.mxu0
      %v3970 = vadd.f32 %v3873, %v3969
      %v3971 = vpop.f32.mrf.mxu0
      %v3972 = vpop.f32.mrf.mxu0
      %v3973 = vadd.f32 %v3876, %v3972
      %v3974 = vpop.f32.mrf.mxu0
      %3975 = vmatprep.mubr.bf16.mxu0 %v3086
      %3976 = vmatmul.mubr.bf16.gmra.mxu0 %v3085
      %v3977 = vpop.f32.mrf.mxu0
      %v3978 = vadd.f32 %v3881, %v3977
      %v3979 = vpop.f32.mrf.mxu0
      %v3980 = vpop.f32.mrf.mxu0
      %v3981 = vadd.f32 %v3884, %v3980
      %v3982 = vpop.f32.mrf.mxu0
      %3983 = vmatprep.mubr.bf16.mxu0 %v3095
      %3984 = vmatmul.mubr.bf16.gmra.mxu0 %v3094
      %v3985 = vpop.f32.mrf.mxu0
      %v3986 = vadd.f32 %v3889, %v3985
      %v3987 = vpop.f32.mrf.mxu0
      %v3988 = vpop.f32.mrf.mxu0
      %v3989 = vadd.f32 %v3892, %v3988
      %v3990 = vpop.f32.mrf.mxu0
      %3991 = vmatprep.mubr.bf16.mxu0 %v3104
      %3992 = vmatmul.mubr.bf16.gmra.mxu0 %v3103
      %v3993 = vpop.f32.mrf.mxu0
      %v3994 = vadd.f32 %v3897, %v3993
      %v3995 = vpop.f32.mrf.mxu0
      %v3996 = vpop.f32.mrf.mxu0
      %v3997 = vadd.f32 %v3900, %v3996
      %v3998 = vpop.f32.mrf.mxu0
      %3999 = vmatprep.mubr.bf16.mxu0 %v3113
      %4000 = vmatmul.mubr.bf16.gmra.mxu0 %v3112
      %v4001 = vpop.f32.mrf.mxu0
      %v4002 = vadd.f32 %v3905, %v4001
      %v4003 = vpop.f32.mrf.mxu0
      %v4004 = vpop.f32.mrf.mxu0
      %v4005 = vadd.f32 %v3908, %v4004
      %v4006 = vpop.f32.mrf.mxu0
      %4007 = vmatprep.mubr.bf16.mxu0 %v3122
      %4008 = vmatmul.mubr.bf16.gmra.mxu0 %v3121
      %v4009 = vpop.f32.mrf.mxu0
      %v4010 = vadd.f32 %v3913, %v4009
      %v4011 = vpop.f32.mrf.mxu0
      %v4012 = vpop.f32.mrf.mxu0
      %v4013 = vadd.f32 %v3916, %v4012
      %v4014 = vpop.f32.mrf.mxu0
      %4015 = vdwg.mxu0
      %4016 = vmatprep.subr.bf16.mxu0 0
      %4017 = vmatpush1.bf16.msra.mxu0 %v3555
      %4018 = vmatprep.subr.bf16.mxu0 0
      %4019 = vmatpush1.bf16.msra.mxu0 %v3554
      %4020 = vmatprep.subr.bf16.mxu0 0
      %4021 = vmatpush1.bf16.msra.mxu0 %v3553
      %4022 = vmatprep.subr.bf16.mxu0 0
      %4023 = vmatpush1.bf16.msra.mxu0 %v3552
      %4024 = vmatprep.subr.bf16.mxu0 0
      %4025 = vmatpush1.bf16.msra.mxu0 %v3551
      %4026 = vmatprep.subr.bf16.mxu0 0
      %4027 = vmatpush1.bf16.msra.mxu0 %v3550
      %4028 = vmatprep.subr.bf16.mxu0 0
      %4029 = vmatpush1.bf16.msra.mxu0 %v3549
      %4030 = vmatprep.subr.bf16.mxu0 0
      %4031 = vmatpush1.bf16.msra.mxu0 %v3548
      %4032 = vmatprep.subr.bf16.mxu0 0
      %4033 = vmatpush2.bf16.msra.mxu0 0
      %4034 = vmatprep.subr.bf16.mxu0 0
      %4035 = vmatpush2.bf16.msra.mxu0 0
      %4036 = vmatprep.subr.bf16.mxu0 0
      %4037 = vmatpush2.bf16.msra.mxu0 0
      %4038 = vmatprep.subr.bf16.mxu0 0
      %4039 = vmatpush2.bf16.msra.mxu0 0
      %4040 = vmatprep.subr.bf16.mxu0 0
      %4041 = vmatpush2.bf16.msra.mxu0 0
      %4042 = vmatprep.subr.bf16.mxu0 0
      %4043 = vmatpush2.bf16.msra.mxu0 0
      %4044 = vmatprep.subr.bf16.mxu0 0
      %4045 = vmatpush2.bf16.msra.mxu0 0
      %4046 = vmatprep.subr.bf16.mxu0 0
      %4047 = vmatpush2.bf16.msra.mxu0 0
      %4048 = vmatprep.mubr.bf16.mxu0 0
      %4049 = vmatmul.mubr.bf16.gmra.mxu0 %v3060
      %v4050 = vpop.f32.mrf.mxu0
      %v4051 = vadd.f32 %v3954, %v4050
      %v4052 = vpop.f32.mrf.mxu0
      %v4053 = vpop.f32.mrf.mxu0
      %v4054 = vadd.f32 %v3957, %v4053
      %v4055 = vpop.f32.mrf.mxu0
      %4056 = vmatprep.mubr.bf16.mxu0 0
      %4057 = vmatmul.mubr.bf16.gmra.mxu0 %v3069
      %v4058 = vpop.f32.mrf.mxu0
      %v4059 = vadd.f32 %v3962, %v4058
      %v4060 = vpop.f32.mrf.mxu0
      %v4061 = vpop.f32.mrf.mxu0
      %v4062 = vadd.f32 %v3965, %v4061
      %v4063 = vpop.f32.mrf.mxu0
      %4064 = vmatprep.mubr.bf16.mxu0 0
      %4065 = vmatmul.mubr.bf16.gmra.mxu0 %v3078
      %v4066 = vpop.f32.mrf.mxu0
      %v4067 = vadd.f32 %v3970, %v4066
      %v4068 = vpop.f32.mrf.mxu0
      %v4069 = vpop.f32.mrf.mxu0
      %v4070 = vadd.f32 %v3973, %v4069
      %v4071 = vpop.f32.mrf.mxu0
      %4072 = vmatprep.mubr.bf16.mxu0 0
      %4073 = vmatmul.mubr.bf16.gmra.mxu0 %v3087
      %v4074 = vpop.f32.mrf.mxu0
      %v4075 = vadd.f32 %v3978, %v4074
      %v4076 = vpop.f32.mrf.mxu0
      %v4077 = vpop.f32.mrf.mxu0
      %v4078 = vadd.f32 %v3981, %v4077
      %v4079 = vpop.f32.mrf.mxu0
      %4080 = vmatprep.mubr.bf16.mxu0 0
      %4081 = vmatmul.mubr.bf16.gmra.mxu0 %v3096
      %v4082 = vpop.f32.mrf.mxu0
      %v4083 = vadd.f32 %v3986, %v4082
      %v4084 = vpop.f32.mrf.mxu0
      %v4085 = vpop.f32.mrf.mxu0
      %v4086 = vadd.f32 %v3989, %v4085
      %v4087 = vpop.f32.mrf.mxu0
      %4088 = vmatprep.mubr.bf16.mxu0 0
      %4089 = vmatmul.mubr.bf16.gmra.mxu0 %v3105
      %v4090 = vpop.f32.mrf.mxu0
      %v4091 = vadd.f32 %v3994, %v4090
      %v4092 = vpop.f32.mrf.mxu0
      %v4093 = vpop.f32.mrf.mxu0
      %v4094 = vadd.f32 %v3997, %v4093
      %v4095 = vpop.f32.mrf.mxu0
      %4096 = vmatprep.mubr.bf16.mxu0 0
      %4097 = vmatmul.mubr.bf16.gmra.mxu0 %v3114
      %v4098 = vpop.f32.mrf.mxu0
      %v4099 = vadd.f32 %v4002, %v4098
      %v4100 = vpop.f32.mrf.mxu0
      %v4101 = vpop.f32.mrf.mxu0
      %v4102 = vadd.f32 %v4005, %v4101
      %v4103 = vpop.f32.mrf.mxu0
      %4104 = vmatprep.mubr.bf16.mxu0 0
      %4105 = vmatmul.mubr.bf16.gmra.mxu0 %v3123
      %v4106 = vpop.f32.mrf.mxu0
      %v4107 = vadd.f32 %v4010, %v4106
      %v4108 = vpop.f32.mrf.mxu0
      %v4109 = vpop.f32.mrf.mxu0
      %v4110 = vadd.f32 %v4013, %v4109
      %v4111 = vpop.f32.mrf.mxu0
      %4112 = vdwg.mxu0
      %4113 = vst [vmem:[#allocation3] sm:$0xff] %v4051
      %4114 = vst [vmem:[#allocation3 + $0x8] sm:$0xff] %v4054
      %4115 = vst [vmem:[#allocation3 + $0x10] sm:$0xff] %v4059
      %4116 = vst [vmem:[#allocation3 + $0x18] sm:$0xff] %v4062
      %4117 = vst [vmem:[#allocation3 + $0x20] sm:$0xff] %v4067
      %4118 = vst [vmem:[#allocation3 + $0x28] sm:$0xff] %v4070
      %4119 = vst [vmem:[#allocation3 + $0x30] sm:$0xff] %v4075
      %4120 = vst [vmem:[#allocation3 + $0x38] sm:$0xff] %v4078
      %4121 = vst [vmem:[#allocation3 + $0x40] sm:$0xff] %v4083
      %4122 = vst [vmem:[#allocation3 + $0x48] sm:$0xff] %v4086
      %4123 = vst [vmem:[#allocation3 + $0x50] sm:$0xff] %v4091
      %4124 = vst [vmem:[#allocation3 + $0x58] sm:$0xff] %v4094
      %4125 = vst [vmem:[#allocation3 + $0x60] sm:$0xff] %v4099
      %4126 = vst [vmem:[#allocation3 + $0x68] sm:$0xff] %v4102
      %4127 = vst [vmem:[#allocation3 + $0x70] sm:$0xff] %v4107
      %4128 = vst [vmem:[#allocation3 + $0x78] sm:$0xff] %v4110
      %v4129 = vld [vmem:[#allocation3] sm:$0xff]
      %v4130 = vld [vmem:[#allocation3 + $0x8] sm:$0xff]
      %v4131 = vld [vmem:[#allocation3 + $0x10] sm:$0xff]
      %v4132 = vld [vmem:[#allocation3 + $0x18] sm:$0xff]
      %v4133 = vld [vmem:[#allocation3 + $0x20] sm:$0xff]
      %v4134 = vld [vmem:[#allocation3 + $0x28] sm:$0xff]
      %v4135 = vld [vmem:[#allocation3 + $0x30] sm:$0xff]
      %v4136 = vld [vmem:[#allocation3 + $0x38] sm:$0xff]
      %v4137 = vld [vmem:[#allocation3 + $0x40] sm:$0xff]
      %v4138 = vld [vmem:[#allocation3 + $0x48] sm:$0xff]
      %v4139 = vld [vmem:[#allocation3 + $0x50] sm:$0xff]
      %v4140 = vld [vmem:[#allocation3 + $0x58] sm:$0xff]
      %v4141 = vld [vmem:[#allocation3 + $0x60] sm:$0xff]
      %v4142 = vld [vmem:[#allocation3 + $0x68] sm:$0xff]
      %v4143 = vld [vmem:[#allocation3 + $0x70] sm:$0xff]
      %v4144 = vld [vmem:[#allocation3 + $0x78] sm:$0xff]
      %v4145 = vld [vmem:[%s4] sm:$0x1]
      %v4147 = vlaneseq
      %v4148 = vshrl.u32 %v4147, 7
      %v4149 = vsub.s32 0, %v4148
      %v4150 = vrot.slane %v4145, %v4149
      %v4152 = vadd.f32 %v4129, %v4150
      %v4153 = vadd.f32 %v4130, %v4150
      %v4154 = vadd.f32 %v4131, %v4150
      %v4155 = vadd.f32 %v4132, %v4150
      %v4156 = vadd.f32 %v4133, %v4150
      %v4157 = vadd.f32 %v4134, %v4150
      %v4158 = vadd.f32 %v4135, %v4150
      %v4159 = vadd.f32 %v4136, %v4150
      %v4160 = vadd.f32 %v4137, %v4150
      %v4161 = vadd.f32 %v4138, %v4150
      %v4162 = vadd.f32 %v4139, %v4150
      %v4163 = vadd.f32 %v4140, %v4150
      %v4164 = vadd.f32 %v4141, %v4150
      %v4165 = vadd.f32 %v4142, %v4150
      %v4166 = vadd.f32 %v4143, %v4150
      %v4167 = vadd.f32 %v4144, %v4150
      %v4168 = vld [vmem:[%s219] sm:$0xf]
      %v4169 = vld [vmem:[%s219 + $0x4] sm:$0xf]
      %v4170 = vld [vmem:[%s219 + $0x8] sm:$0xf]
      %v4171 = vld [vmem:[%s219 + $0xc] sm:$0xf]
      %v4172 = vld [vmem:[%s219 + $0x10] sm:$0xf]
      %v4173 = vld [vmem:[%s219 + $0x14] sm:$0xf]
      %v4174 = vld [vmem:[%s219 + $0x18] sm:$0xf]
      %v4175 = vld [vmem:[%s219 + $0x1c] sm:$0xf]
      %v4176 = vld [vmem:[%s219 + $0x20] sm:$0xf]
      %v4177 = vld [vmem:[%s219 + $0x24] sm:$0xf]
      %v4178 = vld [vmem:[%s219 + $0x28] sm:$0xf]
      %v4179 = vld [vmem:[%s219 + $0x2c] sm:$0xf]
      %v4180 = vld [vmem:[%s219 + $0x30] sm:$0xf]
      %v4181 = vld [vmem:[%s219 + $0x34] sm:$0xf]
      %v4182 = vld [vmem:[%s219 + $0x38] sm:$0xf]
      %v4183 = vld [vmem:[%s219 + $0x3c] sm:$0xf]
      %v4184 = vunpack.c.l.bf16 %v4168
      %v4185 = vunpack.c.l.bf16 %v4169
      %v4186 = vunpack.c.l.bf16 %v4170
      %v4187 = vunpack.c.l.bf16 %v4171
      %v4188 = vunpack.c.l.bf16 %v4172
      %v4189 = vunpack.c.l.bf16 %v4173
      %v4190 = vunpack.c.l.bf16 %v4174
      %v4191 = vunpack.c.l.bf16 %v4175
      %v4192 = vunpack.c.l.bf16 %v4176
      %v4193 = vunpack.c.l.bf16 %v4177
      %v4194 = vunpack.c.l.bf16 %v4178
      %v4195 = vunpack.c.l.bf16 %v4179
      %v4196 = vunpack.c.l.bf16 %v4180
      %v4197 = vunpack.c.l.bf16 %v4181
      %v4198 = vunpack.c.l.bf16 %v4182
      %v4199 = vunpack.c.l.bf16 %v4183
      %v4200 = vadd.f32 %v4152, %v4184
      %v4201 = vadd.f32 %v4153, %v4185
      %v4202 = vadd.f32 %v4154, %v4186
      %v4203 = vadd.f32 %v4155, %v4187
      %v4204 = vadd.f32 %v4156, %v4188
      %v4205 = vadd.f32 %v4157, %v4189
      %v4206 = vadd.f32 %v4158, %v4190
      %v4207 = vadd.f32 %v4159, %v4191
      %v4208 = vadd.f32 %v4160, %v4192
      %v4209 = vadd.f32 %v4161, %v4193
      %v4210 = vadd.f32 %v4162, %v4194
      %v4211 = vadd.f32 %v4163, %v4195
      %v4212 = vadd.f32 %v4164, %v4196
      %v4213 = vadd.f32 %v4165, %v4197
      %v4214 = vadd.f32 %v4166, %v4198
      %v4215 = vadd.f32 %v4167, %v4199
      %v4216 = vmax.f32 %v4200, 0.0
      %v4217 = vmax.f32 %v4201, 0.0
      %v4218 = vmax.f32 %v4202, 0.0
      %v4219 = vmax.f32 %v4203, 0.0
      %v4220 = vmax.f32 %v4204, 0.0
      %v4221 = vmax.f32 %v4205, 0.0
      %v4222 = vmax.f32 %v4206, 0.0
      %v4223 = vmax.f32 %v4207, 0.0
      %v4224 = vmax.f32 %v4208, 0.0
      %v4225 = vmax.f32 %v4209, 0.0
      %v4226 = vmax.f32 %v4210, 0.0
      %v4227 = vmax.f32 %v4211, 0.0
      %v4228 = vmax.f32 %v4212, 0.0
      %v4229 = vmax.f32 %v4213, 0.0
      %v4230 = vmax.f32 %v4214, 0.0
      %v4231 = vmax.f32 %v4215, 0.0
      %4232 = vst [vmem:[%s224] sm:$0xff] %v4216
      %4233 = vst [vmem:[%s224 + $0x8] sm:$0xff] %v4217
      %4234 = vst [vmem:[%s224 + $0x10] sm:$0xff] %v4218
      %4235 = vst [vmem:[%s224 + $0x18] sm:$0xff] %v4219
      %4236 = vst [vmem:[%s224 + $0x20] sm:$0xff] %v4220
      %4237 = vst [vmem:[%s224 + $0x28] sm:$0xff] %v4221
      %4238 = vst [vmem:[%s224 + $0x30] sm:$0xff] %v4222
      %4239 = vst [vmem:[%s224 + $0x38] sm:$0xff] %v4223
      %4240 = vst [vmem:[%s224 + $0x40] sm:$0xff] %v4224
      %4241 = vst [vmem:[%s224 + $0x48] sm:$0xff] %v4225
      %4242 = vst [vmem:[%s224 + $0x50] sm:$0xff] %v4226
      %4243 = vst [vmem:[%s224 + $0x58] sm:$0xff] %v4227
      %4244 = vst [vmem:[%s224 + $0x60] sm:$0xff] %v4228
      %4245 = vst [vmem:[%s224 + $0x68] sm:$0xff] %v4229
      %4246 = vst [vmem:[%s224 + $0x70] sm:$0xff] %v4230
      %4247 = vst [vmem:[%s224 + $0x78] sm:$0xff] %v4231
      %p4248 = scmp.lt.s32.totalorder %s16, 1
      %s4249 = scalar_select %p4248, %s16, 1
      %s4250 = smul.addr %s4249, 16
      %s4251 = smul.addr %s4250, 8
      %s4252 = scalar_lea.vmem %s5, %s4251
      // Predicated region
      $region41: #{basic_block.1} parent=39 // pred_check
        %p4253 = pneg %p144
      $region42: #{basic_block.1} parent=39 // pred_check_branch
        %4255 = sbr.rel (%p4253) target = $region44
      $region43: #{basic_block.1} parent=39 // pred_region
        _
      $region44: #{basic_block.1} parent=39 // pred_fallthru
        _
    $region40: #{basic_block.1} parent=5 // pred_fallthru
      _
    %p4256 = scmp.le.s32.totalorder 2, %s11
    // Predicated region
    $region45: #{basic_block.1} parent=5 // pred_check
      %p4257 = pneg %p4256
    $region46: #{basic_block.1} parent=5 // pred_check_branch
      %4259 = sbr.rel (%p4257) target = $region48
    $region47: #{basic_block.1} parent=5 // pred_region
      %s4260 = ssub.s32 %s11, 2
      // Predicated region
      $region49: #{basic_block.1} parent=47 // pred_check
        %p4261 = pneg %p150
      $region50: #{basic_block.1} parent=47 // pred_check_branch
        %4263 = sbr.rel (%p4261) target = $region52
      $region51: #{basic_block.1} parent=47 // pred_region
        %p4264 = scmp.lt.s32.totalorder %s17, 1
        %s4265 = scalar_select %p4264, %s17, 1
        %s4266 = smul.addr %s4265, 16
        %s4267 = smul.addr %s4266, 8
        %s4268 = scalar_lea.vmem %s5, %s4267
      $region52: #{basic_block.1} parent=47 // pred_fallthru
        _
    $region48: #{basic_block.1} parent=5 // pred_fallthru
      _
  $region6: #{basic_block.1} parent=0 // loop_footer
    %s15 = sadd.s32 1, %s11
  $region7: #{basic_block.1} parent=0 // loop_footer_branch
    %10 = sbr.rel target = $region3
  $region8: #{basic_block.1} parent=0 // loop_exit
    _

// kernel: basic_block.1
$region0: #{basic_block.1}
  #allocation0 [shape = 'u32[]', space=smem, size = 0x4, offset = 0x4, fixed_abs, tag = 'smem constant byte address 0x4 - core index']
  #allocation1 [shape = 'u32[144,128]{1,0:T(1,128)}', space=vmem, size = 0x12000, scoped, tag = 'internal scratch']
  #allocation2 [shape = 'bf16[8,16,1152]{2,1,0:T(8,128)(2,1)}', space=vmem, size = 0x48000, scoped, tag = 'scratch operand']
  #allocation3 [shape = 'f32[8,16,128]{2,1,0:T(8,128)}', space=vmem, size = 0x10000, scoped, tag = 'scratch operand']
  %s0 = inlined_call_operand.vmem [shape: bf16[2,8,16,128], index: 0, kind: input, shape index: {}]
  %s1 = inlined_call_operand.vmem [shape: bf16[1152,128], index: 1, kind: input, shape index: {}]
  %s2 = inlined_call_operand.vmem [shape: f32[1,128], index: 2, kind: input, shape index: {}]
  %s3 = inlined_call_operand.vmem [shape: bf16[1152,128], index: 3, kind: input, shape index: {}]
  %s4 = inlined_call_operand.vmem [shape: f32[1,128], index: 4, kind: input, shape index: {}]
  %s5 = inlined_call_operand.vmem [shape: f32[2,8,16,128], index: 5, kind: output, shape index: {}]
  %s6 = sld [smem:[#allocation0]]
  $region53: #{basic_block.1} parent=0
    _
  %s8 = ssub.s32 1, %s6
  %s9 = scalar_select 0, %s8, %s6
  loop: start=0, step=1, limit=4
  $region2: #{basic_block.1} parent=0 // loop_pre_header
    _
  $region3: #{basic_block.1} parent=0 // loop_header
    %s11 = sphi 0, %s15
    %p12 = scmp.ge.s32.totalorder %s11, 4
    %s21 = sphi 0, %s23
    %s24 = sphi 0, %s21
    %s25 = sphi 0, %s24
    %s41 = sphi 0, %s25
    %s45 = sphi 0, %s45
    %s47 = sphi 0, %s45
    %s48 = sphi 0, %s47
    %s62 = sphi 0, %s48
    %s66 = sphi 0, %s66
    %s68 = sphi 0, %s66
    %s69 = sphi 0, %s68
    %s83 = sphi 0, %s69
    %s87 = sphi 0, %s87
    %s89 = sphi 0, %s87
    %s90 = sphi 0, %s89
    %s104 = sphi 0, %s90
    %s108 = sphi 0, %s108
    %s110 = sphi 0, %s108
    %s111 = sphi 0, %s110
    %s125 = sphi 0, %s111
    %s131 = sphi 0, %s133
    %s134 = sphi 0, %s131
    %s135 = sphi 0, %s134
    %s151 = sphi 0, %s135
  $region4: #{basic_block.1} parent=0 // loop_header_branch
    %14 = sbr.rel (%p12) target = $region8
  $region5: #{basic_block.1} parent=0 // loop_body
    %s16 = ssub.s32 %s11, 1
    %s17 = ssub.s32 %s11, 2
    %s18 = sadd.s32 %s11, 1
    %s19 = ssub.s32 %s11, %s18
    %p20 = scmp.eq.s32.totalorder %s19, 0
    %s22 = sadd.s32 %s21, 1
    %s23 = scalar_select %p20, %s21, %s22
    %p26 = pneg %p20
    %p27 = scmp.eq.s32.totalorder %s11, 1
    %p28 = por %p26, %p27
    %p29 = scmp.ne.s32.totalorder %s21, %s24
    %p30 = scmp.eq.s32.totalorder %s11, 0
    %p31 = por %p29, %p30
    %p32 = scmp.ne.s32.totalorder %s21, %s24
    %p33 = scmp.eq.s32.totalorder %s16, 1
    %p34 = por %p32, %p33
    %p35 = scmp.ne.s32.totalorder %s24, %s25
    %p36 = scmp.eq.s32.totalorder %s16, 0
    %p37 = por %p35, %p36
    %p38 = scmp.ne.s32.totalorder %s24, %s25
    %p39 = scmp.eq.s32.totalorder %s17, 1
    %p40 = por %p38, %p39
    %p42 = scmp.ne.s32.totalorder %s25, %s41
    %p43 = scmp.eq.s32.totalorder %s17, 0
    %p44 = por %p42, %p43
    %s46 = sadd.s32 %s45, 1
    %p49 = scmp.eq.s32.totalorder %s11, 1
    %p50 = scmp.ne.s32.totalorder %s45, %s47
    %p51 = scmp.eq.s32.totalorder %s11, 0
    %p52 = por %p50, %p51
    %p53 = scmp.ne.s32.totalorder %s45, %s47
    %p54 = scmp.eq.s32.totalorder %s16, 1
    %p55 = por %p53, %p54
    %p56 = scmp.ne.s32.totalorder %s47, %s48
    %p57 = scmp.eq.s32.totalorder %s16, 0
    %p58 = por %p56, %p57
    %p59 = scmp.ne.s32.totalorder %s47, %s48
    %p60 = scmp.eq.s32.totalorder %s17, 1
    %p61 = por %p59, %p60
    %p63 = scmp.ne.s32.totalorder %s48, %s62
    %p64 = scmp.eq.s32.totalorder %s17, 0
    %p65 = por %p63, %p64
    %s67 = sadd.s32 %s66, 1
    %p70 = scmp.eq.s32.totalorder %s11, 1
    %p71 = scmp.ne.s32.totalorder %s66, %s68
    %p72 = scmp.eq.s32.totalorder %s11, 0
    %p73 = por %p71, %p72
    %p74 = scmp.ne.s32.totalorder %s66, %s68
    %p75 = scmp.eq.s32.totalorder %s16, 1
    %p76 = por %p74, %p75
    %p77 = scmp.ne.s32.totalorder %s68, %s69
    %p78 = scmp.eq.s32.totalorder %s16, 0
    %p79 = por %p77, %p78
    %p80 = scmp.ne.s32.totalorder %s68, %s69
    %p81 = scmp.eq.s32.totalorder %s17, 1
    %p82 = por %p80, %p81
    %p84 = scmp.ne.s32.totalorder %s69, %s83
    %p85 = scmp.eq.s32.totalorder %s17, 0
    %p86 = por %p84, %p85
    %s88 = sadd.s32 %s87, 1
    %p91 = scmp.eq.s32.totalorder %s11, 1
    %p92 = scmp.ne.s32.totalorder %s87, %s89
    %p93 = scmp.eq.s32.totalorder %s11, 0
    %p94 = por %p92, %p93
    %p95 = scmp.ne.s32.totalorder %s87, %s89
    %p96 = scmp.eq.s32.totalorder %s16, 1
    %p97 = por %p95, %p96
    %p98 = scmp.ne.s32.totalorder %s89, %s90
    %p99 = scmp.eq.s32.totalorder %s16, 0
    %p100 = por %p98, %p99
    %p101 = scmp.ne.s32.totalorder %s89, %s90
    %p102 = scmp.eq.s32.totalorder %s17, 1
    %p103 = por %p101, %p102
    %p105 = scmp.ne.s32.totalorder %s90, %s104
    %p106 = scmp.eq.s32.totalorder %s17, 0
    %p107 = por %p105, %p106
    %s109 = sadd.s32 %s108, 1
    %p112 = scmp.eq.s32.totalorder %s11, 1
    %p113 = scmp.ne.s32.totalorder %s108, %s110
    %p114 = scmp.eq.s32.totalorder %s11, 0
    %p115 = por %p113, %p114
    %p116 = scmp.ne.s32.totalorder %s108, %s110
    %p117 = scmp.eq.s32.totalorder %s16, 1
    %p118 = por %p116, %p117
    %p119 = scmp.ne.s32.totalorder %s110, %s111
    %p120 = scmp.eq.s32.totalorder %s16, 0
    %p121 = por %p119, %p120
    %p122 = scmp.ne.s32.totalorder %s110, %s111
    %p123 = scmp.eq.s32.totalorder %s17, 1
    %p124 = por %p122, %p123
    %p126 = scmp.ne.s32.totalorder %s111, %s125
    %p127 = scmp.eq.s32.totalorder %s17, 0
    %p128 = por %p126, %p127
    %s129 = ssub.s32 %s11, %s18
    %p130 = scmp.eq.s32.totalorder %s129, 0
    %s132 = sadd.s32 %s131, 1
    %s133 = scalar_select %p130, %s131, %s132
    %p136 = pneg %p130
    %p137 = scmp.eq.s32.totalorder %s11, 1
    %p138 = por %p136, %p137
    %p139 = scmp.ne.s32.totalorder %s131, %s134
    %p140 = scmp.eq.s32.totalorder %s11, 0
    %p141 = por %p139, %p140
    %p142 = scmp.ne.s32.totalorder %s131, %s134
    %p143 = scmp.eq.s32.totalorder %s16, 1
    %p144 = por %p142, %p143
    %p145 = scmp.ne.s32.totalorder %s134, %s135
    %p146 = scmp.eq.s32.totalorder %s16, 0
    %p147 = por %p145, %p146
    %p148 = scmp.ne.s32.totalorder %s134, %s135
    %p149 = scmp.eq.s32.totalorder %s17, 1
    %p150 = por %p148, %p149
    %p152 = scmp.ne.s32.totalorder %s135, %s151
    %p153 = scmp.eq.s32.totalorder %s17, 0
    %p154 = por %p152, %p153
    %p155 = scmp.le.s32.totalorder 1, %s11
    %p156 = scmp.lt.s32.totalorder %s11, 3
    %p157 = pnand %p155, %p156
    %p158 = pneg %p157
    // Predicated region
    $region9: #{basic_block.1} parent=5 // pred_check
      _
    $region10: #{basic_block.1} parent=5 // pred_check_branch
      %160 = sbr.rel (%p157) target = $region12
    $region11: #{basic_block.1} parent=5 // pred_region
      %s161 = ssub.s32 %s11, 1
      // Predicated region
      $region13: #{basic_block.1} parent=11 // pred_check
        %p162 = pneg %p58
      $region14: #{basic_block.1} parent=11 // pred_check_branch
        %164 = sbr.rel (%p162) target = $region16
      $region15: #{basic_block.1} parent=11 // pred_region
        _
      $region16: #{basic_block.1} parent=11 // pred_fallthru
        _
      // Predicated region
      $region17: #{basic_block.1} parent=11 // pred_check
        %p165 = pneg %p79
      $region18: #{basic_block.1} parent=11 // pred_check_branch
        %167 = sbr.rel (%p165) target = $region20
      $region19: #{basic_block.1} parent=11 // pred_region
        _
      $region20: #{basic_block.1} parent=11 // pred_fallthru
        _
      // Predicated region
      $region21: #{basic_block.1} parent=11 // pred_check
        %p168 = pneg %p100
      $region22: #{basic_block.1} parent=11 // pred_check_branch
        %170 = sbr.rel (%p168) target = $region24
      $region23: #{basic_block.1} parent=11 // pred_region
        _
      $region24: #{basic_block.1} parent=11 // pred_fallthru
        _
      // Predicated region
      $region25: #{basic_block.1} parent=11 // pred_check
        %p171 = pneg %p121
      $region26: #{basic_block.1} parent=11 // pred_check_branch
        %173 = sbr.rel (%p171) target = $region28
      $region27: #{basic_block.1} parent=11 // pred_region
        _
      $region28: #{basic_block.1} parent=11 // pred_fallthru
        _
    $region12: #{basic_block.1} parent=5 // pred_fallthru
      _
    %p174 = scmp.lt.s32.totalorder %s11, 2
    // Predicated region
    $region29: #{basic_block.1} parent=5 // pred_check
      %p175 = pneg %p174
    $region30: #{basic_block.1} parent=5 // pred_check_branch
      %177 = sbr.rel (%p175) target = $region32
    $region31: #{basic_block.1} parent=5 // pred_region
      // Predicated region
      $region33: #{basic_block.1} parent=31 // pred_check
        %p178 = pneg %p31
      $region34: #{basic_block.1} parent=31 // pred_check_branch
        %180 = sbr.rel (%p178) target = $region36
      $region35: #{basic_block.1} parent=31 // pred_region
        %p181 = scmp.lt.s32.totalorder %s11, 1
        %s182 = scalar_select %p181, %s11, 1
        %s183 = smul.addr %s182, 16
        %s184 = smul.addr %s183, 4
        %s185 = scalar_lea.vmem %s0, %s184
      $region36: #{basic_block.1} parent=31 // pred_fallthru
        _
    $region32: #{basic_block.1} parent=5 // pred_fallthru
      _
    %p186 = scmp.le.s32.totalorder 1, %s11
    %p187 = scmp.lt.s32.totalorder %s11, 3
    %p188 = pnand %p186, %p187
    %p189 = pneg %p188
    // Predicated region
    $region37: #{basic_block.1} parent=5 // pred_check
      _
    $region38: #{basic_block.1} parent=5 // pred_check_branch
      %191 = sbr.rel (%p188) target = $region40
    $region39: #{basic_block.1} parent=5 // pred_region
      %s192 = ssub.s32 %s11, 1
      %p193 = scmp.lt.s32.totalorder %s16, 1
      %s194 = scalar_select %p193, %s16, 1
      %s195 = smul.addr %s194, 16
      %s196 = smul.addr %s195, 4
      %s197 = scalar_lea.vmem %s0, %s196
      %p198 = pneg %p37
      %p199 = pneg %p34
      %p200 = pneg %p58
      %p201 = pneg %p55
      %p202 = pneg %p79
      %p203 = pneg %p76
      %p204 = pneg %p100
      %p205 = pneg %p97
      %p206 = pneg %p121
      %p207 = pneg %p118
      %p208 = pneg %p147
      %p209 = pneg %p144
      %p210 = scmp.lt.s32.totalorder %s16, 1
      %s211 = scalar_select %p210, %s16, 1
      %s212 = smul.addr %s211, 16
      %s213 = smul.addr %s212, 8
      %s214 = scalar_lea.vmem %s5, %s213
      %p215 = scmp.lt.s32.totalorder %s16, 1
      %s216 = scalar_select %p215, %s16, 1
      %s217 = smul.addr %s216, 16
      %s218 = smul.addr %s217, 4
      %s219 = scalar_lea.vmem %s0, %s218
      %p220 = scmp.lt.s32.totalorder %s16, 1
      %s221 = scalar_select %p220, %s16, 1
      %s222 = smul.addr %s221, 16
      %s223 = smul.addr %s222, 8
      %s224 = scalar_lea.vmem %s5, %s223
      %226 = vst [vmem:[#allocation2] sm:$0xff] 0
      %227 = vst [vmem:[#allocation2 + $0x8] sm:$0xf] 0
      %228 = vst [vmem:[#allocation2 + $0x24] sm:$0xff] 0
      %229 = vst [vmem:[#allocation2 + $0x2c] sm:$0xf] 0
      %s230 = scalar_lea.vmem [#allocation2], 504
      %231 = vst [vmem:[%s230 + $0x18] sm:$0xff] 0
      %232 = vst [vmem:[%s230 + $0x20] sm:$0xf] 0
      %233 = vst [vmem:[%s230 + $0x3c] sm:$0xff] 0
      %234 = vst [vmem:[%s230 + $0x44] sm:$0xf] 0
      %v235 = vld [vmem:[%s219] sm:$0xf]
      %v236 = vld [vmem:[%s219 + $0x4] sm:$0xf]
      %v237 = vld [vmem:[%s219 + $0x8] sm:$0xf]
      %v238 = vld [vmem:[%s219 + $0xc] sm:$0xf]
      %v239 = vld [vmem:[%s219 + $0x10] sm:$0xf]
      %v240 = vld [vmem:[%s219 + $0x14] sm:$0xf]
      %v241 = vld [vmem:[%s219 + $0x18] sm:$0xf]
      %v242 = vld [vmem:[%s219 + $0x1c] sm:$0xf]
      %v243 = vld [vmem:[%s219 + $0x20] sm:$0xf]
      %v244 = vld [vmem:[%s219 + $0x24] sm:$0xf]
      %v245 = vld [vmem:[%s219 + $0x28] sm:$0xf]
      %v246 = vld [vmem:[%s219 + $0x2c] sm:$0xf]
      %v247 = vld [vmem:[%s219 + $0x30] sm:$0xf]
      %v248 = vld [vmem:[%s219 + $0x34] sm:$0xf]
      %v249 = vld [vmem:[%s219 + $0x38] sm:$0xf]
      %v250 = vld [vmem:[%s219 + $0x3c] sm:$0xf]
      %v251 = vunpack.c.l.bf16 %v235
      %v252 = vunpack.c.l.bf16 %v236
      %v253 = vunpack.c.l.bf16 %v237
      %v254 = vunpack.c.l.bf16 %v238
      %v255 = vunpack.c.l.bf16 %v239
      %v256 = vunpack.c.l.bf16 %v240
      %v257 = vunpack.c.l.bf16 %v241
      %v258 = vunpack.c.l.bf16 %v242
      %v259 = vunpack.c.l.bf16 %v243
      %v260 = vunpack.c.l.bf16 %v244
      %v261 = vunpack.c.l.bf16 %v245
      %v262 = vunpack.c.l.bf16 %v246
      %v263 = vunpack.c.l.bf16 %v247
      %v264 = vunpack.c.l.bf16 %v248
      %v265 = vunpack.c.l.bf16 %v249
      %v266 = vunpack.c.l.bf16 %v250
      %v267 = vrot.slane %v251, 7
      %v268 = vrot.slane %v253, 7
      %v269 = vrot.slane %v255, 7
      %v270 = vrot.slane %v257, 7
      %v271 = vrot.slane %v259, 7
      %v272 = vrot.slane %v261, 7
      %v273 = vrot.slane %v263, 7
      %v274 = vrot.slane %v265, 7
      %v275 = vrot.slane %v252, 7
      %v276 = vrot.slane %v254, 7
      %v277 = vrot.slane %v256, 7
      %v278 = vrot.slane %v258, 7
      %v279 = vrot.slane %v260, 7
      %v280 = vrot.slane %v262, 7
      %v281 = vrot.slane %v264, 7
      %v282 = vrot.slane %v266, 7
      %v283 = vlaneseq
      %v284 = vshrl.u32 %v283, 7
      %vm285 = vcmp.lt.s32.totalorder %v284, 1
      %v286 = vsel %vm285, %v267, %v275
      %v287 = vsel %vm285, %v268, %v276
      %v288 = vsel %vm285, %v269, %v277
      %v289 = vsel %vm285, %v270, %v278
      %v290 = vsel %vm285, %v271, %v279
      %v291 = vsel %vm285, %v272, %v280
      %v292 = vsel %vm285, %v273, %v281
      %v293 = vsel %vm285, %v274, %v282
      %v294 = vsel %vm285, %v275, %v267
      %v295 = vsel %vm285, %v276, %v268
      %v296 = vsel %vm285, %v277, %v269
      %v297 = vsel %vm285, %v278, %v270
      %v298 = vsel %vm285, %v279, %v271
      %v299 = vsel %vm285, %v280, %v272
      %v300 = vsel %vm285, %v281, %v273
      %v301 = vsel %vm285, %v282, %v274
      %v302 = vpack.c.bf16 %v286, %v294
      %v303 = vpack.c.bf16 %v287, %v295
      %v304 = vpack.c.bf16 %v288, %v296
      %v305 = vpack.c.bf16 %v289, %v297
      %v306 = vpack.c.bf16 %v290, %v298
      %v307 = vpack.c.bf16 %v291, %v299
      %v308 = vpack.c.bf16 %v292, %v300
      %v309 = vpack.c.bf16 %v293, %v301
      %v318 = vunpack.c.l.b16 %v302
      %v319 = vunpack.c.h.b16 %v302
      %v320 = vunpack.c.l.b16 %v303
      %v321 = vunpack.c.h.b16 %v303
      %v322 = vunpack.c.l.b16 %v304
      %v323 = vunpack.c.h.b16 %v304
      %v324 = vunpack.c.l.b16 %v305
      %v325 = vunpack.c.h.b16 %v305
      %v326 = vunpack.c.l.b16 %v306
      %v327 = vunpack.c.h.b16 %v306
      %v328 = vunpack.c.l.b16 %v307
      %v329 = vunpack.c.h.b16 %v307
      %v330 = vunpack.c.l.b16 %v308
      %v331 = vunpack.c.h.b16 %v308
      %v332 = vunpack.c.l.b16 %v309
      %v333 = vunpack.c.h.b16 %v309
      %v334 = vpack.c.b16 %v318, %v318
      %v335 = vpack.c.b16 %v319, %v319
      %v336 = vpack.c.b16 %v320, %v320
      %v337 = vpack.c.b16 %v321, %v321
      %v338 = vpack.c.b16 %v322, %v322
      %v339 = vpack.c.b16 %v323, %v323
      %v340 = vpack.c.b16 %v324, %v324
      %v341 = vpack.c.b16 %v325, %v325
      %v342 = vpack.c.b16 %v326, %v326
      %v343 = vpack.c.b16 %v327, %v327
      %v344 = vpack.c.b16 %v328, %v328
      %v345 = vpack.c.b16 %v329, %v329
      %v346 = vpack.c.b16 %v330, %v330
      %v347 = vpack.c.b16 %v331, %v331
      %v348 = vpack.c.b16 %v332, %v332
      %v349 = vpack.c.b16 %v333, %v333
      %366 = vst [vmem:[#allocation2 + $0xc] sm:$0xf] %v334
      %367 = vst [vmem:[#allocation2 + $0x30] sm:$0xf] %v335
      %368 = vst [vmem:[#allocation2 + $0x54] sm:$0xf] %v336
      %369 = vst [vmem:[#allocation2 + $0x78] sm:$0xf] %v337
      %370 = vst [vmem:[#allocation2 + $0x9c] sm:$0xf] %v338
      %371 = vst [vmem:[#allocation2 + $0xc0] sm:$0xf] %v339
      %372 = vst [vmem:[#allocation2 + $0xe4] sm:$0xf] %v340
      %373 = vst [vmem:[#allocation2 + $0x108] sm:$0xf] %v341
      %374 = vst [vmem:[#allocation2 + $0x12c] sm:$0xf] %v342
      %375 = vst [vmem:[#allocation2 + $0x150] sm:$0xf] %v343
      %376 = vst [vmem:[#allocation2 + $0x174] sm:$0xf] %v344
      %377 = vst [vmem:[#allocation2 + $0x198] sm:$0xf] %v345
      %378 = vst [vmem:[#allocation2 + $0x1bc] sm:$0xf] %v346
      %379 = vst [vmem:[#allocation2 + $0x1e0] sm:$0xf] %v347
      %380 = vst [vmem:[#allocation2 + $0x204] sm:$0xf] %v348
      %381 = vst [vmem:[#allocation2 + $0x228] sm:$0xf] %v349
      %s382 = scalar_lea.vmem [#allocation2], 72
      %383 = vst [vmem:[%s382] sm:$0xf] %v334
      %384 = vst [vmem:[%s382 + $0x24] sm:$0xf] %v335
      %385 = vst [vmem:[%s382 + $0x48] sm:$0xf] %v336
      %386 = vst [vmem:[%s382 + $0x6c] sm:$0xf] %v337
      %387 = vst [vmem:[%s382 + $0x90] sm:$0xf] %v338
      %388 = vst [vmem:[%s382 + $0xb4] sm:$0xf] %v339
      %389 = vst [vmem:[%s382 + $0xd8] sm:$0xf] %v340
      %390 = vst [vmem:[%s382 + $0xfc] sm:$0xf] %v341
      %391 = vst [vmem:[%s382 + $0x120] sm:$0xf] %v342
      %392 = vst [vmem:[%s382 + $0x144] sm:$0xf] %v343
      %393 = vst [vmem:[%s382 + $0x168] sm:$0xf] %v344
      %394 = vst [vmem:[%s382 + $0x18c] sm:$0xf] %v345
      %395 = vst [vmem:[%s382 + $0x1b0] sm:$0xf] %v346
      %396 = vst [vmem:[%s382 + $0x1d4] sm:$0xf] %v347
      %397 = vst [vmem:[#allocation2 + $0x18] sm:$0xf] %v336
      %398 = vst [vmem:[#allocation2 + $0x3c] sm:$0xf] %v337
      %399 = vst [vmem:[#allocation2 + $0x60] sm:$0xf] %v338
      %400 = vst [vmem:[#allocation2 + $0x84] sm:$0xf] %v339
      %401 = vst [vmem:[#allocation2 + $0xa8] sm:$0xf] %v340
      %402 = vst [vmem:[#allocation2 + $0xcc] sm:$0xf] %v341
      %403 = vst [vmem:[#allocation2 + $0xf0] sm:$0xf] %v342
      %404 = vst [vmem:[#allocation2 + $0x114] sm:$0xf] %v343
      %405 = vst [vmem:[#allocation2 + $0x138] sm:$0xf] %v344
      %406 = vst [vmem:[#allocation2 + $0x15c] sm:$0xf] %v345
      %407 = vst [vmem:[#allocation2 + $0x180] sm:$0xf] %v346
      %408 = vst [vmem:[#allocation2 + $0x1a4] sm:$0xf] %v347
      %409 = vst [vmem:[#allocation2 + $0x1c8] sm:$0xf] %v348
      %410 = vst [vmem:[#allocation2 + $0x1ec] sm:$0xf] %v349
      %411 = vst [vmem:[#allocation2 + $0x10] sm:$0xf] %v235
      %412 = vst [vmem:[#allocation2 + $0x34] sm:$0xf] %v236
      %413 = vst [vmem:[#allocation2 + $0x58] sm:$0xf] %v237
      %414 = vst [vmem:[#allocation2 + $0x7c] sm:$0xf] %v238
      %415 = vst [vmem:[#allocation2 + $0xa0] sm:$0xf] %v239
      %416 = vst [vmem:[#allocation2 + $0xc4] sm:$0xf] %v240
      %417 = vst [vmem:[#allocation2 + $0xe8] sm:$0xf] %v241
      %418 = vst [vmem:[#allocation2 + $0x10c] sm:$0xf] %v242
      %419 = vst [vmem:[#allocation2 + $0x130] sm:$0xf] %v243
      %420 = vst [vmem:[#allocation2 + $0x154] sm:$0xf] %v244
      %421 = vst [vmem:[#allocation2 + $0x178] sm:$0xf] %v245
      %422 = vst [vmem:[#allocation2 + $0x19c] sm:$0xf] %v246
      %423 = vst [vmem:[#allocation2 + $0x1c0] sm:$0xf] %v247
      %424 = vst [vmem:[#allocation2 + $0x1e4] sm:$0xf] %v248
      %425 = vst [vmem:[#allocation2 + $0x208] sm:$0xf] %v249
      %426 = vst [vmem:[#allocation2 + $0x22c] sm:$0xf] %v250
      %427 = vst [vmem:[%s382 + $0x4] sm:$0xf] %v235
      %428 = vst [vmem:[%s382 + $0x28] sm:$0xf] %v236
      %429 = vst [vmem:[%s382 + $0x4c] sm:$0xf] %v237
      %430 = vst [vmem:[%s382 + $0x70] sm:$0xf] %v238
      %431 = vst [vmem:[%s382 + $0x94] sm:$0xf] %v239
      %432 = vst [vmem:[%s382 + $0xb8] sm:$0xf] %v240
      %433 = vst [vmem:[%s382 + $0xdc] sm:$0xf] %v241
      %434 = vst [vmem:[%s382 + $0x100] sm:$0xf] %v242
      %435 = vst [vmem:[%s382 + $0x124] sm:$0xf] %v243
      %436 = vst [vmem:[%s382 + $0x148] sm:$0xf] %v244
      %437 = vst [vmem:[%s382 + $0x16c] sm:$0xf] %v245
      %438 = vst [vmem:[%s382 + $0x190] sm:$0xf] %v246
      %439 = vst [vmem:[%s382 + $0x1b4] sm:$0xf] %v247
      %440 = vst [vmem:[%s382 + $0x1d8] sm:$0xf] %v248
      %441 = vst [vmem:[#allocation2 + $0x1c] sm:$0xf] %v237
      %442 = vst [vmem:[#allocation2 + $0x40] sm:$0xf] %v238
      %443 = vst [vmem:[#allocation2 + $0x64] sm:$0xf] %v239
      %444 = vst [vmem:[#allocation2 + $0x88] sm:$0xf] %v240
      %445 = vst [vmem:[#allocation2 + $0xac] sm:$0xf] %v241
      %446 = vst [vmem:[#allocation2 + $0xd0] sm:$0xf] %v242
      %447 = vst [vmem:[#allocation2 + $0xf4] sm:$0xf] %v243
      %448 = vst [vmem:[#allocation2 + $0x118] sm:$0xf] %v244
      %449 = vst [vmem:[#allocation2 + $0x13c] sm:$0xf] %v245
      %450 = vst [vmem:[#allocation2 + $0x160] sm:$0xf] %v246
      %451 = vst [vmem:[#allocation2 + $0x184] sm:$0xf] %v247
      %452 = vst [vmem:[#allocation2 + $0x1a8] sm:$0xf] %v248
      %453 = vst [vmem:[#allocation2 + $0x1cc] sm:$0xf] %v249
      %454 = vst [vmem:[#allocation2 + $0x1f0] sm:$0xf] %v250
      %v455 = vrot.slane %v251, 1
      %v456 = vrot.slane %v253, 1
      %v457 = vrot.slane %v255, 1
      %v458 = vrot.slane %v257, 1
      %v459 = vrot.slane %v259, 1
      %v460 = vrot.slane %v261, 1
      %v461 = vrot.slane %v263, 1
      %v462 = vrot.slane %v265, 1
      %v463 = vrot.slane %v252, 1
      %v464 = vrot.slane %v254, 1
      %v465 = vrot.slane %v256, 1
      %v466 = vrot.slane %v258, 1
      %v467 = vrot.slane %v260, 1
      %v468 = vrot.slane %v262, 1
      %v469 = vrot.slane %v264, 1
      %v470 = vrot.slane %v266, 1
      %vm471 = vcmp.lt.s32.totalorder %v284, 7
      %v472 = vsel %vm471, %v455, %v463
      %v473 = vsel %vm471, %v456, %v464
      %v474 = vsel %vm471, %v457, %v465
      %v475 = vsel %vm471, %v458, %v466
      %v476 = vsel %vm471, %v459, %v467
      %v477 = vsel %vm471, %v460, %v468
      %v478 = vsel %vm471, %v461, %v469
      %v479 = vsel %vm471, %v462, %v470
      %v480 = vsel %vm471, %v463, %v455
      %v481 = vsel %vm471, %v464, %v456
      %v482 = vsel %vm471, %v465, %v457
      %v483 = vsel %vm471, %v466, %v458
      %v484 = vsel %vm471, %v467, %v459
      %v485 = vsel %vm471, %v468, %v460
      %v486 = vsel %vm471, %v469, %v461
      %v487 = vsel %vm471, %v470, %v462
      %v488 = vpack.c.bf16 %v480, %v472
      %v489 = vpack.c.bf16 %v481, %v473
      %v490 = vpack.c.bf16 %v482, %v474
      %v491 = vpack.c.bf16 %v483, %v475
      %v492 = vpack.c.bf16 %v484, %v476
      %v493 = vpack.c.bf16 %v485, %v477
      %v494 = vpack.c.bf16 %v486, %v478
      %v495 = vpack.c.bf16 %v487, %v479
      %v504 = vunpack.c.l.b16 %v488
      %v505 = vunpack.c.h.b16 %v488
      %v506 = vunpack.c.l.b16 %v489
      %v507 = vunpack.c.h.b16 %v489
      %v508 = vunpack.c.l.b16 %v490
      %v509 = vunpack.c.h.b16 %v490
      %v510 = vunpack.c.l.b16 %v491
      %v511 = vunpack.c.h.b16 %v491
      %v512 = vunpack.c.l.b16 %v492
      %v513 = vunpack.c.h.b16 %v492
      %v514 = vunpack.c.l.b16 %v493
      %v515 = vunpack.c.h.b16 %v493
      %v516 = vunpack.c.l.b16 %v494
      %v517 = vunpack.c.h.b16 %v494
      %v518 = vunpack.c.l.b16 %v495
      %v519 = vunpack.c.h.b16 %v495
      %v520 = vpack.c.b16 %v504, %v504
      %v521 = vpack.c.b16 %v505, %v505
      %v522 = vpack.c.b16 %v506, %v506
      %v523 = vpack.c.b16 %v507, %v507
      %v524 = vpack.c.b16 %v508, %v508
      %v525 = vpack.c.b16 %v509, %v509
      %v526 = vpack.c.b16 %v510, %v510
      %v527 = vpack.c.b16 %v511, %v511
      %v528 = vpack.c.b16 %v512, %v512
      %v529 = vpack.c.b16 %v513, %v513
      %v530 = vpack.c.b16 %v514, %v514
      %v531 = vpack.c.b16 %v515, %v515
      %v532 = vpack.c.b16 %v516, %v516
      %v533 = vpack.c.b16 %v517, %v517
      %v534 = vpack.c.b16 %v518, %v518
      %v535 = vpack.c.b16 %v519, %v519
      %552 = vst [vmem:[#allocation2 + $0x14] sm:$0xf] %v520
      %553 = vst [vmem:[#allocation2 + $0x38] sm:$0xf] %v521
      %554 = vst [vmem:[#allocation2 + $0x5c] sm:$0xf] %v522
      %555 = vst [vmem:[#allocation2 + $0x80] sm:$0xf] %v523
      %556 = vst [vmem:[#allocation2 + $0xa4] sm:$0xf] %v524
      %557 = vst [vmem:[#allocation2 + $0xc8] sm:$0xf] %v525
      %558 = vst [vmem:[#allocation2 + $0xec] sm:$0xf] %v526
      %559 = vst [vmem:[#allocation2 + $0x110] sm:$0xf] %v527
      %560 = vst [vmem:[#allocation2 + $0x134] sm:$0xf] %v528
      %561 = vst [vmem:[#allocation2 + $0x158] sm:$0xf] %v529
      %562 = vst [vmem:[#allocation2 + $0x17c] sm:$0xf] %v530
      %563 = vst [vmem:[#allocation2 + $0x1a0] sm:$0xf] %v531
      %564 = vst [vmem:[#allocation2 + $0x1c4] sm:$0xf] %v532
      %565 = vst [vmem:[#allocation2 + $0x1e8] sm:$0xf] %v533
      %566 = vst [vmem:[#allocation2 + $0x20c] sm:$0xf] %v534
      %567 = vst [vmem:[#allocation2 + $0x230] sm:$0xf] %v535
      %568 = vst [vmem:[%s382 + $0x8] sm:$0xf] %v520
      %569 = vst [vmem:[%s382 + $0x2c] sm:$0xf] %v521
      %570 = vst [vmem:[%s382 + $0x50] sm:$0xf] %v522
      %571 = vst [vmem:[%s382 + $0x74] sm:$0xf] %v523
      %572 = vst [vmem:[%s382 + $0x98] sm:$0xf] %v524
      %573 = vst [vmem:[%s382 + $0xbc] sm:$0xf] %v525
      %574 = vst [vmem:[%s382 + $0xe0] sm:$0xf] %v526
      %575 = vst [vmem:[%s382 + $0x104] sm:$0xf] %v527
      %576 = vst [vmem:[%s382 + $0x128] sm:$0xf] %v528
      %577 = vst [vmem:[%s382 + $0x14c] sm:$0xf] %v529
      %578 = vst [vmem:[%s382 + $0x170] sm:$0xf] %v530
      %579 = vst [vmem:[%s382 + $0x194] sm:$0xf] %v531
      %580 = vst [vmem:[%s382 + $0x1b8] sm:$0xf] %v532
      %581 = vst [vmem:[%s382 + $0x1dc] sm:$0xf] %v533
      %582 = vst [vmem:[#allocation2 + $0x20] sm:$0xf] %v522
      %583 = vst [vmem:[#allocation2 + $0x44] sm:$0xf] %v523
      %584 = vst [vmem:[#allocation2 + $0x68] sm:$0xf] %v524
      %585 = vst [vmem:[#allocation2 + $0x8c] sm:$0xf] %v525
      %586 = vst [vmem:[#allocation2 + $0xb0] sm:$0xf] %v526
      %587 = vst [vmem:[#allocation2 + $0xd4] sm:$0xf] %v527
      %588 = vst [vmem:[#allocation2 + $0xf8] sm:$0xf] %v528
      %589 = vst [vmem:[#allocation2 + $0x11c] sm:$0xf] %v529
      %590 = vst [vmem:[#allocation2 + $0x140] sm:$0xf] %v530
      %591 = vst [vmem:[#allocation2 + $0x164] sm:$0xf] %v531
      %592 = vst [vmem:[#allocation2 + $0x188] sm:$0xf] %v532
      %593 = vst [vmem:[#allocation2 + $0x1ac] sm:$0xf] %v533
      %594 = vst [vmem:[#allocation2 + $0x1d0] sm:$0xf] %v534
      %595 = vst [vmem:[#allocation2 + $0x1f4] sm:$0xf] %v535
      %v596 = vld [vmem:[#allocation2] sm:$0xff]
      %v597 = vld [vmem:[#allocation2 + $0x8] sm:$0xff]
      %v598 = vld [vmem:[#allocation2 + $0x10] sm:$0xff]
      %v599 = vld [vmem:[#allocation2 + $0x18] sm:$0xff]
      %v600 = vld [vmem:[#allocation2 + $0x20] sm:$0xf]
      %v601 = vld [vmem:[#allocation2 + $0x24] sm:$0xff]
      %v602 = vld [vmem:[#allocation2 + $0x2c] sm:$0xff]
      %v603 = vld [vmem:[#allocation2 + $0x34] sm:$0xff]
      %v604 = vld [vmem:[#allocation2 + $0x3c] sm:$0xff]
      %v605 = vld [vmem:[#allocation2 + $0x44] sm:$0xf]
      %v606 = vld [vmem:[#allocation2 + $0x48] sm:$0xff]
      %v607 = vld [vmem:[#allocation2 + $0x50] sm:$0xff]
      %v608 = vld [vmem:[#allocation2 + $0x58] sm:$0xff]
      %v609 = vld [vmem:[#allocation2 + $0x60] sm:$0xff]
      %v610 = vld [vmem:[#allocation2 + $0x68] sm:$0xf]
      %v611 = vld [vmem:[#allocation2 + $0x6c] sm:$0xff]
      %v612 = vld [vmem:[#allocation2 + $0x74] sm:$0xff]
      %v613 = vld [vmem:[#allocation2 + $0x7c] sm:$0xff]
      %v614 = vld [vmem:[#allocation2 + $0x84] sm:$0xff]
      %v615 = vld [vmem:[#allocation2 + $0x8c] sm:$0xf]
      %v616 = vld [vmem:[#allocation2 + $0x90] sm:$0xff]
      %v617 = vld [vmem:[#allocation2 + $0x98] sm:$0xff]
      %v618 = vld [vmem:[#allocation2 + $0xa0] sm:$0xff]
      %v619 = vld [vmem:[#allocation2 + $0xa8] sm:$0xff]
      %v620 = vld [vmem:[#allocation2 + $0xb0] sm:$0xf]
      %v621 = vld [vmem:[#allocation2 + $0xb4] sm:$0xff]
      %v622 = vld [vmem:[#allocation2 + $0xbc] sm:$0xff]
      %v623 = vld [vmem:[#allocation2 + $0xc4] sm:$0xff]
      %v624 = vld [vmem:[#allocation2 + $0xcc] sm:$0xff]
      %v625 = vld [vmem:[#allocation2 + $0xd4] sm:$0xf]
      %v626 = vld [vmem:[#allocation2 + $0xd8] sm:$0xff]
      %v627 = vld [vmem:[#allocation2 + $0xe0] sm:$0xff]
      %v628 = vld [vmem:[#allocation2 + $0xe8] sm:$0xff]
      %v629 = vld [vmem:[#allocation2 + $0xf0] sm:$0xff]
      %v630 = vld [vmem:[#allocation2 + $0xf8] sm:$0xf]
      %v631 = vld [vmem:[#allocation2 + $0xfc] sm:$0xff]
      %v632 = vld [vmem:[#allocation2 + $0x104] sm:$0xff]
      %v633 = vld [vmem:[#allocation2 + $0x10c] sm:$0xff]
      %v634 = vld [vmem:[#allocation2 + $0x114] sm:$0xff]
      %v635 = vld [vmem:[#allocation2 + $0x11c] sm:$0xf]
      %v636 = vld [vmem:[#allocation2 + $0x120] sm:$0xff]
      %v637 = vld [vmem:[#allocation2 + $0x128] sm:$0xff]
      %v638 = vld [vmem:[#allocation2 + $0x130] sm:$0xff]
      %v639 = vld [vmem:[#allocation2 + $0x138] sm:$0xff]
      %v640 = vld [vmem:[#allocation2 + $0x140] sm:$0xf]
      %v641 = vld [vmem:[#allocation2 + $0x144] sm:$0xff]
      %v642 = vld [vmem:[#allocation2 + $0x14c] sm:$0xff]
      %v643 = vld [vmem:[#allocation2 + $0x154] sm:$0xff]
      %v644 = vld [vmem:[#allocation2 + $0x15c] sm:$0xff]
      %v645 = vld [vmem:[#allocation2 + $0x164] sm:$0xf]
      %v646 = vld [vmem:[#allocation2 + $0x168] sm:$0xff]
      %v647 = vld [vmem:[#allocation2 + $0x170] sm:$0xff]
      %v648 = vld [vmem:[#allocation2 + $0x178] sm:$0xff]
      %v649 = vld [vmem:[#allocation2 + $0x180] sm:$0xff]
      %v650 = vld [vmem:[#allocation2 + $0x188] sm:$0xf]
      %v651 = vld [vmem:[#allocation2 + $0x18c] sm:$0xff]
      %v652 = vld [vmem:[#allocation2 + $0x194] sm:$0xff]
      %v653 = vld [vmem:[#allocation2 + $0x19c] sm:$0xff]
      %v654 = vld [vmem:[#allocation2 + $0x1a4] sm:$0xff]
      %v655 = vld [vmem:[#allocation2 + $0x1ac] sm:$0xf]
      %v656 = vld [vmem:[#allocation2 + $0x1b0] sm:$0xff]
      %v657 = vld [vmem:[#allocation2 + $0x1b8] sm:$0xff]
      %v658 = vld [vmem:[#allocation2 + $0x1c0] sm:$0xff]
      %v659 = vld [vmem:[#allocation2 + $0x1c8] sm:$0xff]
      %v660 = vld [vmem:[#allocation2 + $0x1d0] sm:$0xf]
      %v661 = vld [vmem:[#allocation2 + $0x1d4] sm:$0xff]
      %v662 = vld [vmem:[#allocation2 + $0x1dc] sm:$0xff]
      %v663 = vld [vmem:[#allocation2 + $0x1e4] sm:$0xff]
      %v664 = vld [vmem:[#allocation2 + $0x1ec] sm:$0xff]
      %v665 = vld [vmem:[#allocation2 + $0x1f4] sm:$0xf]
      %v666 = vld [vmem:[#allocation2 + $0x1f8] sm:$0xff]
      %v667 = vld [vmem:[#allocation2 + $0x200] sm:$0xff]
      %v668 = vld [vmem:[#allocation2 + $0x208] sm:$0xff]
      %v669 = vld [vmem:[#allocation2 + $0x210] sm:$0xff]
      %v670 = vld [vmem:[#allocation2 + $0x218] sm:$0xf]
      %v671 = vld [vmem:[#allocation2 + $0x21c] sm:$0xff]
      %v672 = vld [vmem:[#allocation2 + $0x224] sm:$0xff]
      %v673 = vld [vmem:[#allocation2 + $0x22c] sm:$0xff]
      %v674 = vld [vmem:[#allocation2 + $0x234] sm:$0xff]
      %v675 = vld [vmem:[#allocation2 + $0x23c] sm:$0xf]
      %v676 = vld [vmem:[%s1] sm:$0xf]
      %v677 = vld [vmem:[%s1 + $0x4] sm:$0xf]
      %v678 = vld [vmem:[%s1 + $0x8] sm:$0xf]
      %v679 = vld [vmem:[%s1 + $0xc] sm:$0xf]
      %v680 = vld [vmem:[%s1 + $0x10] sm:$0xf]
      %v681 = vld [vmem:[%s1 + $0x14] sm:$0xf]
      %v682 = vld [vmem:[%s1 + $0x18] sm:$0xf]
      %v683 = vld [vmem:[%s1 + $0x1c] sm:$0xf]
      %v684 = vld [vmem:[%s1 + $0x20] sm:$0xf]
      %v685 = vld [vmem:[%s1 + $0x24] sm:$0xf]
      %v686 = vld [vmem:[%s1 + $0x28] sm:$0xf]
      %v687 = vld [vmem:[%s1 + $0x2c] sm:$0xf]
      %v688 = vld [vmem:[%s1 + $0x30] sm:$0xf]
      %v689 = vld [vmem:[%s1 + $0x34] sm:$0xf]
      %v690 = vld [vmem:[%s1 + $0x38] sm:$0xf]
      %v691 = vld [vmem:[%s1 + $0x3c] sm:$0xf]
      %v692 = vld [vmem:[%s1 + $0x40] sm:$0xf]
      %v693 = vld [vmem:[%s1 + $0x44] sm:$0xf]
      %v694 = vld [vmem:[%s1 + $0x48] sm:$0xf]
      %v695 = vld [vmem:[%s1 + $0x4c] sm:$0xf]
      %v696 = vld [vmem:[%s1 + $0x50] sm:$0xf]
      %v697 = vld [vmem:[%s1 + $0x54] sm:$0xf]
      %v698 = vld [vmem:[%s1 + $0x58] sm:$0xf]
      %v699 = vld [vmem:[%s1 + $0x5c] sm:$0xf]
      %v700 = vld [vmem:[%s1 + $0x60] sm:$0xf]
      %v701 = vld [vmem:[%s1 + $0x64] sm:$0xf]
      %v702 = vld [vmem:[%s1 + $0x68] sm:$0xf]
      %v703 = vld [vmem:[%s1 + $0x6c] sm:$0xf]
      %v704 = vld [vmem:[%s1 + $0x70] sm:$0xf]
      %v705 = vld [vmem:[%s1 + $0x74] sm:$0xf]
      %v706 = vld [vmem:[%s1 + $0x78] sm:$0xf]
      %v707 = vld [vmem:[%s1 + $0x7c] sm:$0xf]
      %v708 = vld [vmem:[%s1 + $0x80] sm:$0xf]
      %v709 = vld [vmem:[%s1 + $0x84] sm:$0xf]
      %v710 = vld [vmem:[%s1 + $0x88] sm:$0xf]
      %v711 = vld [vmem:[%s1 + $0x8c] sm:$0xf]
      %v712 = vld [vmem:[%s1 + $0x90] sm:$0xf]
      %v713 = vld [vmem:[%s1 + $0x94] sm:$0xf]
      %v714 = vld [vmem:[%s1 + $0x98] sm:$0xf]
      %v715 = vld [vmem:[%s1 + $0x9c] sm:$0xf]
      %v716 = vld [vmem:[%s1 + $0xa0] sm:$0xf]
      %v717 = vld [vmem:[%s1 + $0xa4] sm:$0xf]
      %v718 = vld [vmem:[%s1 + $0xa8] sm:$0xf]
      %v719 = vld [vmem:[%s1 + $0xac] sm:$0xf]
      %v720 = vld [vmem:[%s1 + $0xb0] sm:$0xf]
      %v721 = vld [vmem:[%s1 + $0xb4] sm:$0xf]
      %v722 = vld [vmem:[%s1 + $0xb8] sm:$0xf]
      %v723 = vld [vmem:[%s1 + $0xbc] sm:$0xf]
      %v724 = vld [vmem:[%s1 + $0xc0] sm:$0xf]
      %v725 = vld [vmem:[%s1 + $0xc4] sm:$0xf]
      %v726 = vld [vmem:[%s1 + $0xc8] sm:$0xf]
      %v727 = vld [vmem:[%s1 + $0xcc] sm:$0xf]
      %v728 = vld [vmem:[%s1 + $0xd0] sm:$0xf]
      %v729 = vld [vmem:[%s1 + $0xd4] sm:$0xf]
      %v730 = vld [vmem:[%s1 + $0xd8] sm:$0xf]
      %v731 = vld [vmem:[%s1 + $0xdc] sm:$0xf]
      %v732 = vld [vmem:[%s1 + $0xe0] sm:$0xf]
      %v733 = vld [vmem:[%s1 + $0xe4] sm:$0xf]
      %v734 = vld [vmem:[%s1 + $0xe8] sm:$0xf]
      %v735 = vld [vmem:[%s1 + $0xec] sm:$0xf]
      %v736 = vld [vmem:[%s1 + $0xf0] sm:$0xf]
      %v737 = vld [vmem:[%s1 + $0xf4] sm:$0xf]
      %v738 = vld [vmem:[%s1 + $0xf8] sm:$0xf]
      %v739 = vld [vmem:[%s1 + $0xfc] sm:$0xf]
      %v740 = vld [vmem:[%s1 + $0x100] sm:$0xf]
      %v741 = vld [vmem:[%s1 + $0x104] sm:$0xf]
      %v742 = vld [vmem:[%s1 + $0x108] sm:$0xf]
      %v743 = vld [vmem:[%s1 + $0x10c] sm:$0xf]
      %v744 = vld [vmem:[%s1 + $0x110] sm:$0xf]
      %v745 = vld [vmem:[%s1 + $0x114] sm:$0xf]
      %v746 = vld [vmem:[%s1 + $0x118] sm:$0xf]
      %v747 = vld [vmem:[%s1 + $0x11c] sm:$0xf]
      %v748 = vld [vmem:[%s1 + $0x120] sm:$0xf]
      %v749 = vld [vmem:[%s1 + $0x124] sm:$0xf]
      %v750 = vld [vmem:[%s1 + $0x128] sm:$0xf]
      %v751 = vld [vmem:[%s1 + $0x12c] sm:$0xf]
      %v752 = vld [vmem:[%s1 + $0x130] sm:$0xf]
      %v753 = vld [vmem:[%s1 + $0x134] sm:$0xf]
      %v754 = vld [vmem:[%s1 + $0x138] sm:$0xf]
      %v755 = vld [vmem:[%s1 + $0x13c] sm:$0xf]
      %v756 = vld [vmem:[%s1 + $0x140] sm:$0xf]
      %v757 = vld [vmem:[%s1 + $0x144] sm:$0xf]
      %v758 = vld [vmem:[%s1 + $0x148] sm:$0xf]
      %v759 = vld [vmem:[%s1 + $0x14c] sm:$0xf]
      %v760 = vld [vmem:[%s1 + $0x150] sm:$0xf]
      %v761 = vld [vmem:[%s1 + $0x154] sm:$0xf]
      %v762 = vld [vmem:[%s1 + $0x158] sm:$0xf]
      %v763 = vld [vmem:[%s1 + $0x15c] sm:$0xf]
      %v764 = vld [vmem:[%s1 + $0x160] sm:$0xf]
      %v765 = vld [vmem:[%s1 + $0x164] sm:$0xf]
      %v766 = vld [vmem:[%s1 + $0x168] sm:$0xf]
      %v767 = vld [vmem:[%s1 + $0x16c] sm:$0xf]
      %v768 = vld [vmem:[%s1 + $0x170] sm:$0xf]
      %v769 = vld [vmem:[%s1 + $0x174] sm:$0xf]
      %v770 = vld [vmem:[%s1 + $0x178] sm:$0xf]
      %v771 = vld [vmem:[%s1 + $0x17c] sm:$0xf]
      %v772 = vld [vmem:[%s1 + $0x180] sm:$0xf]
      %v773 = vld [vmem:[%s1 + $0x184] sm:$0xf]
      %v774 = vld [vmem:[%s1 + $0x188] sm:$0xf]
      %v775 = vld [vmem:[%s1 + $0x18c] sm:$0xf]
      %v776 = vld [vmem:[%s1 + $0x190] sm:$0xf]
      %v777 = vld [vmem:[%s1 + $0x194] sm:$0xf]
      %v778 = vld [vmem:[%s1 + $0x198] sm:$0xf]
      %v779 = vld [vmem:[%s1 + $0x19c] sm:$0xf]
      %v780 = vld [vmem:[%s1 + $0x1a0] sm:$0xf]
      %v781 = vld [vmem:[%s1 + $0x1a4] sm:$0xf]
      %v782 = vld [vmem:[%s1 + $0x1a8] sm:$0xf]
      %v783 = vld [vmem:[%s1 + $0x1ac] sm:$0xf]
      %v784 = vld [vmem:[%s1 + $0x1b0] sm:$0xf]
      %v785 = vld [vmem:[%s1 + $0x1b4] sm:$0xf]
      %v786 = vld [vmem:[%s1 + $0x1b8] sm:$0xf]
      %v787 = vld [vmem:[%s1 + $0x1bc] sm:$0xf]
      %v788 = vld [vmem:[%s1 + $0x1c0] sm:$0xf]
      %v789 = vld [vmem:[%s1 + $0x1c4] sm:$0xf]
      %v790 = vld [vmem:[%s1 + $0x1c8] sm:$0xf]
      %v791 = vld [vmem:[%s1 + $0x1cc] sm:$0xf]
      %v792 = vld [vmem:[%s1 + $0x1d0] sm:$0xf]
      %v793 = vld [vmem:[%s1 + $0x1d4] sm:$0xf]
      %v794 = vld [vmem:[%s1 + $0x1d8] sm:$0xf]
      %v795 = vld [vmem:[%s1 + $0x1dc] sm:$0xf]
      %v796 = vld [vmem:[%s1 + $0x1e0] sm:$0xf]
      %v797 = vld [vmem:[%s1 + $0x1e4] sm:$0xf]
      %v798 = vld [vmem:[%s1 + $0x1e8] sm:$0xf]
      %v799 = vld [vmem:[%s1 + $0x1ec] sm:$0xf]
      %v800 = vld [vmem:[%s1 + $0x1f0] sm:$0xf]
      %v801 = vld [vmem:[%s1 + $0x1f4] sm:$0xf]
      %v802 = vld [vmem:[%s1 + $0x1f8] sm:$0xf]
      %v803 = vld [vmem:[%s1 + $0x1fc] sm:$0xf]
      %v804 = vld [vmem:[%s1 + $0x200] sm:$0xf]
      %v805 = vld [vmem:[%s1 + $0x204] sm:$0xf]
      %v806 = vld [vmem:[%s1 + $0x208] sm:$0xf]
      %v807 = vld [vmem:[%s1 + $0x20c] sm:$0xf]
      %v808 = vld [vmem:[%s1 + $0x210] sm:$0xf]
      %v809 = vld [vmem:[%s1 + $0x214] sm:$0xf]
      %v810 = vld [vmem:[%s1 + $0x218] sm:$0xf]
      %v811 = vld [vmem:[%s1 + $0x21c] sm:$0xf]
      %v812 = vld [vmem:[%s1 + $0x220] sm:$0xf]
      %v813 = vld [vmem:[%s1 + $0x224] sm:$0xf]
      %v814 = vld [vmem:[%s1 + $0x228] sm:$0xf]
      %v815 = vld [vmem:[%s1 + $0x22c] sm:$0xf]
      %v816 = vld [vmem:[%s1 + $0x230] sm:$0xf]
      %v817 = vld [vmem:[%s1 + $0x234] sm:$0xf]
      %v818 = vld [vmem:[%s1 + $0x238] sm:$0xf]
      %v819 = vld [vmem:[%s1 + $0x23c] sm:$0xf]
      %v900 = vunpack.c.l.b16 %v596
      %v901 = vunpack.c.h.b16 %v596
      %v902 = vunpack.c.l.b16 %v597
      %v903 = vunpack.c.h.b16 %v597
      %v904 = vunpack.c.l.b16 %v598
      %v905 = vunpack.c.h.b16 %v598
      %v906 = vunpack.c.l.b16 %v599
      %v907 = vunpack.c.h.b16 %v599
      %v908 = vunpack.c.l.b16 %v600
      %v909 = vunpack.c.l.b16 %v601
      %v910 = vunpack.c.h.b16 %v601
      %v911 = vunpack.c.l.b16 %v602
      %v912 = vunpack.c.h.b16 %v602
      %v913 = vunpack.c.l.b16 %v603
      %v914 = vunpack.c.h.b16 %v603
      %v915 = vunpack.c.l.b16 %v604
      %v916 = vunpack.c.h.b16 %v604
      %v917 = vunpack.c.l.b16 %v605
      %v918 = vunpack.c.l.b16 %v606
      %v919 = vunpack.c.h.b16 %v606
      %v920 = vunpack.c.l.b16 %v607
      %v921 = vunpack.c.h.b16 %v607
      %v922 = vunpack.c.l.b16 %v608
      %v923 = vunpack.c.h.b16 %v608
      %v924 = vunpack.c.l.b16 %v609
      %v925 = vunpack.c.h.b16 %v609
      %v926 = vunpack.c.l.b16 %v610
      %v927 = vunpack.c.l.b16 %v611
      %v928 = vunpack.c.h.b16 %v611
      %v929 = vunpack.c.l.b16 %v612
      %v930 = vunpack.c.h.b16 %v612
      %v931 = vunpack.c.l.b16 %v613
      %v932 = vunpack.c.h.b16 %v613
      %v933 = vunpack.c.l.b16 %v614
      %v934 = vunpack.c.h.b16 %v614
      %v935 = vunpack.c.l.b16 %v615
      %v936 = vunpack.c.l.b16 %v616
      %v937 = vunpack.c.h.b16 %v616
      %v938 = vunpack.c.l.b16 %v617
      %v939 = vunpack.c.h.b16 %v617
      %v940 = vunpack.c.l.b16 %v618
      %v941 = vunpack.c.h.b16 %v618
      %v942 = vunpack.c.l.b16 %v619
      %v943 = vunpack.c.h.b16 %v619
      %v944 = vunpack.c.l.b16 %v620
      %v945 = vunpack.c.l.b16 %v621
      %v946 = vunpack.c.h.b16 %v621
      %v947 = vunpack.c.l.b16 %v622
      %v948 = vunpack.c.h.b16 %v622
      %v949 = vunpack.c.l.b16 %v623
      %v950 = vunpack.c.h.b16 %v623
      %v951 = vunpack.c.l.b16 %v624
      %v952 = vunpack.c.h.b16 %v624
      %v953 = vunpack.c.l.b16 %v625
      %v954 = vunpack.c.l.b16 %v626
      %v955 = vunpack.c.h.b16 %v626
      %v956 = vunpack.c.l.b16 %v627
      %v957 = vunpack.c.h.b16 %v627
      %v958 = vunpack.c.l.b16 %v628
      %v959 = vunpack.c.h.b16 %v628
      %v960 = vunpack.c.l.b16 %v629
      %v961 = vunpack.c.h.b16 %v629
      %v962 = vunpack.c.l.b16 %v630
      %v963 = vunpack.c.l.b16 %v631
      %v964 = vunpack.c.h.b16 %v631
      %v965 = vunpack.c.l.b16 %v632
      %v966 = vunpack.c.h.b16 %v632
      %v967 = vunpack.c.l.b16 %v633
      %v968 = vunpack.c.h.b16 %v633
      %v969 = vunpack.c.l.b16 %v634
      %v970 = vunpack.c.h.b16 %v634
      %v971 = vunpack.c.l.b16 %v635
      %v972 = vunpack.c.l.b16 %v636
      %v973 = vunpack.c.h.b16 %v636
      %v974 = vunpack.c.l.b16 %v637
      %v975 = vunpack.c.h.b16 %v637
      %v976 = vunpack.c.l.b16 %v638
      %v977 = vunpack.c.h.b16 %v638
      %v978 = vunpack.c.l.b16 %v639
      %v979 = vunpack.c.h.b16 %v639
      %v980 = vunpack.c.l.b16 %v640
      %v981 = vunpack.c.l.b16 %v641
      %v982 = vunpack.c.h.b16 %v641
      %v983 = vunpack.c.l.b16 %v642
      %v984 = vunpack.c.h.b16 %v642
      %v985 = vunpack.c.l.b16 %v643
      %v986 = vunpack.c.h.b16 %v643
      %v987 = vunpack.c.l.b16 %v644
      %v988 = vunpack.c.h.b16 %v644
      %v989 = vunpack.c.l.b16 %v645
      %v990 = vunpack.c.l.b16 %v646
      %v991 = vunpack.c.h.b16 %v646
      %v992 = vunpack.c.l.b16 %v647
      %v993 = vunpack.c.h.b16 %v647
      %v994 = vunpack.c.l.b16 %v648
      %v995 = vunpack.c.h.b16 %v648
      %v996 = vunpack.c.l.b16 %v649
      %v997 = vunpack.c.h.b16 %v649
      %v998 = vunpack.c.l.b16 %v650
      %v999 = vunpack.c.l.b16 %v651
      %v1000 = vunpack.c.h.b16 %v651
      %v1001 = vunpack.c.l.b16 %v652
      %v1002 = vunpack.c.h.b16 %v652
      %v1003 = vunpack.c.l.b16 %v653
      %v1004 = vunpack.c.h.b16 %v653
      %v1005 = vunpack.c.l.b16 %v654
      %v1006 = vunpack.c.h.b16 %v654
      %v1007 = vunpack.c.l.b16 %v655
      %v1008 = vunpack.c.l.b16 %v656
      %v1009 = vunpack.c.h.b16 %v656
      %v1010 = vunpack.c.l.b16 %v657
      %v1011 = vunpack.c.h.b16 %v657
      %v1012 = vunpack.c.l.b16 %v658
      %v1013 = vunpack.c.h.b16 %v658
      %v1014 = vunpack.c.l.b16 %v659
      %v1015 = vunpack.c.h.b16 %v659
      %v1016 = vunpack.c.l.b16 %v660
      %v1017 = vunpack.c.l.b16 %v661
      %v1018 = vunpack.c.h.b16 %v661
      %v1019 = vunpack.c.l.b16 %v662
      %v1020 = vunpack.c.h.b16 %v662
      %v1021 = vunpack.c.l.b16 %v663
      %v1022 = vunpack.c.h.b16 %v663
      %v1023 = vunpack.c.l.b16 %v664
      %v1024 = vunpack.c.h.b16 %v664
      %v1025 = vunpack.c.l.b16 %v665
      %v1026 = vunpack.c.l.b16 %v666
      %v1027 = vunpack.c.h.b16 %v666
      %v1028 = vunpack.c.l.b16 %v667
      %v1029 = vunpack.c.h.b16 %v667
      %v1030 = vunpack.c.l.b16 %v668
      %v1031 = vunpack.c.h.b16 %v668
      %v1032 = vunpack.c.l.b16 %v669
      %v1033 = vunpack.c.h.b16 %v669
      %v1034 = vunpack.c.l.b16 %v670
      %v1035 = vunpack.c.l.b16 %v671
      %v1036 = vunpack.c.h.b16 %v671
      %v1037 = vunpack.c.l.b16 %v672
      %v1038 = vunpack.c.h.b16 %v672
      %v1039 = vunpack.c.l.b16 %v673
      %v1040 = vunpack.c.h.b16 %v673
      %v1041 = vunpack.c.l.b16 %v674
      %v1042 = vunpack.c.h.b16 %v674
      %v1043 = vunpack.c.l.b16 %v675
      %v1044 = vpack.c.b16 %v909, %v900
      %v1045 = vpack.c.b16 %v910, %v901
      %v1046 = vpack.c.b16 %v911, %v902
      %v1047 = vpack.c.b16 %v912, %v903
      %v1048 = vpack.c.b16 %v913, %v904
      %v1049 = vpack.c.b16 %v914, %v905
      %v1050 = vpack.c.b16 %v915, %v906
      %v1051 = vpack.c.b16 %v916, %v907
      %v1052 = vpack.c.b16 %v917, %v908
      %v1053 = vpack.c.b16 %v927, %v918
      %v1054 = vpack.c.b16 %v928, %v919
      %v1055 = vpack.c.b16 %v929, %v920
      %v1056 = vpack.c.b16 %v930, %v921
      %v1057 = vpack.c.b16 %v931, %v922
      %v1058 = vpack.c.b16 %v932, %v923
      %v1059 = vpack.c.b16 %v933, %v924
      %v1060 = vpack.c.b16 %v934, %v925
      %v1061 = vpack.c.b16 %v935, %v926
      %v1062 = vpack.c.b16 %v945, %v936
      %v1063 = vpack.c.b16 %v946, %v937
      %v1064 = vpack.c.b16 %v947, %v938
      %v1065 = vpack.c.b16 %v948, %v939
      %v1066 = vpack.c.b16 %v949, %v940
      %v1067 = vpack.c.b16 %v950, %v941
      %v1068 = vpack.c.b16 %v951, %v942
      %v1069 = vpack.c.b16 %v952, %v943
      %v1070 = vpack.c.b16 %v953, %v944
      %v1071 = vpack.c.b16 %v963, %v954
      %v1072 = vpack.c.b16 %v964, %v955
      %v1073 = vpack.c.b16 %v965, %v956
      %v1074 = vpack.c.b16 %v966, %v957
      %v1075 = vpack.c.b16 %v967, %v958
      %v1076 = vpack.c.b16 %v968, %v959
      %v1077 = vpack.c.b16 %v969, %v960
      %v1078 = vpack.c.b16 %v970, %v961
      %v1079 = vpack.c.b16 %v971, %v962
      %v1080 = vpack.c.b16 %v981, %v972
      %v1081 = vpack.c.b16 %v982, %v973
      %v1082 = vpack.c.b16 %v983, %v974
      %v1083 = vpack.c.b16 %v984, %v975
      %v1084 = vpack.c.b16 %v985, %v976
      %v1085 = vpack.c.b16 %v986, %v977
      %v1086 = vpack.c.b16 %v987, %v978
      %v1087 = vpack.c.b16 %v988, %v979
      %v1088 = vpack.c.b16 %v989, %v980
      %v1089 = vpack.c.b16 %v999, %v990
      %v1090 = vpack.c.b16 %v1000, %v991
      %v1091 = vpack.c.b16 %v1001, %v992
      %v1092 = vpack.c.b16 %v1002, %v993
      %v1093 = vpack.c.b16 %v1003, %v994
      %v1094 = vpack.c.b16 %v1004, %v995
      %v1095 = vpack.c.b16 %v1005, %v996
      %v1096 = vpack.c.b16 %v1006, %v997
      %v1097 = vpack.c.b16 %v1007, %v998
      %v1098 = vpack.c.b16 %v1017, %v1008
      %v1099 = vpack.c.b16 %v1018, %v1009
      %v1100 = vpack.c.b16 %v1019, %v1010
      %v1101 = vpack.c.b16 %v1020, %v1011
      %v1102 = vpack.c.b16 %v1021, %v1012
      %v1103 = vpack.c.b16 %v1022, %v1013
      %v1104 = vpack.c.b16 %v1023, %v1014
      %v1105 = vpack.c.b16 %v1024, %v1015
      %v1106 = vpack.c.b16 %v1025, %v1016
      %v1107 = vpack.c.b16 %v1035, %v1026
      %v1108 = vpack.c.b16 %v1036, %v1027
      %v1109 = vpack.c.b16 %v1037, %v1028
      %v1110 = vpack.c.b16 %v1038, %v1029
      %v1111 = vpack.c.b16 %v1039, %v1030
      %v1112 = vpack.c.b16 %v1040, %v1031
      %v1113 = vpack.c.b16 %v1041, %v1032
      %v1114 = vpack.c.b16 %v1042, %v1033
      %v1115 = vpack.c.b16 %v1043, %v1034
      %v1332 = vunpack.c.l.b16 %v676
      %v1333 = vunpack.c.l.b16 %v677
      %v1334 = vunpack.c.l.b16 %v678
      %v1335 = vunpack.c.l.b16 %v679
      %v1336 = vunpack.c.l.b16 %v680
      %v1337 = vunpack.c.l.b16 %v681
      %v1338 = vunpack.c.l.b16 %v682
      %v1339 = vunpack.c.l.b16 %v683
      %v1340 = vunpack.c.l.b16 %v684
      %v1341 = vunpack.c.l.b16 %v685
      %v1342 = vunpack.c.l.b16 %v686
      %v1343 = vunpack.c.l.b16 %v687
      %v1344 = vunpack.c.l.b16 %v688
      %v1345 = vunpack.c.l.b16 %v689
      %v1346 = vunpack.c.l.b16 %v690
      %v1347 = vunpack.c.l.b16 %v691
      %v1348 = vunpack.c.l.b16 %v692
      %v1349 = vunpack.c.l.b16 %v693
      %v1350 = vunpack.c.l.b16 %v694
      %v1351 = vunpack.c.l.b16 %v695
      %v1352 = vunpack.c.l.b16 %v696
      %v1353 = vunpack.c.l.b16 %v697
      %v1354 = vunpack.c.l.b16 %v698
      %v1355 = vunpack.c.l.b16 %v699
      %v1356 = vunpack.c.l.b16 %v700
      %v1357 = vunpack.c.l.b16 %v701
      %v1358 = vunpack.c.l.b16 %v702
      %v1359 = vunpack.c.l.b16 %v703
      %v1360 = vunpack.c.l.b16 %v704
      %v1361 = vunpack.c.l.b16 %v705
      %v1362 = vunpack.c.l.b16 %v706
      %v1363 = vunpack.c.l.b16 %v707
      %v1364 = vunpack.c.l.b16 %v708
      %v1365 = vunpack.c.l.b16 %v709
      %v1366 = vunpack.c.l.b16 %v710
      %v1367 = vunpack.c.l.b16 %v711
      %v1368 = vunpack.c.l.b16 %v712
      %v1369 = vunpack.c.l.b16 %v713
      %v1370 = vunpack.c.l.b16 %v714
      %v1371 = vunpack.c.l.b16 %v715
      %v1372 = vunpack.c.l.b16 %v716
      %v1373 = vunpack.c.l.b16 %v717
      %v1374 = vunpack.c.l.b16 %v718
      %v1375 = vunpack.c.l.b16 %v719
      %v1376 = vunpack.c.l.b16 %v720
      %v1377 = vunpack.c.l.b16 %v721
      %v1378 = vunpack.c.l.b16 %v722
      %v1379 = vunpack.c.l.b16 %v723
      %v1380 = vunpack.c.l.b16 %v724
      %v1381 = vunpack.c.l.b16 %v725
      %v1382 = vunpack.c.l.b16 %v726
      %v1383 = vunpack.c.l.b16 %v727
      %v1384 = vunpack.c.l.b16 %v728
      %v1385 = vunpack.c.l.b16 %v729
      %v1386 = vunpack.c.l.b16 %v730
      %v1387 = vunpack.c.l.b16 %v731
      %v1388 = vunpack.c.l.b16 %v732
      %v1389 = vunpack.c.l.b16 %v733
      %v1390 = vunpack.c.l.b16 %v734
      %v1391 = vunpack.c.l.b16 %v735
      %v1392 = vunpack.c.l.b16 %v736
      %v1393 = vunpack.c.l.b16 %v737
      %v1394 = vunpack.c.l.b16 %v738
      %v1395 = vunpack.c.l.b16 %v739
      %v1396 = vunpack.c.l.b16 %v740
      %v1397 = vunpack.c.l.b16 %v741
      %v1398 = vunpack.c.l.b16 %v742
      %v1399 = vunpack.c.l.b16 %v743
      %v1400 = vunpack.c.l.b16 %v744
      %v1401 = vunpack.c.l.b16 %v745
      %v1402 = vunpack.c.l.b16 %v746
      %v1403 = vunpack.c.l.b16 %v747
      %v1404 = vunpack.c.l.b16 %v748
      %v1405 = vunpack.c.l.b16 %v749
      %v1406 = vunpack.c.l.b16 %v750
      %v1407 = vunpack.c.l.b16 %v751
      %v1408 = vunpack.c.l.b16 %v752
      %v1409 = vunpack.c.l.b16 %v753
      %v1410 = vunpack.c.l.b16 %v754
      %v1411 = vunpack.c.l.b16 %v755
      %v1412 = vunpack.c.l.b16 %v756
      %v1413 = vunpack.c.l.b16 %v757
      %v1414 = vunpack.c.l.b16 %v758
      %v1415 = vunpack.c.l.b16 %v759
      %v1416 = vunpack.c.l.b16 %v760
      %v1417 = vunpack.c.l.b16 %v761
      %v1418 = vunpack.c.l.b16 %v762
      %v1419 = vunpack.c.l.b16 %v763
      %v1420 = vunpack.c.l.b16 %v764
      %v1421 = vunpack.c.l.b16 %v765
      %v1422 = vunpack.c.l.b16 %v766
      %v1423 = vunpack.c.l.b16 %v767
      %v1424 = vunpack.c.l.b16 %v768
      %v1425 = vunpack.c.l.b16 %v769
      %v1426 = vunpack.c.l.b16 %v770
      %v1427 = vunpack.c.l.b16 %v771
      %v1428 = vunpack.c.l.b16 %v772
      %v1429 = vunpack.c.l.b16 %v773
      %v1430 = vunpack.c.l.b16 %v774
      %v1431 = vunpack.c.l.b16 %v775
      %v1432 = vunpack.c.l.b16 %v776
      %v1433 = vunpack.c.l.b16 %v777
      %v1434 = vunpack.c.l.b16 %v778
      %v1435 = vunpack.c.l.b16 %v779
      %v1436 = vunpack.c.l.b16 %v780
      %v1437 = vunpack.c.l.b16 %v781
      %v1438 = vunpack.c.l.b16 %v782
      %v1439 = vunpack.c.l.b16 %v783
      %v1440 = vunpack.c.l.b16 %v784
      %v1441 = vunpack.c.l.b16 %v785
      %v1442 = vunpack.c.l.b16 %v786
      %v1443 = vunpack.c.l.b16 %v787
      %v1444 = vunpack.c.l.b16 %v788
      %v1445 = vunpack.c.l.b16 %v789
      %v1446 = vunpack.c.l.b16 %v790
      %v1447 = vunpack.c.l.b16 %v791
      %v1448 = vunpack.c.l.b16 %v792
      %v1449 = vunpack.c.l.b16 %v793
      %v1450 = vunpack.c.l.b16 %v794
      %v1451 = vunpack.c.l.b16 %v795
      %v1452 = vunpack.c.l.b16 %v796
      %v1453 = vunpack.c.l.b16 %v797
      %v1454 = vunpack.c.l.b16 %v798
      %v1455 = vunpack.c.l.b16 %v799
      %v1456 = vunpack.c.l.b16 %v800
      %v1457 = vunpack.c.l.b16 %v801
      %v1458 = vunpack.c.l.b16 %v802
      %v1459 = vunpack.c.l.b16 %v803
      %v1460 = vunpack.c.l.b16 %v804
      %v1461 = vunpack.c.l.b16 %v805
      %v1462 = vunpack.c.l.b16 %v806
      %v1463 = vunpack.c.l.b16 %v807
      %v1464 = vunpack.c.l.b16 %v808
      %v1465 = vunpack.c.l.b16 %v809
      %v1466 = vunpack.c.l.b16 %v810
      %v1467 = vunpack.c.l.b16 %v811
      %v1468 = vunpack.c.l.b16 %v812
      %v1469 = vunpack.c.l.b16 %v813
      %v1470 = vunpack.c.l.b16 %v814
      %v1471 = vunpack.c.l.b16 %v815
      %v1472 = vunpack.c.l.b16 %v816
      %v1473 = vunpack.c.l.b16 %v817
      %v1474 = vunpack.c.l.b16 %v818
      %v1475 = vunpack.c.l.b16 %v819
      %v1476 = vpack.c.b16 %v1333, %v1332
      %v1477 = vpack.c.b16 %v1335, %v1334
      %v1478 = vpack.c.b16 %v1337, %v1336
      %v1479 = vpack.c.b16 %v1339, %v1338
      %v1480 = vpack.c.b16 %v1341, %v1340
      %v1481 = vpack.c.b16 %v1343, %v1342
      %v1482 = vpack.c.b16 %v1345, %v1344
      %v1483 = vpack.c.b16 %v1347, %v1346
      %v1484 = vpack.c.b16 %v1349, %v1348
      %v1485 = vpack.c.b16 %v1351, %v1350
      %v1486 = vpack.c.b16 %v1353, %v1352
      %v1487 = vpack.c.b16 %v1355, %v1354
      %v1488 = vpack.c.b16 %v1357, %v1356
      %v1489 = vpack.c.b16 %v1359, %v1358
      %v1490 = vpack.c.b16 %v1361, %v1360
      %v1491 = vpack.c.b16 %v1363, %v1362
      %v1492 = vpack.c.b16 %v1365, %v1364
      %v1493 = vpack.c.b16 %v1367, %v1366
      %v1494 = vpack.c.b16 %v1369, %v1368
      %v1495 = vpack.c.b16 %v1371, %v1370
      %v1496 = vpack.c.b16 %v1373, %v1372
      %v1497 = vpack.c.b16 %v1375, %v1374
      %v1498 = vpack.c.b16 %v1377, %v1376
      %v1499 = vpack.c.b16 %v1379, %v1378
      %v1500 = vpack.c.b16 %v1381, %v1380
      %v1501 = vpack.c.b16 %v1383, %v1382
      %v1502 = vpack.c.b16 %v1385, %v1384
      %v1503 = vpack.c.b16 %v1387, %v1386
      %v1504 = vpack.c.b16 %v1389, %v1388
      %v1505 = vpack.c.b16 %v1391, %v1390
      %v1506 = vpack.c.b16 %v1393, %v1392
      %v1507 = vpack.c.b16 %v1395, %v1394
      %v1508 = vpack.c.b16 %v1397, %v1396
      %v1509 = vpack.c.b16 %v1399, %v1398
      %v1510 = vpack.c.b16 %v1401, %v1400
      %v1511 = vpack.c.b16 %v1403, %v1402
      %v1512 = vpack.c.b16 %v1405, %v1404
      %v1513 = vpack.c.b16 %v1407, %v1406
      %v1514 = vpack.c.b16 %v1409, %v1408
      %v1515 = vpack.c.b16 %v1411, %v1410
      %v1516 = vpack.c.b16 %v1413, %v1412
      %v1517 = vpack.c.b16 %v1415, %v1414
      %v1518 = vpack.c.b16 %v1417, %v1416
      %v1519 = vpack.c.b16 %v1419, %v1418
      %v1520 = vpack.c.b16 %v1421, %v1420
      %v1521 = vpack.c.b16 %v1423, %v1422
      %v1522 = vpack.c.b16 %v1425, %v1424
      %v1523 = vpack.c.b16 %v1427, %v1426
      %v1524 = vpack.c.b16 %v1429, %v1428
      %v1525 = vpack.c.b16 %v1431, %v1430
      %v1526 = vpack.c.b16 %v1433, %v1432
      %v1527 = vpack.c.b16 %v1435, %v1434
      %v1528 = vpack.c.b16 %v1437, %v1436
      %v1529 = vpack.c.b16 %v1439, %v1438
      %v1530 = vpack.c.b16 %v1441, %v1440
      %v1531 = vpack.c.b16 %v1443, %v1442
      %v1532 = vpack.c.b16 %v1445, %v1444
      %v1533 = vpack.c.b16 %v1447, %v1446
      %v1534 = vpack.c.b16 %v1449, %v1448
      %v1535 = vpack.c.b16 %v1451, %v1450
      %v1536 = vpack.c.b16 %v1453, %v1452
      %v1537 = vpack.c.b16 %v1455, %v1454
      %v1538 = vpack.c.b16 %v1457, %v1456
      %v1539 = vpack.c.b16 %v1459, %v1458
      %v1540 = vpack.c.b16 %v1461, %v1460
      %v1541 = vpack.c.b16 %v1463, %v1462
      %v1542 = vpack.c.b16 %v1465, %v1464
      %v1543 = vpack.c.b16 %v1467, %v1466
      %v1544 = vpack.c.b16 %v1469, %v1468
      %v1545 = vpack.c.b16 %v1471, %v1470
      %v1546 = vpack.c.b16 %v1473, %v1472
      %v1547 = vpack.c.b16 %v1475, %v1474
      %1620 = vmatprep.subr.bf16.mxu0 0
      %1621 = vmatpush1.bf16.msra.mxu0 %v1483
      %1622 = vmatprep.subr.bf16.mxu0 0
      %1623 = vmatpush1.bf16.msra.mxu0 %v1482
      %1624 = vmatprep.subr.bf16.mxu0 0
      %1625 = vmatpush1.bf16.msra.mxu0 %v1481
      %1626 = vmatprep.subr.bf16.mxu0 0
      %1627 = vmatpush1.bf16.msra.mxu0 %v1480
      %1628 = vmatprep.subr.bf16.mxu0 0
      %1629 = vmatpush1.bf16.msra.mxu0 %v1479
      %1630 = vmatprep.subr.bf16.mxu0 0
      %1631 = vmatpush1.bf16.msra.mxu0 %v1478
      %1632 = vmatprep.subr.bf16.mxu0 0
      %1633 = vmatpush1.bf16.msra.mxu0 %v1477
      %1634 = vmatprep.subr.bf16.mxu0 0
      %1635 = vmatpush1.bf16.msra.mxu0 %v1476
      %1636 = vmatprep.subr.bf16.mxu0 0
      %1637 = vmatpush2.bf16.msra.mxu0 %v1491
      %1638 = vmatprep.subr.bf16.mxu0 0
      %1639 = vmatpush2.bf16.msra.mxu0 %v1490
      %1640 = vmatprep.subr.bf16.mxu0 0
      %1641 = vmatpush2.bf16.msra.mxu0 %v1489
      %1642 = vmatprep.subr.bf16.mxu0 0
      %1643 = vmatpush2.bf16.msra.mxu0 %v1488
      %1644 = vmatprep.subr.bf16.mxu0 0
      %1645 = vmatpush2.bf16.msra.mxu0 %v1487
      %1646 = vmatprep.subr.bf16.mxu0 0
      %1647 = vmatpush2.bf16.msra.mxu0 %v1486
      %1648 = vmatprep.subr.bf16.mxu0 0
      %1649 = vmatpush2.bf16.msra.mxu0 %v1485
      %1650 = vmatprep.subr.bf16.mxu0 0
      %1651 = vmatpush2.bf16.msra.mxu0 %v1484
      %1652 = vmatprep.mubr.bf16.mxu0 %v1045
      %1653 = vmatmul.mubr.bf16.gmra.mxu0 %v1044
      %v1654 = vpop.f32.mrf.mxu0
      %v1655 = vadd.f32 0.0, %v1654
      %v1656 = vpop.f32.mrf.mxu0
      %v1657 = vpop.f32.mrf.mxu0
      %v1658 = vadd.f32 0.0, %v1657
      %v1659 = vpop.f32.mrf.mxu0
      %1660 = vmatprep.mubr.bf16.mxu0 %v1054
      %1661 = vmatmul.mubr.bf16.gmra.mxu0 %v1053
      %v1662 = vpop.f32.mrf.mxu0
      %v1663 = vadd.f32 0.0, %v1662
      %v1664 = vpop.f32.mrf.mxu0
      %v1665 = vpop.f32.mrf.mxu0
      %v1666 = vadd.f32 0.0, %v1665
      %v1667 = vpop.f32.mrf.mxu0
      %1668 = vmatprep.mubr.bf16.mxu0 %v1063
      %1669 = vmatmul.mubr.bf16.gmra.mxu0 %v1062
      %v1670 = vpop.f32.mrf.mxu0
      %v1671 = vadd.f32 0.0, %v1670
      %v1672 = vpop.f32.mrf.mxu0
      %v1673 = vpop.f32.mrf.mxu0
      %v1674 = vadd.f32 0.0, %v1673
      %v1675 = vpop.f32.mrf.mxu0
      %1676 = vmatprep.mubr.bf16.mxu0 %v1072
      %1677 = vmatmul.mubr.bf16.gmra.mxu0 %v1071
      %v1678 = vpop.f32.mrf.mxu0
      %v1679 = vadd.f32 0.0, %v1678
      %v1680 = vpop.f32.mrf.mxu0
      %v1681 = vpop.f32.mrf.mxu0
      %v1682 = vadd.f32 0.0, %v1681
      %v1683 = vpop.f32.mrf.mxu0
      %1684 = vmatprep.mubr.bf16.mxu0 %v1081
      %1685 = vmatmul.mubr.bf16.gmra.mxu0 %v1080
      %v1686 = vpop.f32.mrf.mxu0
      %v1687 = vadd.f32 0.0, %v1686
      %v1688 = vpop.f32.mrf.mxu0
      %v1689 = vpop.f32.mrf.mxu0
      %v1690 = vadd.f32 0.0, %v1689
      %v1691 = vpop.f32.mrf.mxu0
      %1692 = vmatprep.mubr.bf16.mxu0 %v1090
      %1693 = vmatmul.mubr.bf16.gmra.mxu0 %v1089
      %v1694 = vpop.f32.mrf.mxu0
      %v1695 = vadd.f32 0.0, %v1694
      %v1696 = vpop.f32.mrf.mxu0
      %v1697 = vpop.f32.mrf.mxu0
      %v1698 = vadd.f32 0.0, %v1697
      %v1699 = vpop.f32.mrf.mxu0
      %1700 = vmatprep.mubr.bf16.mxu0 %v1099
      %1701 = vmatmul.mubr.bf16.gmra.mxu0 %v1098
      %v1702 = vpop.f32.mrf.mxu0
      %v1703 = vadd.f32 0.0, %v1702
      %v1704 = vpop.f32.mrf.mxu0
      %v1705 = vpop.f32.mrf.mxu0
      %v1706 = vadd.f32 0.0, %v1705
      %v1707 = vpop.f32.mrf.mxu0
      %1708 = vmatprep.mubr.bf16.mxu0 %v1108
      %1709 = vmatmul.mubr.bf16.gmra.mxu0 %v1107
      %v1710 = vpop.f32.mrf.mxu0
      %v1711 = vadd.f32 0.0, %v1710
      %v1712 = vpop.f32.mrf.mxu0
      %v1713 = vpop.f32.mrf.mxu0
      %v1714 = vadd.f32 0.0, %v1713
      %v1715 = vpop.f32.mrf.mxu0
      %1716 = vdwg.mxu0
      %1717 = vmatprep.subr.bf16.mxu0 0
      %1718 = vmatpush1.bf16.msra.mxu0 %v1499
      %1719 = vmatprep.subr.bf16.mxu0 0
      %1720 = vmatpush1.bf16.msra.mxu0 %v1498
      %1721 = vmatprep.subr.bf16.mxu0 0
      %1722 = vmatpush1.bf16.msra.mxu0 %v1497
      %1723 = vmatprep.subr.bf16.mxu0 0
      %1724 = vmatpush1.bf16.msra.mxu0 %v1496
      %1725 = vmatprep.subr.bf16.mxu0 0
      %1726 = vmatpush1.bf16.msra.mxu0 %v1495
      %1727 = vmatprep.subr.bf16.mxu0 0
      %1728 = vmatpush1.bf16.msra.mxu0 %v1494
      %1729 = vmatprep.subr.bf16.mxu0 0
      %1730 = vmatpush1.bf16.msra.mxu0 %v1493
      %1731 = vmatprep.subr.bf16.mxu0 0
      %1732 = vmatpush1.bf16.msra.mxu0 %v1492
      %1733 = vmatprep.subr.bf16.mxu0 0
      %1734 = vmatpush2.bf16.msra.mxu0 %v1507
      %1735 = vmatprep.subr.bf16.mxu0 0
      %1736 = vmatpush2.bf16.msra.mxu0 %v1506
      %1737 = vmatprep.subr.bf16.mxu0 0
      %1738 = vmatpush2.bf16.msra.mxu0 %v1505
      %1739 = vmatprep.subr.bf16.mxu0 0
      %1740 = vmatpush2.bf16.msra.mxu0 %v1504
      %1741 = vmatprep.subr.bf16.mxu0 0
      %1742 = vmatpush2.bf16.msra.mxu0 %v1503
      %1743 = vmatprep.subr.bf16.mxu0 0
      %1744 = vmatpush2.bf16.msra.mxu0 %v1502
      %1745 = vmatprep.subr.bf16.mxu0 0
      %1746 = vmatpush2.bf16.msra.mxu0 %v1501
      %1747 = vmatprep.subr.bf16.mxu0 0
      %1748 = vmatpush2.bf16.msra.mxu0 %v1500
      %1749 = vmatprep.mubr.bf16.mxu0 %v1047
      %1750 = vmatmul.mubr.bf16.gmra.mxu0 %v1046
      %v1751 = vpop.f32.mrf.mxu0
      %v1752 = vadd.f32 %v1655, %v1751
      %v1753 = vpop.f32.mrf.mxu0
      %v1754 = vpop.f32.mrf.mxu0
      %v1755 = vadd.f32 %v1658, %v1754
      %v1756 = vpop.f32.mrf.mxu0
      %1757 = vmatprep.mubr.bf16.mxu0 %v1056
      %1758 = vmatmul.mubr.bf16.gmra.mxu0 %v1055
      %v1759 = vpop.f32.mrf.mxu0
      %v1760 = vadd.f32 %v1663, %v1759
      %v1761 = vpop.f32.mrf.mxu0
      %v1762 = vpop.f32.mrf.mxu0
      %v1763 = vadd.f32 %v1666, %v1762
      %v1764 = vpop.f32.mrf.mxu0
      %1765 = vmatprep.mubr.bf16.mxu0 %v1065
      %1766 = vmatmul.mubr.bf16.gmra.mxu0 %v1064
      %v1767 = vpop.f32.mrf.mxu0
      %v1768 = vadd.f32 %v1671, %v1767
      %v1769 = vpop.f32.mrf.mxu0
      %v1770 = vpop.f32.mrf.mxu0
      %v1771 = vadd.f32 %v1674, %v1770
      %v1772 = vpop.f32.mrf.mxu0
      %1773 = vmatprep.mubr.bf16.mxu0 %v1074
      %1774 = vmatmul.mubr.bf16.gmra.mxu0 %v1073
      %v1775 = vpop.f32.mrf.mxu0
      %v1776 = vadd.f32 %v1679, %v1775
      %v1777 = vpop.f32.mrf.mxu0
      %v1778 = vpop.f32.mrf.mxu0
      %v1779 = vadd.f32 %v1682, %v1778
      %v1780 = vpop.f32.mrf.mxu0
      %1781 = vmatprep.mubr.bf16.mxu0 %v1083
      %1782 = vmatmul.mubr.bf16.gmra.mxu0 %v1082
      %v1783 = vpop.f32.mrf.mxu0
      %v1784 = vadd.f32 %v1687, %v1783
      %v1785 = vpop.f32.mrf.mxu0
      %v1786 = vpop.f32.mrf.mxu0
      %v1787 = vadd.f32 %v1690, %v1786
      %v1788 = vpop.f32.mrf.mxu0
      %1789 = vmatprep.mubr.bf16.mxu0 %v1092
      %1790 = vmatmul.mubr.bf16.gmra.mxu0 %v1091
      %v1791 = vpop.f32.mrf.mxu0
      %v1792 = vadd.f32 %v1695, %v1791
      %v1793 = vpop.f32.mrf.mxu0
      %v1794 = vpop.f32.mrf.mxu0
      %v1795 = vadd.f32 %v1698, %v1794
      %v1796 = vpop.f32.mrf.mxu0
      %1797 = vmatprep.mubr.bf16.mxu0 %v1101
      %1798 = vmatmul.mubr.bf16.gmra.mxu0 %v1100
      %v1799 = vpop.f32.mrf.mxu0
      %v1800 = vadd.f32 %v1703, %v1799
      %v1801 = vpop.f32.mrf.mxu0
      %v1802 = vpop.f32.mrf.mxu0
      %v1803 = vadd.f32 %v1706, %v1802
      %v1804 = vpop.f32.mrf.mxu0
      %1805 = vmatprep.mubr.bf16.mxu0 %v1110
      %1806 = vmatmul.mubr.bf16.gmra.mxu0 %v1109
      %v1807 = vpop.f32.mrf.mxu0
      %v1808 = vadd.f32 %v1711, %v1807
      %v1809 = vpop.f32.mrf.mxu0
      %v1810 = vpop.f32.mrf.mxu0
      %v1811 = vadd.f32 %v1714, %v1810
      %v1812 = vpop.f32.mrf.mxu0
      %1813 = vdwg.mxu0
      %1814 = vmatprep.subr.bf16.mxu0 0
      %1815 = vmatpush1.bf16.msra.mxu0 %v1515
      %1816 = vmatprep.subr.bf16.mxu0 0
      %1817 = vmatpush1.bf16.msra.mxu0 %v1514
      %1818 = vmatprep.subr.bf16.mxu0 0
      %1819 = vmatpush1.bf16.msra.mxu0 %v1513
      %1820 = vmatprep.subr.bf16.mxu0 0
      %1821 = vmatpush1.bf16.msra.mxu0 %v1512
      %1822 = vmatprep.subr.bf16.mxu0 0
      %1823 = vmatpush1.bf16.msra.mxu0 %v1511
      %1824 = vmatprep.subr.bf16.mxu0 0
      %1825 = vmatpush1.bf16.msra.mxu0 %v1510
      %1826 = vmatprep.subr.bf16.mxu0 0
      %1827 = vmatpush1.bf16.msra.mxu0 %v1509
      %1828 = vmatprep.subr.bf16.mxu0 0
      %1829 = vmatpush1.bf16.msra.mxu0 %v1508
      %1830 = vmatprep.subr.bf16.mxu0 0
      %1831 = vmatpush2.bf16.msra.mxu0 %v1523
      %1832 = vmatprep.subr.bf16.mxu0 0
      %1833 = vmatpush2.bf16.msra.mxu0 %v1522
      %1834 = vmatprep.subr.bf16.mxu0 0
      %1835 = vmatpush2.bf16.msra.mxu0 %v1521
      %1836 = vmatprep.subr.bf16.mxu0 0
      %1837 = vmatpush2.bf16.msra.mxu0 %v1520
      %1838 = vmatprep.subr.bf16.mxu0 0
      %1839 = vmatpush2.bf16.msra.mxu0 %v1519
      %1840 = vmatprep.subr.bf16.mxu0 0
      %1841 = vmatpush2.bf16.msra.mxu0 %v1518
      %1842 = vmatprep.subr.bf16.mxu0 0
      %1843 = vmatpush2.bf16.msra.mxu0 %v1517
      %1844 = vmatprep.subr.bf16.mxu0 0
      %1845 = vmatpush2.bf16.msra.mxu0 %v1516
      %1846 = vmatprep.mubr.bf16.mxu0 %v1049
      %1847 = vmatmul.mubr.bf16.gmra.mxu0 %v1048
      %v1848 = vpop.f32.mrf.mxu0
      %v1849 = vadd.f32 %v1752, %v1848
      %v1850 = vpop.f32.mrf.mxu0
      %v1851 = vpop.f32.mrf.mxu0
      %v1852 = vadd.f32 %v1755, %v1851
      %v1853 = vpop.f32.mrf.mxu0
      %1854 = vmatprep.mubr.bf16.mxu0 %v1058
      %1855 = vmatmul.mubr.bf16.gmra.mxu0 %v1057
      %v1856 = vpop.f32.mrf.mxu0
      %v1857 = vadd.f32 %v1760, %v1856
      %v1858 = vpop.f32.mrf.mxu0
      %v1859 = vpop.f32.mrf.mxu0
      %v1860 = vadd.f32 %v1763, %v1859
      %v1861 = vpop.f32.mrf.mxu0
      %1862 = vmatprep.mubr.bf16.mxu0 %v1067
      %1863 = vmatmul.mubr.bf16.gmra.mxu0 %v1066
      %v1864 = vpop.f32.mrf.mxu0
      %v1865 = vadd.f32 %v1768, %v1864
      %v1866 = vpop.f32.mrf.mxu0
      %v1867 = vpop.f32.mrf.mxu0
      %v1868 = vadd.f32 %v1771, %v1867
      %v1869 = vpop.f32.mrf.mxu0
      %1870 = vmatprep.mubr.bf16.mxu0 %v1076
      %1871 = vmatmul.mubr.bf16.gmra.mxu0 %v1075
      %v1872 = vpop.f32.mrf.mxu0
      %v1873 = vadd.f32 %v1776, %v1872
      %v1874 = vpop.f32.mrf.mxu0
      %v1875 = vpop.f32.mrf.mxu0
      %v1876 = vadd.f32 %v1779, %v1875
      %v1877 = vpop.f32.mrf.mxu0
      %1878 = vmatprep.mubr.bf16.mxu0 %v1085
      %1879 = vmatmul.mubr.bf16.gmra.mxu0 %v1084
      %v1880 = vpop.f32.mrf.mxu0
      %v1881 = vadd.f32 %v1784, %v1880
      %v1882 = vpop.f32.mrf.mxu0
      %v1883 = vpop.f32.mrf.mxu0
      %v1884 = vadd.f32 %v1787, %v1883
      %v1885 = vpop.f32.mrf.mxu0
      %1886 = vmatprep.mubr.bf16.mxu0 %v1094
      %1887 = vmatmul.mubr.bf16.gmra.mxu0 %v1093
      %v1888 = vpop.f32.mrf.mxu0
      %v1889 = vadd.f32 %v1792, %v1888
      %v1890 = vpop.f32.mrf.mxu0
      %v1891 = vpop.f32.mrf.mxu0
      %v1892 = vadd.f32 %v1795, %v1891
      %v1893 = vpop.f32.mrf.mxu0
      %1894 = vmatprep.mubr.bf16.mxu0 %v1103
      %1895 = vmatmul.mubr.bf16.gmra.mxu0 %v1102
      %v1896 = vpop.f32.mrf.mxu0
      %v1897 = vadd.f32 %v1800, %v1896
      %v1898 = vpop.f32.mrf.mxu0
      %v1899 = vpop.f32.mrf.mxu0
      %v1900 = vadd.f32 %v1803, %v1899
      %v1901 = vpop.f32.mrf.mxu0
      %1902 = vmatprep.mubr.bf16.mxu0 %v1112
      %1903 = vmatmul.mubr.bf16.gmra.mxu0 %v1111
      %v1904 = vpop.f32.mrf.mxu0
      %v1905 = vadd.f32 %v1808, %v1904
      %v1906 = vpop.f32.mrf.mxu0
      %v1907 = vpop.f32.mrf.mxu0
      %v1908 = vadd.f32 %v1811, %v1907
      %v1909 = vpop.f32.mrf.mxu0
      %1910 = vdwg.mxu0
      %1911 = vmatprep.subr.bf16.mxu0 0
      %1912 = vmatpush1.bf16.msra.mxu0 %v1531
      %1913 = vmatprep.subr.bf16.mxu0 0
      %1914 = vmatpush1.bf16.msra.mxu0 %v1530
      %1915 = vmatprep.subr.bf16.mxu0 0
      %1916 = vmatpush1.bf16.msra.mxu0 %v1529
      %1917 = vmatprep.subr.bf16.mxu0 0
      %1918 = vmatpush1.bf16.msra.mxu0 %v1528
      %1919 = vmatprep.subr.bf16.mxu0 0
      %1920 = vmatpush1.bf16.msra.mxu0 %v1527
      %1921 = vmatprep.subr.bf16.mxu0 0
      %1922 = vmatpush1.bf16.msra.mxu0 %v1526
      %1923 = vmatprep.subr.bf16.mxu0 0
      %1924 = vmatpush1.bf16.msra.mxu0 %v1525
      %1925 = vmatprep.subr.bf16.mxu0 0
      %1926 = vmatpush1.bf16.msra.mxu0 %v1524
      %1927 = vmatprep.subr.bf16.mxu0 0
      %1928 = vmatpush2.bf16.msra.mxu0 %v1539
      %1929 = vmatprep.subr.bf16.mxu0 0
      %1930 = vmatpush2.bf16.msra.mxu0 %v1538
      %1931 = vmatprep.subr.bf16.mxu0 0
      %1932 = vmatpush2.bf16.msra.mxu0 %v1537
      %1933 = vmatprep.subr.bf16.mxu0 0
      %1934 = vmatpush2.bf16.msra.mxu0 %v1536
      %1935 = vmatprep.subr.bf16.mxu0 0
      %1936 = vmatpush2.bf16.msra.mxu0 %v1535
      %1937 = vmatprep.subr.bf16.mxu0 0
      %1938 = vmatpush2.bf16.msra.mxu0 %v1534
      %1939 = vmatprep.subr.bf16.mxu0 0
      %1940 = vmatpush2.bf16.msra.mxu0 %v1533
      %1941 = vmatprep.subr.bf16.mxu0 0
      %1942 = vmatpush2.bf16.msra.mxu0 %v1532
      %1943 = vmatprep.mubr.bf16.mxu0 %v1051
      %1944 = vmatmul.mubr.bf16.gmra.mxu0 %v1050
      %v1945 = vpop.f32.mrf.mxu0
      %v1946 = vadd.f32 %v1849, %v1945
      %v1947 = vpop.f32.mrf.mxu0
      %v1948 = vpop.f32.mrf.mxu0
      %v1949 = vadd.f32 %v1852, %v1948
      %v1950 = vpop.f32.mrf.mxu0
      %1951 = vmatprep.mubr.bf16.mxu0 %v1060
      %1952 = vmatmul.mubr.bf16.gmra.mxu0 %v1059
      %v1953 = vpop.f32.mrf.mxu0
      %v1954 = vadd.f32 %v1857, %v1953
      %v1955 = vpop.f32.mrf.mxu0
      %v1956 = vpop.f32.mrf.mxu0
      %v1957 = vadd.f32 %v1860, %v1956
      %v1958 = vpop.f32.mrf.mxu0
      %1959 = vmatprep.mubr.bf16.mxu0 %v1069
      %1960 = vmatmul.mubr.bf16.gmra.mxu0 %v1068
      %v1961 = vpop.f32.mrf.mxu0
      %v1962 = vadd.f32 %v1865, %v1961
      %v1963 = vpop.f32.mrf.mxu0
      %v1964 = vpop.f32.mrf.mxu0
      %v1965 = vadd.f32 %v1868, %v1964
      %v1966 = vpop.f32.mrf.mxu0
      %1967 = vmatprep.mubr.bf16.mxu0 %v1078
      %1968 = vmatmul.mubr.bf16.gmra.mxu0 %v1077
      %v1969 = vpop.f32.mrf.mxu0
      %v1970 = vadd.f32 %v1873, %v1969
      %v1971 = vpop.f32.mrf.mxu0
      %v1972 = vpop.f32.mrf.mxu0
      %v1973 = vadd.f32 %v1876, %v1972
      %v1974 = vpop.f32.mrf.mxu0
      %1975 = vmatprep.mubr.bf16.mxu0 %v1087
      %1976 = vmatmul.mubr.bf16.gmra.mxu0 %v1086
      %v1977 = vpop.f32.mrf.mxu0
      %v1978 = vadd.f32 %v1881, %v1977
      %v1979 = vpop.f32.mrf.mxu0
      %v1980 = vpop.f32.mrf.mxu0
      %v1981 = vadd.f32 %v1884, %v1980
      %v1982 = vpop.f32.mrf.mxu0
      %1983 = vmatprep.mubr.bf16.mxu0 %v1096
      %1984 = vmatmul.mubr.bf16.gmra.mxu0 %v1095
      %v1985 = vpop.f32.mrf.mxu0
      %v1986 = vadd.f32 %v1889, %v1985
      %v1987 = vpop.f32.mrf.mxu0
      %v1988 = vpop.f32.mrf.mxu0
      %v1989 = vadd.f32 %v1892, %v1988
      %v1990 = vpop.f32.mrf.mxu0
      %1991 = vmatprep.mubr.bf16.mxu0 %v1105
      %1992 = vmatmul.mubr.bf16.gmra.mxu0 %v1104
      %v1993 = vpop.f32.mrf.mxu0
      %v1994 = vadd.f32 %v1897, %v1993
      %v1995 = vpop.f32.mrf.mxu0
      %v1996 = vpop.f32.mrf.mxu0
      %v1997 = vadd.f32 %v1900, %v1996
      %v1998 = vpop.f32.mrf.mxu0
      %1999 = vmatprep.mubr.bf16.mxu0 %v1114
      %2000 = vmatmul.mubr.bf16.gmra.mxu0 %v1113
      %v2001 = vpop.f32.mrf.mxu0
      %v2002 = vadd.f32 %v1905, %v2001
      %v2003 = vpop.f32.mrf.mxu0
      %v2004 = vpop.f32.mrf.mxu0
      %v2005 = vadd.f32 %v1908, %v2004
      %v2006 = vpop.f32.mrf.mxu0
      %2007 = vdwg.mxu0
      %2008 = vmatprep.subr.bf16.mxu0 0
      %2009 = vmatpush1.bf16.msra.mxu0 %v1547
      %2010 = vmatprep.subr.bf16.mxu0 0
      %2011 = vmatpush1.bf16.msra.mxu0 %v1546
      %2012 = vmatprep.subr.bf16.mxu0 0
      %2013 = vmatpush1.bf16.msra.mxu0 %v1545
      %2014 = vmatprep.subr.bf16.mxu0 0
      %2015 = vmatpush1.bf16.msra.mxu0 %v1544
      %2016 = vmatprep.subr.bf16.mxu0 0
      %2017 = vmatpush1.bf16.msra.mxu0 %v1543
      %2018 = vmatprep.subr.bf16.mxu0 0
      %2019 = vmatpush1.bf16.msra.mxu0 %v1542
      %2020 = vmatprep.subr.bf16.mxu0 0
      %2021 = vmatpush1.bf16.msra.mxu0 %v1541
      %2022 = vmatprep.subr.bf16.mxu0 0
      %2023 = vmatpush1.bf16.msra.mxu0 %v1540
      %2024 = vmatprep.subr.bf16.mxu0 0
      %2025 = vmatpush2.bf16.msra.mxu0 0
      %2026 = vmatprep.subr.bf16.mxu0 0
      %2027 = vmatpush2.bf16.msra.mxu0 0
      %2028 = vmatprep.subr.bf16.mxu0 0
      %2029 = vmatpush2.bf16.msra.mxu0 0
      %2030 = vmatprep.subr.bf16.mxu0 0
      %2031 = vmatpush2.bf16.msra.mxu0 0
      %2032 = vmatprep.subr.bf16.mxu0 0
      %2033 = vmatpush2.bf16.msra.mxu0 0
      %2034 = vmatprep.subr.bf16.mxu0 0
      %2035 = vmatpush2.bf16.msra.mxu0 0
      %2036 = vmatprep.subr.bf16.mxu0 0
      %2037 = vmatpush2.bf16.msra.mxu0 0
      %2038 = vmatprep.subr.bf16.mxu0 0
      %2039 = vmatpush2.bf16.msra.mxu0 0
      %2040 = vmatprep.mubr.bf16.mxu0 0
      %2041 = vmatmul.mubr.bf16.gmra.mxu0 %v1052
      %v2042 = vpop.f32.mrf.mxu0
      %v2043 = vadd.f32 %v1946, %v2042
      %v2044 = vpop.f32.mrf.mxu0
      %v2045 = vpop.f32.mrf.mxu0
      %v2046 = vadd.f32 %v1949, %v2045
      %v2047 = vpop.f32.mrf.mxu0
      %2048 = vmatprep.mubr.bf16.mxu0 0
      %2049 = vmatmul.mubr.bf16.gmra.mxu0 %v1061
      %v2050 = vpop.f32.mrf.mxu0
      %v2051 = vadd.f32 %v1954, %v2050
      %v2052 = vpop.f32.mrf.mxu0
      %v2053 = vpop.f32.mrf.mxu0
      %v2054 = vadd.f32 %v1957, %v2053
      %v2055 = vpop.f32.mrf.mxu0
      %2056 = vmatprep.mubr.bf16.mxu0 0
      %2057 = vmatmul.mubr.bf16.gmra.mxu0 %v1070
      %v2058 = vpop.f32.mrf.mxu0
      %v2059 = vadd.f32 %v1962, %v2058
      %v2060 = vpop.f32.mrf.mxu0
      %v2061 = vpop.f32.mrf.mxu0
      %v2062 = vadd.f32 %v1965, %v2061
      %v2063 = vpop.f32.mrf.mxu0
      %2064 = vmatprep.mubr.bf16.mxu0 0
      %2065 = vmatmul.mubr.bf16.gmra.mxu0 %v1079
      %v2066 = vpop.f32.mrf.mxu0
      %v2067 = vadd.f32 %v1970, %v2066
      %v2068 = vpop.f32.mrf.mxu0
      %v2069 = vpop.f32.mrf.mxu0
      %v2070 = vadd.f32 %v1973, %v2069
      %v2071 = vpop.f32.mrf.mxu0
      %2072 = vmatprep.mubr.bf16.mxu0 0
      %2073 = vmatmul.mubr.bf16.gmra.mxu0 %v1088
      %v2074 = vpop.f32.mrf.mxu0
      %v2075 = vadd.f32 %v1978, %v2074
      %v2076 = vpop.f32.mrf.mxu0
      %v2077 = vpop.f32.mrf.mxu0
      %v2078 = vadd.f32 %v1981, %v2077
      %v2079 = vpop.f32.mrf.mxu0
      %2080 = vmatprep.mubr.bf16.mxu0 0
      %2081 = vmatmul.mubr.bf16.gmra.mxu0 %v1097
      %v2082 = vpop.f32.mrf.mxu0
      %v2083 = vadd.f32 %v1986, %v2082
      %v2084 = vpop.f32.mrf.mxu0
      %v2085 = vpop.f32.mrf.mxu0
      %v2086 = vadd.f32 %v1989, %v2085
      %v2087 = vpop.f32.mrf.mxu0
      %2088 = vmatprep.mubr.bf16.mxu0 0
      %2089 = vmatmul.mubr.bf16.gmra.mxu0 %v1106
      %v2090 = vpop.f32.mrf.mxu0
      %v2091 = vadd.f32 %v1994, %v2090
      %v2092 = vpop.f32.mrf.mxu0
      %v2093 = vpop.f32.mrf.mxu0
      %v2094 = vadd.f32 %v1997, %v2093
      %v2095 = vpop.f32.mrf.mxu0
      %2096 = vmatprep.mubr.bf16.mxu0 0
      %2097 = vmatmul.mubr.bf16.gmra.mxu0 %v1115
      %v2098 = vpop.f32.mrf.mxu0
      %v2099 = vadd.f32 %v2002, %v2098
      %v2100 = vpop.f32.mrf.mxu0
      %v2101 = vpop.f32.mrf.mxu0
      %v2102 = vadd.f32 %v2005, %v2101
      %v2103 = vpop.f32.mrf.mxu0
      %2104 = vdwg.mxu0
      %2105 = vst [vmem:[#allocation3] sm:$0xff] %v2043
      %2106 = vst [vmem:[#allocation3 + $0x8] sm:$0xff] %v2046
      %2107 = vst [vmem:[#allocation3 + $0x10] sm:$0xff] %v2051
      %2108 = vst [vmem:[#allocation3 + $0x18] sm:$0xff] %v2054
      %2109 = vst [vmem:[#allocation3 + $0x20] sm:$0xff] %v2059
      %2110 = vst [vmem:[#allocation3 + $0x28] sm:$0xff] %v2062
      %2111 = vst [vmem:[#allocation3 + $0x30] sm:$0xff] %v2067
      %2112 = vst [vmem:[#allocation3 + $0x38] sm:$0xff] %v2070
      %2113 = vst [vmem:[#allocation3 + $0x40] sm:$0xff] %v2075
      %2114 = vst [vmem:[#allocation3 + $0x48] sm:$0xff] %v2078
      %2115 = vst [vmem:[#allocation3 + $0x50] sm:$0xff] %v2083
      %2116 = vst [vmem:[#allocation3 + $0x58] sm:$0xff] %v2086
      %2117 = vst [vmem:[#allocation3 + $0x60] sm:$0xff] %v2091
      %2118 = vst [vmem:[#allocation3 + $0x68] sm:$0xff] %v2094
      %2119 = vst [vmem:[#allocation3 + $0x70] sm:$0xff] %v2099
      %2120 = vst [vmem:[#allocation3 + $0x78] sm:$0xff] %v2102
      %v2121 = vld [vmem:[#allocation3] sm:$0xff]
      %v2122 = vld [vmem:[#allocation3 + $0x8] sm:$0xff]
      %v2123 = vld [vmem:[#allocation3 + $0x10] sm:$0xff]
      %v2124 = vld [vmem:[#allocation3 + $0x18] sm:$0xff]
      %v2125 = vld [vmem:[#allocation3 + $0x20] sm:$0xff]
      %v2126 = vld [vmem:[#allocation3 + $0x28] sm:$0xff]
      %v2127 = vld [vmem:[#allocation3 + $0x30] sm:$0xff]
      %v2128 = vld [vmem:[#allocation3 + $0x38] sm:$0xff]
      %v2129 = vld [vmem:[#allocation3 + $0x40] sm:$0xff]
      %v2130 = vld [vmem:[#allocation3 + $0x48] sm:$0xff]
      %v2131 = vld [vmem:[#allocation3 + $0x50] sm:$0xff]
      %v2132 = vld [vmem:[#allocation3 + $0x58] sm:$0xff]
      %v2133 = vld [vmem:[#allocation3 + $0x60] sm:$0xff]
      %v2134 = vld [vmem:[#allocation3 + $0x68] sm:$0xff]
      %v2135 = vld [vmem:[#allocation3 + $0x70] sm:$0xff]
      %v2136 = vld [vmem:[#allocation3 + $0x78] sm:$0xff]
      %v2137 = vld [vmem:[%s2] sm:$0x1]
      %v2139 = vlaneseq
      %v2140 = vshrl.u32 %v2139, 7
      %v2141 = vsub.s32 0, %v2140
      %v2142 = vrot.slane %v2137, %v2141
      %v2144 = vadd.f32 %v2121, %v2142
      %v2145 = vadd.f32 %v2122, %v2142
      %v2146 = vadd.f32 %v2123, %v2142
      %v2147 = vadd.f32 %v2124, %v2142
      %v2148 = vadd.f32 %v2125, %v2142
      %v2149 = vadd.f32 %v2126, %v2142
      %v2150 = vadd.f32 %v2127, %v2142
      %v2151 = vadd.f32 %v2128, %v2142
      %v2152 = vadd.f32 %v2129, %v2142
      %v2153 = vadd.f32 %v2130, %v2142
      %v2154 = vadd.f32 %v2131, %v2142
      %v2155 = vadd.f32 %v2132, %v2142
      %v2156 = vadd.f32 %v2133, %v2142
      %v2157 = vadd.f32 %v2134, %v2142
      %v2158 = vadd.f32 %v2135, %v2142
      %v2159 = vadd.f32 %v2136, %v2142
      %v2160 = vmax.f32 %v2144, 0.0
      %v2161 = vmax.f32 %v2145, 0.0
      %v2162 = vmax.f32 %v2146, 0.0
      %v2163 = vmax.f32 %v2147, 0.0
      %v2164 = vmax.f32 %v2148, 0.0
      %v2165 = vmax.f32 %v2149, 0.0
      %v2166 = vmax.f32 %v2150, 0.0
      %v2167 = vmax.f32 %v2151, 0.0
      %v2168 = vmax.f32 %v2152, 0.0
      %v2169 = vmax.f32 %v2153, 0.0
      %v2170 = vmax.f32 %v2154, 0.0
      %v2171 = vmax.f32 %v2155, 0.0
      %v2172 = vmax.f32 %v2156, 0.0
      %v2173 = vmax.f32 %v2157, 0.0
      %v2174 = vmax.f32 %v2158, 0.0
      %v2175 = vmax.f32 %v2159, 0.0
      %2176 = vst [vmem:[#allocation3] sm:$0xff] %v2160
      %2177 = vst [vmem:[#allocation3 + $0x8] sm:$0xff] %v2161
      %2178 = vst [vmem:[#allocation3 + $0x10] sm:$0xff] %v2162
      %2179 = vst [vmem:[#allocation3 + $0x18] sm:$0xff] %v2163
      %2180 = vst [vmem:[#allocation3 + $0x20] sm:$0xff] %v2164
      %2181 = vst [vmem:[#allocation3 + $0x28] sm:$0xff] %v2165
      %2182 = vst [vmem:[#allocation3 + $0x30] sm:$0xff] %v2166
      %2183 = vst [vmem:[#allocation3 + $0x38] sm:$0xff] %v2167
      %2184 = vst [vmem:[#allocation3 + $0x40] sm:$0xff] %v2168
      %2185 = vst [vmem:[#allocation3 + $0x48] sm:$0xff] %v2169
      %2186 = vst [vmem:[#allocation3 + $0x50] sm:$0xff] %v2170
      %2187 = vst [vmem:[#allocation3 + $0x58] sm:$0xff] %v2171
      %2188 = vst [vmem:[#allocation3 + $0x60] sm:$0xff] %v2172
      %2189 = vst [vmem:[#allocation3 + $0x68] sm:$0xff] %v2173
      %2190 = vst [vmem:[#allocation3 + $0x70] sm:$0xff] %v2174
      %2191 = vst [vmem:[#allocation3 + $0x78] sm:$0xff] %v2175
      %2192 = vst [vmem:[#allocation3 + $0x8] sm:$0xff] 0.0
      %2193 = vst [vmem:[#allocation3 + $0x18] sm:$0xff] 0.0
      %2194 = vst [vmem:[#allocation3 + $0x28] sm:$0xff] 0.0
      %2195 = vst [vmem:[#allocation3 + $0x38] sm:$0xff] 0.0
      %2196 = vst [vmem:[#allocation3 + $0x48] sm:$0xff] 0.0
      %2197 = vst [vmem:[#allocation3 + $0x58] sm:$0xff] 0.0
      %2198 = vst [vmem:[#allocation3 + $0x68] sm:$0xff] 0.0
      %2199 = vst [vmem:[#allocation3 + $0x78] sm:$0xff] 0.0
      %v2200 = vld [vmem:[#allocation3] sm:$0xff]
      %v2201 = vld [vmem:[#allocation3 + $0x8] sm:$0xff]
      %v2202 = vld [vmem:[#allocation3 + $0x10] sm:$0xff]
      %v2203 = vld [vmem:[#allocation3 + $0x18] sm:$0xff]
      %v2204 = vld [vmem:[#allocation3 + $0x20] sm:$0xff]
      %v2205 = vld [vmem:[#allocation3 + $0x28] sm:$0xff]
      %v2206 = vld [vmem:[#allocation3 + $0x30] sm:$0xff]
      %v2207 = vld [vmem:[#allocation3 + $0x38] sm:$0xff]
      %v2208 = vld [vmem:[#allocation3 + $0x40] sm:$0xff]
      %v2209 = vld [vmem:[#allocation3 + $0x48] sm:$0xff]
      %v2210 = vld [vmem:[#allocation3 + $0x50] sm:$0xff]
      %v2211 = vld [vmem:[#allocation3 + $0x58] sm:$0xff]
      %v2212 = vld [vmem:[#allocation3 + $0x60] sm:$0xff]
      %v2213 = vld [vmem:[#allocation3 + $0x68] sm:$0xff]
      %v2214 = vld [vmem:[#allocation3 + $0x70] sm:$0xff]
      %v2215 = vld [vmem:[#allocation3 + $0x78] sm:$0xff]
      %v2216 = vrot.slane %v2200, 7
      %v2217 = vrot.slane %v2202, 7
      %v2218 = vrot.slane %v2204, 7
      %v2219 = vrot.slane %v2206, 7
      %v2220 = vrot.slane %v2208, 7
      %v2221 = vrot.slane %v2210, 7
      %v2222 = vrot.slane %v2212, 7
      %v2223 = vrot.slane %v2214, 7
      %v2224 = vrot.slane %v2201, 7
      %v2225 = vrot.slane %v2203, 7
      %v2226 = vrot.slane %v2205, 7
      %v2227 = vrot.slane %v2207, 7
      %v2228 = vrot.slane %v2209, 7
      %v2229 = vrot.slane %v2211, 7
      %v2230 = vrot.slane %v2213, 7
      %v2231 = vrot.slane %v2215, 7
      %v2232 = vsel %vm285, %v2216, %v2224
      %v2233 = vsel %vm285, %v2217, %v2225
      %v2234 = vsel %vm285, %v2218, %v2226
      %v2235 = vsel %vm285, %v2219, %v2227
      %v2236 = vsel %vm285, %v2220, %v2228
      %v2237 = vsel %vm285, %v2221, %v2229
      %v2238 = vsel %vm285, %v2222, %v2230
      %v2239 = vsel %vm285, %v2223, %v2231
      %v2240 = vsel %vm285, %v2224, %v2216
      %v2241 = vsel %vm285, %v2225, %v2217
      %v2242 = vsel %vm285, %v2226, %v2218
      %v2243 = vsel %vm285, %v2227, %v2219
      %v2244 = vsel %vm285, %v2228, %v2220
      %v2245 = vsel %vm285, %v2229, %v2221
      %v2246 = vsel %vm285, %v2230, %v2222
      %v2247 = vsel %vm285, %v2231, %v2223
      %v2248 = vpack.c.bf16 %v2232, %v2240
      %v2249 = vpack.c.bf16 %v2233, %v2241
      %v2250 = vpack.c.bf16 %v2234, %v2242
      %v2251 = vpack.c.bf16 %v2235, %v2243
      %v2252 = vpack.c.bf16 %v2236, %v2244
      %v2253 = vpack.c.bf16 %v2237, %v2245
      %v2254 = vpack.c.bf16 %v2238, %v2246
      %v2255 = vpack.c.bf16 %v2239, %v2247
      %v2264 = vunpack.c.l.b16 %v2248
      %v2265 = vunpack.c.h.b16 %v2248
      %v2266 = vunpack.c.l.b16 %v2249
      %v2267 = vunpack.c.h.b16 %v2249
      %v2268 = vunpack.c.l.b16 %v2250
      %v2269 = vunpack.c.h.b16 %v2250
      %v2270 = vunpack.c.l.b16 %v2251
      %v2271 = vunpack.c.h.b16 %v2251
      %v2272 = vunpack.c.l.b16 %v2252
      %v2273 = vunpack.c.h.b16 %v2252
      %v2274 = vunpack.c.l.b16 %v2253
      %v2275 = vunpack.c.h.b16 %v2253
      %v2276 = vunpack.c.l.b16 %v2254
      %v2277 = vunpack.c.h.b16 %v2254
      %v2278 = vunpack.c.l.b16 %v2255
      %v2279 = vunpack.c.h.b16 %v2255
      %v2280 = vpack.c.b16 %v2264, %v2264
      %v2281 = vpack.c.b16 %v2265, %v2265
      %v2282 = vpack.c.b16 %v2266, %v2266
      %v2283 = vpack.c.b16 %v2267, %v2267
      %v2284 = vpack.c.b16 %v2268, %v2268
      %v2285 = vpack.c.b16 %v2269, %v2269
      %v2286 = vpack.c.b16 %v2270, %v2270
      %v2287 = vpack.c.b16 %v2271, %v2271
      %v2288 = vpack.c.b16 %v2272, %v2272
      %v2289 = vpack.c.b16 %v2273, %v2273
      %v2290 = vpack.c.b16 %v2274, %v2274
      %v2291 = vpack.c.b16 %v2275, %v2275
      %v2292 = vpack.c.b16 %v2276, %v2276
      %v2293 = vpack.c.b16 %v2277, %v2277
      %v2294 = vpack.c.b16 %v2278, %v2278
      %v2295 = vpack.c.b16 %v2279, %v2279
      %2312 = vst [vmem:[#allocation2 + $0xc] sm:$0xf] %v2280
      %2313 = vst [vmem:[#allocation2 + $0x30] sm:$0xf] %v2281
      %2314 = vst [vmem:[#allocation2 + $0x54] sm:$0xf] %v2282
      %2315 = vst [vmem:[#allocation2 + $0x78] sm:$0xf] %v2283
      %2316 = vst [vmem:[#allocation2 + $0x9c] sm:$0xf] %v2284
      %2317 = vst [vmem:[#allocation2 + $0xc0] sm:$0xf] %v2285
      %2318 = vst [vmem:[#allocation2 + $0xe4] sm:$0xf] %v2286
      %2319 = vst [vmem:[#allocation2 + $0x108] sm:$0xf] %v2287
      %2320 = vst [vmem:[#allocation2 + $0x12c] sm:$0xf] %v2288
      %2321 = vst [vmem:[#allocation2 + $0x150] sm:$0xf] %v2289
      %2322 = vst [vmem:[#allocation2 + $0x174] sm:$0xf] %v2290
      %2323 = vst [vmem:[#allocation2 + $0x198] sm:$0xf] %v2291
      %2324 = vst [vmem:[#allocation2 + $0x1bc] sm:$0xf] %v2292
      %2325 = vst [vmem:[#allocation2 + $0x1e0] sm:$0xf] %v2293
      %2326 = vst [vmem:[#allocation2 + $0x204] sm:$0xf] %v2294
      %2327 = vst [vmem:[#allocation2 + $0x228] sm:$0xf] %v2295
      %2328 = vst [vmem:[%s382] sm:$0xf] %v2280
      %2329 = vst [vmem:[%s382 + $0x24] sm:$0xf] %v2281
      %2330 = vst [vmem:[%s382 + $0x48] sm:$0xf] %v2282
      %2331 = vst [vmem:[%s382 + $0x6c] sm:$0xf] %v2283
      %2332 = vst [vmem:[%s382 + $0x90] sm:$0xf] %v2284
      %2333 = vst [vmem:[%s382 + $0xb4] sm:$0xf] %v2285
      %2334 = vst [vmem:[%s382 + $0xd8] sm:$0xf] %v2286
      %2335 = vst [vmem:[%s382 + $0xfc] sm:$0xf] %v2287
      %2336 = vst [vmem:[%s382 + $0x120] sm:$0xf] %v2288
      %2337 = vst [vmem:[%s382 + $0x144] sm:$0xf] %v2289
      %2338 = vst [vmem:[%s382 + $0x168] sm:$0xf] %v2290
      %2339 = vst [vmem:[%s382 + $0x18c] sm:$0xf] %v2291
      %2340 = vst [vmem:[%s382 + $0x1b0] sm:$0xf] %v2292
      %2341 = vst [vmem:[%s382 + $0x1d4] sm:$0xf] %v2293
      %2342 = vst [vmem:[#allocation2 + $0x18] sm:$0xf] %v2282
      %2343 = vst [vmem:[#allocation2 + $0x3c] sm:$0xf] %v2283
      %2344 = vst [vmem:[#allocation2 + $0x60] sm:$0xf] %v2284
      %2345 = vst [vmem:[#allocation2 + $0x84] sm:$0xf] %v2285
      %2346 = vst [vmem:[#allocation2 + $0xa8] sm:$0xf] %v2286
      %2347 = vst [vmem:[#allocation2 + $0xcc] sm:$0xf] %v2287
      %2348 = vst [vmem:[#allocation2 + $0xf0] sm:$0xf] %v2288
      %2349 = vst [vmem:[#allocation2 + $0x114] sm:$0xf] %v2289
      %2350 = vst [vmem:[#allocation2 + $0x138] sm:$0xf] %v2290
      %2351 = vst [vmem:[#allocation2 + $0x15c] sm:$0xf] %v2291
      %2352 = vst [vmem:[#allocation2 + $0x180] sm:$0xf] %v2292
      %2353 = vst [vmem:[#allocation2 + $0x1a4] sm:$0xf] %v2293
      %2354 = vst [vmem:[#allocation2 + $0x1c8] sm:$0xf] %v2294
      %2355 = vst [vmem:[#allocation2 + $0x1ec] sm:$0xf] %v2295
      %v2356 = vpack.c.bf16 %v2201, %v2200
      %v2357 = vpack.c.bf16 %v2203, %v2202
      %v2358 = vpack.c.bf16 %v2205, %v2204
      %v2359 = vpack.c.bf16 %v2207, %v2206
      %v2360 = vpack.c.bf16 %v2209, %v2208
      %v2361 = vpack.c.bf16 %v2211, %v2210
      %v2362 = vpack.c.bf16 %v2213, %v2212
      %v2363 = vpack.c.bf16 %v2215, %v2214
      %v2372 = vunpack.c.l.b16 %v2356
      %v2373 = vunpack.c.h.b16 %v2356
      %v2374 = vunpack.c.l.b16 %v2357
      %v2375 = vunpack.c.h.b16 %v2357
      %v2376 = vunpack.c.l.b16 %v2358
      %v2377 = vunpack.c.h.b16 %v2358
      %v2378 = vunpack.c.l.b16 %v2359
      %v2379 = vunpack.c.h.b16 %v2359
      %v2380 = vunpack.c.l.b16 %v2360
      %v2381 = vunpack.c.h.b16 %v2360
      %v2382 = vunpack.c.l.b16 %v2361
      %v2383 = vunpack.c.h.b16 %v2361
      %v2384 = vunpack.c.l.b16 %v2362
      %v2385 = vunpack.c.h.b16 %v2362
      %v2386 = vunpack.c.l.b16 %v2363
      %v2387 = vunpack.c.h.b16 %v2363
      %v2388 = vpack.c.b16 %v2372, %v2372
      %v2389 = vpack.c.b16 %v2373, %v2373
      %v2390 = vpack.c.b16 %v2374, %v2374
      %v2391 = vpack.c.b16 %v2375, %v2375
      %v2392 = vpack.c.b16 %v2376, %v2376
      %v2393 = vpack.c.b16 %v2377, %v2377
      %v2394 = vpack.c.b16 %v2378, %v2378
      %v2395 = vpack.c.b16 %v2379, %v2379
      %v2396 = vpack.c.b16 %v2380, %v2380
      %v2397 = vpack.c.b16 %v2381, %v2381
      %v2398 = vpack.c.b16 %v2382, %v2382
      %v2399 = vpack.c.b16 %v2383, %v2383
      %v2400 = vpack.c.b16 %v2384, %v2384
      %v2401 = vpack.c.b16 %v2385, %v2385
      %v2402 = vpack.c.b16 %v2386, %v2386
      %v2403 = vpack.c.b16 %v2387, %v2387
      %2420 = vst [vmem:[#allocation2 + $0x10] sm:$0xf] %v2388
      %2421 = vst [vmem:[#allocation2 + $0x34] sm:$0xf] %v2389
      %2422 = vst [vmem:[#allocation2 + $0x58] sm:$0xf] %v2390
      %2423 = vst [vmem:[#allocation2 + $0x7c] sm:$0xf] %v2391
      %2424 = vst [vmem:[#allocation2 + $0xa0] sm:$0xf] %v2392
      %2425 = vst [vmem:[#allocation2 + $0xc4] sm:$0xf] %v2393
      %2426 = vst [vmem:[#allocation2 + $0xe8] sm:$0xf] %v2394
      %2427 = vst [vmem:[#allocation2 + $0x10c] sm:$0xf] %v2395
      %2428 = vst [vmem:[#allocation2 + $0x130] sm:$0xf] %v2396
      %2429 = vst [vmem:[#allocation2 + $0x154] sm:$0xf] %v2397
      %2430 = vst [vmem:[#allocation2 + $0x178] sm:$0xf] %v2398
      %2431 = vst [vmem:[#allocation2 + $0x19c] sm:$0xf] %v2399
      %2432 = vst [vmem:[#allocation2 + $0x1c0] sm:$0xf] %v2400
      %2433 = vst [vmem:[#allocation2 + $0x1e4] sm:$0xf] %v2401
      %2434 = vst [vmem:[#allocation2 + $0x208] sm:$0xf] %v2402
      %2435 = vst [vmem:[#allocation2 + $0x22c] sm:$0xf] %v2403
      %2436 = vst [vmem:[%s382 + $0x4] sm:$0xf] %v2388
      %2437 = vst [vmem:[%s382 + $0x28] sm:$0xf] %v2389
      %2438 = vst [vmem:[%s382 + $0x4c] sm:$0xf] %v2390
      %2439 = vst [vmem:[%s382 + $0x70] sm:$0xf] %v2391
      %2440 = vst [vmem:[%s382 + $0x94] sm:$0xf] %v2392
      %2441 = vst [vmem:[%s382 + $0xb8] sm:$0xf] %v2393
      %2442 = vst [vmem:[%s382 + $0xdc] sm:$0xf] %v2394
      %2443 = vst [vmem:[%s382 + $0x100] sm:$0xf] %v2395
      %2444 = vst [vmem:[%s382 + $0x124] sm:$0xf] %v2396
      %2445 = vst [vmem:[%s382 + $0x148] sm:$0xf] %v2397
      %2446 = vst [vmem:[%s382 + $0x16c] sm:$0xf] %v2398
      %2447 = vst [vmem:[%s382 + $0x190] sm:$0xf] %v2399
      %2448 = vst [vmem:[%s382 + $0x1b4] sm:$0xf] %v2400
      %2449 = vst [vmem:[%s382 + $0x1d8] sm:$0xf] %v2401
      %2450 = vst [vmem:[#allocation2 + $0x1c] sm:$0xf] %v2390
      %2451 = vst [vmem:[#allocation2 + $0x40] sm:$0xf] %v2391
      %2452 = vst [vmem:[#allocation2 + $0x64] sm:$0xf] %v2392
      %2453 = vst [vmem:[#allocation2 + $0x88] sm:$0xf] %v2393
      %2454 = vst [vmem:[#allocation2 + $0xac] sm:$0xf] %v2394
      %2455 = vst [vmem:[#allocation2 + $0xd0] sm:$0xf] %v2395
      %2456 = vst [vmem:[#allocation2 + $0xf4] sm:$0xf] %v2396
      %2457 = vst [vmem:[#allocation2 + $0x118] sm:$0xf] %v2397
      %2458 = vst [vmem:[#allocation2 + $0x13c] sm:$0xf] %v2398
      %2459 = vst [vmem:[#allocation2 + $0x160] sm:$0xf] %v2399
      %2460 = vst [vmem:[#allocation2 + $0x184] sm:$0xf] %v2400
      %2461 = vst [vmem:[#allocation2 + $0x1a8] sm:$0xf] %v2401
      %2462 = vst [vmem:[#allocation2 + $0x1cc] sm:$0xf] %v2402
      %2463 = vst [vmem:[#allocation2 + $0x1f0] sm:$0xf] %v2403
      %v2464 = vrot.slane %v2200, 1
      %v2465 = vrot.slane %v2202, 1
      %v2466 = vrot.slane %v2204, 1
      %v2467 = vrot.slane %v2206, 1
      %v2468 = vrot.slane %v2208, 1
      %v2469 = vrot.slane %v2210, 1
      %v2470 = vrot.slane %v2212, 1
      %v2471 = vrot.slane %v2214, 1
      %v2472 = vrot.slane %v2201, 1
      %v2473 = vrot.slane %v2203, 1
      %v2474 = vrot.slane %v2205, 1
      %v2475 = vrot.slane %v2207, 1
      %v2476 = vrot.slane %v2209, 1
      %v2477 = vrot.slane %v2211, 1
      %v2478 = vrot.slane %v2213, 1
      %v2479 = vrot.slane %v2215, 1
      %v2480 = vsel %vm471, %v2464, %v2472
      %v2481 = vsel %vm471, %v2465, %v2473
      %v2482 = vsel %vm471, %v2466, %v2474
      %v2483 = vsel %vm471, %v2467, %v2475
      %v2484 = vsel %vm471, %v2468, %v2476
      %v2485 = vsel %vm471, %v2469, %v2477
      %v2486 = vsel %vm471, %v2470, %v2478
      %v2487 = vsel %vm471, %v2471, %v2479
      %v2488 = vsel %vm471, %v2472, %v2464
      %v2489 = vsel %vm471, %v2473, %v2465
      %v2490 = vsel %vm471, %v2474, %v2466
      %v2491 = vsel %vm471, %v2475, %v2467
      %v2492 = vsel %vm471, %v2476, %v2468
      %v2493 = vsel %vm471, %v2477, %v2469
      %v2494 = vsel %vm471, %v2478, %v2470
      %v2495 = vsel %vm471, %v2479, %v2471
      %v2496 = vpack.c.bf16 %v2488, %v2480
      %v2497 = vpack.c.bf16 %v2489, %v2481
      %v2498 = vpack.c.bf16 %v2490, %v2482
      %v2499 = vpack.c.bf16 %v2491, %v2483
      %v2500 = vpack.c.bf16 %v2492, %v2484
      %v2501 = vpack.c.bf16 %v2493, %v2485
      %v2502 = vpack.c.bf16 %v2494, %v2486
      %v2503 = vpack.c.bf16 %v2495, %v2487
      %v2512 = vunpack.c.l.b16 %v2496
      %v2513 = vunpack.c.h.b16 %v2496
      %v2514 = vunpack.c.l.b16 %v2497
      %v2515 = vunpack.c.h.b16 %v2497
      %v2516 = vunpack.c.l.b16 %v2498
      %v2517 = vunpack.c.h.b16 %v2498
      %v2518 = vunpack.c.l.b16 %v2499
      %v2519 = vunpack.c.h.b16 %v2499
      %v2520 = vunpack.c.l.b16 %v2500
      %v2521 = vunpack.c.h.b16 %v2500
      %v2522 = vunpack.c.l.b16 %v2501
      %v2523 = vunpack.c.h.b16 %v2501
      %v2524 = vunpack.c.l.b16 %v2502
      %v2525 = vunpack.c.h.b16 %v2502
      %v2526 = vunpack.c.l.b16 %v2503
      %v2527 = vunpack.c.h.b16 %v2503
      %v2528 = vpack.c.b16 %v2512, %v2512
      %v2529 = vpack.c.b16 %v2513, %v2513
      %v2530 = vpack.c.b16 %v2514, %v2514
      %v2531 = vpack.c.b16 %v2515, %v2515
      %v2532 = vpack.c.b16 %v2516, %v2516
      %v2533 = vpack.c.b16 %v2517, %v2517
      %v2534 = vpack.c.b16 %v2518, %v2518
      %v2535 = vpack.c.b16 %v2519, %v2519
      %v2536 = vpack.c.b16 %v2520, %v2520
      %v2537 = vpack.c.b16 %v2521, %v2521
      %v2538 = vpack.c.b16 %v2522, %v2522
      %v2539 = vpack.c.b16 %v2523, %v2523
      %v2540 = vpack.c.b16 %v2524, %v2524
      %v2541 = vpack.c.b16 %v2525, %v2525
      %v2542 = vpack.c.b16 %v2526, %v2526
      %v2543 = vpack.c.b16 %v2527, %v2527
      %2560 = vst [vmem:[#allocation2 + $0x14] sm:$0xf] %v2528
      %2561 = vst [vmem:[#allocation2 + $0x38] sm:$0xf] %v2529
      %2562 = vst [vmem:[#allocation2 + $0x5c] sm:$0xf] %v2530
      %2563 = vst [vmem:[#allocation2 + $0x80] sm:$0xf] %v2531
      %2564 = vst [vmem:[#allocation2 + $0xa4] sm:$0xf] %v2532
      %2565 = vst [vmem:[#allocation2 + $0xc8] sm:$0xf] %v2533
      %2566 = vst [vmem:[#allocation2 + $0xec] sm:$0xf] %v2534
      %2567 = vst [vmem:[#allocation2 + $0x110] sm:$0xf] %v2535
      %2568 = vst [vmem:[#allocation2 + $0x134] sm:$0xf] %v2536
      %2569 = vst [vmem:[#allocation2 + $0x158] sm:$0xf] %v2537
      %2570 = vst [vmem:[#allocation2 + $0x17c] sm:$0xf] %v2538
      %2571 = vst [vmem:[#allocation2 + $0x1a0] sm:$0xf] %v2539
      %2572 = vst [vmem:[#allocation2 + $0x1c4] sm:$0xf] %v2540
      %2573 = vst [vmem:[#allocation2 + $0x1e8] sm:$0xf] %v2541
      %2574 = vst [vmem:[#allocation2 + $0x20c] sm:$0xf] %v2542
      %2575 = vst [vmem:[#allocation2 + $0x230] sm:$0xf] %v2543
      %2576 = vst [vmem:[%s382 + $0x8] sm:$0xf] %v2528
      %2577 = vst [vmem:[%s382 + $0x2c] sm:$0xf] %v2529
      %2578 = vst [vmem:[%s382 + $0x50] sm:$0xf] %v2530
      %2579 = vst [vmem:[%s382 + $0x74] sm:$0xf] %v2531
      %2580 = vst [vmem:[%s382 + $0x98] sm:$0xf] %v2532
      %2581 = vst [vmem:[%s382 + $0xbc] sm:$0xf] %v2533
      %2582 = vst [vmem:[%s382 + $0xe0] sm:$0xf] %v2534
      %2583 = vst [vmem:[%s382 + $0x104] sm:$0xf] %v2535
      %2584 = vst [vmem:[%s382 + $0x128] sm:$0xf] %v2536
      %2585 = vst [vmem:[%s382 + $0x14c] sm:$0xf] %v2537
      %2586 = vst [vmem:[%s382 + $0x170] sm:$0xf] %v2538
      %2587 = vst [vmem:[%s382 + $0x194] sm:$0xf] %v2539
      %2588 = vst [vmem:[%s382 + $0x1b8] sm:$0xf] %v2540
      %2589 = vst [vmem:[%s382 + $0x1dc] sm:$0xf] %v2541
      %2590 = vst [vmem:[#allocation2 + $0x20] sm:$0xf] %v2530
      %2591 = vst [vmem:[#allocation2 + $0x44] sm:$0xf] %v2531
      %2592 = vst [vmem:[#allocation2 + $0x68] sm:$0xf] %v2532
      %2593 = vst [vmem:[#allocation2 + $0x8c] sm:$0xf] %v2533
      %2594 = vst [vmem:[#allocation2 + $0xb0] sm:$0xf] %v2534
      %2595 = vst [vmem:[#allocation2 + $0xd4] sm:$0xf] %v2535
      %2596 = vst [vmem:[#allocation2 + $0xf8] sm:$0xf] %v2536
      %2597 = vst [vmem:[#allocation2 + $0x11c] sm:$0xf] %v2537
      %2598 = vst [vmem:[#allocation2 + $0x140] sm:$0xf] %v2538
      %2599 = vst [vmem:[#allocation2 + $0x164] sm:$0xf] %v2539
      %2600 = vst [vmem:[#allocation2 + $0x188] sm:$0xf] %v2540
      %2601 = vst [vmem:[#allocation2 + $0x1ac] sm:$0xf] %v2541
      %2602 = vst [vmem:[#allocation2 + $0x1d0] sm:$0xf] %v2542
      %2603 = vst [vmem:[#allocation2 + $0x1f4] sm:$0xf] %v2543
      %v2604 = vld [vmem:[#allocation2] sm:$0xff]
      %v2605 = vld [vmem:[#allocation2 + $0x8] sm:$0xff]
      %v2606 = vld [vmem:[#allocation2 + $0x10] sm:$0xff]
      %v2607 = vld [vmem:[#allocation2 + $0x18] sm:$0xff]
      %v2608 = vld [vmem:[#allocation2 + $0x20] sm:$0xf]
      %v2609 = vld [vmem:[#allocation2 + $0x24] sm:$0xff]
      %v2610 = vld [vmem:[#allocation2 + $0x2c] sm:$0xff]
      %v2611 = vld [vmem:[#allocation2 + $0x34] sm:$0xff]
      %v2612 = vld [vmem:[#allocation2 + $0x3c] sm:$0xff]
      %v2613 = vld [vmem:[#allocation2 + $0x44] sm:$0xf]
      %v2614 = vld [vmem:[#allocation2 + $0x48] sm:$0xff]
      %v2615 = vld [vmem:[#allocation2 + $0x50] sm:$0xff]
      %v2616 = vld [vmem:[#allocation2 + $0x58] sm:$0xff]
      %v2617 = vld [vmem:[#allocation2 + $0x60] sm:$0xff]
      %v2618 = vld [vmem:[#allocation2 + $0x68] sm:$0xf]
      %v2619 = vld [vmem:[#allocation2 + $0x6c] sm:$0xff]
      %v2620 = vld [vmem:[#allocation2 + $0x74] sm:$0xff]
      %v2621 = vld [vmem:[#allocation2 + $0x7c] sm:$0xff]
      %v2622 = vld [vmem:[#allocation2 + $0x84] sm:$0xff]
      %v2623 = vld [vmem:[#allocation2 + $0x8c] sm:$0xf]
      %v2624 = vld [vmem:[#allocation2 + $0x90] sm:$0xff]
      %v2625 = vld [vmem:[#allocation2 + $0x98] sm:$0xff]
      %v2626 = vld [vmem:[#allocation2 + $0xa0] sm:$0xff]
      %v2627 = vld [vmem:[#allocation2 + $0xa8] sm:$0xff]
      %v2628 = vld [vmem:[#allocation2 + $0xb0] sm:$0xf]
      %v2629 = vld [vmem:[#allocation2 + $0xb4] sm:$0xff]
      %v2630 = vld [vmem:[#allocation2 + $0xbc] sm:$0xff]
      %v2631 = vld [vmem:[#allocation2 + $0xc4] sm:$0xff]
      %v2632 = vld [vmem:[#allocation2 + $0xcc] sm:$0xff]
      %v2633 = vld [vmem:[#allocation2 + $0xd4] sm:$0xf]
      %v2634 = vld [vmem:[#allocation2 + $0xd8] sm:$0xff]
      %v2635 = vld [vmem:[#allocation2 + $0xe0] sm:$0xff]
      %v2636 = vld [vmem:[#allocation2 + $0xe8] sm:$0xff]
      %v2637 = vld [vmem:[#allocation2 + $0xf0] sm:$0xff]
      %v2638 = vld [vmem:[#allocation2 + $0xf8] sm:$0xf]
      %v2639 = vld [vmem:[#allocation2 + $0xfc] sm:$0xff]
      %v2640 = vld [vmem:[#allocation2 + $0x104] sm:$0xff]
      %v2641 = vld [vmem:[#allocation2 + $0x10c] sm:$0xff]
      %v2642 = vld [vmem:[#allocation2 + $0x114] sm:$0xff]
      %v2643 = vld [vmem:[#allocation2 + $0x11c] sm:$0xf]
      %v2644 = vld [vmem:[#allocation2 + $0x120] sm:$0xff]
      %v2645 = vld [vmem:[#allocation2 + $0x128] sm:$0xff]
      %v2646 = vld [vmem:[#allocation2 + $0x130] sm:$0xff]
      %v2647 = vld [vmem:[#allocation2 + $0x138] sm:$0xff]
      %v2648 = vld [vmem:[#allocation2 + $0x140] sm:$0xf]
      %v2649 = vld [vmem:[#allocation2 + $0x144] sm:$0xff]
      %v2650 = vld [vmem:[#allocation2 + $0x14c] sm:$0xff]
      %v2651 = vld [vmem:[#allocation2 + $0x154] sm:$0xff]
      %v2652 = vld [vmem:[#allocation2 + $0x15c] sm:$0xff]
      %v2653 = vld [vmem:[#allocation2 + $0x164] sm:$0xf]
      %v2654 = vld [vmem:[#allocation2 + $0x168] sm:$0xff]
      %v2655 = vld [vmem:[#allocation2 + $0x170] sm:$0xff]
      %v2656 = vld [vmem:[#allocation2 + $0x178] sm:$0xff]
      %v2657 = vld [vmem:[#allocation2 + $0x180] sm:$0xff]
      %v2658 = vld [vmem:[#allocation2 + $0x188] sm:$0xf]
      %v2659 = vld [vmem:[#allocation2 + $0x18c] sm:$0xff]
      %v2660 = vld [vmem:[#allocation2 + $0x194] sm:$0xff]
      %v2661 = vld [vmem:[#allocation2 + $0x19c] sm:$0xff]
      %v2662 = vld [vmem:[#allocation2 + $0x1a4] sm:$0xff]
      %v2663 = vld [vmem:[#allocation2 + $0x1ac] sm:$0xf]
      %v2664 = vld [vmem:[#allocation2 + $0x1b0] sm:$0xff]
      %v2665 = vld [vmem:[#allocation2 + $0x1b8] sm:$0xff]
      %v2666 = vld [vmem:[#allocation2 + $0x1c0] sm:$0xff]
      %v2667 = vld [vmem:[#allocation2 + $0x1c8] sm:$0xff]
      %v2668 = vld [vmem:[#allocation2 + $0x1d0] sm:$0xf]
      %v2669 = vld [vmem:[#allocation2 + $0x1d4] sm:$0xff]
      %v2670 = vld [vmem:[#allocation2 + $0x1dc] sm:$0xff]
      %v2671 = vld [vmem:[#allocation2 + $0x1e4] sm:$0xff]
      %v2672 = vld [vmem:[#allocation2 + $0x1ec] sm:$0xff]
      %v2673 = vld [vmem:[#allocation2 + $0x1f4] sm:$0xf]
      %v2674 = vld [vmem:[#allocation2 + $0x1f8] sm:$0xff]
      %v2675 = vld [vmem:[#allocation2 + $0x200] sm:$0xff]
      %v2676 = vld [vmem:[#allocation2 + $0x208] sm:$0xff]
      %v2677 = vld [vmem:[#allocation2 + $0x210] sm:$0xff]
      %v2678 = vld [vmem:[#allocation2 + $0x218] sm:$0xf]
      %v2679 = vld [vmem:[#allocation2 + $0x21c] sm:$0xff]
      %v2680 = vld [vmem:[#allocation2 + $0x224] sm:$0xff]
      %v2681 = vld [vmem:[#allocation2 + $0x22c] sm:$0xff]
      %v2682 = vld [vmem:[#allocation2 + $0x234] sm:$0xff]
      %v2683 = vld [vmem:[#allocation2 + $0x23c] sm:$0xf]
      %v2684 = vld [vmem:[%s3] sm:$0xf]
      %v2685 = vld [vmem:[%s3 + $0x4] sm:$0xf]
      %v2686 = vld [vmem:[%s3 + $0x8] sm:$0xf]
      %v2687 = vld [vmem:[%s3 + $0xc] sm:$0xf]
      %v2688 = vld [vmem:[%s3 + $0x10] sm:$0xf]
      %v2689 = vld [vmem:[%s3 + $0x14] sm:$0xf]
      %v2690 = vld [vmem:[%s3 + $0x18] sm:$0xf]
      %v2691 = vld [vmem:[%s3 + $0x1c] sm:$0xf]
      %v2692 = vld [vmem:[%s3 + $0x20] sm:$0xf]
      %v2693 = vld [vmem:[%s3 + $0x24] sm:$0xf]
      %v2694 = vld [vmem:[%s3 + $0x28] sm:$0xf]
      %v2695 = vld [vmem:[%s3 + $0x2c] sm:$0xf]
      %v2696 = vld [vmem:[%s3 + $0x30] sm:$0xf]
      %v2697 = vld [vmem:[%s3 + $0x34] sm:$0xf]
      %v2698 = vld [vmem:[%s3 + $0x38] sm:$0xf]
      %v2699 = vld [vmem:[%s3 + $0x3c] sm:$0xf]
      %v2700 = vld [vmem:[%s3 + $0x40] sm:$0xf]
      %v2701 = vld [vmem:[%s3 + $0x44] sm:$0xf]
      %v2702 = vld [vmem:[%s3 + $0x48] sm:$0xf]
      %v2703 = vld [vmem:[%s3 + $0x4c] sm:$0xf]
      %v2704 = vld [vmem:[%s3 + $0x50] sm:$0xf]
      %v2705 = vld [vmem:[%s3 + $0x54] sm:$0xf]
      %v2706 = vld [vmem:[%s3 + $0x58] sm:$0xf]
      %v2707 = vld [vmem:[%s3 + $0x5c] sm:$0xf]
      %v2708 = vld [vmem:[%s3 + $0x60] sm:$0xf]
      %v2709 = vld [vmem:[%s3 + $0x64] sm:$0xf]
      %v2710 = vld [vmem:[%s3 + $0x68] sm:$0xf]
      %v2711 = vld [vmem:[%s3 + $0x6c] sm:$0xf]
      %v2712 = vld [vmem:[%s3 + $0x70] sm:$0xf]
      %v2713 = vld [vmem:[%s3 + $0x74] sm:$0xf]
      %v2714 = vld [vmem:[%s3 + $0x78] sm:$0xf]
      %v2715 = vld [vmem:[%s3 + $0x7c] sm:$0xf]
      %v2716 = vld [vmem:[%s3 + $0x80] sm:$0xf]
      %v2717 = vld [vmem:[%s3 + $0x84] sm:$0xf]
      %v2718 = vld [vmem:[%s3 + $0x88] sm:$0xf]
      %v2719 = vld [vmem:[%s3 + $0x8c] sm:$0xf]
      %v2720 = vld [vmem:[%s3 + $0x90] sm:$0xf]
      %v2721 = vld [vmem:[%s3 + $0x94] sm:$0xf]
      %v2722 = vld [vmem:[%s3 + $0x98] sm:$0xf]
      %v2723 = vld [vmem:[%s3 + $0x9c] sm:$0xf]
      %v2724 = vld [vmem:[%s3 + $0xa0] sm:$0xf]
      %v2725 = vld [vmem:[%s3 + $0xa4] sm:$0xf]
      %v2726 = vld [vmem:[%s3 + $0xa8] sm:$0xf]
      %v2727 = vld [vmem:[%s3 + $0xac] sm:$0xf]
      %v2728 = vld [vmem:[%s3 + $0xb0] sm:$0xf]
      %v2729 = vld [vmem:[%s3 + $0xb4] sm:$0xf]
      %v2730 = vld [vmem:[%s3 + $0xb8] sm:$0xf]
      %v2731 = vld [vmem:[%s3 + $0xbc] sm:$0xf]
      %v2732 = vld [vmem:[%s3 + $0xc0] sm:$0xf]
      %v2733 = vld [vmem:[%s3 + $0xc4] sm:$0xf]
      %v2734 = vld [vmem:[%s3 + $0xc8] sm:$0xf]
      %v2735 = vld [vmem:[%s3 + $0xcc] sm:$0xf]
      %v2736 = vld [vmem:[%s3 + $0xd0] sm:$0xf]
      %v2737 = vld [vmem:[%s3 + $0xd4] sm:$0xf]
      %v2738 = vld [vmem:[%s3 + $0xd8] sm:$0xf]
      %v2739 = vld [vmem:[%s3 + $0xdc] sm:$0xf]
      %v2740 = vld [vmem:[%s3 + $0xe0] sm:$0xf]
      %v2741 = vld [vmem:[%s3 + $0xe4] sm:$0xf]
      %v2742 = vld [vmem:[%s3 + $0xe8] sm:$0xf]
      %v2743 = vld [vmem:[%s3 + $0xec] sm:$0xf]
      %v2744 = vld [vmem:[%s3 + $0xf0] sm:$0xf]
      %v2745 = vld [vmem:[%s3 + $0xf4] sm:$0xf]
      %v2746 = vld [vmem:[%s3 + $0xf8] sm:$0xf]
      %v2747 = vld [vmem:[%s3 + $0xfc] sm:$0xf]
      %v2748 = vld [vmem:[%s3 + $0x100] sm:$0xf]
      %v2749 = vld [vmem:[%s3 + $0x104] sm:$0xf]
      %v2750 = vld [vmem:[%s3 + $0x108] sm:$0xf]
      %v2751 = vld [vmem:[%s3 + $0x10c] sm:$0xf]
      %v2752 = vld [vmem:[%s3 + $0x110] sm:$0xf]
      %v2753 = vld [vmem:[%s3 + $0x114] sm:$0xf]
      %v2754 = vld [vmem:[%s3 + $0x118] sm:$0xf]
      %v2755 = vld [vmem:[%s3 + $0x11c] sm:$0xf]
      %v2756 = vld [vmem:[%s3 + $0x120] sm:$0xf]
      %v2757 = vld [vmem:[%s3 + $0x124] sm:$0xf]
      %v2758 = vld [vmem:[%s3 + $0x128] sm:$0xf]
      %v2759 = vld [vmem:[%s3 + $0x12c] sm:$0xf]
      %v2760 = vld [vmem:[%s3 + $0x130] sm:$0xf]
      %v2761 = vld [vmem:[%s3 + $0x134] sm:$0xf]
      %v2762 = vld [vmem:[%s3 + $0x138] sm:$0xf]
      %v2763 = vld [vmem:[%s3 + $0x13c] sm:$0xf]
      %v2764 = vld [vmem:[%s3 + $0x140] sm:$0xf]
      %v2765 = vld [vmem:[%s3 + $0x144] sm:$0xf]
      %v2766 = vld [vmem:[%s3 + $0x148] sm:$0xf]
      %v2767 = vld [vmem:[%s3 + $0x14c] sm:$0xf]
      %v2768 = vld [vmem:[%s3 + $0x150] sm:$0xf]
      %v2769 = vld [vmem:[%s3 + $0x154] sm:$0xf]
      %v2770 = vld [vmem:[%s3 + $0x158] sm:$0xf]
      %v2771 = vld [vmem:[%s3 + $0x15c] sm:$0xf]
      %v2772 = vld [vmem:[%s3 + $0x160] sm:$0xf]
      %v2773 = vld [vmem:[%s3 + $0x164] sm:$0xf]
      %v2774 = vld [vmem:[%s3 + $0x168] sm:$0xf]
      %v2775 = vld [vmem:[%s3 + $0x16c] sm:$0xf]
      %v2776 = vld [vmem:[%s3 + $0x170] sm:$0xf]
      %v2777 = vld [vmem:[%s3 + $0x174] sm:$0xf]
      %v2778 = vld [vmem:[%s3 + $0x178] sm:$0xf]
      %v2779 = vld [vmem:[%s3 + $0x17c] sm:$0xf]
      %v2780 = vld [vmem:[%s3 + $0x180] sm:$0xf]
      %v2781 = vld [vmem:[%s3 + $0x184] sm:$0xf]
      %v2782 = vld [vmem:[%s3 + $0x188] sm:$0xf]
      %v2783 = vld [vmem:[%s3 + $0x18c] sm:$0xf]
      %v2784 = vld [vmem:[%s3 + $0x190] sm:$0xf]
      %v2785 = vld [vmem:[%s3 + $0x194] sm:$0xf]
      %v2786 = vld [vmem:[%s3 + $0x198] sm:$0xf]
      %v2787 = vld [vmem:[%s3 + $0x19c] sm:$0xf]
      %v2788 = vld [vmem:[%s3 + $0x1a0] sm:$0xf]
      %v2789 = vld [vmem:[%s3 + $0x1a4] sm:$0xf]
      %v2790 = vld [vmem:[%s3 + $0x1a8] sm:$0xf]
      %v2791 = vld [vmem:[%s3 + $0x1ac] sm:$0xf]
      %v2792 = vld [vmem:[%s3 + $0x1b0] sm:$0xf]
      %v2793 = vld [vmem:[%s3 + $0x1b4] sm:$0xf]
      %v2794 = vld [vmem:[%s3 + $0x1b8] sm:$0xf]
      %v2795 = vld [vmem:[%s3 + $0x1bc] sm:$0xf]
      %v2796 = vld [vmem:[%s3 + $0x1c0] sm:$0xf]
      %v2797 = vld [vmem:[%s3 + $0x1c4] sm:$0xf]
      %v2798 = vld [vmem:[%s3 + $0x1c8] sm:$0xf]
      %v2799 = vld [vmem:[%s3 + $0x1cc] sm:$0xf]
      %v2800 = vld [vmem:[%s3 + $0x1d0] sm:$0xf]
      %v2801 = vld [vmem:[%s3 + $0x1d4] sm:$0xf]
      %v2802 = vld [vmem:[%s3 + $0x1d8] sm:$0xf]
      %v2803 = vld [vmem:[%s3 + $0x1dc] sm:$0xf]
      %v2804 = vld [vmem:[%s3 + $0x1e0] sm:$0xf]
      %v2805 = vld [vmem:[%s3 + $0x1e4] sm:$0xf]
      %v2806 = vld [vmem:[%s3 + $0x1e8] sm:$0xf]
      %v2807 = vld [vmem:[%s3 + $0x1ec] sm:$0xf]
      %v2808 = vld [vmem:[%s3 + $0x1f0] sm:$0xf]
      %v2809 = vld [vmem:[%s3 + $0x1f4] sm:$0xf]
      %v2810 = vld [vmem:[%s3 + $0x1f8] sm:$0xf]
      %v2811 = vld [vmem:[%s3 + $0x1fc] sm:$0xf]
      %v2812 = vld [vmem:[%s3 + $0x200] sm:$0xf]
      %v2813 = vld [vmem:[%s3 + $0x204] sm:$0xf]
      %v2814 = vld [vmem:[%s3 + $0x208] sm:$0xf]
      %v2815 = vld [vmem:[%s3 + $0x20c] sm:$0xf]
      %v2816 = vld [vmem:[%s3 + $0x210] sm:$0xf]
      %v2817 = vld [vmem:[%s3 + $0x214] sm:$0xf]
      %v2818 = vld [vmem:[%s3 + $0x218] sm:$0xf]
      %v2819 = vld [vmem:[%s3 + $0x21c] sm:$0xf]
      %v2820 = vld [vmem:[%s3 + $0x220] sm:$0xf]
      %v2821 = vld [vmem:[%s3 + $0x224] sm:$0xf]
      %v2822 = vld [vmem:[%s3 + $0x228] sm:$0xf]
      %v2823 = vld [vmem:[%s3 + $0x22c] sm:$0xf]
      %v2824 = vld [vmem:[%s3 + $0x230] sm:$0xf]
      %v2825 = vld [vmem:[%s3 + $0x234] sm:$0xf]
      %v2826 = vld [vmem:[%s3 + $0x238] sm:$0xf]
      %v2827 = vld [vmem:[%s3 + $0x23c] sm:$0xf]
      %v2908 = vunpack.c.l.b16 %v2604
      %v2909 = vunpack.c.h.b16 %v2604
      %v2910 = vunpack.c.l.b16 %v2605
      %v2911 = vunpack.c.h.b16 %v2605
      %v2912 = vunpack.c.l.b16 %v2606
      %v2913 = vunpack.c.h.b16 %v2606
      %v2914 = vunpack.c.l.b16 %v2607
      %v2915 = vunpack.c.h.b16 %v2607
      %v2916 = vunpack.c.l.b16 %v2608
      %v2917 = vunpack.c.l.b16 %v2609
      %v2918 = vunpack.c.h.b16 %v2609
      %v2919 = vunpack.c.l.b16 %v2610
      %v2920 = vunpack.c.h.b16 %v2610
      %v2921 = vunpack.c.l.b16 %v2611
      %v2922 = vunpack.c.h.b16 %v2611
      %v2923 = vunpack.c.l.b16 %v2612
      %v2924 = vunpack.c.h.b16 %v2612
      %v2925 = vunpack.c.l.b16 %v2613
      %v2926 = vunpack.c.l.b16 %v2614
      %v2927 = vunpack.c.h.b16 %v2614
      %v2928 = vunpack.c.l.b16 %v2615
      %v2929 = vunpack.c.h.b16 %v2615
      %v2930 = vunpack.c.l.b16 %v2616
      %v2931 = vunpack.c.h.b16 %v2616
      %v2932 = vunpack.c.l.b16 %v2617
      %v2933 = vunpack.c.h.b16 %v2617
      %v2934 = vunpack.c.l.b16 %v2618
      %v2935 = vunpack.c.l.b16 %v2619
      %v2936 = vunpack.c.h.b16 %v2619
      %v2937 = vunpack.c.l.b16 %v2620
      %v2938 = vunpack.c.h.b16 %v2620
      %v2939 = vunpack.c.l.b16 %v2621
      %v2940 = vunpack.c.h.b16 %v2621
      %v2941 = vunpack.c.l.b16 %v2622
      %v2942 = vunpack.c.h.b16 %v2622
      %v2943 = vunpack.c.l.b16 %v2623
      %v2944 = vunpack.c.l.b16 %v2624
      %v2945 = vunpack.c.h.b16 %v2624
      %v2946 = vunpack.c.l.b16 %v2625
      %v2947 = vunpack.c.h.b16 %v2625
      %v2948 = vunpack.c.l.b16 %v2626
      %v2949 = vunpack.c.h.b16 %v2626
      %v2950 = vunpack.c.l.b16 %v2627
      %v2951 = vunpack.c.h.b16 %v2627
      %v2952 = vunpack.c.l.b16 %v2628
      %v2953 = vunpack.c.l.b16 %v2629
      %v2954 = vunpack.c.h.b16 %v2629
      %v2955 = vunpack.c.l.b16 %v2630
      %v2956 = vunpack.c.h.b16 %v2630
      %v2957 = vunpack.c.l.b16 %v2631
      %v2958 = vunpack.c.h.b16 %v2631
      %v2959 = vunpack.c.l.b16 %v2632
      %v2960 = vunpack.c.h.b16 %v2632
      %v2961 = vunpack.c.l.b16 %v2633
      %v2962 = vunpack.c.l.b16 %v2634
      %v2963 = vunpack.c.h.b16 %v2634
      %v2964 = vunpack.c.l.b16 %v2635
      %v2965 = vunpack.c.h.b16 %v2635
      %v2966 = vunpack.c.l.b16 %v2636
      %v2967 = vunpack.c.h.b16 %v2636
      %v2968 = vunpack.c.l.b16 %v2637
      %v2969 = vunpack.c.h.b16 %v2637
      %v2970 = vunpack.c.l.b16 %v2638
      %v2971 = vunpack.c.l.b16 %v2639
      %v2972 = vunpack.c.h.b16 %v2639
      %v2973 = vunpack.c.l.b16 %v2640
      %v2974 = vunpack.c.h.b16 %v2640
      %v2975 = vunpack.c.l.b16 %v2641
      %v2976 = vunpack.c.h.b16 %v2641
      %v2977 = vunpack.c.l.b16 %v2642
      %v2978 = vunpack.c.h.b16 %v2642
      %v2979 = vunpack.c.l.b16 %v2643
      %v2980 = vunpack.c.l.b16 %v2644
      %v2981 = vunpack.c.h.b16 %v2644
      %v2982 = vunpack.c.l.b16 %v2645
      %v2983 = vunpack.c.h.b16 %v2645
      %v2984 = vunpack.c.l.b16 %v2646
      %v2985 = vunpack.c.h.b16 %v2646
      %v2986 = vunpack.c.l.b16 %v2647
      %v2987 = vunpack.c.h.b16 %v2647
      %v2988 = vunpack.c.l.b16 %v2648
      %v2989 = vunpack.c.l.b16 %v2649
      %v2990 = vunpack.c.h.b16 %v2649
      %v2991 = vunpack.c.l.b16 %v2650
      %v2992 = vunpack.c.h.b16 %v2650
      %v2993 = vunpack.c.l.b16 %v2651
      %v2994 = vunpack.c.h.b16 %v2651
      %v2995 = vunpack.c.l.b16 %v2652
      %v2996 = vunpack.c.h.b16 %v2652
      %v2997 = vunpack.c.l.b16 %v2653
      %v2998 = vunpack.c.l.b16 %v2654
      %v2999 = vunpack.c.h.b16 %v2654
      %v3000 = vunpack.c.l.b16 %v2655
      %v3001 = vunpack.c.h.b16 %v2655
      %v3002 = vunpack.c.l.b16 %v2656
      %v3003 = vunpack.c.h.b16 %v2656
      %v3004 = vunpack.c.l.b16 %v2657
      %v3005 = vunpack.c.h.b16 %v2657
      %v3006 = vunpack.c.l.b16 %v2658
      %v3007 = vunpack.c.l.b16 %v2659
      %v3008 = vunpack.c.h.b16 %v2659
      %v3009 = vunpack.c.l.b16 %v2660
      %v3010 = vunpack.c.h.b16 %v2660
      %v3011 = vunpack.c.l.b16 %v2661
      %v3012 = vunpack.c.h.b16 %v2661
      %v3013 = vunpack.c.l.b16 %v2662
      %v3014 = vunpack.c.h.b16 %v2662
      %v3015 = vunpack.c.l.b16 %v2663
      %v3016 = vunpack.c.l.b16 %v2664
      %v3017 = vunpack.c.h.b16 %v2664
      %v3018 = vunpack.c.l.b16 %v2665
      %v3019 = vunpack.c.h.b16 %v2665
      %v3020 = vunpack.c.l.b16 %v2666
      %v3021 = vunpack.c.h.b16 %v2666
      %v3022 = vunpack.c.l.b16 %v2667
      %v3023 = vunpack.c.h.b16 %v2667
      %v3024 = vunpack.c.l.b16 %v2668
      %v3025 = vunpack.c.l.b16 %v2669
      %v3026 = vunpack.c.h.b16 %v2669
      %v3027 = vunpack.c.l.b16 %v2670
      %v3028 = vunpack.c.h.b16 %v2670
      %v3029 = vunpack.c.l.b16 %v2671
      %v3030 = vunpack.c.h.b16 %v2671
      %v3031 = vunpack.c.l.b16 %v2672
      %v3032 = vunpack.c.h.b16 %v2672
      %v3033 = vunpack.c.l.b16 %v2673
      %v3034 = vunpack.c.l.b16 %v2674
      %v3035 = vunpack.c.h.b16 %v2674
      %v3036 = vunpack.c.l.b16 %v2675
      %v3037 = vunpack.c.h.b16 %v2675
      %v3038 = vunpack.c.l.b16 %v2676
      %v3039 = vunpack.c.h.b16 %v2676
      %v3040 = vunpack.c.l.b16 %v2677
      %v3041 = vunpack.c.h.b16 %v2677
      %v3042 = vunpack.c.l.b16 %v2678
      %v3043 = vunpack.c.l.b16 %v2679
      %v3044 = vunpack.c.h.b16 %v2679
      %v3045 = vunpack.c.l.b16 %v2680
      %v3046 = vunpack.c.h.b16 %v2680
      %v3047 = vunpack.c.l.b16 %v2681
      %v3048 = vunpack.c.h.b16 %v2681
      %v3049 = vunpack.c.l.b16 %v2682
      %v3050 = vunpack.c.h.b16 %v2682
      %v3051 = vunpack.c.l.b16 %v2683
      %v3052 = vpack.c.b16 %v2917, %v2908
      %v3053 = vpack.c.b16 %v2918, %v2909
      %v3054 = vpack.c.b16 %v2919, %v2910
      %v3055 = vpack.c.b16 %v2920, %v2911
      %v3056 = vpack.c.b16 %v2921, %v2912
      %v3057 = vpack.c.b16 %v2922, %v2913
      %v3058 = vpack.c.b16 %v2923, %v2914
      %v3059 = vpack.c.b16 %v2924, %v2915
      %v3060 = vpack.c.b16 %v2925, %v2916
      %v3061 = vpack.c.b16 %v2935, %v2926
      %v3062 = vpack.c.b16 %v2936, %v2927
      %v3063 = vpack.c.b16 %v2937, %v2928
      %v3064 = vpack.c.b16 %v2938, %v2929
      %v3065 = vpack.c.b16 %v2939, %v2930
      %v3066 = vpack.c.b16 %v2940, %v2931
      %v3067 = vpack.c.b16 %v2941, %v2932
      %v3068 = vpack.c.b16 %v2942, %v2933
      %v3069 = vpack.c.b16 %v2943, %v2934
      %v3070 = vpack.c.b16 %v2953, %v2944
      %v3071 = vpack.c.b16 %v2954, %v2945
      %v3072 = vpack.c.b16 %v2955, %v2946
      %v3073 = vpack.c.b16 %v2956, %v2947
      %v3074 = vpack.c.b16 %v2957, %v2948
      %v3075 = vpack.c.b16 %v2958, %v2949
      %v3076 = vpack.c.b16 %v2959, %v2950
      %v3077 = vpack.c.b16 %v2960, %v2951
      %v3078 = vpack.c.b16 %v2961, %v2952
      %v3079 = vpack.c.b16 %v2971, %v2962
      %v3080 = vpack.c.b16 %v2972, %v2963
      %v3081 = vpack.c.b16 %v2973, %v2964
      %v3082 = vpack.c.b16 %v2974, %v2965
      %v3083 = vpack.c.b16 %v2975, %v2966
      %v3084 = vpack.c.b16 %v2976, %v2967
      %v3085 = vpack.c.b16 %v2977, %v2968
      %v3086 = vpack.c.b16 %v2978, %v2969
      %v3087 = vpack.c.b16 %v2979, %v2970
      %v3088 = vpack.c.b16 %v2989, %v2980
      %v3089 = vpack.c.b16 %v2990, %v2981
      %v3090 = vpack.c.b16 %v2991, %v2982
      %v3091 = vpack.c.b16 %v2992, %v2983
      %v3092 = vpack.c.b16 %v2993, %v2984
      %v3093 = vpack.c.b16 %v2994, %v2985
      %v3094 = vpack.c.b16 %v2995, %v2986
      %v3095 = vpack.c.b16 %v2996, %v2987
      %v3096 = vpack.c.b16 %v2997, %v2988
      %v3097 = vpack.c.b16 %v3007, %v2998
      %v3098 = vpack.c.b16 %v3008, %v2999
      %v3099 = vpack.c.b16 %v3009, %v3000
      %v3100 = vpack.c.b16 %v3010, %v3001
      %v3101 = vpack.c.b16 %v3011, %v3002
      %v3102 = vpack.c.b16 %v3012, %v3003
      %v3103 = vpack.c.b16 %v3013, %v3004
      %v3104 = vpack.c.b16 %v3014, %v3005
      %v3105 = vpack.c.b16 %v3015, %v3006
      %v3106 = vpack.c.b16 %v3025, %v3016
      %v3107 = vpack.c.b16 %v3026, %v3017
      %v3108 = vpack.c.b16 %v3027, %v3018
      %v3109 = vpack.c.b16 %v3028, %v3019
      %v3110 = vpack.c.b16 %v3029, %v3020
      %v3111 = vpack.c.b16 %v3030, %v3021
      %v3112 = vpack.c.b16 %v3031, %v3022
      %v3113 = vpack.c.b16 %v3032, %v3023
      %v3114 = vpack.c.b16 %v3033, %v3024
      %v3115 = vpack.c.b16 %v3043, %v3034
      %v3116 = vpack.c.b16 %v3044, %v3035
      %v3117 = vpack.c.b16 %v3045, %v3036
      %v3118 = vpack.c.b16 %v3046, %v3037
      %v3119 = vpack.c.b16 %v3047, %v3038
      %v3120 = vpack.c.b16 %v3048, %v3039
      %v3121 = vpack.c.b16 %v3049, %v3040
      %v3122 = vpack.c.b16 %v3050, %v3041
      %v3123 = vpack.c.b16 %v3051, %v3042
      %v3340 = vunpack.c.l.b16 %v2684
      %v3341 = vunpack.c.l.b16 %v2685
      %v3342 = vunpack.c.l.b16 %v2686
      %v3343 = vunpack.c.l.b16 %v2687
      %v3344 = vunpack.c.l.b16 %v2688
      %v3345 = vunpack.c.l.b16 %v2689
      %v3346 = vunpack.c.l.b16 %v2690
      %v3347 = vunpack.c.l.b16 %v2691
      %v3348 = vunpack.c.l.b16 %v2692
      %v3349 = vunpack.c.l.b16 %v2693
      %v3350 = vunpack.c.l.b16 %v2694
      %v3351 = vunpack.c.l.b16 %v2695
      %v3352 = vunpack.c.l.b16 %v2696
      %v3353 = vunpack.c.l.b16 %v2697
      %v3354 = vunpack.c.l.b16 %v2698
      %v3355 = vunpack.c.l.b16 %v2699
      %v3356 = vunpack.c.l.b16 %v2700
      %v3357 = vunpack.c.l.b16 %v2701
      %v3358 = vunpack.c.l.b16 %v2702
      %v3359 = vunpack.c.l.b16 %v2703
      %v3360 = vunpack.c.l.b16 %v2704
      %v3361 = vunpack.c.l.b16 %v2705
      %v3362 = vunpack.c.l.b16 %v2706
      %v3363 = vunpack.c.l.b16 %v2707
      %v3364 = vunpack.c.l.b16 %v2708
      %v3365 = vunpack.c.l.b16 %v2709
      %v3366 = vunpack.c.l.b16 %v2710
      %v3367 = vunpack.c.l.b16 %v2711
      %v3368 = vunpack.c.l.b16 %v2712
      %v3369 = vunpack.c.l.b16 %v2713
      %v3370 = vunpack.c.l.b16 %v2714
      %v3371 = vunpack.c.l.b16 %v2715
      %v3372 = vunpack.c.l.b16 %v2716
      %v3373 = vunpack.c.l.b16 %v2717
      %v3374 = vunpack.c.l.b16 %v2718
      %v3375 = vunpack.c.l.b16 %v2719
      %v3376 = vunpack.c.l.b16 %v2720
      %v3377 = vunpack.c.l.b16 %v2721
      %v3378 = vunpack.c.l.b16 %v2722
      %v3379 = vunpack.c.l.b16 %v2723
      %v3380 = vunpack.c.l.b16 %v2724
      %v3381 = vunpack.c.l.b16 %v2725
      %v3382 = vunpack.c.l.b16 %v2726
      %v3383 = vunpack.c.l.b16 %v2727
      %v3384 = vunpack.c.l.b16 %v2728
      %v3385 = vunpack.c.l.b16 %v2729
      %v3386 = vunpack.c.l.b16 %v2730
      %v3387 = vunpack.c.l.b16 %v2731
      %v3388 = vunpack.c.l.b16 %v2732
      %v3389 = vunpack.c.l.b16 %v2733
      %v3390 = vunpack.c.l.b16 %v2734
      %v3391 = vunpack.c.l.b16 %v2735
      %v3392 = vunpack.c.l.b16 %v2736
      %v3393 = vunpack.c.l.b16 %v2737
      %v3394 = vunpack.c.l.b16 %v2738
      %v3395 = vunpack.c.l.b16 %v2739
      %v3396 = vunpack.c.l.b16 %v2740
      %v3397 = vunpack.c.l.b16 %v2741
      %v3398 = vunpack.c.l.b16 %v2742
      %v3399 = vunpack.c.l.b16 %v2743
      %v3400 = vunpack.c.l.b16 %v2744
      %v3401 = vunpack.c.l.b16 %v2745
      %v3402 = vunpack.c.l.b16 %v2746
      %v3403 = vunpack.c.l.b16 %v2747
      %v3404 = vunpack.c.l.b16 %v2748
      %v3405 = vunpack.c.l.b16 %v2749
      %v3406 = vunpack.c.l.b16 %v2750
      %v3407 = vunpack.c.l.b16 %v2751
      %v3408 = vunpack.c.l.b16 %v2752
      %v3409 = vunpack.c.l.b16 %v2753
      %v3410 = vunpack.c.l.b16 %v2754
      %v3411 = vunpack.c.l.b16 %v2755
      %v3412 = vunpack.c.l.b16 %v2756
      %v3413 = vunpack.c.l.b16 %v2757
      %v3414 = vunpack.c.l.b16 %v2758
      %v3415 = vunpack.c.l.b16 %v2759
      %v3416 = vunpack.c.l.b16 %v2760
      %v3417 = vunpack.c.l.b16 %v2761
      %v3418 = vunpack.c.l.b16 %v2762
      %v3419 = vunpack.c.l.b16 %v2763
      %v3420 = vunpack.c.l.b16 %v2764
      %v3421 = vunpack.c.l.b16 %v2765
      %v3422 = vunpack.c.l.b16 %v2766
      %v3423 = vunpack.c.l.b16 %v2767
      %v3424 = vunpack.c.l.b16 %v2768
      %v3425 = vunpack.c.l.b16 %v2769
      %v3426 = vunpack.c.l.b16 %v2770
      %v3427 = vunpack.c.l.b16 %v2771
      %v3428 = vunpack.c.l.b16 %v2772
      %v3429 = vunpack.c.l.b16 %v2773
      %v3430 = vunpack.c.l.b16 %v2774
      %v3431 = vunpack.c.l.b16 %v2775
      %v3432 = vunpack.c.l.b16 %v2776
      %v3433 = vunpack.c.l.b16 %v2777
      %v3434 = vunpack.c.l.b16 %v2778
      %v3435 = vunpack.c.l.b16 %v2779
      %v3436 = vunpack.c.l.b16 %v2780
      %v3437 = vunpack.c.l.b16 %v2781
      %v3438 = vunpack.c.l.b16 %v2782
      %v3439 = vunpack.c.l.b16 %v2783
      %v3440 = vunpack.c.l.b16 %v2784
      %v3441 = vunpack.c.l.b16 %v2785
      %v3442 = vunpack.c.l.b16 %v2786
      %v3443 = vunpack.c.l.b16 %v2787
      %v3444 = vunpack.c.l.b16 %v2788
      %v3445 = vunpack.c.l.b16 %v2789
      %v3446 = vunpack.c.l.b16 %v2790
      %v3447 = vunpack.c.l.b16 %v2791
      %v3448 = vunpack.c.l.b16 %v2792
      %v3449 = vunpack.c.l.b16 %v2793
      %v3450 = vunpack.c.l.b16 %v2794
      %v3451 = vunpack.c.l.b16 %v2795
      %v3452 = vunpack.c.l.b16 %v2796
      %v3453 = vunpack.c.l.b16 %v2797
      %v3454 = vunpack.c.l.b16 %v2798
      %v3455 = vunpack.c.l.b16 %v2799
      %v3456 = vunpack.c.l.b16 %v2800
      %v3457 = vunpack.c.l.b16 %v2801
      %v3458 = vunpack.c.l.b16 %v2802
      %v3459 = vunpack.c.l.b16 %v2803
      %v3460 = vunpack.c.l.b16 %v2804
      %v3461 = vunpack.c.l.b16 %v2805
      %v3462 = vunpack.c.l.b16 %v2806
      %v3463 = vunpack.c.l.b16 %v2807
      %v3464 = vunpack.c.l.b16 %v2808
      %v3465 = vunpack.c.l.b16 %v2809
      %v3466 = vunpack.c.l.b16 %v2810
      %v3467 = vunpack.c.l.b16 %v2811
      %v3468 = vunpack.c.l.b16 %v2812
      %v3469 = vunpack.c.l.b16 %v2813
      %v3470 = vunpack.c.l.b16 %v2814
      %v3471 = vunpack.c.l.b16 %v2815
      %v3472 = vunpack.c.l.b16 %v2816
      %v3473 = vunpack.c.l.b16 %v2817
      %v3474 = vunpack.c.l.b16 %v2818
      %v3475 = vunpack.c.l.b16 %v2819
      %v3476 = vunpack.c.l.b16 %v2820
      %v3477 = vunpack.c.l.b16 %v2821
      %v3478 = vunpack.c.l.b16 %v2822
      %v3479 = vunpack.c.l.b16 %v2823
      %v3480 = vunpack.c.l.b16 %v2824
      %v3481 = vunpack.c.l.b16 %v2825
      %v3482 = vunpack.c.l.b16 %v2826
      %v3483 = vunpack.c.l.b16 %v2827
      %v3484 = vpack.c.b16 %v3341, %v3340
      %v3485 = vpack.c.b16 %v3343, %v3342
      %v3486 = vpack.c.b16 %v3345, %v3344
      %v3487 = vpack.c.b16 %v3347, %v3346
      %v3488 = vpack.c.b16 %v3349, %v3348
      %v3489 = vpack.c.b16 %v3351, %v3350
      %v3490 = vpack.c.b16 %v3353, %v3352
      %v3491 = vpack.c.b16 %v3355, %v3354
      %v3492 = vpack.c.b16 %v3357, %v3356
      %v3493 = vpack.c.b16 %v3359, %v3358
      %v3494 = vpack.c.b16 %v3361, %v3360
      %v3495 = vpack.c.b16 %v3363, %v3362
      %v3496 = vpack.c.b16 %v3365, %v3364
      %v3497 = vpack.c.b16 %v3367, %v3366
      %v3498 = vpack.c.b16 %v3369, %v3368
      %v3499 = vpack.c.b16 %v3371, %v3370
      %v3500 = vpack.c.b16 %v3373, %v3372
      %v3501 = vpack.c.b16 %v3375, %v3374
      %v3502 = vpack.c.b16 %v3377, %v3376
      %v3503 = vpack.c.b16 %v3379, %v3378
      %v3504 = vpack.c.b16 %v3381, %v3380
      %v3505 = vpack.c.b16 %v3383, %v3382
      %v3506 = vpack.c.b16 %v3385, %v3384
      %v3507 = vpack.c.b16 %v3387, %v3386
      %v3508 = vpack.c.b16 %v3389, %v3388
      %v3509 = vpack.c.b16 %v3391, %v3390
      %v3510 = vpack.c.b16 %v3393, %v3392
      %v3511 = vpack.c.b16 %v3395, %v3394
      %v3512 = vpack.c.b16 %v3397, %v3396
      %v3513 = vpack.c.b16 %v3399, %v3398
      %v3514 = vpack.c.b16 %v3401, %v3400
      %v3515 = vpack.c.b16 %v3403, %v3402
      %v3516 = vpack.c.b16 %v3405, %v3404
      %v3517 = vpack.c.b16 %v3407, %v3406
      %v3518 = vpack.c.b16 %v3409, %v3408
      %v3519 = vpack.c.b16 %v3411, %v3410
      %v3520 = vpack.c.b16 %v3413, %v3412
      %v3521 = vpack.c.b16 %v3415, %v3414
      %v3522 = vpack.c.b16 %v3417, %v3416
      %v3523 = vpack.c.b16 %v3419, %v3418
      %v3524 = vpack.c.b16 %v3421, %v3420
      %v3525 = vpack.c.b16 %v3423, %v3422
      %v3526 = vpack.c.b16 %v3425, %v3424
      %v3527 = vpack.c.b16 %v3427, %v3426
      %v3528 = vpack.c.b16 %v3429, %v3428
      %v3529 = vpack.c.b16 %v3431, %v3430
      %v3530 = vpack.c.b16 %v3433, %v3432
      %v3531 = vpack.c.b16 %v3435, %v3434
      %v3532 = vpack.c.b16 %v3437, %v3436
      %v3533 = vpack.c.b16 %v3439, %v3438
      %v3534 = vpack.c.b16 %v3441, %v3440
      %v3535 = vpack.c.b16 %v3443, %v3442
      %v3536 = vpack.c.b16 %v3445, %v3444
      %v3537 = vpack.c.b16 %v3447, %v3446
      %v3538 = vpack.c.b16 %v3449, %v3448
      %v3539 = vpack.c.b16 %v3451, %v3450
      %v3540 = vpack.c.b16 %v3453, %v3452
      %v3541 = vpack.c.b16 %v3455, %v3454
      %v3542 = vpack.c.b16 %v3457, %v3456
      %v3543 = vpack.c.b16 %v3459, %v3458
      %v3544 = vpack.c.b16 %v3461, %v3460
      %v3545 = vpack.c.b16 %v3463, %v3462
      %v3546 = vpack.c.b16 %v3465, %v3464
      %v3547 = vpack.c.b16 %v3467, %v3466
      %v3548 = vpack.c.b16 %v3469, %v3468
      %v3549 = vpack.c.b16 %v3471, %v3470
      %v3550 = vpack.c.b16 %v3473, %v3472
      %v3551 = vpack.c.b16 %v3475, %v3474
      %v3552 = vpack.c.b16 %v3477, %v3476
      %v3553 = vpack.c.b16 %v3479, %v3478
      %v3554 = vpack.c.b16 %v3481, %v3480
      %v3555 = vpack.c.b16 %v3483, %v3482
      %3628 = vmatprep.subr.bf16.mxu0 0
      %3629 = vmatpush1.bf16.msra.mxu0 %v3491
      %3630 = vmatprep.subr.bf16.mxu0 0
      %3631 = vmatpush1.bf16.msra.mxu0 %v3490
      %3632 = vmatprep.subr.bf16.mxu0 0
      %3633 = vmatpush1.bf16.msra.mxu0 %v3489
      %3634 = vmatprep.subr.bf16.mxu0 0
      %3635 = vmatpush1.bf16.msra.mxu0 %v3488
      %3636 = vmatprep.subr.bf16.mxu0 0
      %3637 = vmatpush1.bf16.msra.mxu0 %v3487
      %3638 = vmatprep.subr.bf16.mxu0 0
      %3639 = vmatpush1.bf16.msra.mxu0 %v3486
      %3640 = vmatprep.subr.bf16.mxu0 0
      %3641 = vmatpush1.bf16.msra.mxu0 %v3485
      %3642 = vmatprep.subr.bf16.mxu0 0
      %3643 = vmatpush1.bf16.msra.mxu0 %v3484
      %3644 = vmatprep.subr.bf16.mxu0 0
      %3645 = vmatpush2.bf16.msra.mxu0 %v3499
      %3646 = vmatprep.subr.bf16.mxu0 0
      %3647 = vmatpush2.bf16.msra.mxu0 %v3498
      %3648 = vmatprep.subr.bf16.mxu0 0
      %3649 = vmatpush2.bf16.msra.mxu0 %v3497
      %3650 = vmatprep.subr.bf16.mxu0 0
      %3651 = vmatpush2.bf16.msra.mxu0 %v3496
      %3652 = vmatprep.subr.bf16.mxu0 0
      %3653 = vmatpush2.bf16.msra.mxu0 %v3495
      %3654 = vmatprep.subr.bf16.mxu0 0
      %3655 = vmatpush2.bf16.msra.mxu0 %v3494
      %3656 = vmatprep.subr.bf16.mxu0 0
      %3657 = vmatpush2.bf16.msra.mxu0 %v3493
      %3658 = vmatprep.subr.bf16.mxu0 0
      %3659 = vmatpush2.bf16.msra.mxu0 %v3492
      %3660 = vmatprep.mubr.bf16.mxu0 %v3053
      %3661 = vmatmul.mubr.bf16.gmra.mxu0 %v3052
      %v3662 = vpop.f32.mrf.mxu0
      %v3663 = vadd.f32 0.0, %v3662
      %v3664 = vpop.f32.mrf.mxu0
      %v3665 = vpop.f32.mrf.mxu0
      %v3666 = vadd.f32 0.0, %v3665
      %v3667 = vpop.f32.mrf.mxu0
      %3668 = vmatprep.mubr.bf16.mxu0 %v3062
      %3669 = vmatmul.mubr.bf16.gmra.mxu0 %v3061
      %v3670 = vpop.f32.mrf.mxu0
      %v3671 = vadd.f32 0.0, %v3670
      %v3672 = vpop.f32.mrf.mxu0
      %v3673 = vpop.f32.mrf.mxu0
      %v3674 = vadd.f32 0.0, %v3673
      %v3675 = vpop.f32.mrf.mxu0
      %3676 = vmatprep.mubr.bf16.mxu0 %v3071
      %3677 = vmatmul.mubr.bf16.gmra.mxu0 %v3070
      %v3678 = vpop.f32.mrf.mxu0
      %v3679 = vadd.f32 0.0, %v3678
      %v3680 = vpop.f32.mrf.mxu0
      %v3681 = vpop.f32.mrf.mxu0
      %v3682 = vadd.f32 0.0, %v3681
      %v3683 = vpop.f32.mrf.mxu0
      %3684 = vmatprep.mubr.bf16.mxu0 %v3080
      %3685 = vmatmul.mubr.bf16.gmra.mxu0 %v3079
      %v3686 = vpop.f32.mrf.mxu0
      %v3687 = vadd.f32 0.0, %v3686
      %v3688 = vpop.f32.mrf.mxu0
      %v3689 = vpop.f32.mrf.mxu0
      %v3690 = vadd.f32 0.0, %v3689
      %v3691 = vpop.f32.mrf.mxu0
      %3692 = vmatprep.mubr.bf16.mxu0 %v3089
      %3693 = vmatmul.mubr.bf16.gmra.mxu0 %v3088
      %v3694 = vpop.f32.mrf.mxu0
      %v3695 = vadd.f32 0.0, %v3694
      %v3696 = vpop.f32.mrf.mxu0
      %v3697 = vpop.f32.mrf.mxu0
      %v3698 = vadd.f32 0.0, %v3697
      %v3699 = vpop.f32.mrf.mxu0
      %3700 = vmatprep.mubr.bf16.mxu0 %v3098
      %3701 = vmatmul.mubr.bf16.gmra.mxu0 %v3097
      %v3702 = vpop.f32.mrf.mxu0
      %v3703 = vadd.f32 0.0, %v3702
      %v3704 = vpop.f32.mrf.mxu0
      %v3705 = vpop.f32.mrf.mxu0
      %v3706 = vadd.f32 0.0, %v3705
      %v3707 = vpop.f32.mrf.mxu0
      %3708 = vmatprep.mubr.bf16.mxu0 %v3107
      %3709 = vmatmul.mubr.bf16.gmra.mxu0 %v3106
      %v3710 = vpop.f32.mrf.mxu0
      %v3711 = vadd.f32 0.0, %v3710
      %v3712 = vpop.f32.mrf.mxu0
      %v3713 = vpop.f32.mrf.mxu0
      %v3714 = vadd.f32 0.0, %v3713
      %v3715 = vpop.f32.mrf.mxu0
      %3716 = vmatprep.mubr.bf16.mxu0 %v3116
      %3717 = vmatmul.mubr.bf16.gmra.mxu0 %v3115
      %v3718 = vpop.f32.mrf.mxu0
      %v3719 = vadd.f32 0.0, %v3718
      %v3720 = vpop.f32.mrf.mxu0
      %v3721 = vpop.f32.mrf.mxu0
      %v3722 = vadd.f32 0.0, %v3721
      %v3723 = vpop.f32.mrf.mxu0
      %3724 = vdwg.mxu0
      %3725 = vmatprep.subr.bf16.mxu0 0
      %3726 = vmatpush1.bf16.msra.mxu0 %v3507
      %3727 = vmatprep.subr.bf16.mxu0 0
      %3728 = vmatpush1.bf16.msra.mxu0 %v3506
      %3729 = vmatprep.subr.bf16.mxu0 0
      %3730 = vmatpush1.bf16.msra.mxu0 %v3505
      %3731 = vmatprep.subr.bf16.mxu0 0
      %3732 = vmatpush1.bf16.msra.mxu0 %v3504
      %3733 = vmatprep.subr.bf16.mxu0 0
      %3734 = vmatpush1.bf16.msra.mxu0 %v3503
      %3735 = vmatprep.subr.bf16.mxu0 0
      %3736 = vmatpush1.bf16.msra.mxu0 %v3502
      %3737 = vmatprep.subr.bf16.mxu0 0
      %3738 = vmatpush1.bf16.msra.mxu0 %v3501
      %3739 = vmatprep.subr.bf16.mxu0 0
      %3740 = vmatpush1.bf16.msra.mxu0 %v3500
      %3741 = vmatprep.subr.bf16.mxu0 0
      %3742 = vmatpush2.bf16.msra.mxu0 %v3515
      %3743 = vmatprep.subr.bf16.mxu0 0
      %3744 = vmatpush2.bf16.msra.mxu0 %v3514
      %3745 = vmatprep.subr.bf16.mxu0 0
      %3746 = vmatpush2.bf16.msra.mxu0 %v3513
      %3747 = vmatprep.subr.bf16.mxu0 0
      %3748 = vmatpush2.bf16.msra.mxu0 %v3512
      %3749 = vmatprep.subr.bf16.mxu0 0
      %3750 = vmatpush2.bf16.msra.mxu0 %v3511
      %3751 = vmatprep.subr.bf16.mxu0 0
      %3752 = vmatpush2.bf16.msra.mxu0 %v3510
      %3753 = vmatprep.subr.bf16.mxu0 0
      %3754 = vmatpush2.bf16.msra.mxu0 %v3509
      %3755 = vmatprep.subr.bf16.mxu0 0
      %3756 = vmatpush2.bf16.msra.mxu0 %v3508
      %3757 = vmatprep.mubr.bf16.mxu0 %v3055
      %3758 = vmatmul.mubr.bf16.gmra.mxu0 %v3054
      %v3759 = vpop.f32.mrf.mxu0
      %v3760 = vadd.f32 %v3663, %v3759
      %v3761 = vpop.f32.mrf.mxu0
      %v3762 = vpop.f32.mrf.mxu0
      %v3763 = vadd.f32 %v3666, %v3762
      %v3764 = vpop.f32.mrf.mxu0
      %3765 = vmatprep.mubr.bf16.mxu0 %v3064
      %3766 = vmatmul.mubr.bf16.gmra.mxu0 %v3063
      %v3767 = vpop.f32.mrf.mxu0
      %v3768 = vadd.f32 %v3671, %v3767
      %v3769 = vpop.f32.mrf.mxu0
      %v3770 = vpop.f32.mrf.mxu0
      %v3771 = vadd.f32 %v3674, %v3770
      %v3772 = vpop.f32.mrf.mxu0
      %3773 = vmatprep.mubr.bf16.mxu0 %v3073
      %3774 = vmatmul.mubr.bf16.gmra.mxu0 %v3072
      %v3775 = vpop.f32.mrf.mxu0
      %v3776 = vadd.f32 %v3679, %v3775
      %v3777 = vpop.f32.mrf.mxu0
      %v3778 = vpop.f32.mrf.mxu0
      %v3779 = vadd.f32 %v3682, %v3778
      %v3780 = vpop.f32.mrf.mxu0
      %3781 = vmatprep.mubr.bf16.mxu0 %v3082
      %3782 = vmatmul.mubr.bf16.gmra.mxu0 %v3081
      %v3783 = vpop.f32.mrf.mxu0
      %v3784 = vadd.f32 %v3687, %v3783
      %v3785 = vpop.f32.mrf.mxu0
      %v3786 = vpop.f32.mrf.mxu0
      %v3787 = vadd.f32 %v3690, %v3786
      %v3788 = vpop.f32.mrf.mxu0
      %3789 = vmatprep.mubr.bf16.mxu0 %v3091
      %3790 = vmatmul.mubr.bf16.gmra.mxu0 %v3090
      %v3791 = vpop.f32.mrf.mxu0
      %v3792 = vadd.f32 %v3695, %v3791
      %v3793 = vpop.f32.mrf.mxu0
      %v3794 = vpop.f32.mrf.mxu0
      %v3795 = vadd.f32 %v3698, %v3794
      %v3796 = vpop.f32.mrf.mxu0
      %3797 = vmatprep.mubr.bf16.mxu0 %v3100
      %3798 = vmatmul.mubr.bf16.gmra.mxu0 %v3099
      %v3799 = vpop.f32.mrf.mxu0
      %v3800 = vadd.f32 %v3703, %v3799
      %v3801 = vpop.f32.mrf.mxu0
      %v3802 = vpop.f32.mrf.mxu0
      %v3803 = vadd.f32 %v3706, %v3802
      %v3804 = vpop.f32.mrf.mxu0
      %3805 = vmatprep.mubr.bf16.mxu0 %v3109
      %3806 = vmatmul.mubr.bf16.gmra.mxu0 %v3108
      %v3807 = vpop.f32.mrf.mxu0
      %v3808 = vadd.f32 %v3711, %v3807
      %v3809 = vpop.f32.mrf.mxu0
      %v3810 = vpop.f32.mrf.mxu0
      %v3811 = vadd.f32 %v3714, %v3810
      %v3812 = vpop.f32.mrf.mxu0
      %3813 = vmatprep.mubr.bf16.mxu0 %v3118
      %3814 = vmatmul.mubr.bf16.gmra.mxu0 %v3117
      %v3815 = vpop.f32.mrf.mxu0
      %v3816 = vadd.f32 %v3719, %v3815
      %v3817 = vpop.f32.mrf.mxu0
      %v3818 = vpop.f32.mrf.mxu0
      %v3819 = vadd.f32 %v3722, %v3818
      %v3820 = vpop.f32.mrf.mxu0
      %3821 = vdwg.mxu0
      %3822 = vmatprep.subr.bf16.mxu0 0
      %3823 = vmatpush1.bf16.msra.mxu0 %v3523
      %3824 = vmatprep.subr.bf16.mxu0 0
      %3825 = vmatpush1.bf16.msra.mxu0 %v3522
      %3826 = vmatprep.subr.bf16.mxu0 0
      %3827 = vmatpush1.bf16.msra.mxu0 %v3521
      %3828 = vmatprep.subr.bf16.mxu0 0
      %3829 = vmatpush1.bf16.msra.mxu0 %v3520
      %3830 = vmatprep.subr.bf16.mxu0 0
      %3831 = vmatpush1.bf16.msra.mxu0 %v3519
      %3832 = vmatprep.subr.bf16.mxu0 0
      %3833 = vmatpush1.bf16.msra.mxu0 %v3518
      %3834 = vmatprep.subr.bf16.mxu0 0
      %3835 = vmatpush1.bf16.msra.mxu0 %v3517
      %3836 = vmatprep.subr.bf16.mxu0 0
      %3837 = vmatpush1.bf16.msra.mxu0 %v3516
      %3838 = vmatprep.subr.bf16.mxu0 0
      %3839 = vmatpush2.bf16.msra.mxu0 %v3531
      %3840 = vmatprep.subr.bf16.mxu0 0
      %3841 = vmatpush2.bf16.msra.mxu0 %v3530
      %3842 = vmatprep.subr.bf16.mxu0 0
      %3843 = vmatpush2.bf16.msra.mxu0 %v3529
      %3844 = vmatprep.subr.bf16.mxu0 0
      %3845 = vmatpush2.bf16.msra.mxu0 %v3528
      %3846 = vmatprep.subr.bf16.mxu0 0
      %3847 = vmatpush2.bf16.msra.mxu0 %v3527
      %3848 = vmatprep.subr.bf16.mxu0 0
      %3849 = vmatpush2.bf16.msra.mxu0 %v3526
      %3850 = vmatprep.subr.bf16.mxu0 0
      %3851 = vmatpush2.bf16.msra.mxu0 %v3525
      %3852 = vmatprep.subr.bf16.mxu0 0
      %3853 = vmatpush2.bf16.msra.mxu0 %v3524
      %3854 = vmatprep.mubr.bf16.mxu0 %v3057
      %3855 = vmatmul.mubr.bf16.gmra.mxu0 %v3056
      %v3856 = vpop.f32.mrf.mxu0
      %v3857 = vadd.f32 %v3760, %v3856
      %v3858 = vpop.f32.mrf.mxu0
      %v3859 = vpop.f32.mrf.mxu0
      %v3860 = vadd.f32 %v3763, %v3859
      %v3861 = vpop.f32.mrf.mxu0
      %3862 = vmatprep.mubr.bf16.mxu0 %v3066
      %3863 = vmatmul.mubr.bf16.gmra.mxu0 %v3065
      %v3864 = vpop.f32.mrf.mxu0
      %v3865 = vadd.f32 %v3768, %v3864
      %v3866 = vpop.f32.mrf.mxu0
      %v3867 = vpop.f32.mrf.mxu0
      %v3868 = vadd.f32 %v3771, %v3867
      %v3869 = vpop.f32.mrf.mxu0
      %3870 = vmatprep.mubr.bf16.mxu0 %v3075
      %3871 = vmatmul.mubr.bf16.gmra.mxu0 %v3074
      %v3872 = vpop.f32.mrf.mxu0
      %v3873 = vadd.f32 %v3776, %v3872
      %v3874 = vpop.f32.mrf.mxu0
      %v3875 = vpop.f32.mrf.mxu0
      %v3876 = vadd.f32 %v3779, %v3875
      %v3877 = vpop.f32.mrf.mxu0
      %3878 = vmatprep.mubr.bf16.mxu0 %v3084
      %3879 = vmatmul.mubr.bf16.gmra.mxu0 %v3083
      %v3880 = vpop.f32.mrf.mxu0
      %v3881 = vadd.f32 %v3784, %v3880
      %v3882 = vpop.f32.mrf.mxu0
      %v3883 = vpop.f32.mrf.mxu0
      %v3884 = vadd.f32 %v3787, %v3883
      %v3885 = vpop.f32.mrf.mxu0
      %3886 = vmatprep.mubr.bf16.mxu0 %v3093
      %3887 = vmatmul.mubr.bf16.gmra.mxu0 %v3092
      %v3888 = vpop.f32.mrf.mxu0
      %v3889 = vadd.f32 %v3792, %v3888
      %v3890 = vpop.f32.mrf.mxu0
      %v3891 = vpop.f32.mrf.mxu0
      %v3892 = vadd.f32 %v3795, %v3891
      %v3893 = vpop.f32.mrf.mxu0
      %3894 = vmatprep.mubr.bf16.mxu0 %v3102
      %3895 = vmatmul.mubr.bf16.gmra.mxu0 %v3101
      %v3896 = vpop.f32.mrf.mxu0
      %v3897 = vadd.f32 %v3800, %v3896
      %v3898 = vpop.f32.mrf.mxu0
      %v3899 = vpop.f32.mrf.mxu0
      %v3900 = vadd.f32 %v3803, %v3899
      %v3901 = vpop.f32.mrf.mxu0
      %3902 = vmatprep.mubr.bf16.mxu0 %v3111
      %3903 = vmatmul.mubr.bf16.gmra.mxu0 %v3110
      %v3904 = vpop.f32.mrf.mxu0
      %v3905 = vadd.f32 %v3808, %v3904
      %v3906 = vpop.f32.mrf.mxu0
      %v3907 = vpop.f32.mrf.mxu0
      %v3908 = vadd.f32 %v3811, %v3907
      %v3909 = vpop.f32.mrf.mxu0
      %3910 = vmatprep.mubr.bf16.mxu0 %v3120
      %3911 = vmatmul.mubr.bf16.gmra.mxu0 %v3119
      %v3912 = vpop.f32.mrf.mxu0
      %v3913 = vadd.f32 %v3816, %v3912
      %v3914 = vpop.f32.mrf.mxu0
      %v3915 = vpop.f32.mrf.mxu0
      %v3916 = vadd.f32 %v3819, %v3915
      %v3917 = vpop.f32.mrf.mxu0
      %3918 = vdwg.mxu0
      %3919 = vmatprep.subr.bf16.mxu0 0
      %3920 = vmatpush1.bf16.msra.mxu0 %v3539
      %3921 = vmatprep.subr.bf16.mxu0 0
      %3922 = vmatpush1.bf16.msra.mxu0 %v3538
      %3923 = vmatprep.subr.bf16.mxu0 0
      %3924 = vmatpush1.bf16.msra.mxu0 %v3537
      %3925 = vmatprep.subr.bf16.mxu0 0
      %3926 = vmatpush1.bf16.msra.mxu0 %v3536
      %3927 = vmatprep.subr.bf16.mxu0 0
      %3928 = vmatpush1.bf16.msra.mxu0 %v3535
      %3929 = vmatprep.subr.bf16.mxu0 0
      %3930 = vmatpush1.bf16.msra.mxu0 %v3534
      %3931 = vmatprep.subr.bf16.mxu0 0
      %3932 = vmatpush1.bf16.msra.mxu0 %v3533
      %3933 = vmatprep.subr.bf16.mxu0 0
      %3934 = vmatpush1.bf16.msra.mxu0 %v3532
      %3935 = vmatprep.subr.bf16.mxu0 0
      %3936 = vmatpush2.bf16.msra.mxu0 %v3547
      %3937 = vmatprep.subr.bf16.mxu0 0
      %3938 = vmatpush2.bf16.msra.mxu0 %v3546
      %3939 = vmatprep.subr.bf16.mxu0 0
      %3940 = vmatpush2.bf16.msra.mxu0 %v3545
      %3941 = vmatprep.subr.bf16.mxu0 0
      %3942 = vmatpush2.bf16.msra.mxu0 %v3544
      %3943 = vmatprep.subr.bf16.mxu0 0
      %3944 = vmatpush2.bf16.msra.mxu0 %v3543
      %3945 = vmatprep.subr.bf16.mxu0 0
      %3946 = vmatpush2.bf16.msra.mxu0 %v3542
      %3947 = vmatprep.subr.bf16.mxu0 0
      %3948 = vmatpush2.bf16.msra.mxu0 %v3541
      %3949 = vmatprep.subr.bf16.mxu0 0
      %3950 = vmatpush2.bf16.msra.mxu0 %v3540
      %3951 = vmatprep.mubr.bf16.mxu0 %v3059
      %3952 = vmatmul.mubr.bf16.gmra.mxu0 %v3058
      %v3953 = vpop.f32.mrf.mxu0
      %v3954 = vadd.f32 %v3857, %v3953
      %v3955 = vpop.f32.mrf.mxu0
      %v3956 = vpop.f32.mrf.mxu0
      %v3957 = vadd.f32 %v3860, %v3956
      %v3958 = vpop.f32.mrf.mxu0
      %3959 = vmatprep.mubr.bf16.mxu0 %v3068
      %3960 = vmatmul.mubr.bf16.gmra.mxu0 %v3067
      %v3961 = vpop.f32.mrf.mxu0
      %v3962 = vadd.f32 %v3865, %v3961
      %v3963 = vpop.f32.mrf.mxu0
      %v3964 = vpop.f32.mrf.mxu0
      %v3965 = vadd.f32 %v3868, %v3964
      %v3966 = vpop.f32.mrf.mxu0
      %3967 = vmatprep.mubr.bf16.mxu0 %v3077
      %3968 = vmatmul.mubr.bf16.gmra.mxu0 %v3076
      %v3969 = vpop.f32.mrf.mxu0
      %v3970 = vadd.f32 %v3873, %v3969
      %v3971 = vpop.f32.mrf.mxu0
      %v3972 = vpop.f32.mrf.mxu0
      %v3973 = vadd.f32 %v3876, %v3972
      %v3974 = vpop.f32.mrf.mxu0
      %3975 = vmatprep.mubr.bf16.mxu0 %v3086
      %3976 = vmatmul.mubr.bf16.gmra.mxu0 %v3085
      %v3977 = vpop.f32.mrf.mxu0
      %v3978 = vadd.f32 %v3881, %v3977
      %v3979 = vpop.f32.mrf.mxu0
      %v3980 = vpop.f32.mrf.mxu0
      %v3981 = vadd.f32 %v3884, %v3980
      %v3982 = vpop.f32.mrf.mxu0
      %3983 = vmatprep.mubr.bf16.mxu0 %v3095
      %3984 = vmatmul.mubr.bf16.gmra.mxu0 %v3094
      %v3985 = vpop.f32.mrf.mxu0
      %v3986 = vadd.f32 %v3889, %v3985
      %v3987 = vpop.f32.mrf.mxu0
      %v3988 = vpop.f32.mrf.mxu0
      %v3989 = vadd.f32 %v3892, %v3988
      %v3990 = vpop.f32.mrf.mxu0
      %3991 = vmatprep.mubr.bf16.mxu0 %v3104
      %3992 = vmatmul.mubr.bf16.gmra.mxu0 %v3103
      %v3993 = vpop.f32.mrf.mxu0
      %v3994 = vadd.f32 %v3897, %v3993
      %v3995 = vpop.f32.mrf.mxu0
      %v3996 = vpop.f32.mrf.mxu0
      %v3997 = vadd.f32 %v3900, %v3996
      %v3998 = vpop.f32.mrf.mxu0
      %3999 = vmatprep.mubr.bf16.mxu0 %v3113
      %4000 = vmatmul.mubr.bf16.gmra.mxu0 %v3112
      %v4001 = vpop.f32.mrf.mxu0
      %v4002 = vadd.f32 %v3905, %v4001
      %v4003 = vpop.f32.mrf.mxu0
      %v4004 = vpop.f32.mrf.mxu0
      %v4005 = vadd.f32 %v3908, %v4004
      %v4006 = vpop.f32.mrf.mxu0
      %4007 = vmatprep.mubr.bf16.mxu0 %v3122
      %4008 = vmatmul.mubr.bf16.gmra.mxu0 %v3121
      %v4009 = vpop.f32.mrf.mxu0
      %v4010 = vadd.f32 %v3913, %v4009
      %v4011 = vpop.f32.mrf.mxu0
      %v4012 = vpop.f32.mrf.mxu0
      %v4013 = vadd.f32 %v3916, %v4012
      %v4014 = vpop.f32.mrf.mxu0
      %4015 = vdwg.mxu0
      %4016 = vmatprep.subr.bf16.mxu0 0
      %4017 = vmatpush1.bf16.msra.mxu0 %v3555
      %4018 = vmatprep.subr.bf16.mxu0 0
      %4019 = vmatpush1.bf16.msra.mxu0 %v3554
      %4020 = vmatprep.subr.bf16.mxu0 0
      %4021 = vmatpush1.bf16.msra.mxu0 %v3553
      %4022 = vmatprep.subr.bf16.mxu0 0
      %4023 = vmatpush1.bf16.msra.mxu0 %v3552
      %4024 = vmatprep.subr.bf16.mxu0 0
      %4025 = vmatpush1.bf16.msra.mxu0 %v3551
      %4026 = vmatprep.subr.bf16.mxu0 0
      %4027 = vmatpush1.bf16.msra.mxu0 %v3550
      %4028 = vmatprep.subr.bf16.mxu0 0
      %4029 = vmatpush1.bf16.msra.mxu0 %v3549
      %4030 = vmatprep.subr.bf16.mxu0 0
      %4031 = vmatpush1.bf16.msra.mxu0 %v3548
      %4032 = vmatprep.subr.bf16.mxu0 0
      %4033 = vmatpush2.bf16.msra.mxu0 0
      %4034 = vmatprep.subr.bf16.mxu0 0
      %4035 = vmatpush2.bf16.msra.mxu0 0
      %4036 = vmatprep.subr.bf16.mxu0 0
      %4037 = vmatpush2.bf16.msra.mxu0 0
      %4038 = vmatprep.subr.bf16.mxu0 0
      %4039 = vmatpush2.bf16.msra.mxu0 0
      %4040 = vmatprep.subr.bf16.mxu0 0
      %4041 = vmatpush2.bf16.msra.mxu0 0
      %4042 = vmatprep.subr.bf16.mxu0 0
      %4043 = vmatpush2.bf16.msra.mxu0 0
      %4044 = vmatprep.subr.bf16.mxu0 0
      %4045 = vmatpush2.bf16.msra.mxu0 0
      %4046 = vmatprep.subr.bf16.mxu0 0
      %4047 = vmatpush2.bf16.msra.mxu0 0
      %4048 = vmatprep.mubr.bf16.mxu0 0
      %4049 = vmatmul.mubr.bf16.gmra.mxu0 %v3060
      %v4050 = vpop.f32.mrf.mxu0
      %v4051 = vadd.f32 %v3954, %v4050
      %v4052 = vpop.f32.mrf.mxu0
      %v4053 = vpop.f32.mrf.mxu0
      %v4054 = vadd.f32 %v3957, %v4053
      %v4055 = vpop.f32.mrf.mxu0
      %4056 = vmatprep.mubr.bf16.mxu0 0
      %4057 = vmatmul.mubr.bf16.gmra.mxu0 %v3069
      %v4058 = vpop.f32.mrf.mxu0
      %v4059 = vadd.f32 %v3962, %v4058
      %v4060 = vpop.f32.mrf.mxu0
      %v4061 = vpop.f32.mrf.mxu0
      %v4062 = vadd.f32 %v3965, %v4061
      %v4063 = vpop.f32.mrf.mxu0
      %4064 = vmatprep.mubr.bf16.mxu0 0
      %4065 = vmatmul.mubr.bf16.gmra.mxu0 %v3078
      %v4066 = vpop.f32.mrf.mxu0
      %v4067 = vadd.f32 %v3970, %v4066
      %v4068 = vpop.f32.mrf.mxu0
      %v4069 = vpop.f32.mrf.mxu0
      %v4070 = vadd.f32 %v3973, %v4069
      %v4071 = vpop.f32.mrf.mxu0
      %4072 = vmatprep.mubr.bf16.mxu0 0
      %4073 = vmatmul.mubr.bf16.gmra.mxu0 %v3087
      %v4074 = vpop.f32.mrf.mxu0
      %v4075 = vadd.f32 %v3978, %v4074
      %v4076 = vpop.f32.mrf.mxu0
      %v4077 = vpop.f32.mrf.mxu0
      %v4078 = vadd.f32 %v3981, %v4077
      %v4079 = vpop.f32.mrf.mxu0
      %4080 = vmatprep.mubr.bf16.mxu0 0
      %4081 = vmatmul.mubr.bf16.gmra.mxu0 %v3096
      %v4082 = vpop.f32.mrf.mxu0
      %v4083 = vadd.f32 %v3986, %v4082
      %v4084 = vpop.f32.mrf.mxu0
      %v4085 = vpop.f32.mrf.mxu0
      %v4086 = vadd.f32 %v3989, %v4085
      %v4087 = vpop.f32.mrf.mxu0
      %4088 = vmatprep.mubr.bf16.mxu0 0
      %4089 = vmatmul.mubr.bf16.gmra.mxu0 %v3105
      %v4090 = vpop.f32.mrf.mxu0
      %v4091 = vadd.f32 %v3994, %v4090
      %v4092 = vpop.f32.mrf.mxu0
      %v4093 = vpop.f32.mrf.mxu0
      %v4094 = vadd.f32 %v3997, %v4093
      %v4095 = vpop.f32.mrf.mxu0
      %4096 = vmatprep.mubr.bf16.mxu0 0
      %4097 = vmatmul.mubr.bf16.gmra.mxu0 %v3114
      %v4098 = vpop.f32.mrf.mxu0
      %v4099 = vadd.f32 %v4002, %v4098
      %v4100 = vpop.f32.mrf.mxu0
      %v4101 = vpop.f32.mrf.mxu0
      %v4102 = vadd.f32 %v4005, %v4101
      %v4103 = vpop.f32.mrf.mxu0
      %4104 = vmatprep.mubr.bf16.mxu0 0
      %4105 = vmatmul.mubr.bf16.gmra.mxu0 %v3123
      %v4106 = vpop.f32.mrf.mxu0
      %v4107 = vadd.f32 %v4010, %v4106
      %v4108 = vpop.f32.mrf.mxu0
      %v4109 = vpop.f32.mrf.mxu0
      %v4110 = vadd.f32 %v4013, %v4109
      %v4111 = vpop.f32.mrf.mxu0
      %4112 = vdwg.mxu0
      %4113 = vst [vmem:[#allocation3] sm:$0xff] %v4051
      %4114 = vst [vmem:[#allocation3 + $0x8] sm:$0xff] %v4054
      %4115 = vst [vmem:[#allocation3 + $0x10] sm:$0xff] %v4059
      %4116 = vst [vmem:[#allocation3 + $0x18] sm:$0xff] %v4062
      %4117 = vst [vmem:[#allocation3 + $0x20] sm:$0xff] %v4067
      %4118 = vst [vmem:[#allocation3 + $0x28] sm:$0xff] %v4070
      %4119 = vst [vmem:[#allocation3 + $0x30] sm:$0xff] %v4075
      %4120 = vst [vmem:[#allocation3 + $0x38] sm:$0xff] %v4078
      %4121 = vst [vmem:[#allocation3 + $0x40] sm:$0xff] %v4083
      %4122 = vst [vmem:[#allocation3 + $0x48] sm:$0xff] %v4086
      %4123 = vst [vmem:[#allocation3 + $0x50] sm:$0xff] %v4091
      %4124 = vst [vmem:[#allocation3 + $0x58] sm:$0xff] %v4094
      %4125 = vst [vmem:[#allocation3 + $0x60] sm:$0xff] %v4099
      %4126 = vst [vmem:[#allocation3 + $0x68] sm:$0xff] %v4102
      %4127 = vst [vmem:[#allocation3 + $0x70] sm:$0xff] %v4107
      %4128 = vst [vmem:[#allocation3 + $0x78] sm:$0xff] %v4110
      %v4129 = vld [vmem:[#allocation3] sm:$0xff]
      %v4130 = vld [vmem:[#allocation3 + $0x8] sm:$0xff]
      %v4131 = vld [vmem:[#allocation3 + $0x10] sm:$0xff]
      %v4132 = vld [vmem:[#allocation3 + $0x18] sm:$0xff]
      %v4133 = vld [vmem:[#allocation3 + $0x20] sm:$0xff]
      %v4134 = vld [vmem:[#allocation3 + $0x28] sm:$0xff]
      %v4135 = vld [vmem:[#allocation3 + $0x30] sm:$0xff]
      %v4136 = vld [vmem:[#allocation3 + $0x38] sm:$0xff]
      %v4137 = vld [vmem:[#allocation3 + $0x40] sm:$0xff]
      %v4138 = vld [vmem:[#allocation3 + $0x48] sm:$0xff]
      %v4139 = vld [vmem:[#allocation3 + $0x50] sm:$0xff]
      %v4140 = vld [vmem:[#allocation3 + $0x58] sm:$0xff]
      %v4141 = vld [vmem:[#allocation3 + $0x60] sm:$0xff]
      %v4142 = vld [vmem:[#allocation3 + $0x68] sm:$0xff]
      %v4143 = vld [vmem:[#allocation3 + $0x70] sm:$0xff]
      %v4144 = vld [vmem:[#allocation3 + $0x78] sm:$0xff]
      %v4145 = vld [vmem:[%s4] sm:$0x1]
      %v4147 = vlaneseq
      %v4148 = vshrl.u32 %v4147, 7
      %v4149 = vsub.s32 0, %v4148
      %v4150 = vrot.slane %v4145, %v4149
      %v4152 = vadd.f32 %v4129, %v4150
      %v4153 = vadd.f32 %v4130, %v4150
      %v4154 = vadd.f32 %v4131, %v4150
      %v4155 = vadd.f32 %v4132, %v4150
      %v4156 = vadd.f32 %v4133, %v4150
      %v4157 = vadd.f32 %v4134, %v4150
      %v4158 = vadd.f32 %v4135, %v4150
      %v4159 = vadd.f32 %v4136, %v4150
      %v4160 = vadd.f32 %v4137, %v4150
      %v4161 = vadd.f32 %v4138, %v4150
      %v4162 = vadd.f32 %v4139, %v4150
      %v4163 = vadd.f32 %v4140, %v4150
      %v4164 = vadd.f32 %v4141, %v4150
      %v4165 = vadd.f32 %v4142, %v4150
      %v4166 = vadd.f32 %v4143, %v4150
      %v4167 = vadd.f32 %v4144, %v4150
      %v4168 = vld [vmem:[%s219] sm:$0xf]
      %v4169 = vld [vmem:[%s219 + $0x4] sm:$0xf]
      %v4170 = vld [vmem:[%s219 + $0x8] sm:$0xf]
      %v4171 = vld [vmem:[%s219 + $0xc] sm:$0xf]
      %v4172 = vld [vmem:[%s219 + $0x10] sm:$0xf]
      %v4173 = vld [vmem:[%s219 + $0x14] sm:$0xf]
      %v4174 = vld [vmem:[%s219 + $0x18] sm:$0xf]
      %v4175 = vld [vmem:[%s219 + $0x1c] sm:$0xf]
      %v4176 = vld [vmem:[%s219 + $0x20] sm:$0xf]
      %v4177 = vld [vmem:[%s219 + $0x24] sm:$0xf]
      %v4178 = vld [vmem:[%s219 + $0x28] sm:$0xf]
      %v4179 = vld [vmem:[%s219 + $0x2c] sm:$0xf]
      %v4180 = vld [vmem:[%s219 + $0x30] sm:$0xf]
      %v4181 = vld [vmem:[%s219 + $0x34] sm:$0xf]
      %v4182 = vld [vmem:[%s219 + $0x38] sm:$0xf]
      %v4183 = vld [vmem:[%s219 + $0x3c] sm:$0xf]
      %v4184 = vunpack.c.l.bf16 %v4168
      %v4185 = vunpack.c.l.bf16 %v4169
      %v4186 = vunpack.c.l.bf16 %v4170
      %v4187 = vunpack.c.l.bf16 %v4171
      %v4188 = vunpack.c.l.bf16 %v4172
      %v4189 = vunpack.c.l.bf16 %v4173
      %v4190 = vunpack.c.l.bf16 %v4174
      %v4191 = vunpack.c.l.bf16 %v4175
      %v4192 = vunpack.c.l.bf16 %v4176
      %v4193 = vunpack.c.l.bf16 %v4177
      %v4194 = vunpack.c.l.bf16 %v4178
      %v4195 = vunpack.c.l.bf16 %v4179
      %v4196 = vunpack.c.l.bf16 %v4180
      %v4197 = vunpack.c.l.bf16 %v4181
      %v4198 = vunpack.c.l.bf16 %v4182
      %v4199 = vunpack.c.l.bf16 %v4183
      %v4200 = vadd.f32 %v4152, %v4184
      %v4201 = vadd.f32 %v4153, %v4185
      %v4202 = vadd.f32 %v4154, %v4186
      %v4203 = vadd.f32 %v4155, %v4187
      %v4204 = vadd.f32 %v4156, %v4188
      %v4205 = vadd.f32 %v4157, %v4189
      %v4206 = vadd.f32 %v4158, %v4190
      %v4207 = vadd.f32 %v4159, %v4191
      %v4208 = vadd.f32 %v4160, %v4192
      %v4209 = vadd.f32 %v4161, %v4193
      %v4210 = vadd.f32 %v4162, %v4194
      %v4211 = vadd.f32 %v4163, %v4195
      %v4212 = vadd.f32 %v4164, %v4196
      %v4213 = vadd.f32 %v4165, %v4197
      %v4214 = vadd.f32 %v4166, %v4198
      %v4215 = vadd.f32 %v4167, %v4199
      %v4216 = vmax.f32 %v4200, 0.0
      %v4217 = vmax.f32 %v4201, 0.0
      %v4218 = vmax.f32 %v4202, 0.0
      %v4219 = vmax.f32 %v4203, 0.0
      %v4220 = vmax.f32 %v4204, 0.0
      %v4221 = vmax.f32 %v4205, 0.0
      %v4222 = vmax.f32 %v4206, 0.0
      %v4223 = vmax.f32 %v4207, 0.0
      %v4224 = vmax.f32 %v4208, 0.0
      %v4225 = vmax.f32 %v4209, 0.0
      %v4226 = vmax.f32 %v4210, 0.0
      %v4227 = vmax.f32 %v4211, 0.0
      %v4228 = vmax.f32 %v4212, 0.0
      %v4229 = vmax.f32 %v4213, 0.0
      %v4230 = vmax.f32 %v4214, 0.0
      %v4231 = vmax.f32 %v4215, 0.0
      %4232 = vst [vmem:[%s224] sm:$0xff] %v4216
      %4233 = vst [vmem:[%s224 + $0x8] sm:$0xff] %v4217
      %4234 = vst [vmem:[%s224 + $0x10] sm:$0xff] %v4218
      %4235 = vst [vmem:[%s224 + $0x18] sm:$0xff] %v4219
      %4236 = vst [vmem:[%s224 + $0x20] sm:$0xff] %v4220
      %4237 = vst [vmem:[%s224 + $0x28] sm:$0xff] %v4221
      %4238 = vst [vmem:[%s224 + $0x30] sm:$0xff] %v4222
      %4239 = vst [vmem:[%s224 + $0x38] sm:$0xff] %v4223
      %4240 = vst [vmem:[%s224 + $0x40] sm:$0xff] %v4224
      %4241 = vst [vmem:[%s224 + $0x48] sm:$0xff] %v4225
      %4242 = vst [vmem:[%s224 + $0x50] sm:$0xff] %v4226
      %4243 = vst [vmem:[%s224 + $0x58] sm:$0xff] %v4227
      %4244 = vst [vmem:[%s224 + $0x60] sm:$0xff] %v4228
      %4245 = vst [vmem:[%s224 + $0x68] sm:$0xff] %v4229
      %4246 = vst [vmem:[%s224 + $0x70] sm:$0xff] %v4230
      %4247 = vst [vmem:[%s224 + $0x78] sm:$0xff] %v4231
      %p4248 = scmp.lt.s32.totalorder %s16, 1
      %s4249 = scalar_select %p4248, %s16, 1
      %s4250 = smul.addr %s4249, 16
      %s4251 = smul.addr %s4250, 8
      %s4252 = scalar_lea.vmem %s5, %s4251
      // Predicated region
      $region41: #{basic_block.1} parent=39 // pred_check
        %p4253 = pneg %p144
      $region42: #{basic_block.1} parent=39 // pred_check_branch
        %4255 = sbr.rel (%p4253) target = $region44
      $region43: #{basic_block.1} parent=39 // pred_region
        _
      $region44: #{basic_block.1} parent=39 // pred_fallthru
        _
    $region40: #{basic_block.1} parent=5 // pred_fallthru
      _
    %p4256 = scmp.le.s32.totalorder 2, %s11
    // Predicated region
    $region45: #{basic_block.1} parent=5 // pred_check
      %p4257 = pneg %p4256
    $region46: #{basic_block.1} parent=5 // pred_check_branch
      %4259 = sbr.rel (%p4257) target = $region48
    $region47: #{basic_block.1} parent=5 // pred_region
      %s4260 = ssub.s32 %s11, 2
      // Predicated region
      $region49: #{basic_block.1} parent=47 // pred_check
        %p4261 = pneg %p150
      $region50: #{basic_block.1} parent=47 // pred_check_branch
        %4263 = sbr.rel (%p4261) target = $region52
      $region51: #{basic_block.1} parent=47 // pred_region
        %p4264 = scmp.lt.s32.totalorder %s17, 1
        %s4265 = scalar_select %p4264, %s17, 1
        %s4266 = smul.addr %s4265, 16
        %s4267 = smul.addr %s4266, 8
        %s4268 = scalar_lea.vmem %s5, %s4267
      $region52: #{basic_block.1} parent=47 // pred_fallthru
        _
    $region48: #{basic_block.1} parent=5 // pred_fallthru
      _
  $region6: #{basic_block.1} parent=0 // loop_footer
    %s15 = sadd.s32 1, %s11
  $region7: #{basic_block.1} parent=0 // loop_footer_branch
    %10 = sbr.rel target = $region3
  $region8: #{basic_block.1} parent=0 // loop_exit
    _

</llo_original>
